<compile_context>
chip_gen: v5e
topology: v5e:2x2
jax: 0.10.0
libtpu: 0.0.40
codegen_flags: <defaults>
</compile_context>

<pallas_src>
import functools
import math

import jax
import jax.numpy as jnp
from jax.experimental import pallas as pl
from jax.experimental.pallas import tpu as pltpu

K, S, P = 4, 2, 1   # kernel size, stride, padding of every conv layer


def _vmem_limit_bytes():
    """Generation-aware VMEM cap (~70% of physical), with a safe fallback."""
    try:
        info = pltpu.get_tpu_info()
        cap = getattr(info, "vmem_capacity_bytes", None)
        if cap:
            return int(0.7 * int(cap))
    except Exception:
        pass
    return 32 * 1024 * 1024


def _make_encoder_kernel(layer_dims):
    """layer_dims: tuple of (H, W, Cin, OH, OW, Cout) per conv layer."""
    n_layers = len(layer_dims)

    def kernel(*refs):
        x_ref = refs[0]                       # (1, H0, W0, C0)
        out_ref = refs[1 + 2 * n_layers]      # (1, 1, C_last)
        scratch0 = 2 + 2 * n_layers

        # activation of this image, kept as an in-register/VMEM value
        a = x_ref[0].astype(jnp.float32)      # (H, W, Cin)

        for l, (H, W, Cin, OH, OW, Cout) in enumerate(layer_dims):
            w_ref = refs[1 + 2 * l]           # (K*K, Cin, Cout)
            b_ref = refs[2 + 2 * l]           # (1, Cout) f32
            ap_ref = refs[scratch0 + 2 * l]   # (H+2P, W+2P, Cin) f32 scratch
            u_ref = refs[scratch0 + 2 * l + 1]  # (OH, W+2P, Cin) f32 scratch

            # Zero-padded activation, fully VMEM resident (in-kernel "pad").
            ap_ref[...] = jnp.zeros(ap_ref.shape, ap_ref.dtype)
            ap_ref[1:1 + H, 1:1 + W, :] = a

            acc = jnp.zeros((OH * OW, Cout), jnp.float32)
            for kh in range(K):
                # kh shift: rows kh, kh+2, ... of the padded input
                # (plain whole-row copies along the major axis).
                for oh in range(OH):
                    u_ref[oh] = ap_ref[2 * oh + kh]
                for kw in range(K):
                    # kw shift: stride-2 sublane-strided read = in-kernel
                    # im2col column for this (kh, kw).
                    sh = u_ref[:, pl.ds(kw, OW, 2), :]        # (OH, OW, Cin)
                    sh2 = sh.reshape(OH * OW, Cin).astype(w_ref.dtype)
                    acc += jnp.dot(sh2, w_ref[kh * K + kw],
                                   preferred_element_type=jnp.float32)

            # f32 bias + ReLU epilogue; result feeds the next layer directly.
            a = jnp.maximum(acc + b_ref[...], 0.0).reshape(OH, OW, Cout)

        # Final spatial size is 1x1; cast on store (bf16 when use_bf16).
        out_ref[...] = a.reshape(1, 1, -1).astype(out_ref.dtype)

    return kernel


def cnn_encoder(x_nchw, params, *, use_bf16=False):
    """CNNEncoder forward: NCHW input, list of (w, b) conv params."""
    N, C0, H0, W0 = x_nchw.shape
    op_dtype = jnp.bfloat16 if use_bf16 else jnp.float32   # HBM / MXU operand dtype

    x = jnp.transpose(x_nchw, (0, 2, 3, 1)).astype(op_dtype)   # NCHW -> NHWC once

    layer_dims = []
    inputs = [x]
    in_specs = [pl.BlockSpec((1, H0, W0, C0), lambda i: (i, 0, 0, 0))]
    h, w, cin = H0, W0, C0
    for (wt, bs) in params:
        cout = wt.shape[0]
        oh = (h + 2 * P - K) // S + 1
        ow = (w + 2 * P - K) // S + 1
        layer_dims.append((h, w, cin, oh, ow, cout))
        # torch (Cout, Cin, KH, KW) -> (KH*KW, Cin, Cout), (kh, kw)-major order
        wm = jnp.transpose(wt, (2, 3, 1, 0)).reshape(K * K, cin, cout).astype(op_dtype)
        br = bs.reshape(1, cout).astype(jnp.float32)
        inputs.extend([wm, br])
        in_specs.append(pl.BlockSpec((K * K, cin, cout), lambda i: (0, 0, 0)))
        in_specs.append(pl.BlockSpec((1, cout), lambda i: (0, 0)))
        h, w, cin = oh, ow, cout
    c_last = cin
    assert h == 1 and w == 1, "encoder must reduce spatial dims to 1x1"

    # VMEM scratch: padded activation + kh-shifted row buffer per layer (f32).
    scratch_shapes = []
    for (hh, ww, ci, oh, ow, co) in layer_dims:
        scratch_shapes.append(pltpu.VMEM((hh + 2 * P, ww + 2 * P, ci), jnp.float32))
        scratch_shapes.append(pltpu.VMEM((oh, ww + 2 * P, ci), jnp.float32))

    flops = 2 * N * sum(oh * ow * K * K * ci * co
                        for (_, _, ci, oh, ow, co) in layer_dims)
    bytes_accessed = int(x.size) * x.dtype.itemsize
    bytes_accessed += sum(int(a.size) * a.dtype.itemsize for a in inputs[1:])
    bytes_accessed += N * c_last * jnp.dtype(op_dtype).itemsize

    out = pl.pallas_call(
        _make_encoder_kernel(tuple(layer_dims)),
        out_shape=jax.ShapeDtypeStruct((N, 1, c_last), op_dtype),
        grid=(N,),
        in_specs=in_specs,
        out_specs=pl.BlockSpec((1, 1, c_last), lambda i: (i, 0, 0)),
        scratch_shapes=scratch_shapes,
        compiler_params=pltpu.CompilerParams(
            dimension_semantics=("parallel",),
            vmem_limit_bytes=_vmem_limit_bytes()),
        cost_estimate=pl.CostEstimate(flops=flops, transcendentals=0,
                                      bytes_accessed=bytes_accessed),
    )(*inputs)

    # spatial dims are 1x1, so NHWC -> NCHW is a free reshape
    return out.reshape(N, c_last, 1, 1)


def init_params(key, input_channels, img_size, initial_channels=4):
    """Deterministic params mirroring CNNEncoder.__init__ layer shapes."""
    params = []
    in_c = input_channels
    cur = initial_channels
    size = img_size
    while size > 1:
        key, k_w, k_b = jax.random.split(key, 3)
        fan_in = in_c * K * K
        bound = 1.0 / math.sqrt(fan_in)
        w = jax.random.uniform(k_w, (cur, in_c, K, K), jnp.float32, -bound, bound)
        b = jax.random.uniform(k_b, (cur,), jnp.float32, -bound, bound)
        params.append((w, b))
        in_c = cur
        cur *= 2
        size //= 2
    return params


def _reference_forward(x, params):
    """Pure-JAX reference (lax.conv, highest precision) for correctness."""
    for w, b in params:
        x = jax.lax.conv_general_dilated(
            x, w, window_strides=(S, S), padding=((P, P), (P, P)),
            dimension_numbers=("NCHW", "OIHW", "NCHW"),
            precision=jax.lax.Precision.HIGHEST)
        x = jnp.maximum(x + b[None, :, None, None], 0.0)
    return x


if __name__ == "__main__":
    key = jax.random.PRNGKey(0)
    k_x, k_p = jax.random.split(key)

    # Small shapes consistent with the module: batch=2, channels=4, img=16x16.
    N, C_IN, IMG = 2, 4, 16
    x = jax.random.normal(k_x, (N, C_IN, IMG, IMG), dtype=jnp.float32)
    params = init_params(k_p, C_IN, IMG, initial_channels=4)

    ref = jax.block_until_ready(_reference_forward(x, params))

    # f32 path: matches the module's forward semantics.
    out = jax.block_until_ready(jax.jit(cnn_encoder)(x, params))
    assert out.shape == (N, 32, 1, 1), out.shape
    assert out.dtype == jnp.float32
    err = float(jnp.max(jnp.abs(out - ref)))
    assert err < 1e-2, f"f32 path mismatch vs reference: {err}"

    # bf16 HBM/MXU-operand path (bandwidth optimization on all generations,
    # incl. v5e); f32 accumulate + epilogue, bf16 output; looser tolerance.
    out_bf16 = jax.block_until_ready(
        jax.jit(functools.partial(cnn_encoder, use_bf16=True))(x, params))
    assert out_bf16.shape == (N, 32, 1, 1), out_bf16.shape
    err_bf16 = float(jnp.max(jnp.abs(out_bf16.astype(jnp.float32) - ref)))
    assert err_bf16 < 1e-1, f"bf16 path diverged: {err_bf16}"

    print("KERNEL_OK")
</pallas_src>

<mosaic_0001>
module attributes {stable_mosaic.version = 11 : i64} {
  func.func @kernel(%arg0: i32, %arg1: memref<1x16x16x4xf32, #tpu.memory_space<vmem>>, %arg2: memref<16x4x4xf32, #tpu.memory_space<vmem>>, %arg3: memref<1x4xf32, #tpu.memory_space<vmem>>, %arg4: memref<16x4x8xf32, #tpu.memory_space<vmem>>, %arg5: memref<1x8xf32, #tpu.memory_space<vmem>>, %arg6: memref<16x8x16xf32, #tpu.memory_space<vmem>>, %arg7: memref<1x16xf32, #tpu.memory_space<vmem>>, %arg8: memref<16x16x32xf32, #tpu.memory_space<vmem>>, %arg9: memref<1x32xf32, #tpu.memory_space<vmem>>, %arg10: memref<1x1x32xf32, #tpu.memory_space<vmem>>, %arg11: memref<18x18x4xf32, #tpu.memory_space<vmem>>, %arg12: memref<8x18x4xf32, #tpu.memory_space<vmem>>, %arg13: memref<10x10x4xf32, #tpu.memory_space<vmem>>, %arg14: memref<4x10x4xf32, #tpu.memory_space<vmem>>, %arg15: memref<6x6x8xf32, #tpu.memory_space<vmem>>, %arg16: memref<2x6x8xf32, #tpu.memory_space<vmem>>, %arg17: memref<4x4x16xf32, #tpu.memory_space<vmem>>, %arg18: memref<1x4x16xf32, #tpu.memory_space<vmem>>) attributes {dimension_semantics = [#tpu.dimension_semantics<parallel>], iteration_bounds = array<i64: 2>, scalar_prefetch = 0 : i64, scratch_operands = 8 : i64, tpu.core_type = #tpu.core_type<tc>, window_params = [{transform_indices = @transform_0, window_bounds = array<i64: 1, 16, 16, 4>}, {pipeline_mode = #tpu.pipeline_mode<synchronous>, transform_indices = @transform_1, window_bounds = array<i64: 16, 4, 4>}, {pipeline_mode = #tpu.pipeline_mode<synchronous>, transform_indices = @transform_2, window_bounds = array<i64: 1, 4>}, {pipeline_mode = #tpu.pipeline_mode<synchronous>, transform_indices = @transform_3, window_bounds = array<i64: 16, 4, 8>}, {pipeline_mode = #tpu.pipeline_mode<synchronous>, transform_indices = @transform_4, window_bounds = array<i64: 1, 8>}, {pipeline_mode = #tpu.pipeline_mode<synchronous>, transform_indices = @transform_5, window_bounds = array<i64: 16, 8, 16>}, {pipeline_mode = #tpu.pipeline_mode<synchronous>, transform_indices = @transform_6, window_bounds = array<i64: 1, 16>}, {pipeline_mode = #tpu.pipeline_mode<synchronous>, transform_indices = @transform_7, window_bounds = array<i64: 16, 16, 32>}, {pipeline_mode = #tpu.pipeline_mode<synchronous>, transform_indices = @transform_8, window_bounds = array<i64: 1, 32>}, {transform_indices = @transform_9, window_bounds = array<i64: 1, 1, 32>}]} {
    %c0 = arith.constant 0 : index
    %c0_0 = arith.constant 0 : index
    %c0_1 = arith.constant 0 : index
    %c0_2 = arith.constant 0 : index
    %0 = vector.load %arg1[%c0, %c0_0, %c0_1, %c0_2] : memref<1x16x16x4xf32, #tpu.memory_space<vmem>>, vector<1x16x16x4xf32>
    %1 = vector.shape_cast %0 : vector<1x16x16x4xf32> to vector<16x16x4xf32>
    %cst = arith.constant 0.000000e+00 : f32
    %2 = vector.broadcast %cst : f32 to vector<18x18x4xf32>
    %c0_3 = arith.constant 0 : index
    %c0_4 = arith.constant 0 : index
    %c0_5 = arith.constant 0 : index
    %3 = vector.load %arg11[%c0_3, %c0_4, %c0_5] : memref<18x18x4xf32, #tpu.memory_space<vmem>>, vector<18x18x4xf32>
    tpu.vector_store %arg11[%c0_3, %c0_4, %c0_5], %2 {strides = array<i32>} : memref<18x18x4xf32, #tpu.memory_space<vmem>>, vector<18x18x4xf32>,
    %c1 = arith.constant 1 : index
    %c1_6 = arith.constant 1 : index
    %c0_7 = arith.constant 0 : index
    %4 = vector.load %arg11[%c1, %c1_6, %c0_7] : memref<18x18x4xf32, #tpu.memory_space<vmem>>, vector<16x16x4xf32>
    tpu.vector_store %arg11[%c1, %c1_6, %c0_7], %1 {strides = array<i32>} : memref<18x18x4xf32, #tpu.memory_space<vmem>>, vector<16x16x4xf32>,
    %cst_8 = arith.constant 0.000000e+00 : f32
    %5 = vector.broadcast %cst_8 : f32 to vector<64x4xf32>
    %c0_9 = arith.constant 0 : index
    %c0_10 = arith.constant 0 : index
    %c0_11 = arith.constant 0 : index
    %6 = vector.load %arg11[%c0_9, %c0_10, %c0_11] : memref<18x18x4xf32, #tpu.memory_space<vmem>>, vector<1x18x4xf32>
    %7 = vector.shape_cast %6 : vector<1x18x4xf32> to vector<18x4xf32>
    %c0_12 = arith.constant 0 : index
    %c0_13 = arith.constant 0 : index
    %c0_14 = arith.constant 0 : index
    %8 = vector.load %arg12[%c0_12, %c0_13, %c0_14] : memref<8x18x4xf32, #tpu.memory_space<vmem>>, vector<1x18x4xf32>
    %9 = vector.shape_cast %8 : vector<1x18x4xf32> to vector<18x4xf32>
    %10 = vector.shape_cast %7 : vector<18x4xf32> to vector<1x18x4xf32>
    tpu.vector_store %arg12[%c0_12, %c0_13, %c0_14], %10 {strides = array<i32>} : memref<8x18x4xf32, #tpu.memory_space<vmem>>, vector<1x18x4xf32>,
    %c2 = arith.constant 2 : index
    %c0_15 = arith.constant 0 : index
    %c0_16 = arith.constant 0 : index
    %11 = vector.load %arg11[%c2, %c0_15, %c0_16] : memref<18x18x4xf32, #tpu.memory_space<vmem>>, vector<1x18x4xf32>
    %12 = vector.shape_cast %11 : vector<1x18x4xf32> to vector<18x4xf32>
    %c1_17 = arith.constant 1 : index
    %c0_18 = arith.constant 0 : index
    %c0_19 = arith.constant 0 : index
    %13 = vector.load %arg12[%c1_17, %c0_18, %c0_19] : memref<8x18x4xf32, #tpu.memory_space<vmem>>, vector<1x18x4xf32>
    %14 = vector.shape_cast %13 : vector<1x18x4xf32> to vector<18x4xf32>
    %15 = vector.shape_cast %12 : vector<18x4xf32> to vector<1x18x4xf32>
    tpu.vector_store %arg12[%c1_17, %c0_18, %c0_19], %15 {strides = array<i32>} : memref<8x18x4xf32, #tpu.memory_space<vmem>>, vector<1x18x4xf32>,
    %c4 = arith.constant 4 : index
    %c0_20 = arith.constant 0 : index
    %c0_21 = arith.constant 0 : index
    %16 = vector.load %arg11[%c4, %c0_20, %c0_21] : memref<18x18x4xf32, #tpu.memory_space<vmem>>, vector<1x18x4xf32>
    %17 = vector.shape_cast %16 : vector<1x18x4xf32> to vector<18x4xf32>
    %c2_22 = arith.constant 2 : index
    %c0_23 = arith.constant 0 : index
    %c0_24 = arith.constant 0 : index
    %18 = vector.load %arg12[%c2_22, %c0_23, %c0_24] : memref<8x18x4xf32, #tpu.memory_space<vmem>>, vector<1x18x4xf32>
    %19 = vector.shape_cast %18 : vector<1x18x4xf32> to vector<18x4xf32>
    %20 = vector.shape_cast %17 : vector<18x4xf32> to vector<1x18x4xf32>
    tpu.vector_store %arg12[%c2_22, %c0_23, %c0_24], %20 {strides = array<i32>} : memref<8x18x4xf32, #tpu.memory_space<vmem>>, vector<1x18x4xf32>,
    %c6 = arith.constant 6 : index
    %c0_25 = arith.constant 0 : index
    %c0_26 = arith.constant 0 : index
    %21 = vector.load %arg11[%c6, %c0_25, %c0_26] : memref<18x18x4xf32, #tpu.memory_space<vmem>>, vector<1x18x4xf32>
    %22 = vector.shape_cast %21 : vector<1x18x4xf32> to vector<18x4xf32>
    %c3 = arith.constant 3 : index
    %c0_27 = arith.constant 0 : index
    %c0_28 = arith.constant 0 : index
    %23 = vector.load %arg12[%c3, %c0_27, %c0_28] : memref<8x18x4xf32, #tpu.memory_space<vmem>>, vector<1x18x4xf32>
    %24 = vector.shape_cast %23 : vector<1x18x4xf32> to vector<18x4xf32>
    %25 = vector.shape_cast %22 : vector<18x4xf32> to vector<1x18x4xf32>
    tpu.vector_store %arg12[%c3, %c0_27, %c0_28], %25 {strides = array<i32>} : memref<8x18x4xf32, #tpu.memory_space<vmem>>, vector<1x18x4xf32>,
    %c8 = arith.constant 8 : index
    %c0_29 = arith.constant 0 : index
    %c0_30 = arith.constant 0 : index
    %26 = vector.load %arg11[%c8, %c0_29, %c0_30] : memref<18x18x4xf32, #tpu.memory_space<vmem>>, vector<1x18x4xf32>
    %27 = vector.shape_cast %26 : vector<1x18x4xf32> to vector<18x4xf32>
    %c4_31 = arith.constant 4 : index
    %c0_32 = arith.constant 0 : index
    %c0_33 = arith.constant 0 : index
    %28 = vector.load %arg12[%c4_31, %c0_32, %c0_33] : memref<8x18x4xf32, #tpu.memory_space<vmem>>, vector<1x18x4xf32>
    %29 = vector.shape_cast %28 : vector<1x18x4xf32> to vector<18x4xf32>
    %30 = vector.shape_cast %27 : vector<18x4xf32> to vector<1x18x4xf32>
    tpu.vector_store %arg12[%c4_31, %c0_32, %c0_33], %30 {strides = array<i32>} : memref<8x18x4xf32, #tpu.memory_space<vmem>>, vector<1x18x4xf32>,
    %c10 = arith.constant 10 : index
    %c0_34 = arith.constant 0 : index
    %c0_35 = arith.constant 0 : index
    %31 = vector.load %arg11[%c10, %c0_34, %c0_35] : memref<18x18x4xf32, #tpu.memory_space<vmem>>, vector<1x18x4xf32>
    %32 = vector.shape_cast %31 : vector<1x18x4xf32> to vector<18x4xf32>
    %c5 = arith.constant 5 : index
    %c0_36 = arith.constant 0 : index
    %c0_37 = arith.constant 0 : index
    %33 = vector.load %arg12[%c5, %c0_36, %c0_37] : memref<8x18x4xf32, #tpu.memory_space<vmem>>, vector<1x18x4xf32>
    %34 = vector.shape_cast %33 : vector<1x18x4xf32> to vector<18x4xf32>
    %35 = vector.shape_cast %32 : vector<18x4xf32> to vector<1x18x4xf32>
    tpu.vector_store %arg12[%c5, %c0_36, %c0_37], %35 {strides = array<i32>} : memref<8x18x4xf32, #tpu.memory_space<vmem>>, vector<1x18x4xf32>,
    %c12 = arith.constant 12 : index
    %c0_38 = arith.constant 0 : index
    %c0_39 = arith.constant 0 : index
    %36 = vector.load %arg11[%c12, %c0_38, %c0_39] : memref<18x18x4xf32, #tpu.memory_space<vmem>>, vector<1x18x4xf32>
    %37 = vector.shape_cast %36 : vector<1x18x4xf32> to vector<18x4xf32>
    %c6_40 = arith.constant 6 : index
    %c0_41 = arith.constant 0 : index
    %c0_42 = arith.constant 0 : index
    %38 = vector.load %arg12[%c6_40, %c0_41, %c0_42] : memref<8x18x4xf32, #tpu.memory_space<vmem>>, vector<1x18x4xf32>
    %39 = vector.shape_cast %38 : vector<1x18x4xf32> to vector<18x4xf32>
    %40 = vector.shape_cast %37 : vector<18x4xf32> to vector<1x18x4xf32>
    tpu.vector_store %arg12[%c6_40, %c0_41, %c0_42], %40 {strides = array<i32>} : memref<8x18x4xf32, #tpu.memory_space<vmem>>, vector<1x18x4xf32>,
    %c14 = arith.constant 14 : index
    %c0_43 = arith.constant 0 : index
    %c0_44 = arith.constant 0 : index
    %41 = vector.load %arg11[%c14, %c0_43, %c0_44] : memref<18x18x4xf32, #tpu.memory_space<vmem>>, vector<1x18x4xf32>
    %42 = vector.shape_cast %41 : vector<1x18x4xf32> to vector<18x4xf32>
    %c7 = arith.constant 7 : index
    %c0_45 = arith.constant 0 : index
    %c0_46 = arith.constant 0 : index
    %43 = vector.load %arg12[%c7, %c0_45, %c0_46] : memref<8x18x4xf32, #tpu.memory_space<vmem>>, vector<1x18x4xf32>
    %44 = vector.shape_cast %43 : vector<1x18x4xf32> to vector<18x4xf32>
    %45 = vector.shape_cast %42 : vector<18x4xf32> to vector<1x18x4xf32>
    tpu.vector_store %arg12[%c7, %c0_45, %c0_46], %45 {strides = array<i32>} : memref<8x18x4xf32, #tpu.memory_space<vmem>>, vector<1x18x4xf32>,
    %c0_47 = arith.constant 0 : index
    %c0_48 = arith.constant 0 : index
    %c0_49 = arith.constant 0 : index
    %46 = tpu.strided_load %arg12[%c0_47, %c0_48, %c0_49] {strides = array<i32: 1, 2, 1>} : memref<8x18x4xf32, #tpu.memory_space<vmem>>, vector<8x8x4xf32>
    %47 = vector.shape_cast %46 : vector<8x8x4xf32> to vector<64x4xf32>
    %c0_50 = arith.constant 0 : index
    %c0_51 = arith.constant 0 : index
    %c0_52 = arith.constant 0 : index
    %48 = vector.load %arg2[%c0_50, %c0_51, %c0_52] : memref<16x4x4xf32, #tpu.memory_space<vmem>>, vector<1x4x4xf32>
    %49 = vector.shape_cast %48 : vector<1x4x4xf32> to vector<4x4xf32>
    %cst_53 = arith.constant dense<0.000000e+00> : vector<64x4xf32>
    %50 = tpu.matmul %47, %49, %cst_53 {dimension_numbers = #tpu.dot_dimension_numbers<[1], [0], [0], [1], [0, 0, 1, 1], [], []>} : vector<64x4xf32>, vector<4x4xf32>, vector<64x4xf32> -> vector<64x4xf32>
    %51 = arith.addf %5, %50 : vector<64x4xf32>
    %c0_54 = arith.constant 0 : index
    %c1_55 = arith.constant 1 : index
    %c0_56 = arith.constant 0 : index
    %52 = tpu.strided_load %arg12[%c0_54, %c1_55, %c0_56] {strides = array<i32: 1, 2, 1>} : memref<8x18x4xf32, #tpu.memory_space<vmem>>, vector<8x8x4xf32>
    %53 = vector.shape_cast %52 : vector<8x8x4xf32> to vector<64x4xf32>
    %c1_57 = arith.constant 1 : index
    %c0_58 = arith.constant 0 : index
    %c0_59 = arith.constant 0 : index
    %54 = vector.load %arg2[%c1_57, %c0_58, %c0_59] : memref<16x4x4xf32, #tpu.memory_space<vmem>>, vector<1x4x4xf32>
    %55 = vector.shape_cast %54 : vector<1x4x4xf32> to vector<4x4xf32>
    %cst_60 = arith.constant dense<0.000000e+00> : vector<64x4xf32>
    %56 = tpu.matmul %53, %55, %cst_60 {dimension_numbers = #tpu.dot_dimension_numbers<[1], [0], [0], [1], [0, 0, 1, 1], [], []>} : vector<64x4xf32>, vector<4x4xf32>, vector<64x4xf32> -> vector<64x4xf32>
    %57 = arith.addf %51, %56 : vector<64x4xf32>
    %c0_61 = arith.constant 0 : index
    %c2_62 = arith.constant 2 : index
    %c0_63 = arith.constant 0 : index
    %58 = tpu.strided_load %arg12[%c0_61, %c2_62, %c0_63] {strides = array<i32: 1, 2, 1>} : memref<8x18x4xf32, #tpu.memory_space<vmem>>, vector<8x8x4xf32>
    %59 = vector.shape_cast %58 : vector<8x8x4xf32> to vector<64x4xf32>
    %c2_64 = arith.constant 2 : index
    %c0_65 = arith.constant 0 : index
    %c0_66 = arith.constant 0 : index
    %60 = vector.load %arg2[%c2_64, %c0_65, %c0_66] : memref<16x4x4xf32, #tpu.memory_space<vmem>>, vector<1x4x4xf32>
    %61 = vector.shape_cast %60 : vector<1x4x4xf32> to vector<4x4xf32>
    %cst_67 = arith.constant dense<0.000000e+00> : vector<64x4xf32>
    %62 = tpu.matmul %59, %61, %cst_67 {dimension_numbers = #tpu.dot_dimension_numbers<[1], [0], [0], [1], [0, 0, 1, 1], [], []>} : vector<64x4xf32>, vector<4x4xf32>, vector<64x4xf32> -> vector<64x4xf32>
    %63 = arith.addf %57, %62 : vector<64x4xf32>
    %c0_68 = arith.constant 0 : index
    %c3_69 = arith.constant 3 : index
    %c0_70 = arith.constant 0 : index
    %64 = tpu.strided_load %arg12[%c0_68, %c3_69, %c0_70] {strides = array<i32: 1, 2, 1>} : memref<8x18x4xf32, #tpu.memory_space<vmem>>, vector<8x8x4xf32>
    %65 = vector.shape_cast %64 : vector<8x8x4xf32> to vector<64x4xf32>
    %c3_71 = arith.constant 3 : index
    %c0_72 = arith.constant 0 : index
    %c0_73 = arith.constant 0 : index
    %66 = vector.load %arg2[%c3_71, %c0_72, %c0_73] : memref<16x4x4xf32, #tpu.memory_space<vmem>>, vector<1x4x4xf32>
    %67 = vector.shape_cast %66 : vector<1x4x4xf32> to vector<4x4xf32>
    %cst_74 = arith.constant dense<0.000000e+00> : vector<64x4xf32>
    %68 = tpu.matmul %65, %67, %cst_74 {dimension_numbers = #tpu.dot_dimension_numbers<[1], [0], [0], [1], [0, 0, 1, 1], [], []>} : vector<64x4xf32>, vector<4x4xf32>, vector<64x4xf32> -> vector<64x4xf32>
    %69 = arith.addf %63, %68 : vector<64x4xf32>
    %c1_75 = arith.constant 1 : index
    %c0_76 = arith.constant 0 : index
    %c0_77 = arith.constant 0 : index
    %70 = vector.load %arg11[%c1_75, %c0_76, %c0_77] : memref<18x18x4xf32, #tpu.memory_space<vmem>>, vector<1x18x4xf32>
    %71 = vector.shape_cast %70 : vector<1x18x4xf32> to vector<18x4xf32>
    %c0_78 = arith.constant 0 : index
    %c0_79 = arith.constant 0 : index
    %c0_80 = arith.constant 0 : index
    %72 = vector.load %arg12[%c0_78, %c0_79, %c0_80] : memref<8x18x4xf32, #tpu.memory_space<vmem>>, vector<1x18x4xf32>
    %73 = vector.shape_cast %72 : vector<1x18x4xf32> to vector<18x4xf32>
    %74 = vector.shape_cast %71 : vector<18x4xf32> to vector<1x18x4xf32>
    tpu.vector_store %arg12[%c0_78, %c0_79, %c0_80], %74 {strides = array<i32>} : memref<8x18x4xf32, #tpu.memory_space<vmem>>, vector<1x18x4xf32>,
    %c3_81 = arith.constant 3 : index
    %c0_82 = arith.constant 0 : index
    %c0_83 = arith.constant 0 : index
    %75 = vector.load %arg11[%c3_81, %c0_82, %c0_83] : memref<18x18x4xf32, #tpu.memory_space<vmem>>, vector<1x18x4xf32>
    %76 = vector.shape_cast %75 : vector<1x18x4xf32> to vector<18x4xf32>
    %c1_84 = arith.constant 1 : index
    %c0_85 = arith.constant 0 : index
    %c0_86 = arith.constant 0 : index
    %77 = vector.load %arg12[%c1_84, %c0_85, %c0_86] : memref<8x18x4xf32, #tpu.memory_space<vmem>>, vector<1x18x4xf32>
    %78 = vector.shape_cast %77 : vector<1x18x4xf32> to vector<18x4xf32>
    %79 = vector.shape_cast %76 : vector<18x4xf32> to vector<1x18x4xf32>
    tpu.vector_store %arg12[%c1_84, %c0_85, %c0_86], %79 {strides = array<i32>} : memref<8x18x4xf32, #tpu.memory_space<vmem>>, vector<1x18x4xf32>,
    %c5_87 = arith.constant 5 : index
    %c0_88 = arith.constant 0 : index
    %c0_89 = arith.constant 0 : index
    %80 = vector.load %arg11[%c5_87, %c0_88, %c0_89] : memref<18x18x4xf32, #tpu.memory_space<vmem>>, vector<1x18x4xf32>
    %81 = vector.shape_cast %80 : vector<1x18x4xf32> to vector<18x4xf32>
    %c2_90 = arith.constant 2 : index
    %c0_91 = arith.constant 0 : index
    %c0_92 = arith.constant 0 : index
    %82 = vector.load %arg12[%c2_90, %c0_91, %c0_92] : memref<8x18x4xf32, #tpu.memory_space<vmem>>, vector<1x18x4xf32>
    %83 = vector.shape_cast %82 : vector<1x18x4xf32> to vector<18x4xf32>
    %84 = vector.shape_cast %81 : vector<18x4xf32> to vector<1x18x4xf32>
    tpu.vector_store %arg12[%c2_90, %c0_91, %c0_92], %84 {strides = array<i32>} : memref<8x18x4xf32, #tpu.memory_space<vmem>>, vector<1x18x4xf32>,
    %c7_93 = arith.constant 7 : index
    %c0_94 = arith.constant 0 : index
    %c0_95 = arith.constant 0 : index
    %85 = vector.load %arg11[%c7_93, %c0_94, %c0_95] : memref<18x18x4xf32, #tpu.memory_space<vmem>>, vector<1x18x4xf32>
    %86 = vector.shape_cast %85 : vector<1x18x4xf32> to vector<18x4xf32>
    %c3_96 = arith.constant 3 : index
    %c0_97 = arith.constant 0 : index
    %c0_98 = arith.constant 0 : index
    %87 = vector.load %arg12[%c3_96, %c0_97, %c0_98] : memref<8x18x4xf32, #tpu.memory_space<vmem>>, vector<1x18x4xf32>
    %88 = vector.shape_cast %87 : vector<1x18x4xf32> to vector<18x4xf32>
    %89 = vector.shape_cast %86 : vector<18x4xf32> to vector<1x18x4xf32>
    tpu.vector_store %arg12[%c3_96, %c0_97, %c0_98], %89 {strides = array<i32>} : memref<8x18x4xf32, #tpu.memory_space<vmem>>, vector<1x18x4xf32>,
    %c9 = arith.constant 9 : index
    %c0_99 = arith.constant 0 : index
    %c0_100 = arith.constant 0 : index
    %90 = vector.load %arg11[%c9, %c0_99, %c0_100] : memref<18x18x4xf32, #tpu.memory_space<vmem>>, vector<1x18x4xf32>
    %91 = vector.shape_cast %90 : vector<1x18x4xf32> to vector<18x4xf32>
    %c4_101 = arith.constant 4 : index
    %c0_102 = arith.constant 0 : index
    %c0_103 = arith.constant 0 : index
    %92 = vector.load %arg12[%c4_101, %c0_102, %c0_103] : memref<8x18x4xf32, #tpu.memory_space<vmem>>, vector<1x18x4xf32>
    %93 = vector.shape_cast %92 : vector<1x18x4xf32> to vector<18x4xf32>
    %94 = vector.shape_cast %91 : vector<18x4xf32> to vector<1x18x4xf32>
    tpu.vector_store %arg12[%c4_101, %c0_102, %c0_103], %94 {strides = array<i32>} : memref<8x18x4xf32, #tpu.memory_space<vmem>>, vector<1x18x4xf32>,
    %c11 = arith.constant 11 : index
    %c0_104 = arith.constant 0 : index
    %c0_105 = arith.constant 0 : index
    %95 = vector.load %arg11[%c11, %c0_104, %c0_105] : memref<18x18x4xf32, #tpu.memory_space<vmem>>, vector<1x18x4xf32>
    %96 = vector.shape_cast %95 : vector<1x18x4xf32> to vector<18x4xf32>
    %c5_106 = arith.constant 5 : index
    %c0_107 = arith.constant 0 : index
    %c0_108 = arith.constant 0 : index
    %97 = vector.load %arg12[%c5_106, %c0_107, %c0_108] : memref<8x18x4xf32, #tpu.memory_space<vmem>>, vector<1x18x4xf32>
    %98 = vector.shape_cast %97 : vector<1x18x4xf32> to vector<18x4xf32>
    %99 = vector.shape_cast %96 : vector<18x4xf32> to vector<1x18x4xf32>
    tpu.vector_store %arg12[%c5_106, %c0_107, %c0_108], %99 {strides = array<i32>} : memref<8x18x4xf32, #tpu.memory_space<vmem>>, vector<1x18x4xf32>,
    %c13 = arith.constant 13 : index
    %c0_109 = arith.constant 0 : index
    %c0_110 = arith.constant 0 : index
    %100 = vector.load %arg11[%c13, %c0_109, %c0_110] : memref<18x18x4xf32, #tpu.memory_space<vmem>>, vector<1x18x4xf32>
    %101 = vector.shape_cast %100 : vector<1x18x4xf32> to vector<18x4xf32>
    %c6_111 = arith.constant 6 : index
    %c0_112 = arith.constant 0 : index
    %c0_113 = arith.constant 0 : index
    %102 = vector.load %arg12[%c6_111, %c0_112, %c0_113] : memref<8x18x4xf32, #tpu.memory_space<vmem>>, vector<1x18x4xf32>
    %103 = vector.shape_cast %102 : vector<1x18x4xf32> to vector<18x4xf32>
    %104 = vector.shape_cast %101 : vector<18x4xf32> to vector<1x18x4xf32>
    tpu.vector_store %arg12[%c6_111, %c0_112, %c0_113], %104 {strides = array<i32>} : memref<8x18x4xf32, #tpu.memory_space<vmem>>, vector<1x18x4xf32>,
    %c15 = arith.constant 15 : index
    %c0_114 = arith.constant 0 : index
    %c0_115 = arith.constant 0 : index
    %105 = vector.load %arg11[%c15, %c0_114, %c0_115] : memref<18x18x4xf32, #tpu.memory_space<vmem>>, vector<1x18x4xf32>
    %106 = vector.shape_cast %105 : vector<1x18x4xf32> to vector<18x4xf32>
    %c7_116 = arith.constant 7 : index
    %c0_117 = arith.constant 0 : index
    %c0_118 = arith.constant 0 : index
    %107 = vector.load %arg12[%c7_116, %c0_117, %c0_118] : memref<8x18x4xf32, #tpu.memory_space<vmem>>, vector<1x18x4xf32>
    %108 = vector.shape_cast %107 : vector<1x18x4xf32> to vector<18x4xf32>
    %109 = vector.shape_cast %106 : vector<18x4xf32> to vector<1x18x4xf32>
    tpu.vector_store %arg12[%c7_116, %c0_117, %c0_118], %109 {strides = array<i32>} : memref<8x18x4xf32, #tpu.memory_space<vmem>>, vector<1x18x4xf32>,
    %c0_119 = arith.constant 0 : index
    %c0_120 = arith.constant 0 : index
    %c0_121 = arith.constant 0 : index
    %110 = tpu.strided_load %arg12[%c0_119, %c0_120, %c0_121] {strides = array<i32: 1, 2, 1>} : memref<8x18x4xf32, #tpu.memory_space<vmem>>, vector<8x8x4xf32>
    %111 = vector.shape_cast %110 : vector<8x8x4xf32> to vector<64x4xf32>
    %c4_122 = arith.constant 4 : index
    %c0_123 = arith.constant 0 : index
    %c0_124 = arith.constant 0 : index
    %112 = vector.load %arg2[%c4_122, %c0_123, %c0_124] : memref<16x4x4xf32, #tpu.memory_space<vmem>>, vector<1x4x4xf32>
    %113 = vector.shape_cast %112 : vector<1x4x4xf32> to vector<4x4xf32>
    %cst_125 = arith.constant dense<0.000000e+00> : vector<64x4xf32>
    %114 = tpu.matmul %111, %113, %cst_125 {dimension_numbers = #tpu.dot_dimension_numbers<[1], [0], [0], [1], [0, 0, 1, 1], [], []>} : vector<64x4xf32>, vector<4x4xf32>, vector<64x4xf32> -> vector<64x4xf32>
    %115 = arith.addf %69, %114 : vector<64x4xf32>
    %c0_126 = arith.constant 0 : index
    %c1_127 = arith.constant 1 : index
    %c0_128 = arith.constant 0 : index
    %116 = tpu.strided_load %arg12[%c0_126, %c1_127, %c0_128] {strides = array<i32: 1, 2, 1>} : memref<8x18x4xf32, #tpu.memory_space<vmem>>, vector<8x8x4xf32>
    %117 = vector.shape_cast %116 : vector<8x8x4xf32> to vector<64x4xf32>
    %c5_129 = arith.constant 5 : index
    %c0_130 = arith.constant 0 : index
    %c0_131 = arith.constant 0 : index
    %118 = vector.load %arg2[%c5_129, %c0_130, %c0_131] : memref<16x4x4xf32, #tpu.memory_space<vmem>>, vector<1x4x4xf32>
    %119 = vector.shape_cast %118 : vector<1x4x4xf32> to vector<4x4xf32>
    %cst_132 = arith.constant dense<0.000000e+00> : vector<64x4xf32>
    %120 = tpu.matmul %117, %119, %cst_132 {dimension_numbers = #tpu.dot_dimension_numbers<[1], [0], [0], [1], [0, 0, 1, 1], [], []>} : vector<64x4xf32>, vector<4x4xf32>, vector<64x4xf32> -> vector<64x4xf32>
    %121 = arith.addf %115, %120 : vector<64x4xf32>
    %c0_133 = arith.constant 0 : index
    %c2_134 = arith.constant 2 : index
    %c0_135 = arith.constant 0 : index
    %122 = tpu.strided_load %arg12[%c0_133, %c2_134, %c0_135] {strides = array<i32: 1, 2, 1>} : memref<8x18x4xf32, #tpu.memory_space<vmem>>, vector<8x8x4xf32>
    %123 = vector.shape_cast %122 : vector<8x8x4xf32> to vector<64x4xf32>
    %c6_136 = arith.constant 6 : index
    %c0_137 = arith.constant 0 : index
    %c0_138 = arith.constant 0 : index
    %124 = vector.load %arg2[%c6_136, %c0_137, %c0_138] : memref<16x4x4xf32, #tpu.memory_space<vmem>>, vector<1x4x4xf32>
    %125 = vector.shape_cast %124 : vector<1x4x4xf32> to vector<4x4xf32>
    %cst_139 = arith.constant dense<0.000000e+00> : vector<64x4xf32>
    %126 = tpu.matmul %123, %125, %cst_139 {dimension_numbers = #tpu.dot_dimension_numbers<[1], [0], [0], [1], [0, 0, 1, 1], [], []>} : vector<64x4xf32>, vector<4x4xf32>, vector<64x4xf32> -> vector<64x4xf32>
    %127 = arith.addf %121, %126 : vector<64x4xf32>
    %c0_140 = arith.constant 0 : index
    %c3_141 = arith.constant 3 : index
    %c0_142 = arith.constant 0 : index
    %128 = tpu.strided_load %arg12[%c0_140, %c3_141, %c0_142] {strides = array<i32: 1, 2, 1>} : memref<8x18x4xf32, #tpu.memory_space<vmem>>, vector<8x8x4xf32>
    %129 = vector.shape_cast %128 : vector<8x8x4xf32> to vector<64x4xf32>
    %c7_143 = arith.constant 7 : index
    %c0_144 = arith.constant 0 : index
    %c0_145 = arith.constant 0 : index
    %130 = vector.load %arg2[%c7_143, %c0_144, %c0_145] : memref<16x4x4xf32, #tpu.memory_space<vmem>>, vector<1x4x4xf32>
    %131 = vector.shape_cast %130 : vector<1x4x4xf32> to vector<4x4xf32>
    %cst_146 = arith.constant dense<0.000000e+00> : vector<64x4xf32>
    %132 = tpu.matmul %129, %131, %cst_146 {dimension_numbers = #tpu.dot_dimension_numbers<[1], [0], [0], [1], [0, 0, 1, 1], [], []>} : vector<64x4xf32>, vector<4x4xf32>, vector<64x4xf32> -> vector<64x4xf32>
    %133 = arith.addf %127, %132 : vector<64x4xf32>
    %c2_147 = arith.constant 2 : index
    %c0_148 = arith.constant 0 : index
    %c0_149 = arith.constant 0 : index
    %134 = vector.load %arg11[%c2_147, %c0_148, %c0_149] : memref<18x18x4xf32, #tpu.memory_space<vmem>>, vector<1x18x4xf32>
    %135 = vector.shape_cast %134 : vector<1x18x4xf32> to vector<18x4xf32>
    %c0_150 = arith.constant 0 : index
    %c0_151 = arith.constant 0 : index
    %c0_152 = arith.constant 0 : index
    %136 = vector.load %arg12[%c0_150, %c0_151, %c0_152] : memref<8x18x4xf32, #tpu.memory_space<vmem>>, vector<1x18x4xf32>
    %137 = vector.shape_cast %136 : vector<1x18x4xf32> to vector<18x4xf32>
    %138 = vector.shape_cast %135 : vector<18x4xf32> to vector<1x18x4xf32>
    tpu.vector_store %arg12[%c0_150, %c0_151, %c0_152], %138 {strides = array<i32>} : memref<8x18x4xf32, #tpu.memory_space<vmem>>, vector<1x18x4xf32>,
    %c4_153 = arith.constant 4 : index
    %c0_154 = arith.constant 0 : index
    %c0_155 = arith.constant 0 : index
    %139 = vector.load %arg11[%c4_153, %c0_154, %c0_155] : memref<18x18x4xf32, #tpu.memory_space<vmem>>, vector<1x18x4xf32>
    %140 = vector.shape_cast %139 : vector<1x18x4xf32> to vector<18x4xf32>
    %c1_156 = arith.constant 1 : index
    %c0_157 = arith.constant 0 : index
    %c0_158 = arith.constant 0 : index
    %141 = vector.load %arg12[%c1_156, %c0_157, %c0_158] : memref<8x18x4xf32, #tpu.memory_space<vmem>>, vector<1x18x4xf32>
    %142 = vector.shape_cast %141 : vector<1x18x4xf32> to vector<18x4xf32>
    %143 = vector.shape_cast %140 : vector<18x4xf32> to vector<1x18x4xf32>
    tpu.vector_store %arg12[%c1_156, %c0_157, %c0_158], %143 {strides = array<i32>} : memref<8x18x4xf32, #tpu.memory_space<vmem>>, vector<1x18x4xf32>,
    %c6_159 = arith.constant 6 : index
    %c0_160 = arith.constant 0 : index
    %c0_161 = arith.constant 0 : index
    %144 = vector.load %arg11[%c6_159, %c0_160, %c0_161] : memref<18x18x4xf32, #tpu.memory_space<vmem>>, vector<1x18x4xf32>
    %145 = vector.shape_cast %144 : vector<1x18x4xf32> to vector<18x4xf32>
    %c2_162 = arith.constant 2 : index
    %c0_163 = arith.constant 0 : index
    %c0_164 = arith.constant 0 : index
    %146 = vector.load %arg12[%c2_162, %c0_163, %c0_164] : memref<8x18x4xf32, #tpu.memory_space<vmem>>, vector<1x18x4xf32>
    %147 = vector.shape_cast %146 : vector<1x18x4xf32> to vector<18x4xf32>
    %148 = vector.shape_cast %145 : vector<18x4xf32> to vector<1x18x4xf32>
    tpu.vector_store %arg12[%c2_162, %c0_163, %c0_164], %148 {strides = array<i32>} : memref<8x18x4xf32, #tpu.memory_space<vmem>>, vector<1x18x4xf32>,
    %c8_165 = arith.constant 8 : index
    %c0_166 = arith.constant 0 : index
    %c0_167 = arith.constant 0 : index
    %149 = vector.load %arg11[%c8_165, %c0_166, %c0_167] : memref<18x18x4xf32, #tpu.memory_space<vmem>>, vector<1x18x4xf32>
    %150 = vector.shape_cast %149 : vector<1x18x4xf32> to vector<18x4xf32>
    %c3_168 = arith.constant 3 : index
    %c0_169 = arith.constant 0 : index
    %c0_170 = arith.constant 0 : index
    %151 = vector.load %arg12[%c3_168, %c0_169, %c0_170] : memref<8x18x4xf32, #tpu.memory_space<vmem>>, vector<1x18x4xf32>
    %152 = vector.shape_cast %151 : vector<1x18x4xf32> to vector<18x4xf32>
    %153 = vector.shape_cast %150 : vector<18x4xf32> to vector<1x18x4xf32>
    tpu.vector_store %arg12[%c3_168, %c0_169, %c0_170], %153 {strides = array<i32>} : memref<8x18x4xf32, #tpu.memory_space<vmem>>, vector<1x18x4xf32>,
    %c10_171 = arith.constant 10 : index
    %c0_172 = arith.constant 0 : index
    %c0_173 = arith.constant 0 : index
    %154 = vector.load %arg11[%c10_171, %c0_172, %c0_173] : memref<18x18x4xf32, #tpu.memory_space<vmem>>, vector<1x18x4xf32>
    %155 = vector.shape_cast %154 : vector<1x18x4xf32> to vector<18x4xf32>
    %c4_174 = arith.constant 4 : index
    %c0_175 = arith.constant 0 : index
    %c0_176 = arith.constant 0 : index
    %156 = vector.load %arg12[%c4_174, %c0_175, %c0_176] : memref<8x18x4xf32, #tpu.memory_space<vmem>>, vector<1x18x4xf32>
    %157 = vector.shape_cast %156 : vector<1x18x4xf32> to vector<18x4xf32>
    %158 = vector.shape_cast %155 : vector<18x4xf32> to vector<1x18x4xf32>
    tpu.vector_store %arg12[%c4_174, %c0_175, %c0_176], %158 {strides = array<i32>} : memref<8x18x4xf32, #tpu.memory_space<vmem>>, vector<1x18x4xf32>,
    %c12_177 = arith.constant 12 : index
    %c0_178 = arith.constant 0 : index
    %c0_179 = arith.constant 0 : index
    %159 = vector.load %arg11[%c12_177, %c0_178, %c0_179] : memref<18x18x4xf32, #tpu.memory_space<vmem>>, vector<1x18x4xf32>
    %160 = vector.shape_cast %159 : vector<1x18x4xf32> to vector<18x4xf32>
    %c5_180 = arith.constant 5 : index
    %c0_181 = arith.constant 0 : index
    %c0_182 = arith.constant 0 : index
    %161 = vector.load %arg12[%c5_180, %c0_181, %c0_182] : memref<8x18x4xf32, #tpu.memory_space<vmem>>, vector<1x18x4xf32>
    %162 = vector.shape_cast %161 : vector<1x18x4xf32> to vector<18x4xf32>
    %163 = vector.shape_cast %160 : vector<18x4xf32> to vector<1x18x4xf32>
    tpu.vector_store %arg12[%c5_180, %c0_181, %c0_182], %163 {strides = array<i32>} : memref<8x18x4xf32, #tpu.memory_space<vmem>>, vector<1x18x4xf32>,
    %c14_183 = arith.constant 14 : index
    %c0_184 = arith.constant 0 : index
    %c0_185 = arith.constant 0 : index
    %164 = vector.load %arg11[%c14_183, %c0_184, %c0_185] : memref<18x18x4xf32, #tpu.memory_space<vmem>>, vector<1x18x4xf32>
    %165 = vector.shape_cast %164 : vector<1x18x4xf32> to vector<18x4xf32>
    %c6_186 = arith.constant 6 : index
    %c0_187 = arith.constant 0 : index
    %c0_188 = arith.constant 0 : index
    %166 = vector.load %arg12[%c6_186, %c0_187, %c0_188] : memref<8x18x4xf32, #tpu.memory_space<vmem>>, vector<1x18x4xf32>
    %167 = vector.shape_cast %166 : vector<1x18x4xf32> to vector<18x4xf32>
    %168 = vector.shape_cast %165 : vector<18x4xf32> to vector<1x18x4xf32>
    tpu.vector_store %arg12[%c6_186, %c0_187, %c0_188], %168 {strides = array<i32>} : memref<8x18x4xf32, #tpu.memory_space<vmem>>, vector<1x18x4xf32>,
    %c16 = arith.constant 16 : index
    %c0_189 = arith.constant 0 : index
    %c0_190 = arith.constant 0 : index
    %169 = vector.load %arg11[%c16, %c0_189, %c0_190] : memref<18x18x4xf32, #tpu.memory_space<vmem>>, vector<1x18x4xf32>
    %170 = vector.shape_cast %169 : vector<1x18x4xf32> to vector<18x4xf32>
    %c7_191 = arith.constant 7 : index
    %c0_192 = arith.constant 0 : index
    %c0_193 = arith.constant 0 : index
    %171 = vector.load %arg12[%c7_191, %c0_192, %c0_193] : memref<8x18x4xf32, #tpu.memory_space<vmem>>, vector<1x18x4xf32>
    %172 = vector.shape_cast %171 : vector<1x18x4xf32> to vector<18x4xf32>
    %173 = vector.shape_cast %170 : vector<18x4xf32> to vector<1x18x4xf32>
    tpu.vector_store %arg12[%c7_191, %c0_192, %c0_193], %173 {strides = array<i32>} : memref<8x18x4xf32, #tpu.memory_space<vmem>>, vector<1x18x4xf32>,
    %c0_194 = arith.constant 0 : index
    %c0_195 = arith.constant 0 : index
    %c0_196 = arith.constant 0 : index
    %174 = tpu.strided_load %arg12[%c0_194, %c0_195, %c0_196] {strides = array<i32: 1, 2, 1>} : memref<8x18x4xf32, #tpu.memory_space<vmem>>, vector<8x8x4xf32>
    %175 = vector.shape_cast %174 : vector<8x8x4xf32> to vector<64x4xf32>
    %c8_197 = arith.constant 8 : index
    %c0_198 = arith.constant 0 : index
    %c0_199 = arith.constant 0 : index
    %176 = vector.load %arg2[%c8_197, %c0_198, %c0_199] : memref<16x4x4xf32, #tpu.memory_space<vmem>>, vector<1x4x4xf32>
    %177 = vector.shape_cast %176 : vector<1x4x4xf32> to vector<4x4xf32>
    %cst_200 = arith.constant dense<0.000000e+00> : vector<64x4xf32>
    %178 = tpu.matmul %175, %177, %cst_200 {dimension_numbers = #tpu.dot_dimension_numbers<[1], [0], [0], [1], [0, 0, 1, 1], [], []>} : vector<64x4xf32>, vector<4x4xf32>, vector<64x4xf32> -> vector<64x4xf32>
    %179 = arith.addf %133, %178 : vector<64x4xf32>
    %c0_201 = arith.constant 0 : index
    %c1_202 = arith.constant 1 : index
    %c0_203 = arith.constant 0 : index
    %180 = tpu.strided_load %arg12[%c0_201, %c1_202, %c0_203] {strides = array<i32: 1, 2, 1>} : memref<8x18x4xf32, #tpu.memory_space<vmem>>, vector<8x8x4xf32>
    %181 = vector.shape_cast %180 : vector<8x8x4xf32> to vector<64x4xf32>
    %c9_204 = arith.constant 9 : index
    %c0_205 = arith.constant 0 : index
    %c0_206 = arith.constant 0 : index
    %182 = vector.load %arg2[%c9_204, %c0_205, %c0_206] : memref<16x4x4xf32, #tpu.memory_space<vmem>>, vector<1x4x4xf32>
    %183 = vector.shape_cast %182 : vector<1x4x4xf32> to vector<4x4xf32>
    %cst_207 = arith.constant dense<0.000000e+00> : vector<64x4xf32>
    %184 = tpu.matmul %181, %183, %cst_207 {dimension_numbers = #tpu.dot_dimension_numbers<[1], [0], [0], [1], [0, 0, 1, 1], [], []>} : vector<64x4xf32>, vector<4x4xf32>, vector<64x4xf32> -> vector<64x4xf32>
    %185 = arith.addf %179, %184 : vector<64x4xf32>
    %c0_208 = arith.constant 0 : index
    %c2_209 = arith.constant 2 : index
    %c0_210 = arith.constant 0 : index
    %186 = tpu.strided_load %arg12[%c0_208, %c2_209, %c0_210] {strides = array<i32: 1, 2, 1>} : memref<8x18x4xf32, #tpu.memory_space<vmem>>, vector<8x8x4xf32>
    %187 = vector.shape_cast %186 : vector<8x8x4xf32> to vector<64x4xf32>
    %c10_211 = arith.constant 10 : index
    %c0_212 = arith.constant 0 : index
    %c0_213 = arith.constant 0 : index
    %188 = vector.load %arg2[%c10_211, %c0_212, %c0_213] : memref<16x4x4xf32, #tpu.memory_space<vmem>>, vector<1x4x4xf32>
    %189 = vector.shape_cast %188 : vector<1x4x4xf32> to vector<4x4xf32>
    %cst_214 = arith.constant dense<0.000000e+00> : vector<64x4xf32>
    %190 = tpu.matmul %187, %189, %cst_214 {dimension_numbers = #tpu.dot_dimension_numbers<[1], [0], [0], [1], [0, 0, 1, 1], [], []>} : vector<64x4xf32>, vector<4x4xf32>, vector<64x4xf32> -> vector<64x4xf32>
    %191 = arith.addf %185, %190 : vector<64x4xf32>
    %c0_215 = arith.constant 0 : index
    %c3_216 = arith.constant 3 : index
    %c0_217 = arith.constant 0 : index
    %192 = tpu.strided_load %arg12[%c0_215, %c3_216, %c0_217] {strides = array<i32: 1, 2, 1>} : memref<8x18x4xf32, #tpu.memory_space<vmem>>, vector<8x8x4xf32>
    %193 = vector.shape_cast %192 : vector<8x8x4xf32> to vector<64x4xf32>
    %c11_218 = arith.constant 11 : index
    %c0_219 = arith.constant 0 : index
    %c0_220 = arith.constant 0 : index
    %194 = vector.load %arg2[%c11_218, %c0_219, %c0_220] : memref<16x4x4xf32, #tpu.memory_space<vmem>>, vector<1x4x4xf32>
    %195 = vector.shape_cast %194 : vector<1x4x4xf32> to vector<4x4xf32>
    %cst_221 = arith.constant dense<0.000000e+00> : vector<64x4xf32>
    %196 = tpu.matmul %193, %195, %cst_221 {dimension_numbers = #tpu.dot_dimension_numbers<[1], [0], [0], [1], [0, 0, 1, 1], [], []>} : vector<64x4xf32>, vector<4x4xf32>, vector<64x4xf32> -> vector<64x4xf32>
    %197 = arith.addf %191, %196 : vector<64x4xf32>
    %c3_222 = arith.constant 3 : index
    %c0_223 = arith.constant 0 : index
    %c0_224 = arith.constant 0 : index
    %198 = vector.load %arg11[%c3_222, %c0_223, %c0_224] : memref<18x18x4xf32, #tpu.memory_space<vmem>>, vector<1x18x4xf32>
    %199 = vector.shape_cast %198 : vector<1x18x4xf32> to vector<18x4xf32>
    %c0_225 = arith.constant 0 : index
    %c0_226 = arith.constant 0 : index
    %c0_227 = arith.constant 0 : index
    %200 = vector.load %arg12[%c0_225, %c0_226, %c0_227] : memref<8x18x4xf32, #tpu.memory_space<vmem>>, vector<1x18x4xf32>
    %201 = vector.shape_cast %200 : vector<1x18x4xf32> to vector<18x4xf32>
    %202 = vector.shape_cast %199 : vector<18x4xf32> to vector<1x18x4xf32>
    tpu.vector_store %arg12[%c0_225, %c0_226, %c0_227], %202 {strides = array<i32>} : memref<8x18x4xf32, #tpu.memory_space<vmem>>, vector<1x18x4xf32>,
    %c5_228 = arith.constant 5 : index
    %c0_229 = arith.constant 0 : index
    %c0_230 = arith.constant 0 : index
    %203 = vector.load %arg11[%c5_228, %c0_229, %c0_230] : memref<18x18x4xf32, #tpu.memory_space<vmem>>, vector<1x18x4xf32>
    %204 = vector.shape_cast %203 : vector<1x18x4xf32> to vector<18x4xf32>
    %c1_231 = arith.constant 1 : index
    %c0_232 = arith.constant 0 : index
    %c0_233 = arith.constant 0 : index
    %205 = vector.load %arg12[%c1_231, %c0_232, %c0_233] : memref<8x18x4xf32, #tpu.memory_space<vmem>>, vector<1x18x4xf32>
    %206 = vector.shape_cast %205 : vector<1x18x4xf32> to vector<18x4xf32>
    %207 = vector.shape_cast %204 : vector<18x4xf32> to vector<1x18x4xf32>
    tpu.vector_store %arg12[%c1_231, %c0_232, %c0_233], %207 {strides = array<i32>} : memref<8x18x4xf32, #tpu.memory_space<vmem>>, vector<1x18x4xf32>,
    %c7_234 = arith.constant 7 : index
    %c0_235 = arith.constant 0 : index
    %c0_236 = arith.constant 0 : index
    %208 = vector.load %arg11[%c7_234, %c0_235, %c0_236] : memref<18x18x4xf32, #tpu.memory_space<vmem>>, vector<1x18x4xf32>
    %209 = vector.shape_cast %208 : vector<1x18x4xf32> to vector<18x4xf32>
    %c2_237 = arith.constant 2 : index
    %c0_238 = arith.constant 0 : index
    %c0_239 = arith.constant 0 : index
    %210 = vector.load %arg12[%c2_237, %c0_238, %c0_239] : memref<8x18x4xf32, #tpu.memory_space<vmem>>, vector<1x18x4xf32>
    %211 = vector.shape_cast %210 : vector<1x18x4xf32> to vector<18x4xf32>
    %212 = vector.shape_cast %209 : vector<18x4xf32> to vector<1x18x4xf32>
    tpu.vector_store %arg12[%c2_237, %c0_238, %c0_239], %212 {strides = array<i32>} : memref<8x18x4xf32, #tpu.memory_space<vmem>>, vector<1x18x4xf32>,
    %c9_240 = arith.constant 9 : index
    %c0_241 = arith.constant 0 : index
    %c0_242 = arith.constant 0 : index
    %213 = vector.load %arg11[%c9_240, %c0_241, %c0_242] : memref<18x18x4xf32, #tpu.memory_space<vmem>>, vector<1x18x4xf32>
    %214 = vector.shape_cast %213 : vector<1x18x4xf32> to vector<18x4xf32>
    %c3_243 = arith.constant 3 : index
    %c0_244 = arith.constant 0 : index
    %c0_245 = arith.constant 0 : index
    %215 = vector.load %arg12[%c3_243, %c0_244, %c0_245] : memref<8x18x4xf32, #tpu.memory_space<vmem>>, vector<1x18x4xf32>
    %216 = vector.shape_cast %215 : vector<1x18x4xf32> to vector<18x4xf32>
    %217 = vector.shape_cast %214 : vector<18x4xf32> to vector<1x18x4xf32>
    tpu.vector_store %arg12[%c3_243, %c0_244, %c0_245], %217 {strides = array<i32>} : memref<8x18x4xf32, #tpu.memory_space<vmem>>, vector<1x18x4xf32>,
    %c11_246 = arith.constant 11 : index
    %c0_247 = arith.constant 0 : index
    %c0_248 = arith.constant 0 : index
    %218 = vector.load %arg11[%c11_246, %c0_247, %c0_248] : memref<18x18x4xf32, #tpu.memory_space<vmem>>, vector<1x18x4xf32>
    %219 = vector.shape_cast %218 : vector<1x18x4xf32> to vector<18x4xf32>
    %c4_249 = arith.constant 4 : index
    %c0_250 = arith.constant 0 : index
    %c0_251 = arith.constant 0 : index
    %220 = vector.load %arg12[%c4_249, %c0_250, %c0_251] : memref<8x18x4xf32, #tpu.memory_space<vmem>>, vector<1x18x4xf32>
    %221 = vector.shape_cast %220 : vector<1x18x4xf32> to vector<18x4xf32>
    %222 = vector.shape_cast %219 : vector<18x4xf32> to vector<1x18x4xf32>
    tpu.vector_store %arg12[%c4_249, %c0_250, %c0_251], %222 {strides = array<i32>} : memref<8x18x4xf32, #tpu.memory_space<vmem>>, vector<1x18x4xf32>,
    %c13_252 = arith.constant 13 : index
    %c0_253 = arith.constant 0 : index
    %c0_254 = arith.constant 0 : index
    %223 = vector.load %arg11[%c13_252, %c0_253, %c0_254] : memref<18x18x4xf32, #tpu.memory_space<vmem>>, vector<1x18x4xf32>
    %224 = vector.shape_cast %223 : vector<1x18x4xf32> to vector<18x4xf32>
    %c5_255 = arith.constant 5 : index
    %c0_256 = arith.constant 0 : index
    %c0_257 = arith.constant 0 : index
    %225 = vector.load %arg12[%c5_255, %c0_256, %c0_257] : memref<8x18x4xf32, #tpu.memory_space<vmem>>, vector<1x18x4xf32>
    %226 = vector.shape_cast %225 : vector<1x18x4xf32> to vector<18x4xf32>
    %227 = vector.shape_cast %224 : vector<18x4xf32> to vector<1x18x4xf32>
    tpu.vector_store %arg12[%c5_255, %c0_256, %c0_257], %227 {strides = array<i32>} : memref<8x18x4xf32, #tpu.memory_space<vmem>>, vector<1x18x4xf32>,
    %c15_258 = arith.constant 15 : index
    %c0_259 = arith.constant 0 : index
    %c0_260 = arith.constant 0 : index
    %228 = vector.load %arg11[%c15_258, %c0_259, %c0_260] : memref<18x18x4xf32, #tpu.memory_space<vmem>>, vector<1x18x4xf32>
    %229 = vector.shape_cast %228 : vector<1x18x4xf32> to vector<18x4xf32>
    %c6_261 = arith.constant 6 : index
    %c0_262 = arith.constant 0 : index
    %c0_263 = arith.constant 0 : index
    %230 = vector.load %arg12[%c6_261, %c0_262, %c0_263] : memref<8x18x4xf32, #tpu.memory_space<vmem>>, vector<1x18x4xf32>
    %231 = vector.shape_cast %230 : vector<1x18x4xf32> to vector<18x4xf32>
    %232 = vector.shape_cast %229 : vector<18x4xf32> to vector<1x18x4xf32>
    tpu.vector_store %arg12[%c6_261, %c0_262, %c0_263], %232 {strides = array<i32>} : memref<8x18x4xf32, #tpu.memory_space<vmem>>, vector<1x18x4xf32>,
    %c17 = arith.constant 17 : index
    %c0_264 = arith.constant 0 : index
    %c0_265 = arith.constant 0 : index
    %233 = vector.load %arg11[%c17, %c0_264, %c0_265] : memref<18x18x4xf32, #tpu.memory_space<vmem>>, vector<1x18x4xf32>
    %234 = vector.shape_cast %233 : vector<1x18x4xf32> to vector<18x4xf32>
    %c7_266 = arith.constant 7 : index
    %c0_267 = arith.constant 0 : index
    %c0_268 = arith.constant 0 : index
    %235 = vector.load %arg12[%c7_266, %c0_267, %c0_268] : memref<8x18x4xf32, #tpu.memory_space<vmem>>, vector<1x18x4xf32>
    %236 = vector.shape_cast %235 : vector<1x18x4xf32> to vector<18x4xf32>
    %237 = vector.shape_cast %234 : vector<18x4xf32> to vector<1x18x4xf32>
    tpu.vector_store %arg12[%c7_266, %c0_267, %c0_268], %237 {strides = array<i32>} : memref<8x18x4xf32, #tpu.memory_space<vmem>>, vector<1x18x4xf32>,
    %c0_269 = arith.constant 0 : index
    %c0_270 = arith.constant 0 : index
    %c0_271 = arith.constant 0 : index
    %238 = tpu.strided_load %arg12[%c0_269, %c0_270, %c0_271] {strides = array<i32: 1, 2, 1>} : memref<8x18x4xf32, #tpu.memory_space<vmem>>, vector<8x8x4xf32>
    %239 = vector.shape_cast %238 : vector<8x8x4xf32> to vector<64x4xf32>
    %c12_272 = arith.constant 12 : index
    %c0_273 = arith.constant 0 : index
    %c0_274 = arith.constant 0 : index
    %240 = vector.load %arg2[%c12_272, %c0_273, %c0_274] : memref<16x4x4xf32, #tpu.memory_space<vmem>>, vector<1x4x4xf32>
    %241 = vector.shape_cast %240 : vector<1x4x4xf32> to vector<4x4xf32>
    %cst_275 = arith.constant dense<0.000000e+00> : vector<64x4xf32>
    %242 = tpu.matmul %239, %241, %cst_275 {dimension_numbers = #tpu.dot_dimension_numbers<[1], [0], [0], [1], [0, 0, 1, 1], [], []>} : vector<64x4xf32>, vector<4x4xf32>, vector<64x4xf32> -> vector<64x4xf32>
    %243 = arith.addf %197, %242 : vector<64x4xf32>
    %c0_276 = arith.constant 0 : index
    %c1_277 = arith.constant 1 : index
    %c0_278 = arith.constant 0 : index
    %244 = tpu.strided_load %arg12[%c0_276, %c1_277, %c0_278] {strides = array<i32: 1, 2, 1>} : memref<8x18x4xf32, #tpu.memory_space<vmem>>, vector<8x8x4xf32>
    %245 = vector.shape_cast %244 : vector<8x8x4xf32> to vector<64x4xf32>
    %c13_279 = arith.constant 13 : index
    %c0_280 = arith.constant 0 : index
    %c0_281 = arith.constant 0 : index
    %246 = vector.load %arg2[%c13_279, %c0_280, %c0_281] : memref<16x4x4xf32, #tpu.memory_space<vmem>>, vector<1x4x4xf32>
    %247 = vector.shape_cast %246 : vector<1x4x4xf32> to vector<4x4xf32>
    %cst_282 = arith.constant dense<0.000000e+00> : vector<64x4xf32>
    %248 = tpu.matmul %245, %247, %cst_282 {dimension_numbers = #tpu.dot_dimension_numbers<[1], [0], [0], [1], [0, 0, 1, 1], [], []>} : vector<64x4xf32>, vector<4x4xf32>, vector<64x4xf32> -> vector<64x4xf32>
    %249 = arith.addf %243, %248 : vector<64x4xf32>
    %c0_283 = arith.constant 0 : index
    %c2_284 = arith.constant 2 : index
    %c0_285 = arith.constant 0 : index
    %250 = tpu.strided_load %arg12[%c0_283, %c2_284, %c0_285] {strides = array<i32: 1, 2, 1>} : memref<8x18x4xf32, #tpu.memory_space<vmem>>, vector<8x8x4xf32>
    %251 = vector.shape_cast %250 : vector<8x8x4xf32> to vector<64x4xf32>
    %c14_286 = arith.constant 14 : index
    %c0_287 = arith.constant 0 : index
    %c0_288 = arith.constant 0 : index
    %252 = vector.load %arg2[%c14_286, %c0_287, %c0_288] : memref<16x4x4xf32, #tpu.memory_space<vmem>>, vector<1x4x4xf32>
    %253 = vector.shape_cast %252 : vector<1x4x4xf32> to vector<4x4xf32>
    %cst_289 = arith.constant dense<0.000000e+00> : vector<64x4xf32>
    %254 = tpu.matmul %251, %253, %cst_289 {dimension_numbers = #tpu.dot_dimension_numbers<[1], [0], [0], [1], [0, 0, 1, 1], [], []>} : vector<64x4xf32>, vector<4x4xf32>, vector<64x4xf32> -> vector<64x4xf32>
    %255 = arith.addf %249, %254 : vector<64x4xf32>
    %c0_290 = arith.constant 0 : index
    %c3_291 = arith.constant 3 : index
    %c0_292 = arith.constant 0 : index
    %256 = tpu.strided_load %arg12[%c0_290, %c3_291, %c0_292] {strides = array<i32: 1, 2, 1>} : memref<8x18x4xf32, #tpu.memory_space<vmem>>, vector<8x8x4xf32>
    %257 = vector.shape_cast %256 : vector<8x8x4xf32> to vector<64x4xf32>
    %c15_293 = arith.constant 15 : index
    %c0_294 = arith.constant 0 : index
    %c0_295 = arith.constant 0 : index
    %258 = vector.load %arg2[%c15_293, %c0_294, %c0_295] : memref<16x4x4xf32, #tpu.memory_space<vmem>>, vector<1x4x4xf32>
    %259 = vector.shape_cast %258 : vector<1x4x4xf32> to vector<4x4xf32>
    %cst_296 = arith.constant dense<0.000000e+00> : vector<64x4xf32>
    %260 = tpu.matmul %257, %259, %cst_296 {dimension_numbers = #tpu.dot_dimension_numbers<[1], [0], [0], [1], [0, 0, 1, 1], [], []>} : vector<64x4xf32>, vector<4x4xf32>, vector<64x4xf32> -> vector<64x4xf32>
    %261 = arith.addf %255, %260 : vector<64x4xf32>
    %c0_297 = arith.constant 0 : index
    %c0_298 = arith.constant 0 : index
    %262 = vector.load %arg3[%c0_297, %c0_298] : memref<1x4xf32, #tpu.memory_space<vmem>>, vector<1x4xf32>
    %263 = vector.broadcast %262 : vector<1x4xf32> to vector<64x4xf32>
    %264 = arith.addf %261, %263 : vector<64x4xf32>
    %cst_299 = arith.constant 0.000000e+00 : f32
    %265 = vector.broadcast %cst_299 : f32 to vector<64x4xf32>
    %266 = arith.maximumf %264, %265 : vector<64x4xf32>
    %267 = vector.shape_cast %266 : vector<64x4xf32> to vector<8x8x4xf32>
    %cst_300 = arith.constant 0.000000e+00 : f32
    %268 = vector.broadcast %cst_300 : f32 to vector<10x10x4xf32>
    %c0_301 = arith.constant 0 : index
    %c0_302 = arith.constant 0 : index
    %c0_303 = arith.constant 0 : index
    %269 = vector.load %arg13[%c0_301, %c0_302, %c0_303] : memref<10x10x4xf32, #tpu.memory_space<vmem>>, vector<10x10x4xf32>
    tpu.vector_store %arg13[%c0_301, %c0_302, %c0_303], %268 {strides = array<i32>} : memref<10x10x4xf32, #tpu.memory_space<vmem>>, vector<10x10x4xf32>,
    %c1_304 = arith.constant 1 : index
    %c1_305 = arith.constant 1 : index
    %c0_306 = arith.constant 0 : index
    %270 = vector.load %arg13[%c1_304, %c1_305, %c0_306] : memref<10x10x4xf32, #tpu.memory_space<vmem>>, vector<8x8x4xf32>
    tpu.vector_store %arg13[%c1_304, %c1_305, %c0_306], %267 {strides = array<i32>} : memref<10x10x4xf32, #tpu.memory_space<vmem>>, vector<8x8x4xf32>,
    %cst_307 = arith.constant 0.000000e+00 : f32
    %271 = vector.broadcast %cst_307 : f32 to vector<16x8xf32>
    %c0_308 = arith.constant 0 : index
    %c0_309 = arith.constant 0 : index
    %c0_310 = arith.constant 0 : index
    %272 = vector.load %arg13[%c0_308, %c0_309, %c0_310] : memref<10x10x4xf32, #tpu.memory_space<vmem>>, vector<1x10x4xf32>
    %273 = vector.shape_cast %272 : vector<1x10x4xf32> to vector<10x4xf32>
    %c0_311 = arith.constant 0 : index
    %c0_312 = arith.constant 0 : index
    %c0_313 = arith.constant 0 : index
    %274 = vector.load %arg14[%c0_311, %c0_312, %c0_313] : memref<4x10x4xf32, #tpu.memory_space<vmem>>, vector<1x10x4xf32>
    %275 = vector.shape_cast %274 : vector<1x10x4xf32> to vector<10x4xf32>
    %276 = vector.shape_cast %273 : vector<10x4xf32> to vector<1x10x4xf32>
    tpu.vector_store %arg14[%c0_311, %c0_312, %c0_313], %276 {strides = array<i32>} : memref<4x10x4xf32, #tpu.memory_space<vmem>>, vector<1x10x4xf32>,
    %c2_314 = arith.constant 2 : index
    %c0_315 = arith.constant 0 : index
    %c0_316 = arith.constant 0 : index
    %277 = vector.load %arg13[%c2_314, %c0_315, %c0_316] : memref<10x10x4xf32, #tpu.memory_space<vmem>>, vector<1x10x4xf32>
    %278 = vector.shape_cast %277 : vector<1x10x4xf32> to vector<10x4xf32>
    %c1_317 = arith.constant 1 : index
    %c0_318 = arith.constant 0 : index
    %c0_319 = arith.constant 0 : index
    %279 = vector.load %arg14[%c1_317, %c0_318, %c0_319] : memref<4x10x4xf32, #tpu.memory_space<vmem>>, vector<1x10x4xf32>
    %280 = vector.shape_cast %279 : vector<1x10x4xf32> to vector<10x4xf32>
    %281 = vector.shape_cast %278 : vector<10x4xf32> to vector<1x10x4xf32>
    tpu.vector_store %arg14[%c1_317, %c0_318, %c0_319], %281 {strides = array<i32>} : memref<4x10x4xf32, #tpu.memory_space<vmem>>, vector<1x10x4xf32>,
    %c4_320 = arith.constant 4 : index
    %c0_321 = arith.constant 0 : index
    %c0_322 = arith.constant 0 : index
    %282 = vector.load %arg13[%c4_320, %c0_321, %c0_322] : memref<10x10x4xf32, #tpu.memory_space<vmem>>, vector<1x10x4xf32>
    %283 = vector.shape_cast %282 : vector<1x10x4xf32> to vector<10x4xf32>
    %c2_323 = arith.constant 2 : index
    %c0_324 = arith.constant 0 : index
    %c0_325 = arith.constant 0 : index
    %284 = vector.load %arg14[%c2_323, %c0_324, %c0_325] : memref<4x10x4xf32, #tpu.memory_space<vmem>>, vector<1x10x4xf32>
    %285 = vector.shape_cast %284 : vector<1x10x4xf32> to vector<10x4xf32>
    %286 = vector.shape_cast %283 : vector<10x4xf32> to vector<1x10x4xf32>
    tpu.vector_store %arg14[%c2_323, %c0_324, %c0_325], %286 {strides = array<i32>} : memref<4x10x4xf32, #tpu.memory_space<vmem>>, vector<1x10x4xf32>,
    %c6_326 = arith.constant 6 : index
    %c0_327 = arith.constant 0 : index
    %c0_328 = arith.constant 0 : index
    %287 = vector.load %arg13[%c6_326, %c0_327, %c0_328] : memref<10x10x4xf32, #tpu.memory_space<vmem>>, vector<1x10x4xf32>
    %288 = vector.shape_cast %287 : vector<1x10x4xf32> to vector<10x4xf32>
    %c3_329 = arith.constant 3 : index
    %c0_330 = arith.constant 0 : index
    %c0_331 = arith.constant 0 : index
    %289 = vector.load %arg14[%c3_329, %c0_330, %c0_331] : memref<4x10x4xf32, #tpu.memory_space<vmem>>, vector<1x10x4xf32>
    %290 = vector.shape_cast %289 : vector<1x10x4xf32> to vector<10x4xf32>
    %291 = vector.shape_cast %288 : vector<10x4xf32> to vector<1x10x4xf32>
    tpu.vector_store %arg14[%c3_329, %c0_330, %c0_331], %291 {strides = array<i32>} : memref<4x10x4xf32, #tpu.memory_space<vmem>>, vector<1x10x4xf32>,
    %c0_332 = arith.constant 0 : index
    %c0_333 = arith.constant 0 : index
    %c0_334 = arith.constant 0 : index
    %292 = tpu.strided_load %arg14[%c0_332, %c0_333, %c0_334] {strides = array<i32: 1, 2, 1>} : memref<4x10x4xf32, #tpu.memory_space<vmem>>, vector<4x4x4xf32>
    %293 = vector.shape_cast %292 : vector<4x4x4xf32> to vector<16x4xf32>
    %c0_335 = arith.constant 0 : index
    %c0_336 = arith.constant 0 : index
    %c0_337 = arith.constant 0 : index
    %294 = vector.load %arg4[%c0_335, %c0_336, %c0_337] : memref<16x4x8xf32, #tpu.memory_space<vmem>>, vector<1x4x8xf32>
    %295 = vector.shape_cast %294 : vector<1x4x8xf32> to vector<4x8xf32>
    %cst_338 = arith.constant dense<0.000000e+00> : vector<16x8xf32>
    %296 = tpu.matmul %293, %295, %cst_338 {dimension_numbers = #tpu.dot_dimension_numbers<[1], [0], [0], [1], [0, 0, 1, 1], [], []>} : vector<16x4xf32>, vector<4x8xf32>, vector<16x8xf32> -> vector<16x8xf32>
    %297 = arith.addf %271, %296 : vector<16x8xf32>
    %c0_339 = arith.constant 0 : index
    %c1_340 = arith.constant 1 : index
    %c0_341 = arith.constant 0 : index
    %298 = tpu.strided_load %arg14[%c0_339, %c1_340, %c0_341] {strides = array<i32: 1, 2, 1>} : memref<4x10x4xf32, #tpu.memory_space<vmem>>, vector<4x4x4xf32>
    %299 = vector.shape_cast %298 : vector<4x4x4xf32> to vector<16x4xf32>
    %c1_342 = arith.constant 1 : index
    %c0_343 = arith.constant 0 : index
    %c0_344 = arith.constant 0 : index
    %300 = vector.load %arg4[%c1_342, %c0_343, %c0_344] : memref<16x4x8xf32, #tpu.memory_space<vmem>>, vector<1x4x8xf32>
    %301 = vector.shape_cast %300 : vector<1x4x8xf32> to vector<4x8xf32>
    %cst_345 = arith.constant dense<0.000000e+00> : vector<16x8xf32>
    %302 = tpu.matmul %299, %301, %cst_345 {dimension_numbers = #tpu.dot_dimension_numbers<[1], [0], [0], [1], [0, 0, 1, 1], [], []>} : vector<16x4xf32>, vector<4x8xf32>, vector<16x8xf32> -> vector<16x8xf32>
    %303 = arith.addf %297, %302 : vector<16x8xf32>
    %c0_346 = arith.constant 0 : index
    %c2_347 = arith.constant 2 : index
    %c0_348 = arith.constant 0 : index
    %304 = tpu.strided_load %arg14[%c0_346, %c2_347, %c0_348] {strides = array<i32: 1, 2, 1>} : memref<4x10x4xf32, #tpu.memory_space<vmem>>, vector<4x4x4xf32>
    %305 = vector.shape_cast %304 : vector<4x4x4xf32> to vector<16x4xf32>
    %c2_349 = arith.constant 2 : index
    %c0_350 = arith.constant 0 : index
    %c0_351 = arith.constant 0 : index
    %306 = vector.load %arg4[%c2_349, %c0_350, %c0_351] : memref<16x4x8xf32, #tpu.memory_space<vmem>>, vector<1x4x8xf32>
    %307 = vector.shape_cast %306 : vector<1x4x8xf32> to vector<4x8xf32>
    %cst_352 = arith.constant dense<0.000000e+00> : vector<16x8xf32>
    %308 = tpu.matmul %305, %307, %cst_352 {dimension_numbers = #tpu.dot_dimension_numbers<[1], [0], [0], [1], [0, 0, 1, 1], [], []>} : vector<16x4xf32>, vector<4x8xf32>, vector<16x8xf32> -> vector<16x8xf32>
    %309 = arith.addf %303, %308 : vector<16x8xf32>
    %c0_353 = arith.constant 0 : index
    %c3_354 = arith.constant 3 : index
    %c0_355 = arith.constant 0 : index
    %310 = tpu.strided_load %arg14[%c0_353, %c3_354, %c0_355] {strides = array<i32: 1, 2, 1>} : memref<4x10x4xf32, #tpu.memory_space<vmem>>, vector<4x4x4xf32>
    %311 = vector.shape_cast %310 : vector<4x4x4xf32> to vector<16x4xf32>
    %c3_356 = arith.constant 3 : index
    %c0_357 = arith.constant 0 : index
    %c0_358 = arith.constant 0 : index
    %312 = vector.load %arg4[%c3_356, %c0_357, %c0_358] : memref<16x4x8xf32, #tpu.memory_space<vmem>>, vector<1x4x8xf32>
    %313 = vector.shape_cast %312 : vector<1x4x8xf32> to vector<4x8xf32>
    %cst_359 = arith.constant dense<0.000000e+00> : vector<16x8xf32>
    %314 = tpu.matmul %311, %313, %cst_359 {dimension_numbers = #tpu.dot_dimension_numbers<[1], [0], [0], [1], [0, 0, 1, 1], [], []>} : vector<16x4xf32>, vector<4x8xf32>, vector<16x8xf32> -> vector<16x8xf32>
    %315 = arith.addf %309, %314 : vector<16x8xf32>
    %c1_360 = arith.constant 1 : index
    %c0_361 = arith.constant 0 : index
    %c0_362 = arith.constant 0 : index
    %316 = vector.load %arg13[%c1_360, %c0_361, %c0_362] : memref<10x10x4xf32, #tpu.memory_space<vmem>>, vector<1x10x4xf32>
    %317 = vector.shape_cast %316 : vector<1x10x4xf32> to vector<10x4xf32>
    %c0_363 = arith.constant 0 : index
    %c0_364 = arith.constant 0 : index
    %c0_365 = arith.constant 0 : index
    %318 = vector.load %arg14[%c0_363, %c0_364, %c0_365] : memref<4x10x4xf32, #tpu.memory_space<vmem>>, vector<1x10x4xf32>
    %319 = vector.shape_cast %318 : vector<1x10x4xf32> to vector<10x4xf32>
    %320 = vector.shape_cast %317 : vector<10x4xf32> to vector<1x10x4xf32>
    tpu.vector_store %arg14[%c0_363, %c0_364, %c0_365], %320 {strides = array<i32>} : memref<4x10x4xf32, #tpu.memory_space<vmem>>, vector<1x10x4xf32>,
    %c3_366 = arith.constant 3 : index
    %c0_367 = arith.constant 0 : index
    %c0_368 = arith.constant 0 : index
    %321 = vector.load %arg13[%c3_366, %c0_367, %c0_368] : memref<10x10x4xf32, #tpu.memory_space<vmem>>, vector<1x10x4xf32>
    %322 = vector.shape_cast %321 : vector<1x10x4xf32> to vector<10x4xf32>
    %c1_369 = arith.constant 1 : index
    %c0_370 = arith.constant 0 : index
    %c0_371 = arith.constant 0 : index
    %323 = vector.load %arg14[%c1_369, %c0_370, %c0_371] : memref<4x10x4xf32, #tpu.memory_space<vmem>>, vector<1x10x4xf32>
    %324 = vector.shape_cast %323 : vector<1x10x4xf32> to vector<10x4xf32>
    %325 = vector.shape_cast %322 : vector<10x4xf32> to vector<1x10x4xf32>
    tpu.vector_store %arg14[%c1_369, %c0_370, %c0_371], %325 {strides = array<i32>} : memref<4x10x4xf32, #tpu.memory_space<vmem>>, vector<1x10x4xf32>,
    %c5_372 = arith.constant 5 : index
    %c0_373 = arith.constant 0 : index
    %c0_374 = arith.constant 0 : index
    %326 = vector.load %arg13[%c5_372, %c0_373, %c0_374] : memref<10x10x4xf32, #tpu.memory_space<vmem>>, vector<1x10x4xf32>
    %327 = vector.shape_cast %326 : vector<1x10x4xf32> to vector<10x4xf32>
    %c2_375 = arith.constant 2 : index
    %c0_376 = arith.constant 0 : index
    %c0_377 = arith.constant 0 : index
    %328 = vector.load %arg14[%c2_375, %c0_376, %c0_377] : memref<4x10x4xf32, #tpu.memory_space<vmem>>, vector<1x10x4xf32>
    %329 = vector.shape_cast %328 : vector<1x10x4xf32> to vector<10x4xf32>
    %330 = vector.shape_cast %327 : vector<10x4xf32> to vector<1x10x4xf32>
    tpu.vector_store %arg14[%c2_375, %c0_376, %c0_377], %330 {strides = array<i32>} : memref<4x10x4xf32, #tpu.memory_space<vmem>>, vector<1x10x4xf32>,
    %c7_378 = arith.constant 7 : index
    %c0_379 = arith.constant 0 : index
    %c0_380 = arith.constant 0 : index
    %331 = vector.load %arg13[%c7_378, %c0_379, %c0_380] : memref<10x10x4xf32, #tpu.memory_space<vmem>>, vector<1x10x4xf32>
    %332 = vector.shape_cast %331 : vector<1x10x4xf32> to vector<10x4xf32>
    %c3_381 = arith.constant 3 : index
    %c0_382 = arith.constant 0 : index
    %c0_383 = arith.constant 0 : index
    %333 = vector.load %arg14[%c3_381, %c0_382, %c0_383] : memref<4x10x4xf32, #tpu.memory_space<vmem>>, vector<1x10x4xf32>
    %334 = vector.shape_cast %333 : vector<1x10x4xf32> to vector<10x4xf32>
    %335 = vector.shape_cast %332 : vector<10x4xf32> to vector<1x10x4xf32>
    tpu.vector_store %arg14[%c3_381, %c0_382, %c0_383], %335 {strides = array<i32>} : memref<4x10x4xf32, #tpu.memory_space<vmem>>, vector<1x10x4xf32>,
    %c0_384 = arith.constant 0 : index
    %c0_385 = arith.constant 0 : index
    %c0_386 = arith.constant 0 : index
    %336 = tpu.strided_load %arg14[%c0_384, %c0_385, %c0_386] {strides = array<i32: 1, 2, 1>} : memref<4x10x4xf32, #tpu.memory_space<vmem>>, vector<4x4x4xf32>
    %337 = vector.shape_cast %336 : vector<4x4x4xf32> to vector<16x4xf32>
    %c4_387 = arith.constant 4 : index
    %c0_388 = arith.constant 0 : index
    %c0_389 = arith.constant 0 : index
    %338 = vector.load %arg4[%c4_387, %c0_388, %c0_389] : memref<16x4x8xf32, #tpu.memory_space<vmem>>, vector<1x4x8xf32>
    %339 = vector.shape_cast %338 : vector<1x4x8xf32> to vector<4x8xf32>
    %cst_390 = arith.constant dense<0.000000e+00> : vector<16x8xf32>
    %340 = tpu.matmul %337, %339, %cst_390 {dimension_numbers = #tpu.dot_dimension_numbers<[1], [0], [0], [1], [0, 0, 1, 1], [], []>} : vector<16x4xf32>, vector<4x8xf32>, vector<16x8xf32> -> vector<16x8xf32>
    %341 = arith.addf %315, %340 : vector<16x8xf32>
    %c0_391 = arith.constant 0 : index
    %c1_392 = arith.constant 1 : index
    %c0_393 = arith.constant 0 : index
    %342 = tpu.strided_load %arg14[%c0_391, %c1_392, %c0_393] {strides = array<i32: 1, 2, 1>} : memref<4x10x4xf32, #tpu.memory_space<vmem>>, vector<4x4x4xf32>
    %343 = vector.shape_cast %342 : vector<4x4x4xf32> to vector<16x4xf32>
    %c5_394 = arith.constant 5 : index
    %c0_395 = arith.constant 0 : index
    %c0_396 = arith.constant 0 : index
    %344 = vector.load %arg4[%c5_394, %c0_395, %c0_396] : memref<16x4x8xf32, #tpu.memory_space<vmem>>, vector<1x4x8xf32>
    %345 = vector.shape_cast %344 : vector<1x4x8xf32> to vector<4x8xf32>
    %cst_397 = arith.constant dense<0.000000e+00> : vector<16x8xf32>
    %346 = tpu.matmul %343, %345, %cst_397 {dimension_numbers = #tpu.dot_dimension_numbers<[1], [0], [0], [1], [0, 0, 1, 1], [], []>} : vector<16x4xf32>, vector<4x8xf32>, vector<16x8xf32> -> vector<16x8xf32>
    %347 = arith.addf %341, %346 : vector<16x8xf32>
    %c0_398 = arith.constant 0 : index
    %c2_399 = arith.constant 2 : index
    %c0_400 = arith.constant 0 : index
    %348 = tpu.strided_load %arg14[%c0_398, %c2_399, %c0_400] {strides = array<i32: 1, 2, 1>} : memref<4x10x4xf32, #tpu.memory_space<vmem>>, vector<4x4x4xf32>
    %349 = vector.shape_cast %348 : vector<4x4x4xf32> to vector<16x4xf32>
    %c6_401 = arith.constant 6 : index
    %c0_402 = arith.constant 0 : index
    %c0_403 = arith.constant 0 : index
    %350 = vector.load %arg4[%c6_401, %c0_402, %c0_403] : memref<16x4x8xf32, #tpu.memory_space<vmem>>, vector<1x4x8xf32>
    %351 = vector.shape_cast %350 : vector<1x4x8xf32> to vector<4x8xf32>
    %cst_404 = arith.constant dense<0.000000e+00> : vector<16x8xf32>
    %352 = tpu.matmul %349, %351, %cst_404 {dimension_numbers = #tpu.dot_dimension_numbers<[1], [0], [0], [1], [0, 0, 1, 1], [], []>} : vector<16x4xf32>, vector<4x8xf32>, vector<16x8xf32> -> vector<16x8xf32>
    %353 = arith.addf %347, %352 : vector<16x8xf32>
    %c0_405 = arith.constant 0 : index
    %c3_406 = arith.constant 3 : index
    %c0_407 = arith.constant 0 : index
    %354 = tpu.strided_load %arg14[%c0_405, %c3_406, %c0_407] {strides = array<i32: 1, 2, 1>} : memref<4x10x4xf32, #tpu.memory_space<vmem>>, vector<4x4x4xf32>
    %355 = vector.shape_cast %354 : vector<4x4x4xf32> to vector<16x4xf32>
    %c7_408 = arith.constant 7 : index
    %c0_409 = arith.constant 0 : index
    %c0_410 = arith.constant 0 : index
    %356 = vector.load %arg4[%c7_408, %c0_409, %c0_410] : memref<16x4x8xf32, #tpu.memory_space<vmem>>, vector<1x4x8xf32>
    %357 = vector.shape_cast %356 : vector<1x4x8xf32> to vector<4x8xf32>
    %cst_411 = arith.constant dense<0.000000e+00> : vector<16x8xf32>
    %358 = tpu.matmul %355, %357, %cst_411 {dimension_numbers = #tpu.dot_dimension_numbers<[1], [0], [0], [1], [0, 0, 1, 1], [], []>} : vector<16x4xf32>, vector<4x8xf32>, vector<16x8xf32> -> vector<16x8xf32>
    %359 = arith.addf %353, %358 : vector<16x8xf32>
    %c2_412 = arith.constant 2 : index
    %c0_413 = arith.constant 0 : index
    %c0_414 = arith.constant 0 : index
    %360 = vector.load %arg13[%c2_412, %c0_413, %c0_414] : memref<10x10x4xf32, #tpu.memory_space<vmem>>, vector<1x10x4xf32>
    %361 = vector.shape_cast %360 : vector<1x10x4xf32> to vector<10x4xf32>
    %c0_415 = arith.constant 0 : index
    %c0_416 = arith.constant 0 : index
    %c0_417 = arith.constant 0 : index
    %362 = vector.load %arg14[%c0_415, %c0_416, %c0_417] : memref<4x10x4xf32, #tpu.memory_space<vmem>>, vector<1x10x4xf32>
    %363 = vector.shape_cast %362 : vector<1x10x4xf32> to vector<10x4xf32>
    %364 = vector.shape_cast %361 : vector<10x4xf32> to vector<1x10x4xf32>
    tpu.vector_store %arg14[%c0_415, %c0_416, %c0_417], %364 {strides = array<i32>} : memref<4x10x4xf32, #tpu.memory_space<vmem>>, vector<1x10x4xf32>,
    %c4_418 = arith.constant 4 : index
    %c0_419 = arith.constant 0 : index
    %c0_420 = arith.constant 0 : index
    %365 = vector.load %arg13[%c4_418, %c0_419, %c0_420] : memref<10x10x4xf32, #tpu.memory_space<vmem>>, vector<1x10x4xf32>
    %366 = vector.shape_cast %365 : vector<1x10x4xf32> to vector<10x4xf32>
    %c1_421 = arith.constant 1 : index
    %c0_422 = arith.constant 0 : index
    %c0_423 = arith.constant 0 : index
    %367 = vector.load %arg14[%c1_421, %c0_422, %c0_423] : memref<4x10x4xf32, #tpu.memory_space<vmem>>, vector<1x10x4xf32>
    %368 = vector.shape_cast %367 : vector<1x10x4xf32> to vector<10x4xf32>
    %369 = vector.shape_cast %366 : vector<10x4xf32> to vector<1x10x4xf32>
    tpu.vector_store %arg14[%c1_421, %c0_422, %c0_423], %369 {strides = array<i32>} : memref<4x10x4xf32, #tpu.memory_space<vmem>>, vector<1x10x4xf32>,
    %c6_424 = arith.constant 6 : index
    %c0_425 = arith.constant 0 : index
    %c0_426 = arith.constant 0 : index
    %370 = vector.load %arg13[%c6_424, %c0_425, %c0_426] : memref<10x10x4xf32, #tpu.memory_space<vmem>>, vector<1x10x4xf32>
    %371 = vector.shape_cast %370 : vector<1x10x4xf32> to vector<10x4xf32>
    %c2_427 = arith.constant 2 : index
    %c0_428 = arith.constant 0 : index
    %c0_429 = arith.constant 0 : index
    %372 = vector.load %arg14[%c2_427, %c0_428, %c0_429] : memref<4x10x4xf32, #tpu.memory_space<vmem>>, vector<1x10x4xf32>
    %373 = vector.shape_cast %372 : vector<1x10x4xf32> to vector<10x4xf32>
    %374 = vector.shape_cast %371 : vector<10x4xf32> to vector<1x10x4xf32>
    tpu.vector_store %arg14[%c2_427, %c0_428, %c0_429], %374 {strides = array<i32>} : memref<4x10x4xf32, #tpu.memory_space<vmem>>, vector<1x10x4xf32>,
    %c8_430 = arith.constant 8 : index
    %c0_431 = arith.constant 0 : index
    %c0_432 = arith.constant 0 : index
    %375 = vector.load %arg13[%c8_430, %c0_431, %c0_432] : memref<10x10x4xf32, #tpu.memory_space<vmem>>, vector<1x10x4xf32>
    %376 = vector.shape_cast %375 : vector<1x10x4xf32> to vector<10x4xf32>
    %c3_433 = arith.constant 3 : index
    %c0_434 = arith.constant 0 : index
    %c0_435 = arith.constant 0 : index
    %377 = vector.load %arg14[%c3_433, %c0_434, %c0_435] : memref<4x10x4xf32, #tpu.memory_space<vmem>>, vector<1x10x4xf32>
    %378 = vector.shape_cast %377 : vector<1x10x4xf32> to vector<10x4xf32>
    %379 = vector.shape_cast %376 : vector<10x4xf32> to vector<1x10x4xf32>
    tpu.vector_store %arg14[%c3_433, %c0_434, %c0_435], %379 {strides = array<i32>} : memref<4x10x4xf32, #tpu.memory_space<vmem>>, vector<1x10x4xf32>,
    %c0_436 = arith.constant 0 : index
    %c0_437 = arith.constant 0 : index
    %c0_438 = arith.constant 0 : index
    %380 = tpu.strided_load %arg14[%c0_436, %c0_437, %c0_438] {strides = array<i32: 1, 2, 1>} : memref<4x10x4xf32, #tpu.memory_space<vmem>>, vector<4x4x4xf32>
    %381 = vector.shape_cast %380 : vector<4x4x4xf32> to vector<16x4xf32>
    %c8_439 = arith.constant 8 : index
    %c0_440 = arith.constant 0 : index
    %c0_441 = arith.constant 0 : index
    %382 = vector.load %arg4[%c8_439, %c0_440, %c0_441] : memref<16x4x8xf32, #tpu.memory_space<vmem>>, vector<1x4x8xf32>
    %383 = vector.shape_cast %382 : vector<1x4x8xf32> to vector<4x8xf32>
    %cst_442 = arith.constant dense<0.000000e+00> : vector<16x8xf32>
    %384 = tpu.matmul %381, %383, %cst_442 {dimension_numbers = #tpu.dot_dimension_numbers<[1], [0], [0], [1], [0, 0, 1, 1], [], []>} : vector<16x4xf32>, vector<4x8xf32>, vector<16x8xf32> -> vector<16x8xf32>
    %385 = arith.addf %359, %384 : vector<16x8xf32>
    %c0_443 = arith.constant 0 : index
    %c1_444 = arith.constant 1 : index
    %c0_445 = arith.constant 0 : index
    %386 = tpu.strided_load %arg14[%c0_443, %c1_444, %c0_445] {strides = array<i32: 1, 2, 1>} : memref<4x10x4xf32, #tpu.memory_space<vmem>>, vector<4x4x4xf32>
    %387 = vector.shape_cast %386 : vector<4x4x4xf32> to vector<16x4xf32>
    %c9_446 = arith.constant 9 : index
    %c0_447 = arith.constant 0 : index
    %c0_448 = arith.constant 0 : index
    %388 = vector.load %arg4[%c9_446, %c0_447, %c0_448] : memref<16x4x8xf32, #tpu.memory_space<vmem>>, vector<1x4x8xf32>
    %389 = vector.shape_cast %388 : vector<1x4x8xf32> to vector<4x8xf32>
    %cst_449 = arith.constant dense<0.000000e+00> : vector<16x8xf32>
    %390 = tpu.matmul %387, %389, %cst_449 {dimension_numbers = #tpu.dot_dimension_numbers<[1], [0], [0], [1], [0, 0, 1, 1], [], []>} : vector<16x4xf32>, vector<4x8xf32>, vector<16x8xf32> -> vector<16x8xf32>
    %391 = arith.addf %385, %390 : vector<16x8xf32>
    %c0_450 = arith.constant 0 : index
    %c2_451 = arith.constant 2 : index
    %c0_452 = arith.constant 0 : index
    %392 = tpu.strided_load %arg14[%c0_450, %c2_451, %c0_452] {strides = array<i32: 1, 2, 1>} : memref<4x10x4xf32, #tpu.memory_space<vmem>>, vector<4x4x4xf32>
    %393 = vector.shape_cast %392 : vector<4x4x4xf32> to vector<16x4xf32>
    %c10_453 = arith.constant 10 : index
    %c0_454 = arith.constant 0 : index
    %c0_455 = arith.constant 0 : index
    %394 = vector.load %arg4[%c10_453, %c0_454, %c0_455] : memref<16x4x8xf32, #tpu.memory_space<vmem>>, vector<1x4x8xf32>
    %395 = vector.shape_cast %394 : vector<1x4x8xf32> to vector<4x8xf32>
    %cst_456 = arith.constant dense<0.000000e+00> : vector<16x8xf32>
    %396 = tpu.matmul %393, %395, %cst_456 {dimension_numbers = #tpu.dot_dimension_numbers<[1], [0], [0], [1], [0, 0, 1, 1], [], []>} : vector<16x4xf32>, vector<4x8xf32>, vector<16x8xf32> -> vector<16x8xf32>
    %397 = arith.addf %391, %396 : vector<16x8xf32>
    %c0_457 = arith.constant 0 : index
    %c3_458 = arith.constant 3 : index
    %c0_459 = arith.constant 0 : index
    %398 = tpu.strided_load %arg14[%c0_457, %c3_458, %c0_459] {strides = array<i32: 1, 2, 1>} : memref<4x10x4xf32, #tpu.memory_space<vmem>>, vector<4x4x4xf32>
    %399 = vector.shape_cast %398 : vector<4x4x4xf32> to vector<16x4xf32>
    %c11_460 = arith.constant 11 : index
    %c0_461 = arith.constant 0 : index
    %c0_462 = arith.constant 0 : index
    %400 = vector.load %arg4[%c11_460, %c0_461, %c0_462] : memref<16x4x8xf32, #tpu.memory_space<vmem>>, vector<1x4x8xf32>
    %401 = vector.shape_cast %400 : vector<1x4x8xf32> to vector<4x8xf32>
    %cst_463 = arith.constant dense<0.000000e+00> : vector<16x8xf32>
    %402 = tpu.matmul %399, %401, %cst_463 {dimension_numbers = #tpu.dot_dimension_numbers<[1], [0], [0], [1], [0, 0, 1, 1], [], []>} : vector<16x4xf32>, vector<4x8xf32>, vector<16x8xf32> -> vector<16x8xf32>
    %403 = arith.addf %397, %402 : vector<16x8xf32>
    %c3_464 = arith.constant 3 : index
    %c0_465 = arith.constant 0 : index
    %c0_466 = arith.constant 0 : index
    %404 = vector.load %arg13[%c3_464, %c0_465, %c0_466] : memref<10x10x4xf32, #tpu.memory_space<vmem>>, vector<1x10x4xf32>
    %405 = vector.shape_cast %404 : vector<1x10x4xf32> to vector<10x4xf32>
    %c0_467 = arith.constant 0 : index
    %c0_468 = arith.constant 0 : index
    %c0_469 = arith.constant 0 : index
    %406 = vector.load %arg14[%c0_467, %c0_468, %c0_469] : memref<4x10x4xf32, #tpu.memory_space<vmem>>, vector<1x10x4xf32>
    %407 = vector.shape_cast %406 : vector<1x10x4xf32> to vector<10x4xf32>
    %408 = vector.shape_cast %405 : vector<10x4xf32> to vector<1x10x4xf32>
    tpu.vector_store %arg14[%c0_467, %c0_468, %c0_469], %408 {strides = array<i32>} : memref<4x10x4xf32, #tpu.memory_space<vmem>>, vector<1x10x4xf32>,
    %c5_470 = arith.constant 5 : index
    %c0_471 = arith.constant 0 : index
    %c0_472 = arith.constant 0 : index
    %409 = vector.load %arg13[%c5_470, %c0_471, %c0_472] : memref<10x10x4xf32, #tpu.memory_space<vmem>>, vector<1x10x4xf32>
    %410 = vector.shape_cast %409 : vector<1x10x4xf32> to vector<10x4xf32>
    %c1_473 = arith.constant 1 : index
    %c0_474 = arith.constant 0 : index
    %c0_475 = arith.constant 0 : index
    %411 = vector.load %arg14[%c1_473, %c0_474, %c0_475] : memref<4x10x4xf32, #tpu.memory_space<vmem>>, vector<1x10x4xf32>
    %412 = vector.shape_cast %411 : vector<1x10x4xf32> to vector<10x4xf32>
    %413 = vector.shape_cast %410 : vector<10x4xf32> to vector<1x10x4xf32>
    tpu.vector_store %arg14[%c1_473, %c0_474, %c0_475], %413 {strides = array<i32>} : memref<4x10x4xf32, #tpu.memory_space<vmem>>, vector<1x10x4xf32>,
    %c7_476 = arith.constant 7 : index
    %c0_477 = arith.constant 0 : index
    %c0_478 = arith.constant 0 : index
    %414 = vector.load %arg13[%c7_476, %c0_477, %c0_478] : memref<10x10x4xf32, #tpu.memory_space<vmem>>, vector<1x10x4xf32>
    %415 = vector.shape_cast %414 : vector<1x10x4xf32> to vector<10x4xf32>
    %c2_479 = arith.constant 2 : index
    %c0_480 = arith.constant 0 : index
    %c0_481 = arith.constant 0 : index
    %416 = vector.load %arg14[%c2_479, %c0_480, %c0_481] : memref<4x10x4xf32, #tpu.memory_space<vmem>>, vector<1x10x4xf32>
    %417 = vector.shape_cast %416 : vector<1x10x4xf32> to vector<10x4xf32>
    %418 = vector.shape_cast %415 : vector<10x4xf32> to vector<1x10x4xf32>
    tpu.vector_store %arg14[%c2_479, %c0_480, %c0_481], %418 {strides = array<i32>} : memref<4x10x4xf32, #tpu.memory_space<vmem>>, vector<1x10x4xf32>,
    %c9_482 = arith.constant 9 : index
    %c0_483 = arith.constant 0 : index
    %c0_484 = arith.constant 0 : index
    %419 = vector.load %arg13[%c9_482, %c0_483, %c0_484] : memref<10x10x4xf32, #tpu.memory_space<vmem>>, vector<1x10x4xf32>
    %420 = vector.shape_cast %419 : vector<1x10x4xf32> to vector<10x4xf32>
    %c3_485 = arith.constant 3 : index
    %c0_486 = arith.constant 0 : index
    %c0_487 = arith.constant 0 : index
    %421 = vector.load %arg14[%c3_485, %c0_486, %c0_487] : memref<4x10x4xf32, #tpu.memory_space<vmem>>, vector<1x10x4xf32>
    %422 = vector.shape_cast %421 : vector<1x10x4xf32> to vector<10x4xf32>
    %423 = vector.shape_cast %420 : vector<10x4xf32> to vector<1x10x4xf32>
    tpu.vector_store %arg14[%c3_485, %c0_486, %c0_487], %423 {strides = array<i32>} : memref<4x10x4xf32, #tpu.memory_space<vmem>>, vector<1x10x4xf32>,
    %c0_488 = arith.constant 0 : index
    %c0_489 = arith.constant 0 : index
    %c0_490 = arith.constant 0 : index
    %424 = tpu.strided_load %arg14[%c0_488, %c0_489, %c0_490] {strides = array<i32: 1, 2, 1>} : memref<4x10x4xf32, #tpu.memory_space<vmem>>, vector<4x4x4xf32>
    %425 = vector.shape_cast %424 : vector<4x4x4xf32> to vector<16x4xf32>
    %c12_491 = arith.constant 12 : index
    %c0_492 = arith.constant 0 : index
    %c0_493 = arith.constant 0 : index
    %426 = vector.load %arg4[%c12_491, %c0_492, %c0_493] : memref<16x4x8xf32, #tpu.memory_space<vmem>>, vector<1x4x8xf32>
    %427 = vector.shape_cast %426 : vector<1x4x8xf32> to vector<4x8xf32>
    %cst_494 = arith.constant dense<0.000000e+00> : vector<16x8xf32>
    %428 = tpu.matmul %425, %427, %cst_494 {dimension_numbers = #tpu.dot_dimension_numbers<[1], [0], [0], [1], [0, 0, 1, 1], [], []>} : vector<16x4xf32>, vector<4x8xf32>, vector<16x8xf32> -> vector<16x8xf32>
    %429 = arith.addf %403, %428 : vector<16x8xf32>
    %c0_495 = arith.constant 0 : index
    %c1_496 = arith.constant 1 : index
    %c0_497 = arith.constant 0 : index
    %430 = tpu.strided_load %arg14[%c0_495, %c1_496, %c0_497] {strides = array<i32: 1, 2, 1>} : memref<4x10x4xf32, #tpu.memory_space<vmem>>, vector<4x4x4xf32>
    %431 = vector.shape_cast %430 : vector<4x4x4xf32> to vector<16x4xf32>
    %c13_498 = arith.constant 13 : index
    %c0_499 = arith.constant 0 : index
    %c0_500 = arith.constant 0 : index
    %432 = vector.load %arg4[%c13_498, %c0_499, %c0_500] : memref<16x4x8xf32, #tpu.memory_space<vmem>>, vector<1x4x8xf32>
    %433 = vector.shape_cast %432 : vector<1x4x8xf32> to vector<4x8xf32>
    %cst_501 = arith.constant dense<0.000000e+00> : vector<16x8xf32>
    %434 = tpu.matmul %431, %433, %cst_501 {dimension_numbers = #tpu.dot_dimension_numbers<[1], [0], [0], [1], [0, 0, 1, 1], [], []>} : vector<16x4xf32>, vector<4x8xf32>, vector<16x8xf32> -> vector<16x8xf32>
    %435 = arith.addf %429, %434 : vector<16x8xf32>
    %c0_502 = arith.constant 0 : index
    %c2_503 = arith.constant 2 : index
    %c0_504 = arith.constant 0 : index
    %436 = tpu.strided_load %arg14[%c0_502, %c2_503, %c0_504] {strides = array<i32: 1, 2, 1>} : memref<4x10x4xf32, #tpu.memory_space<vmem>>, vector<4x4x4xf32>
    %437 = vector.shape_cast %436 : vector<4x4x4xf32> to vector<16x4xf32>
    %c14_505 = arith.constant 14 : index
    %c0_506 = arith.constant 0 : index
    %c0_507 = arith.constant 0 : index
    %438 = vector.load %arg4[%c14_505, %c0_506, %c0_507] : memref<16x4x8xf32, #tpu.memory_space<vmem>>, vector<1x4x8xf32>
    %439 = vector.shape_cast %438 : vector<1x4x8xf32> to vector<4x8xf32>
    %cst_508 = arith.constant dense<0.000000e+00> : vector<16x8xf32>
    %440 = tpu.matmul %437, %439, %cst_508 {dimension_numbers = #tpu.dot_dimension_numbers<[1], [0], [0], [1], [0, 0, 1, 1], [], []>} : vector<16x4xf32>, vector<4x8xf32>, vector<16x8xf32> -> vector<16x8xf32>
    %441 = arith.addf %435, %440 : vector<16x8xf32>
    %c0_509 = arith.constant 0 : index
    %c3_510 = arith.constant 3 : index
    %c0_511 = arith.constant 0 : index
    %442 = tpu.strided_load %arg14[%c0_509, %c3_510, %c0_511] {strides = array<i32: 1, 2, 1>} : memref<4x10x4xf32, #tpu.memory_space<vmem>>, vector<4x4x4xf32>
    %443 = vector.shape_cast %442 : vector<4x4x4xf32> to vector<16x4xf32>
    %c15_512 = arith.constant 15 : index
    %c0_513 = arith.constant 0 : index
    %c0_514 = arith.constant 0 : index
    %444 = vector.load %arg4[%c15_512, %c0_513, %c0_514] : memref<16x4x8xf32, #tpu.memory_space<vmem>>, vector<1x4x8xf32>
    %445 = vector.shape_cast %444 : vector<1x4x8xf32> to vector<4x8xf32>
    %cst_515 = arith.constant dense<0.000000e+00> : vector<16x8xf32>
    %446 = tpu.matmul %443, %445, %cst_515 {dimension_numbers = #tpu.dot_dimension_numbers<[1], [0], [0], [1], [0, 0, 1, 1], [], []>} : vector<16x4xf32>, vector<4x8xf32>, vector<16x8xf32> -> vector<16x8xf32>
    %447 = arith.addf %441, %446 : vector<16x8xf32>
    %c0_516 = arith.constant 0 : index
    %c0_517 = arith.constant 0 : index
    %448 = vector.load %arg5[%c0_516, %c0_517] : memref<1x8xf32, #tpu.memory_space<vmem>>, vector<1x8xf32>
    %449 = vector.broadcast %448 : vector<1x8xf32> to vector<16x8xf32>
    %450 = arith.addf %447, %449 : vector<16x8xf32>
    %cst_518 = arith.constant 0.000000e+00 : f32
    %451 = vector.broadcast %cst_518 : f32 to vector<16x8xf32>
    %452 = arith.maximumf %450, %451 : vector<16x8xf32>
    %453 = vector.shape_cast %452 : vector<16x8xf32> to vector<4x4x8xf32>
    %cst_519 = arith.constant 0.000000e+00 : f32
    %454 = vector.broadcast %cst_519 : f32 to vector<6x6x8xf32>
    %c0_520 = arith.constant 0 : index
    %c0_521 = arith.constant 0 : index
    %c0_522 = arith.constant 0 : index
    %455 = vector.load %arg15[%c0_520, %c0_521, %c0_522] : memref<6x6x8xf32, #tpu.memory_space<vmem>>, vector<6x6x8xf32>
    tpu.vector_store %arg15[%c0_520, %c0_521, %c0_522], %454 {strides = array<i32>} : memref<6x6x8xf32, #tpu.memory_space<vmem>>, vector<6x6x8xf32>,
    %c1_523 = arith.constant 1 : index
    %c1_524 = arith.constant 1 : index
    %c0_525 = arith.constant 0 : index
    %456 = vector.load %arg15[%c1_523, %c1_524, %c0_525] : memref<6x6x8xf32, #tpu.memory_space<vmem>>, vector<4x4x8xf32>
    tpu.vector_store %arg15[%c1_523, %c1_524, %c0_525], %453 {strides = array<i32>} : memref<6x6x8xf32, #tpu.memory_space<vmem>>, vector<4x4x8xf32>,
    %cst_526 = arith.constant 0.000000e+00 : f32
    %457 = vector.broadcast %cst_526 : f32 to vector<4x16xf32>
    %c0_527 = arith.constant 0 : index
    %c0_528 = arith.constant 0 : index
    %c0_529 = arith.constant 0 : index
    %458 = vector.load %arg15[%c0_527, %c0_528, %c0_529] : memref<6x6x8xf32, #tpu.memory_space<vmem>>, vector<1x6x8xf32>
    %459 = vector.shape_cast %458 : vector<1x6x8xf32> to vector<6x8xf32>
    %c0_530 = arith.constant 0 : index
    %c0_531 = arith.constant 0 : index
    %c0_532 = arith.constant 0 : index
    %460 = vector.load %arg16[%c0_530, %c0_531, %c0_532] : memref<2x6x8xf32, #tpu.memory_space<vmem>>, vector<1x6x8xf32>
    %461 = vector.shape_cast %460 : vector<1x6x8xf32> to vector<6x8xf32>
    %462 = vector.shape_cast %459 : vector<6x8xf32> to vector<1x6x8xf32>
    tpu.vector_store %arg16[%c0_530, %c0_531, %c0_532], %462 {strides = array<i32>} : memref<2x6x8xf32, #tpu.memory_space<vmem>>, vector<1x6x8xf32>,
    %c2_533 = arith.constant 2 : index
    %c0_534 = arith.constant 0 : index
    %c0_535 = arith.constant 0 : index
    %463 = vector.load %arg15[%c2_533, %c0_534, %c0_535] : memref<6x6x8xf32, #tpu.memory_space<vmem>>, vector<1x6x8xf32>
    %464 = vector.shape_cast %463 : vector<1x6x8xf32> to vector<6x8xf32>
    %c1_536 = arith.constant 1 : index
    %c0_537 = arith.constant 0 : index
    %c0_538 = arith.constant 0 : index
    %465 = vector.load %arg16[%c1_536, %c0_537, %c0_538] : memref<2x6x8xf32, #tpu.memory_space<vmem>>, vector<1x6x8xf32>
    %466 = vector.shape_cast %465 : vector<1x6x8xf32> to vector<6x8xf32>
    %467 = vector.shape_cast %464 : vector<6x8xf32> to vector<1x6x8xf32>
    tpu.vector_store %arg16[%c1_536, %c0_537, %c0_538], %467 {strides = array<i32>} : memref<2x6x8xf32, #tpu.memory_space<vmem>>, vector<1x6x8xf32>,
    %c0_539 = arith.constant 0 : index
    %c0_540 = arith.constant 0 : index
    %c0_541 = arith.constant 0 : index
    %468 = tpu.strided_load %arg16[%c0_539, %c0_540, %c0_541] {strides = array<i32: 1, 2, 1>} : memref<2x6x8xf32, #tpu.memory_space<vmem>>, vector<2x2x8xf32>
    %469 = vector.shape_cast %468 : vector<2x2x8xf32> to vector<4x8xf32>
    %c0_542 = arith.constant 0 : index
    %c0_543 = arith.constant 0 : index
    %c0_544 = arith.constant 0 : index
    %470 = vector.load %arg6[%c0_542, %c0_543, %c0_544] : memref<16x8x16xf32, #tpu.memory_space<vmem>>, vector<1x8x16xf32>
    %471 = vector.shape_cast %470 : vector<1x8x16xf32> to vector<8x16xf32>
    %cst_545 = arith.constant dense<0.000000e+00> : vector<4x16xf32>
    %472 = tpu.matmul %469, %471, %cst_545 {dimension_numbers = #tpu.dot_dimension_numbers<[1], [0], [0], [1], [0, 0, 1, 1], [], []>} : vector<4x8xf32>, vector<8x16xf32>, vector<4x16xf32> -> vector<4x16xf32>
    %473 = arith.addf %457, %472 : vector<4x16xf32>
    %c0_546 = arith.constant 0 : index
    %c1_547 = arith.constant 1 : index
    %c0_548 = arith.constant 0 : index
    %474 = tpu.strided_load %arg16[%c0_546, %c1_547, %c0_548] {strides = array<i32: 1, 2, 1>} : memref<2x6x8xf32, #tpu.memory_space<vmem>>, vector<2x2x8xf32>
    %475 = vector.shape_cast %474 : vector<2x2x8xf32> to vector<4x8xf32>
    %c1_549 = arith.constant 1 : index
    %c0_550 = arith.constant 0 : index
    %c0_551 = arith.constant 0 : index
    %476 = vector.load %arg6[%c1_549, %c0_550, %c0_551] : memref<16x8x16xf32, #tpu.memory_space<vmem>>, vector<1x8x16xf32>
    %477 = vector.shape_cast %476 : vector<1x8x16xf32> to vector<8x16xf32>
    %cst_552 = arith.constant dense<0.000000e+00> : vector<4x16xf32>
    %478 = tpu.matmul %475, %477, %cst_552 {dimension_numbers = #tpu.dot_dimension_numbers<[1], [0], [0], [1], [0, 0, 1, 1], [], []>} : vector<4x8xf32>, vector<8x16xf32>, vector<4x16xf32> -> vector<4x16xf32>
    %479 = arith.addf %473, %478 : vector<4x16xf32>
    %c0_553 = arith.constant 0 : index
    %c2_554 = arith.constant 2 : index
    %c0_555 = arith.constant 0 : index
    %480 = tpu.strided_load %arg16[%c0_553, %c2_554, %c0_555] {strides = array<i32: 1, 2, 1>} : memref<2x6x8xf32, #tpu.memory_space<vmem>>, vector<2x2x8xf32>
    %481 = vector.shape_cast %480 : vector<2x2x8xf32> to vector<4x8xf32>
    %c2_556 = arith.constant 2 : index
    %c0_557 = arith.constant 0 : index
    %c0_558 = arith.constant 0 : index
    %482 = vector.load %arg6[%c2_556, %c0_557, %c0_558] : memref<16x8x16xf32, #tpu.memory_space<vmem>>, vector<1x8x16xf32>
    %483 = vector.shape_cast %482 : vector<1x8x16xf32> to vector<8x16xf32>
    %cst_559 = arith.constant dense<0.000000e+00> : vector<4x16xf32>
    %484 = tpu.matmul %481, %483, %cst_559 {dimension_numbers = #tpu.dot_dimension_numbers<[1], [0], [0], [1], [0, 0, 1, 1], [], []>} : vector<4x8xf32>, vector<8x16xf32>, vector<4x16xf32> -> vector<4x16xf32>
    %485 = arith.addf %479, %484 : vector<4x16xf32>
    %c0_560 = arith.constant 0 : index
    %c3_561 = arith.constant 3 : index
    %c0_562 = arith.constant 0 : index
    %486 = tpu.strided_load %arg16[%c0_560, %c3_561, %c0_562] {strides = array<i32: 1, 2, 1>} : memref<2x6x8xf32, #tpu.memory_space<vmem>>, vector<2x2x8xf32>
    %487 = vector.shape_cast %486 : vector<2x2x8xf32> to vector<4x8xf32>
    %c3_563 = arith.constant 3 : index
    %c0_564 = arith.constant 0 : index
    %c0_565 = arith.constant 0 : index
    %488 = vector.load %arg6[%c3_563, %c0_564, %c0_565] : memref<16x8x16xf32, #tpu.memory_space<vmem>>, vector<1x8x16xf32>
    %489 = vector.shape_cast %488 : vector<1x8x16xf32> to vector<8x16xf32>
    %cst_566 = arith.constant dense<0.000000e+00> : vector<4x16xf32>
    %490 = tpu.matmul %487, %489, %cst_566 {dimension_numbers = #tpu.dot_dimension_numbers<[1], [0], [0], [1], [0, 0, 1, 1], [], []>} : vector<4x8xf32>, vector<8x16xf32>, vector<4x16xf32> -> vector<4x16xf32>
    %491 = arith.addf %485, %490 : vector<4x16xf32>
    %c1_567 = arith.constant 1 : index
    %c0_568 = arith.constant 0 : index
    %c0_569 = arith.constant 0 : index
    %492 = vector.load %arg15[%c1_567, %c0_568, %c0_569] : memref<6x6x8xf32, #tpu.memory_space<vmem>>, vector<1x6x8xf32>
    %493 = vector.shape_cast %492 : vector<1x6x8xf32> to vector<6x8xf32>
    %c0_570 = arith.constant 0 : index
    %c0_571 = arith.constant 0 : index
    %c0_572 = arith.constant 0 : index
    %494 = vector.load %arg16[%c0_570, %c0_571, %c0_572] : memref<2x6x8xf32, #tpu.memory_space<vmem>>, vector<1x6x8xf32>
    %495 = vector.shape_cast %494 : vector<1x6x8xf32> to vector<6x8xf32>
    %496 = vector.shape_cast %493 : vector<6x8xf32> to vector<1x6x8xf32>
    tpu.vector_store %arg16[%c0_570, %c0_571, %c0_572], %496 {strides = array<i32>} : memref<2x6x8xf32, #tpu.memory_space<vmem>>, vector<1x6x8xf32>,
    %c3_573 = arith.constant 3 : index
    %c0_574 = arith.constant 0 : index
    %c0_575 = arith.constant 0 : index
    %497 = vector.load %arg15[%c3_573, %c0_574, %c0_575] : memref<6x6x8xf32, #tpu.memory_space<vmem>>, vector<1x6x8xf32>
    %498 = vector.shape_cast %497 : vector<1x6x8xf32> to vector<6x8xf32>
    %c1_576 = arith.constant 1 : index
    %c0_577 = arith.constant 0 : index
    %c0_578 = arith.constant 0 : index
    %499 = vector.load %arg16[%c1_576, %c0_577, %c0_578] : memref<2x6x8xf32, #tpu.memory_space<vmem>>, vector<1x6x8xf32>
    %500 = vector.shape_cast %499 : vector<1x6x8xf32> to vector<6x8xf32>
    %501 = vector.shape_cast %498 : vector<6x8xf32> to vector<1x6x8xf32>
    tpu.vector_store %arg16[%c1_576, %c0_577, %c0_578], %501 {strides = array<i32>} : memref<2x6x8xf32, #tpu.memory_space<vmem>>, vector<1x6x8xf32>,
    %c0_579 = arith.constant 0 : index
    %c0_580 = arith.constant 0 : index
    %c0_581 = arith.constant 0 : index
    %502 = tpu.strided_load %arg16[%c0_579, %c0_580, %c0_581] {strides = array<i32: 1, 2, 1>} : memref<2x6x8xf32, #tpu.memory_space<vmem>>, vector<2x2x8xf32>
    %503 = vector.shape_cast %502 : vector<2x2x8xf32> to vector<4x8xf32>
    %c4_582 = arith.constant 4 : index
    %c0_583 = arith.constant 0 : index
    %c0_584 = arith.constant 0 : index
    %504 = vector.load %arg6[%c4_582, %c0_583, %c0_584] : memref<16x8x16xf32, #tpu.memory_space<vmem>>, vector<1x8x16xf32>
    %505 = vector.shape_cast %504 : vector<1x8x16xf32> to vector<8x16xf32>
    %cst_585 = arith.constant dense<0.000000e+00> : vector<4x16xf32>
    %506 = tpu.matmul %503, %505, %cst_585 {dimension_numbers = #tpu.dot_dimension_numbers<[1], [0], [0], [1], [0, 0, 1, 1], [], []>} : vector<4x8xf32>, vector<8x16xf32>, vector<4x16xf32> -> vector<4x16xf32>
    %507 = arith.addf %491, %506 : vector<4x16xf32>
    %c0_586 = arith.constant 0 : index
    %c1_587 = arith.constant 1 : index
    %c0_588 = arith.constant 0 : index
    %508 = tpu.strided_load %arg16[%c0_586, %c1_587, %c0_588] {strides = array<i32: 1, 2, 1>} : memref<2x6x8xf32, #tpu.memory_space<vmem>>, vector<2x2x8xf32>
    %509 = vector.shape_cast %508 : vector<2x2x8xf32> to vector<4x8xf32>
    %c5_589 = arith.constant 5 : index
    %c0_590 = arith.constant 0 : index
    %c0_591 = arith.constant 0 : index
    %510 = vector.load %arg6[%c5_589, %c0_590, %c0_591] : memref<16x8x16xf32, #tpu.memory_space<vmem>>, vector<1x8x16xf32>
    %511 = vector.shape_cast %510 : vector<1x8x16xf32> to vector<8x16xf32>
    %cst_592 = arith.constant dense<0.000000e+00> : vector<4x16xf32>
    %512 = tpu.matmul %509, %511, %cst_592 {dimension_numbers = #tpu.dot_dimension_numbers<[1], [0], [0], [1], [0, 0, 1, 1], [], []>} : vector<4x8xf32>, vector<8x16xf32>, vector<4x16xf32> -> vector<4x16xf32>
    %513 = arith.addf %507, %512 : vector<4x16xf32>
    %c0_593 = arith.constant 0 : index
    %c2_594 = arith.constant 2 : index
    %c0_595 = arith.constant 0 : index
    %514 = tpu.strided_load %arg16[%c0_593, %c2_594, %c0_595] {strides = array<i32: 1, 2, 1>} : memref<2x6x8xf32, #tpu.memory_space<vmem>>, vector<2x2x8xf32>
    %515 = vector.shape_cast %514 : vector<2x2x8xf32> to vector<4x8xf32>
    %c6_596 = arith.constant 6 : index
    %c0_597 = arith.constant 0 : index
    %c0_598 = arith.constant 0 : index
    %516 = vector.load %arg6[%c6_596, %c0_597, %c0_598] : memref<16x8x16xf32, #tpu.memory_space<vmem>>, vector<1x8x16xf32>
    %517 = vector.shape_cast %516 : vector<1x8x16xf32> to vector<8x16xf32>
    %cst_599 = arith.constant dense<0.000000e+00> : vector<4x16xf32>
    %518 = tpu.matmul %515, %517, %cst_599 {dimension_numbers = #tpu.dot_dimension_numbers<[1], [0], [0], [1], [0, 0, 1, 1], [], []>} : vector<4x8xf32>, vector<8x16xf32>, vector<4x16xf32> -> vector<4x16xf32>
    %519 = arith.addf %513, %518 : vector<4x16xf32>
    %c0_600 = arith.constant 0 : index
    %c3_601 = arith.constant 3 : index
    %c0_602 = arith.constant 0 : index
    %520 = tpu.strided_load %arg16[%c0_600, %c3_601, %c0_602] {strides = array<i32: 1, 2, 1>} : memref<2x6x8xf32, #tpu.memory_space<vmem>>, vector<2x2x8xf32>
    %521 = vector.shape_cast %520 : vector<2x2x8xf32> to vector<4x8xf32>
    %c7_603 = arith.constant 7 : index
    %c0_604 = arith.constant 0 : index
    %c0_605 = arith.constant 0 : index
    %522 = vector.load %arg6[%c7_603, %c0_604, %c0_605] : memref<16x8x16xf32, #tpu.memory_space<vmem>>, vector<1x8x16xf32>
    %523 = vector.shape_cast %522 : vector<1x8x16xf32> to vector<8x16xf32>
    %cst_606 = arith.constant dense<0.000000e+00> : vector<4x16xf32>
    %524 = tpu.matmul %521, %523, %cst_606 {dimension_numbers = #tpu.dot_dimension_numbers<[1], [0], [0], [1], [0, 0, 1, 1], [], []>} : vector<4x8xf32>, vector<8x16xf32>, vector<4x16xf32> -> vector<4x16xf32>
    %525 = arith.addf %519, %524 : vector<4x16xf32>
    %c2_607 = arith.constant 2 : index
    %c0_608 = arith.constant 0 : index
    %c0_609 = arith.constant 0 : index
    %526 = vector.load %arg15[%c2_607, %c0_608, %c0_609] : memref<6x6x8xf32, #tpu.memory_space<vmem>>, vector<1x6x8xf32>
    %527 = vector.shape_cast %526 : vector<1x6x8xf32> to vector<6x8xf32>
    %c0_610 = arith.constant 0 : index
    %c0_611 = arith.constant 0 : index
    %c0_612 = arith.constant 0 : index
    %528 = vector.load %arg16[%c0_610, %c0_611, %c0_612] : memref<2x6x8xf32, #tpu.memory_space<vmem>>, vector<1x6x8xf32>
    %529 = vector.shape_cast %528 : vector<1x6x8xf32> to vector<6x8xf32>
    %530 = vector.shape_cast %527 : vector<6x8xf32> to vector<1x6x8xf32>
    tpu.vector_store %arg16[%c0_610, %c0_611, %c0_612], %530 {strides = array<i32>} : memref<2x6x8xf32, #tpu.memory_space<vmem>>, vector<1x6x8xf32>,
    %c4_613 = arith.constant 4 : index
    %c0_614 = arith.constant 0 : index
    %c0_615 = arith.constant 0 : index
    %531 = vector.load %arg15[%c4_613, %c0_614, %c0_615] : memref<6x6x8xf32, #tpu.memory_space<vmem>>, vector<1x6x8xf32>
    %532 = vector.shape_cast %531 : vector<1x6x8xf32> to vector<6x8xf32>
    %c1_616 = arith.constant 1 : index
    %c0_617 = arith.constant 0 : index
    %c0_618 = arith.constant 0 : index
    %533 = vector.load %arg16[%c1_616, %c0_617, %c0_618] : memref<2x6x8xf32, #tpu.memory_space<vmem>>, vector<1x6x8xf32>
    %534 = vector.shape_cast %533 : vector<1x6x8xf32> to vector<6x8xf32>
    %535 = vector.shape_cast %532 : vector<6x8xf32> to vector<1x6x8xf32>
    tpu.vector_store %arg16[%c1_616, %c0_617, %c0_618], %535 {strides = array<i32>} : memref<2x6x8xf32, #tpu.memory_space<vmem>>, vector<1x6x8xf32>,
    %c0_619 = arith.constant 0 : index
    %c0_620 = arith.constant 0 : index
    %c0_621 = arith.constant 0 : index
    %536 = tpu.strided_load %arg16[%c0_619, %c0_620, %c0_621] {strides = array<i32: 1, 2, 1>} : memref<2x6x8xf32, #tpu.memory_space<vmem>>, vector<2x2x8xf32>
    %537 = vector.shape_cast %536 : vector<2x2x8xf32> to vector<4x8xf32>
    %c8_622 = arith.constant 8 : index
    %c0_623 = arith.constant 0 : index
    %c0_624 = arith.constant 0 : index
    %538 = vector.load %arg6[%c8_622, %c0_623, %c0_624] : memref<16x8x16xf32, #tpu.memory_space<vmem>>, vector<1x8x16xf32>
    %539 = vector.shape_cast %538 : vector<1x8x16xf32> to vector<8x16xf32>
    %cst_625 = arith.constant dense<0.000000e+00> : vector<4x16xf32>
    %540 = tpu.matmul %537, %539, %cst_625 {dimension_numbers = #tpu.dot_dimension_numbers<[1], [0], [0], [1], [0, 0, 1, 1], [], []>} : vector<4x8xf32>, vector<8x16xf32>, vector<4x16xf32> -> vector<4x16xf32>
    %541 = arith.addf %525, %540 : vector<4x16xf32>
    %c0_626 = arith.constant 0 : index
    %c1_627 = arith.constant 1 : index
    %c0_628 = arith.constant 0 : index
    %542 = tpu.strided_load %arg16[%c0_626, %c1_627, %c0_628] {strides = array<i32: 1, 2, 1>} : memref<2x6x8xf32, #tpu.memory_space<vmem>>, vector<2x2x8xf32>
    %543 = vector.shape_cast %542 : vector<2x2x8xf32> to vector<4x8xf32>
    %c9_629 = arith.constant 9 : index
    %c0_630 = arith.constant 0 : index
    %c0_631 = arith.constant 0 : index
    %544 = vector.load %arg6[%c9_629, %c0_630, %c0_631] : memref<16x8x16xf32, #tpu.memory_space<vmem>>, vector<1x8x16xf32>
    %545 = vector.shape_cast %544 : vector<1x8x16xf32> to vector<8x16xf32>
    %cst_632 = arith.constant dense<0.000000e+00> : vector<4x16xf32>
    %546 = tpu.matmul %543, %545, %cst_632 {dimension_numbers = #tpu.dot_dimension_numbers<[1], [0], [0], [1], [0, 0, 1, 1], [], []>} : vector<4x8xf32>, vector<8x16xf32>, vector<4x16xf32> -> vector<4x16xf32>
    %547 = arith.addf %541, %546 : vector<4x16xf32>
    %c0_633 = arith.constant 0 : index
    %c2_634 = arith.constant 2 : index
    %c0_635 = arith.constant 0 : index
    %548 = tpu.strided_load %arg16[%c0_633, %c2_634, %c0_635] {strides = array<i32: 1, 2, 1>} : memref<2x6x8xf32, #tpu.memory_space<vmem>>, vector<2x2x8xf32>
    %549 = vector.shape_cast %548 : vector<2x2x8xf32> to vector<4x8xf32>
    %c10_636 = arith.constant 10 : index
    %c0_637 = arith.constant 0 : index
    %c0_638 = arith.constant 0 : index
    %550 = vector.load %arg6[%c10_636, %c0_637, %c0_638] : memref<16x8x16xf32, #tpu.memory_space<vmem>>, vector<1x8x16xf32>
    %551 = vector.shape_cast %550 : vector<1x8x16xf32> to vector<8x16xf32>
    %cst_639 = arith.constant dense<0.000000e+00> : vector<4x16xf32>
    %552 = tpu.matmul %549, %551, %cst_639 {dimension_numbers = #tpu.dot_dimension_numbers<[1], [0], [0], [1], [0, 0, 1, 1], [], []>} : vector<4x8xf32>, vector<8x16xf32>, vector<4x16xf32> -> vector<4x16xf32>
    %553 = arith.addf %547, %552 : vector<4x16xf32>
    %c0_640 = arith.constant 0 : index
    %c3_641 = arith.constant 3 : index
    %c0_642 = arith.constant 0 : index
    %554 = tpu.strided_load %arg16[%c0_640, %c3_641, %c0_642] {strides = array<i32: 1, 2, 1>} : memref<2x6x8xf32, #tpu.memory_space<vmem>>, vector<2x2x8xf32>
    %555 = vector.shape_cast %554 : vector<2x2x8xf32> to vector<4x8xf32>
    %c11_643 = arith.constant 11 : index
    %c0_644 = arith.constant 0 : index
    %c0_645 = arith.constant 0 : index
    %556 = vector.load %arg6[%c11_643, %c0_644, %c0_645] : memref<16x8x16xf32, #tpu.memory_space<vmem>>, vector<1x8x16xf32>
    %557 = vector.shape_cast %556 : vector<1x8x16xf32> to vector<8x16xf32>
    %cst_646 = arith.constant dense<0.000000e+00> : vector<4x16xf32>
    %558 = tpu.matmul %555, %557, %cst_646 {dimension_numbers = #tpu.dot_dimension_numbers<[1], [0], [0], [1], [0, 0, 1, 1], [], []>} : vector<4x8xf32>, vector<8x16xf32>, vector<4x16xf32> -> vector<4x16xf32>
    %559 = arith.addf %553, %558 : vector<4x16xf32>
    %c3_647 = arith.constant 3 : index
    %c0_648 = arith.constant 0 : index
    %c0_649 = arith.constant 0 : index
    %560 = vector.load %arg15[%c3_647, %c0_648, %c0_649] : memref<6x6x8xf32, #tpu.memory_space<vmem>>, vector<1x6x8xf32>
    %561 = vector.shape_cast %560 : vector<1x6x8xf32> to vector<6x8xf32>
    %c0_650 = arith.constant 0 : index
    %c0_651 = arith.constant 0 : index
    %c0_652 = arith.constant 0 : index
    %562 = vector.load %arg16[%c0_650, %c0_651, %c0_652] : memref<2x6x8xf32, #tpu.memory_space<vmem>>, vector<1x6x8xf32>
    %563 = vector.shape_cast %562 : vector<1x6x8xf32> to vector<6x8xf32>
    %564 = vector.shape_cast %561 : vector<6x8xf32> to vector<1x6x8xf32>
    tpu.vector_store %arg16[%c0_650, %c0_651, %c0_652], %564 {strides = array<i32>} : memref<2x6x8xf32, #tpu.memory_space<vmem>>, vector<1x6x8xf32>,
    %c5_653 = arith.constant 5 : index
    %c0_654 = arith.constant 0 : index
    %c0_655 = arith.constant 0 : index
    %565 = vector.load %arg15[%c5_653, %c0_654, %c0_655] : memref<6x6x8xf32, #tpu.memory_space<vmem>>, vector<1x6x8xf32>
    %566 = vector.shape_cast %565 : vector<1x6x8xf32> to vector<6x8xf32>
    %c1_656 = arith.constant 1 : index
    %c0_657 = arith.constant 0 : index
    %c0_658 = arith.constant 0 : index
    %567 = vector.load %arg16[%c1_656, %c0_657, %c0_658] : memref<2x6x8xf32, #tpu.memory_space<vmem>>, vector<1x6x8xf32>
    %568 = vector.shape_cast %567 : vector<1x6x8xf32> to vector<6x8xf32>
    %569 = vector.shape_cast %566 : vector<6x8xf32> to vector<1x6x8xf32>
    tpu.vector_store %arg16[%c1_656, %c0_657, %c0_658], %569 {strides = array<i32>} : memref<2x6x8xf32, #tpu.memory_space<vmem>>, vector<1x6x8xf32>,
    %c0_659 = arith.constant 0 : index
    %c0_660 = arith.constant 0 : index
    %c0_661 = arith.constant 0 : index
    %570 = tpu.strided_load %arg16[%c0_659, %c0_660, %c0_661] {strides = array<i32: 1, 2, 1>} : memref<2x6x8xf32, #tpu.memory_space<vmem>>, vector<2x2x8xf32>
    %571 = vector.shape_cast %570 : vector<2x2x8xf32> to vector<4x8xf32>
    %c12_662 = arith.constant 12 : index
    %c0_663 = arith.constant 0 : index
    %c0_664 = arith.constant 0 : index
    %572 = vector.load %arg6[%c12_662, %c0_663, %c0_664] : memref<16x8x16xf32, #tpu.memory_space<vmem>>, vector<1x8x16xf32>
    %573 = vector.shape_cast %572 : vector<1x8x16xf32> to vector<8x16xf32>
    %cst_665 = arith.constant dense<0.000000e+00> : vector<4x16xf32>
    %574 = tpu.matmul %571, %573, %cst_665 {dimension_numbers = #tpu.dot_dimension_numbers<[1], [0], [0], [1], [0, 0, 1, 1], [], []>} : vector<4x8xf32>, vector<8x16xf32>, vector<4x16xf32> -> vector<4x16xf32>
    %575 = arith.addf %559, %574 : vector<4x16xf32>
    %c0_666 = arith.constant 0 : index
    %c1_667 = arith.constant 1 : index
    %c0_668 = arith.constant 0 : index
    %576 = tpu.strided_load %arg16[%c0_666, %c1_667, %c0_668] {strides = array<i32: 1, 2, 1>} : memref<2x6x8xf32, #tpu.memory_space<vmem>>, vector<2x2x8xf32>
    %577 = vector.shape_cast %576 : vector<2x2x8xf32> to vector<4x8xf32>
    %c13_669 = arith.constant 13 : index
    %c0_670 = arith.constant 0 : index
    %c0_671 = arith.constant 0 : index
    %578 = vector.load %arg6[%c13_669, %c0_670, %c0_671] : memref<16x8x16xf32, #tpu.memory_space<vmem>>, vector<1x8x16xf32>
    %579 = vector.shape_cast %578 : vector<1x8x16xf32> to vector<8x16xf32>
    %cst_672 = arith.constant dense<0.000000e+00> : vector<4x16xf32>
    %580 = tpu.matmul %577, %579, %cst_672 {dimension_numbers = #tpu.dot_dimension_numbers<[1], [0], [0], [1], [0, 0, 1, 1], [], []>} : vector<4x8xf32>, vector<8x16xf32>, vector<4x16xf32> -> vector<4x16xf32>
    %581 = arith.addf %575, %580 : vector<4x16xf32>
    %c0_673 = arith.constant 0 : index
    %c2_674 = arith.constant 2 : index
    %c0_675 = arith.constant 0 : index
    %582 = tpu.strided_load %arg16[%c0_673, %c2_674, %c0_675] {strides = array<i32: 1, 2, 1>} : memref<2x6x8xf32, #tpu.memory_space<vmem>>, vector<2x2x8xf32>
    %583 = vector.shape_cast %582 : vector<2x2x8xf32> to vector<4x8xf32>
    %c14_676 = arith.constant 14 : index
    %c0_677 = arith.constant 0 : index
    %c0_678 = arith.constant 0 : index
    %584 = vector.load %arg6[%c14_676, %c0_677, %c0_678] : memref<16x8x16xf32, #tpu.memory_space<vmem>>, vector<1x8x16xf32>
    %585 = vector.shape_cast %584 : vector<1x8x16xf32> to vector<8x16xf32>
    %cst_679 = arith.constant dense<0.000000e+00> : vector<4x16xf32>
    %586 = tpu.matmul %583, %585, %cst_679 {dimension_numbers = #tpu.dot_dimension_numbers<[1], [0], [0], [1], [0, 0, 1, 1], [], []>} : vector<4x8xf32>, vector<8x16xf32>, vector<4x16xf32> -> vector<4x16xf32>
    %587 = arith.addf %581, %586 : vector<4x16xf32>
    %c0_680 = arith.constant 0 : index
    %c3_681 = arith.constant 3 : index
    %c0_682 = arith.constant 0 : index
    %588 = tpu.strided_load %arg16[%c0_680, %c3_681, %c0_682] {strides = array<i32: 1, 2, 1>} : memref<2x6x8xf32, #tpu.memory_space<vmem>>, vector<2x2x8xf32>
    %589 = vector.shape_cast %588 : vector<2x2x8xf32> to vector<4x8xf32>
    %c15_683 = arith.constant 15 : index
    %c0_684 = arith.constant 0 : index
    %c0_685 = arith.constant 0 : index
    %590 = vector.load %arg6[%c15_683, %c0_684, %c0_685] : memref<16x8x16xf32, #tpu.memory_space<vmem>>, vector<1x8x16xf32>
    %591 = vector.shape_cast %590 : vector<1x8x16xf32> to vector<8x16xf32>
    %cst_686 = arith.constant dense<0.000000e+00> : vector<4x16xf32>
    %592 = tpu.matmul %589, %591, %cst_686 {dimension_numbers = #tpu.dot_dimension_numbers<[1], [0], [0], [1], [0, 0, 1, 1], [], []>} : vector<4x8xf32>, vector<8x16xf32>, vector<4x16xf32> -> vector<4x16xf32>
    %593 = arith.addf %587, %592 : vector<4x16xf32>
    %c0_687 = arith.constant 0 : index
    %c0_688 = arith.constant 0 : index
    %594 = vector.load %arg7[%c0_687, %c0_688] : memref<1x16xf32, #tpu.memory_space<vmem>>, vector<1x16xf32>
    %595 = vector.broadcast %594 : vector<1x16xf32> to vector<4x16xf32>
    %596 = arith.addf %593, %595 : vector<4x16xf32>
    %cst_689 = arith.constant 0.000000e+00 : f32
    %597 = vector.broadcast %cst_689 : f32 to vector<4x16xf32>
    %598 = arith.maximumf %596, %597 : vector<4x16xf32>
    %599 = vector.shape_cast %598 : vector<4x16xf32> to vector<2x2x16xf32>
    %cst_690 = arith.constant 0.000000e+00 : f32
    %600 = vector.broadcast %cst_690 : f32 to vector<4x4x16xf32>
    %c0_691 = arith.constant 0 : index
    %c0_692 = arith.constant 0 : index
    %c0_693 = arith.constant 0 : index
    %601 = vector.load %arg17[%c0_691, %c0_692, %c0_693] : memref<4x4x16xf32, #tpu.memory_space<vmem>>, vector<4x4x16xf32>
    tpu.vector_store %arg17[%c0_691, %c0_692, %c0_693], %600 {strides = array<i32>} : memref<4x4x16xf32, #tpu.memory_space<vmem>>, vector<4x4x16xf32>,
    %c1_694 = arith.constant 1 : index
    %c1_695 = arith.constant 1 : index
    %c0_696 = arith.constant 0 : index
    %602 = vector.load %arg17[%c1_694, %c1_695, %c0_696] : memref<4x4x16xf32, #tpu.memory_space<vmem>>, vector<2x2x16xf32>
    tpu.vector_store %arg17[%c1_694, %c1_695, %c0_696], %599 {strides = array<i32>} : memref<4x4x16xf32, #tpu.memory_space<vmem>>, vector<2x2x16xf32>,
    %cst_697 = arith.constant 0.000000e+00 : f32
    %603 = vector.broadcast %cst_697 : f32 to vector<1x32xf32>
    %c0_698 = arith.constant 0 : index
    %c0_699 = arith.constant 0 : index
    %c0_700 = arith.constant 0 : index
    %604 = vector.load %arg17[%c0_698, %c0_699, %c0_700] : memref<4x4x16xf32, #tpu.memory_space<vmem>>, vector<1x4x16xf32>
    %605 = vector.shape_cast %604 : vector<1x4x16xf32> to vector<4x16xf32>
    %c0_701 = arith.constant 0 : index
    %c0_702 = arith.constant 0 : index
    %c0_703 = arith.constant 0 : index
    %606 = vector.load %arg18[%c0_701, %c0_702, %c0_703] : memref<1x4x16xf32, #tpu.memory_space<vmem>>, vector<1x4x16xf32>
    %607 = vector.shape_cast %606 : vector<1x4x16xf32> to vector<4x16xf32>
    %608 = vector.shape_cast %605 : vector<4x16xf32> to vector<1x4x16xf32>
    tpu.vector_store %arg18[%c0_701, %c0_702, %c0_703], %608 {strides = array<i32>} : memref<1x4x16xf32, #tpu.memory_space<vmem>>, vector<1x4x16xf32>,
    %c0_704 = arith.constant 0 : index
    %c0_705 = arith.constant 0 : index
    %c0_706 = arith.constant 0 : index
    %609 = tpu.strided_load %arg18[%c0_704, %c0_705, %c0_706] {strides = array<i32: 1, 2, 1>} : memref<1x4x16xf32, #tpu.memory_space<vmem>>, vector<1x1x16xf32>
    %610 = vector.shape_cast %609 : vector<1x1x16xf32> to vector<1x16xf32>
    %c0_707 = arith.constant 0 : index
    %c0_708 = arith.constant 0 : index
    %c0_709 = arith.constant 0 : index
    %611 = vector.load %arg8[%c0_707, %c0_708, %c0_709] : memref<16x16x32xf32, #tpu.memory_space<vmem>>, vector<1x16x32xf32>
    %612 = vector.shape_cast %611 : vector<1x16x32xf32> to vector<16x32xf32>
    %cst_710 = arith.constant dense<0.000000e+00> : vector<1x32xf32>
    %613 = tpu.matmul %610, %612, %cst_710 {dimension_numbers = #tpu.dot_dimension_numbers<[1], [0], [0], [1], [0, 0, 1, 1], [], []>} : vector<1x16xf32>, vector<16x32xf32>, vector<1x32xf32> -> vector<1x32xf32>
    %614 = arith.addf %603, %613 : vector<1x32xf32>
    %c0_711 = arith.constant 0 : index
    %c1_712 = arith.constant 1 : index
    %c0_713 = arith.constant 0 : index
    %615 = tpu.strided_load %arg18[%c0_711, %c1_712, %c0_713] {strides = array<i32: 1, 2, 1>} : memref<1x4x16xf32, #tpu.memory_space<vmem>>, vector<1x1x16xf32>
    %616 = vector.shape_cast %615 : vector<1x1x16xf32> to vector<1x16xf32>
    %c1_714 = arith.constant 1 : index
    %c0_715 = arith.constant 0 : index
    %c0_716 = arith.constant 0 : index
    %617 = vector.load %arg8[%c1_714, %c0_715, %c0_716] : memref<16x16x32xf32, #tpu.memory_space<vmem>>, vector<1x16x32xf32>
    %618 = vector.shape_cast %617 : vector<1x16x32xf32> to vector<16x32xf32>
    %cst_717 = arith.constant dense<0.000000e+00> : vector<1x32xf32>
    %619 = tpu.matmul %616, %618, %cst_717 {dimension_numbers = #tpu.dot_dimension_numbers<[1], [0], [0], [1], [0, 0, 1, 1], [], []>} : vector<1x16xf32>, vector<16x32xf32>, vector<1x32xf32> -> vector<1x32xf32>
    %620 = arith.addf %614, %619 : vector<1x32xf32>
    %c0_718 = arith.constant 0 : index
    %c2_719 = arith.constant 2 : index
    %c0_720 = arith.constant 0 : index
    %621 = tpu.strided_load %arg18[%c0_718, %c2_719, %c0_720] {strides = array<i32: 1, 2, 1>} : memref<1x4x16xf32, #tpu.memory_space<vmem>>, vector<1x1x16xf32>
    %622 = vector.shape_cast %621 : vector<1x1x16xf32> to vector<1x16xf32>
    %c2_721 = arith.constant 2 : index
    %c0_722 = arith.constant 0 : index
    %c0_723 = arith.constant 0 : index
    %623 = vector.load %arg8[%c2_721, %c0_722, %c0_723] : memref<16x16x32xf32, #tpu.memory_space<vmem>>, vector<1x16x32xf32>
    %624 = vector.shape_cast %623 : vector<1x16x32xf32> to vector<16x32xf32>
    %cst_724 = arith.constant dense<0.000000e+00> : vector<1x32xf32>
    %625 = tpu.matmul %622, %624, %cst_724 {dimension_numbers = #tpu.dot_dimension_numbers<[1], [0], [0], [1], [0, 0, 1, 1], [], []>} : vector<1x16xf32>, vector<16x32xf32>, vector<1x32xf32> -> vector<1x32xf32>
    %626 = arith.addf %620, %625 : vector<1x32xf32>
    %c0_725 = arith.constant 0 : index
    %c3_726 = arith.constant 3 : index
    %c0_727 = arith.constant 0 : index
    %627 = tpu.strided_load %arg18[%c0_725, %c3_726, %c0_727] {strides = array<i32: 1, 2, 1>} : memref<1x4x16xf32, #tpu.memory_space<vmem>>, vector<1x1x16xf32>
    %628 = vector.shape_cast %627 : vector<1x1x16xf32> to vector<1x16xf32>
    %c3_728 = arith.constant 3 : index
    %c0_729 = arith.constant 0 : index
    %c0_730 = arith.constant 0 : index
    %629 = vector.load %arg8[%c3_728, %c0_729, %c0_730] : memref<16x16x32xf32, #tpu.memory_space<vmem>>, vector<1x16x32xf32>
    %630 = vector.shape_cast %629 : vector<1x16x32xf32> to vector<16x32xf32>
    %cst_731 = arith.constant dense<0.000000e+00> : vector<1x32xf32>
    %631 = tpu.matmul %628, %630, %cst_731 {dimension_numbers = #tpu.dot_dimension_numbers<[1], [0], [0], [1], [0, 0, 1, 1], [], []>} : vector<1x16xf32>, vector<16x32xf32>, vector<1x32xf32> -> vector<1x32xf32>
    %632 = arith.addf %626, %631 : vector<1x32xf32>
    %c1_732 = arith.constant 1 : index
    %c0_733 = arith.constant 0 : index
    %c0_734 = arith.constant 0 : index
    %633 = vector.load %arg17[%c1_732, %c0_733, %c0_734] : memref<4x4x16xf32, #tpu.memory_space<vmem>>, vector<1x4x16xf32>
    %634 = vector.shape_cast %633 : vector<1x4x16xf32> to vector<4x16xf32>
    %c0_735 = arith.constant 0 : index
    %c0_736 = arith.constant 0 : index
    %c0_737 = arith.constant 0 : index
    %635 = vector.load %arg18[%c0_735, %c0_736, %c0_737] : memref<1x4x16xf32, #tpu.memory_space<vmem>>, vector<1x4x16xf32>
    %636 = vector.shape_cast %635 : vector<1x4x16xf32> to vector<4x16xf32>
    %637 = vector.shape_cast %634 : vector<4x16xf32> to vector<1x4x16xf32>
    tpu.vector_store %arg18[%c0_735, %c0_736, %c0_737], %637 {strides = array<i32>} : memref<1x4x16xf32, #tpu.memory_space<vmem>>, vector<1x4x16xf32>,
    %c0_738 = arith.constant 0 : index
    %c0_739 = arith.constant 0 : index
    %c0_740 = arith.constant 0 : index
    %638 = tpu.strided_load %arg18[%c0_738, %c0_739, %c0_740] {strides = array<i32: 1, 2, 1>} : memref<1x4x16xf32, #tpu.memory_space<vmem>>, vector<1x1x16xf32>
    %639 = vector.shape_cast %638 : vector<1x1x16xf32> to vector<1x16xf32>
    %c4_741 = arith.constant 4 : index
    %c0_742 = arith.constant 0 : index
    %c0_743 = arith.constant 0 : index
    %640 = vector.load %arg8[%c4_741, %c0_742, %c0_743] : memref<16x16x32xf32, #tpu.memory_space<vmem>>, vector<1x16x32xf32>
    %641 = vector.shape_cast %640 : vector<1x16x32xf32> to vector<16x32xf32>
    %cst_744 = arith.constant dense<0.000000e+00> : vector<1x32xf32>
    %642 = tpu.matmul %639, %641, %cst_744 {dimension_numbers = #tpu.dot_dimension_numbers<[1], [0], [0], [1], [0, 0, 1, 1], [], []>} : vector<1x16xf32>, vector<16x32xf32>, vector<1x32xf32> -> vector<1x32xf32>
    %643 = arith.addf %632, %642 : vector<1x32xf32>
    %c0_745 = arith.constant 0 : index
    %c1_746 = arith.constant 1 : index
    %c0_747 = arith.constant 0 : index
    %644 = tpu.strided_load %arg18[%c0_745, %c1_746, %c0_747] {strides = array<i32: 1, 2, 1>} : memref<1x4x16xf32, #tpu.memory_space<vmem>>, vector<1x1x16xf32>
    %645 = vector.shape_cast %644 : vector<1x1x16xf32> to vector<1x16xf32>
    %c5_748 = arith.constant 5 : index
    %c0_749 = arith.constant 0 : index
    %c0_750 = arith.constant 0 : index
    %646 = vector.load %arg8[%c5_748, %c0_749, %c0_750] : memref<16x16x32xf32, #tpu.memory_space<vmem>>, vector<1x16x32xf32>
    %647 = vector.shape_cast %646 : vector<1x16x32xf32> to vector<16x32xf32>
    %cst_751 = arith.constant dense<0.000000e+00> : vector<1x32xf32>
    %648 = tpu.matmul %645, %647, %cst_751 {dimension_numbers = #tpu.dot_dimension_numbers<[1], [0], [0], [1], [0, 0, 1, 1], [], []>} : vector<1x16xf32>, vector<16x32xf32>, vector<1x32xf32> -> vector<1x32xf32>
    %649 = arith.addf %643, %648 : vector<1x32xf32>
    %c0_752 = arith.constant 0 : index
    %c2_753 = arith.constant 2 : index
    %c0_754 = arith.constant 0 : index
    %650 = tpu.strided_load %arg18[%c0_752, %c2_753, %c0_754] {strides = array<i32: 1, 2, 1>} : memref<1x4x16xf32, #tpu.memory_space<vmem>>, vector<1x1x16xf32>
    %651 = vector.shape_cast %650 : vector<1x1x16xf32> to vector<1x16xf32>
    %c6_755 = arith.constant 6 : index
    %c0_756 = arith.constant 0 : index
    %c0_757 = arith.constant 0 : index
    %652 = vector.load %arg8[%c6_755, %c0_756, %c0_757] : memref<16x16x32xf32, #tpu.memory_space<vmem>>, vector<1x16x32xf32>
    %653 = vector.shape_cast %652 : vector<1x16x32xf32> to vector<16x32xf32>
    %cst_758 = arith.constant dense<0.000000e+00> : vector<1x32xf32>
    %654 = tpu.matmul %651, %653, %cst_758 {dimension_numbers = #tpu.dot_dimension_numbers<[1], [0], [0], [1], [0, 0, 1, 1], [], []>} : vector<1x16xf32>, vector<16x32xf32>, vector<1x32xf32> -> vector<1x32xf32>
    %655 = arith.addf %649, %654 : vector<1x32xf32>
    %c0_759 = arith.constant 0 : index
    %c3_760 = arith.constant 3 : index
    %c0_761 = arith.constant 0 : index
    %656 = tpu.strided_load %arg18[%c0_759, %c3_760, %c0_761] {strides = array<i32: 1, 2, 1>} : memref<1x4x16xf32, #tpu.memory_space<vmem>>, vector<1x1x16xf32>
    %657 = vector.shape_cast %656 : vector<1x1x16xf32> to vector<1x16xf32>
    %c7_762 = arith.constant 7 : index
    %c0_763 = arith.constant 0 : index
    %c0_764 = arith.constant 0 : index
    %658 = vector.load %arg8[%c7_762, %c0_763, %c0_764] : memref<16x16x32xf32, #tpu.memory_space<vmem>>, vector<1x16x32xf32>
    %659 = vector.shape_cast %658 : vector<1x16x32xf32> to vector<16x32xf32>
    %cst_765 = arith.constant dense<0.000000e+00> : vector<1x32xf32>
    %660 = tpu.matmul %657, %659, %cst_765 {dimension_numbers = #tpu.dot_dimension_numbers<[1], [0], [0], [1], [0, 0, 1, 1], [], []>} : vector<1x16xf32>, vector<16x32xf32>, vector<1x32xf32> -> vector<1x32xf32>
    %661 = arith.addf %655, %660 : vector<1x32xf32>
    %c2_766 = arith.constant 2 : index
    %c0_767 = arith.constant 0 : index
    %c0_768 = arith.constant 0 : index
    %662 = vector.load %arg17[%c2_766, %c0_767, %c0_768] : memref<4x4x16xf32, #tpu.memory_space<vmem>>, vector<1x4x16xf32>
    %663 = vector.shape_cast %662 : vector<1x4x16xf32> to vector<4x16xf32>
    %c0_769 = arith.constant 0 : index
    %c0_770 = arith.constant 0 : index
    %c0_771 = arith.constant 0 : index
    %664 = vector.load %arg18[%c0_769, %c0_770, %c0_771] : memref<1x4x16xf32, #tpu.memory_space<vmem>>, vector<1x4x16xf32>
    %665 = vector.shape_cast %664 : vector<1x4x16xf32> to vector<4x16xf32>
    %666 = vector.shape_cast %663 : vector<4x16xf32> to vector<1x4x16xf32>
    tpu.vector_store %arg18[%c0_769, %c0_770, %c0_771], %666 {strides = array<i32>} : memref<1x4x16xf32, #tpu.memory_space<vmem>>, vector<1x4x16xf32>,
    %c0_772 = arith.constant 0 : index
    %c0_773 = arith.constant 0 : index
    %c0_774 = arith.constant 0 : index
    %667 = tpu.strided_load %arg18[%c0_772, %c0_773, %c0_774] {strides = array<i32: 1, 2, 1>} : memref<1x4x16xf32, #tpu.memory_space<vmem>>, vector<1x1x16xf32>
    %668 = vector.shape_cast %667 : vector<1x1x16xf32> to vector<1x16xf32>
    %c8_775 = arith.constant 8 : index
    %c0_776 = arith.constant 0 : index
    %c0_777 = arith.constant 0 : index
    %669 = vector.load %arg8[%c8_775, %c0_776, %c0_777] : memref<16x16x32xf32, #tpu.memory_space<vmem>>, vector<1x16x32xf32>
    %670 = vector.shape_cast %669 : vector<1x16x32xf32> to vector<16x32xf32>
    %cst_778 = arith.constant dense<0.000000e+00> : vector<1x32xf32>
    %671 = tpu.matmul %668, %670, %cst_778 {dimension_numbers = #tpu.dot_dimension_numbers<[1], [0], [0], [1], [0, 0, 1, 1], [], []>} : vector<1x16xf32>, vector<16x32xf32>, vector<1x32xf32> -> vector<1x32xf32>
    %672 = arith.addf %661, %671 : vector<1x32xf32>
    %c0_779 = arith.constant 0 : index
    %c1_780 = arith.constant 1 : index
    %c0_781 = arith.constant 0 : index
    %673 = tpu.strided_load %arg18[%c0_779, %c1_780, %c0_781] {strides = array<i32: 1, 2, 1>} : memref<1x4x16xf32, #tpu.memory_space<vmem>>, vector<1x1x16xf32>
    %674 = vector.shape_cast %673 : vector<1x1x16xf32> to vector<1x16xf32>
    %c9_782 = arith.constant 9 : index
    %c0_783 = arith.constant 0 : index
    %c0_784 = arith.constant 0 : index
    %675 = vector.load %arg8[%c9_782, %c0_783, %c0_784] : memref<16x16x32xf32, #tpu.memory_space<vmem>>, vector<1x16x32xf32>
    %676 = vector.shape_cast %675 : vector<1x16x32xf32> to vector<16x32xf32>
    %cst_785 = arith.constant dense<0.000000e+00> : vector<1x32xf32>
    %677 = tpu.matmul %674, %676, %cst_785 {dimension_numbers = #tpu.dot_dimension_numbers<[1], [0], [0], [1], [0, 0, 1, 1], [], []>} : vector<1x16xf32>, vector<16x32xf32>, vector<1x32xf32> -> vector<1x32xf32>
    %678 = arith.addf %672, %677 : vector<1x32xf32>
    %c0_786 = arith.constant 0 : index
    %c2_787 = arith.constant 2 : index
    %c0_788 = arith.constant 0 : index
    %679 = tpu.strided_load %arg18[%c0_786, %c2_787, %c0_788] {strides = array<i32: 1, 2, 1>} : memref<1x4x16xf32, #tpu.memory_space<vmem>>, vector<1x1x16xf32>
    %680 = vector.shape_cast %679 : vector<1x1x16xf32> to vector<1x16xf32>
    %c10_789 = arith.constant 10 : index
    %c0_790 = arith.constant 0 : index
    %c0_791 = arith.constant 0 : index
    %681 = vector.load %arg8[%c10_789, %c0_790, %c0_791] : memref<16x16x32xf32, #tpu.memory_space<vmem>>, vector<1x16x32xf32>
    %682 = vector.shape_cast %681 : vector<1x16x32xf32> to vector<16x32xf32>
    %cst_792 = arith.constant dense<0.000000e+00> : vector<1x32xf32>
    %683 = tpu.matmul %680, %682, %cst_792 {dimension_numbers = #tpu.dot_dimension_numbers<[1], [0], [0], [1], [0, 0, 1, 1], [], []>} : vector<1x16xf32>, vector<16x32xf32>, vector<1x32xf32> -> vector<1x32xf32>
    %684 = arith.addf %678, %683 : vector<1x32xf32>
    %c0_793 = arith.constant 0 : index
    %c3_794 = arith.constant 3 : index
    %c0_795 = arith.constant 0 : index
    %685 = tpu.strided_load %arg18[%c0_793, %c3_794, %c0_795] {strides = array<i32: 1, 2, 1>} : memref<1x4x16xf32, #tpu.memory_space<vmem>>, vector<1x1x16xf32>
    %686 = vector.shape_cast %685 : vector<1x1x16xf32> to vector<1x16xf32>
    %c11_796 = arith.constant 11 : index
    %c0_797 = arith.constant 0 : index
    %c0_798 = arith.constant 0 : index
    %687 = vector.load %arg8[%c11_796, %c0_797, %c0_798] : memref<16x16x32xf32, #tpu.memory_space<vmem>>, vector<1x16x32xf32>
    %688 = vector.shape_cast %687 : vector<1x16x32xf32> to vector<16x32xf32>
    %cst_799 = arith.constant dense<0.000000e+00> : vector<1x32xf32>
    %689 = tpu.matmul %686, %688, %cst_799 {dimension_numbers = #tpu.dot_dimension_numbers<[1], [0], [0], [1], [0, 0, 1, 1], [], []>} : vector<1x16xf32>, vector<16x32xf32>, vector<1x32xf32> -> vector<1x32xf32>
    %690 = arith.addf %684, %689 : vector<1x32xf32>
    %c3_800 = arith.constant 3 : index
    %c0_801 = arith.constant 0 : index
    %c0_802 = arith.constant 0 : index
    %691 = vector.load %arg17[%c3_800, %c0_801, %c0_802] : memref<4x4x16xf32, #tpu.memory_space<vmem>>, vector<1x4x16xf32>
    %692 = vector.shape_cast %691 : vector<1x4x16xf32> to vector<4x16xf32>
    %c0_803 = arith.constant 0 : index
    %c0_804 = arith.constant 0 : index
    %c0_805 = arith.constant 0 : index
    %693 = vector.load %arg18[%c0_803, %c0_804, %c0_805] : memref<1x4x16xf32, #tpu.memory_space<vmem>>, vector<1x4x16xf32>
    %694 = vector.shape_cast %693 : vector<1x4x16xf32> to vector<4x16xf32>
    %695 = vector.shape_cast %692 : vector<4x16xf32> to vector<1x4x16xf32>
    tpu.vector_store %arg18[%c0_803, %c0_804, %c0_805], %695 {strides = array<i32>} : memref<1x4x16xf32, #tpu.memory_space<vmem>>, vector<1x4x16xf32>,
    %c0_806 = arith.constant 0 : index
    %c0_807 = arith.constant 0 : index
    %c0_808 = arith.constant 0 : index
    %696 = tpu.strided_load %arg18[%c0_806, %c0_807, %c0_808] {strides = array<i32: 1, 2, 1>} : memref<1x4x16xf32, #tpu.memory_space<vmem>>, vector<1x1x16xf32>
    %697 = vector.shape_cast %696 : vector<1x1x16xf32> to vector<1x16xf32>
    %c12_809 = arith.constant 12 : index
    %c0_810 = arith.constant 0 : index
    %c0_811 = arith.constant 0 : index
    %698 = vector.load %arg8[%c12_809, %c0_810, %c0_811] : memref<16x16x32xf32, #tpu.memory_space<vmem>>, vector<1x16x32xf32>
    %699 = vector.shape_cast %698 : vector<1x16x32xf32> to vector<16x32xf32>
    %cst_812 = arith.constant dense<0.000000e+00> : vector<1x32xf32>
    %700 = tpu.matmul %697, %699, %cst_812 {dimension_numbers = #tpu.dot_dimension_numbers<[1], [0], [0], [1], [0, 0, 1, 1], [], []>} : vector<1x16xf32>, vector<16x32xf32>, vector<1x32xf32> -> vector<1x32xf32>
    %701 = arith.addf %690, %700 : vector<1x32xf32>
    %c0_813 = arith.constant 0 : index
    %c1_814 = arith.constant 1 : index
    %c0_815 = arith.constant 0 : index
    %702 = tpu.strided_load %arg18[%c0_813, %c1_814, %c0_815] {strides = array<i32: 1, 2, 1>} : memref<1x4x16xf32, #tpu.memory_space<vmem>>, vector<1x1x16xf32>
    %703 = vector.shape_cast %702 : vector<1x1x16xf32> to vector<1x16xf32>
    %c13_816 = arith.constant 13 : index
    %c0_817 = arith.constant 0 : index
    %c0_818 = arith.constant 0 : index
    %704 = vector.load %arg8[%c13_816, %c0_817, %c0_818] : memref<16x16x32xf32, #tpu.memory_space<vmem>>, vector<1x16x32xf32>
    %705 = vector.shape_cast %704 : vector<1x16x32xf32> to vector<16x32xf32>
    %cst_819 = arith.constant dense<0.000000e+00> : vector<1x32xf32>
    %706 = tpu.matmul %703, %705, %cst_819 {dimension_numbers = #tpu.dot_dimension_numbers<[1], [0], [0], [1], [0, 0, 1, 1], [], []>} : vector<1x16xf32>, vector<16x32xf32>, vector<1x32xf32> -> vector<1x32xf32>
    %707 = arith.addf %701, %706 : vector<1x32xf32>
    %c0_820 = arith.constant 0 : index
    %c2_821 = arith.constant 2 : index
    %c0_822 = arith.constant 0 : index
    %708 = tpu.strided_load %arg18[%c0_820, %c2_821, %c0_822] {strides = array<i32: 1, 2, 1>} : memref<1x4x16xf32, #tpu.memory_space<vmem>>, vector<1x1x16xf32>
    %709 = vector.shape_cast %708 : vector<1x1x16xf32> to vector<1x16xf32>
    %c14_823 = arith.constant 14 : index
    %c0_824 = arith.constant 0 : index
    %c0_825 = arith.constant 0 : index
    %710 = vector.load %arg8[%c14_823, %c0_824, %c0_825] : memref<16x16x32xf32, #tpu.memory_space<vmem>>, vector<1x16x32xf32>
    %711 = vector.shape_cast %710 : vector<1x16x32xf32> to vector<16x32xf32>
    %cst_826 = arith.constant dense<0.000000e+00> : vector<1x32xf32>
    %712 = tpu.matmul %709, %711, %cst_826 {dimension_numbers = #tpu.dot_dimension_numbers<[1], [0], [0], [1], [0, 0, 1, 1], [], []>} : vector<1x16xf32>, vector<16x32xf32>, vector<1x32xf32> -> vector<1x32xf32>
    %713 = arith.addf %707, %712 : vector<1x32xf32>
    %c0_827 = arith.constant 0 : index
    %c3_828 = arith.constant 3 : index
    %c0_829 = arith.constant 0 : index
    %714 = tpu.strided_load %arg18[%c0_827, %c3_828, %c0_829] {strides = array<i32: 1, 2, 1>} : memref<1x4x16xf32, #tpu.memory_space<vmem>>, vector<1x1x16xf32>
    %715 = vector.shape_cast %714 : vector<1x1x16xf32> to vector<1x16xf32>
    %c15_830 = arith.constant 15 : index
    %c0_831 = arith.constant 0 : index
    %c0_832 = arith.constant 0 : index
    %716 = vector.load %arg8[%c15_830, %c0_831, %c0_832] : memref<16x16x32xf32, #tpu.memory_space<vmem>>, vector<1x16x32xf32>
    %717 = vector.shape_cast %716 : vector<1x16x32xf32> to vector<16x32xf32>
    %cst_833 = arith.constant dense<0.000000e+00> : vector<1x32xf32>
    %718 = tpu.matmul %715, %717, %cst_833 {dimension_numbers = #tpu.dot_dimension_numbers<[1], [0], [0], [1], [0, 0, 1, 1], [], []>} : vector<1x16xf32>, vector<16x32xf32>, vector<1x32xf32> -> vector<1x32xf32>
    %719 = arith.addf %713, %718 : vector<1x32xf32>
    %c0_834 = arith.constant 0 : index
    %c0_835 = arith.constant 0 : index
    %720 = vector.load %arg9[%c0_834, %c0_835] : memref<1x32xf32, #tpu.memory_space<vmem>>, vector<1x32xf32>
    %721 = arith.addf %719, %720 : vector<1x32xf32>
    %cst_836 = arith.constant 0.000000e+00 : f32
    %722 = vector.broadcast %cst_836 : f32 to vector<1x32xf32>
    %723 = arith.maximumf %721, %722 : vector<1x32xf32>
    %724 = vector.shape_cast %723 : vector<1x32xf32> to vector<1x1x32xf32>
    %c0_837 = arith.constant 0 : index
    %c0_838 = arith.constant 0 : index
    %c0_839 = arith.constant 0 : index
    %725 = vector.load %arg10[%c0_837, %c0_838, %c0_839] : memref<1x1x32xf32, #tpu.memory_space<vmem>>, vector<1x1x32xf32>
    tpu.vector_store %arg10[%c0_837, %c0_838, %c0_839], %724 {strides = array<i32>} : memref<1x1x32xf32, #tpu.memory_space<vmem>>, vector<1x1x32xf32>,
    return
  }
  func.func @transform_0(%arg0: i32) -> (i32, i32, i32, i32) {
    %c0_i32 = arith.constant 0 : i32
    %c0_i32_0 = arith.constant 0 : i32
    %c0_i32_1 = arith.constant 0 : i32
    %c0_i32_2 = arith.constant 0 : i32
    return %arg0, %c0_i32, %c0_i32_0, %c0_i32_1 : i32, i32, i32, i32
  }
  func.func @transform_1(%arg0: i32) -> (i32, i32, i32) {
    %c0_i32 = arith.constant 0 : i32
    %c0_i32_0 = arith.constant 0 : i32
    %c0_i32_1 = arith.constant 0 : i32
    %c0_i32_2 = arith.constant 0 : i32
    return %c0_i32, %c0_i32_0, %c0_i32_1 : i32, i32, i32
  }
  func.func @transform_2(%arg0: i32) -> (i32, i32) {
    %c0_i32 = arith.constant 0 : i32
    %c0_i32_0 = arith.constant 0 : i32
    %c0_i32_1 = arith.constant 0 : i32
    return %c0_i32, %c0_i32_0 : i32, i32
  }
  func.func @transform_3(%arg0: i32) -> (i32, i32, i32) {
    %c0_i32 = arith.constant 0 : i32
    %c0_i32_0 = arith.constant 0 : i32
    %c0_i32_1 = arith.constant 0 : i32
    %c0_i32_2 = arith.constant 0 : i32
    return %c0_i32, %c0_i32_0, %c0_i32_1 : i32, i32, i32
  }
  func.func @transform_4(%arg0: i32) -> (i32, i32) {
    %c0_i32 = arith.constant 0 : i32
    %c0_i32_0 = arith.constant 0 : i32
    %c0_i32_1 = arith.constant 0 : i32
    return %c0_i32, %c0_i32_0 : i32, i32
  }
  func.func @transform_5(%arg0: i32) -> (i32, i32, i32) {
    %c0_i32 = arith.constant 0 : i32
    %c0_i32_0 = arith.constant 0 : i32
    %c0_i32_1 = arith.constant 0 : i32
    %c0_i32_2 = arith.constant 0 : i32
    return %c0_i32, %c0_i32_0, %c0_i32_1 : i32, i32, i32
  }
  func.func @transform_6(%arg0: i32) -> (i32, i32) {
    %c0_i32 = arith.constant 0 : i32
    %c0_i32_0 = arith.constant 0 : i32
    %c0_i32_1 = arith.constant 0 : i32
    return %c0_i32, %c0_i32_0 : i32, i32
  }
  func.func @transform_7(%arg0: i32) -> (i32, i32, i32) {
    %c0_i32 = arith.constant 0 : i32
    %c0_i32_0 = arith.constant 0 : i32
    %c0_i32_1 = arith.constant 0 : i32
    %c0_i32_2 = arith.constant 0 : i32
    return %c0_i32, %c0_i32_0, %c0_i32_1 : i32, i32, i32
  }
  func.func @transform_8(%arg0: i32) -> (i32, i32) {
    %c0_i32 = arith.constant 0 : i32
    %c0_i32_0 = arith.constant 0 : i32
    %c0_i32_1 = arith.constant 0 : i32
    return %c0_i32, %c0_i32_0 : i32, i32
  }
  func.func @transform_9(%arg0: i32) -> (i32, i32, i32) {
    %c0_i32 = arith.constant 0 : i32
    %c0_i32_0 = arith.constant 0 : i32
    %c0_i32_1 = arith.constant 0 : i32
    return %arg0, %c0_i32, %c0_i32_0 : i32, i32, i32
  }
}

</mosaic_0001>

<llo_original>
// kernel: cnn_encoder.1
$region0: #{cnn_encoder.1}
  #allocation0 [shape = 'u32[]', space=smem, size = 0x4, offset = 0x4, fixed_abs, tag = 'smem constant byte address 0x4 - core index']
  #allocation1 [shape = 'u32[72,128]{1,0:T(1,128)}', space=vmem, size = 0x9000, scoped, tag = 'internal scratch']
  #allocation2 [shape = 'f32[18,18,4]{2,1,0:T(8,128)}', space=vmem, size = 0x36000, scoped, tag = 'scratch operand']
  #allocation3 [shape = 'f32[8,18,4]{2,1,0:T(8,128)}', space=vmem, size = 0x18000, scoped, tag = 'scratch operand']
  #allocation4 [shape = 'f32[10,10,4]{2,1,0:T(8,128)}', space=vmem, size = 0x14000, scoped, tag = 'scratch operand']
  #allocation5 [shape = 'f32[4,10,4]{2,1,0:T(8,128)}', space=vmem, size = 0x8000, scoped, tag = 'scratch operand']
  #allocation6 [shape = 'f32[6,6,8]{2,1,0:T(8,128)}', space=vmem, size = 0x6000, scoped, tag = 'scratch operand']
  #allocation7 [shape = 'f32[2,6,8]{2,1,0:T(8,128)}', space=vmem, size = 0x2000, scoped, tag = 'scratch operand']
  #allocation8 [shape = 'f32[4,4,16]{2,1,0:T(4,128)}', space=vmem, size = 0x2000, scoped, tag = 'scratch operand']
  #allocation9 [shape = 'f32[1,4,16]{2,1,0:T(4,128)}', space=vmem, size = 0x800, scoped, tag = 'scratch operand']
  %s0 = inlined_call_operand.vmem [shape: f32[2,16,16,4], index: 0, kind: input, shape index: {}]
  %s1 = inlined_call_operand.vmem [shape: f32[16,4,4], index: 1, kind: input, shape index: {}]
  %s2 = inlined_call_operand.vmem [shape: f32[1,4], index: 2, kind: input, shape index: {}]
  %s3 = inlined_call_operand.vmem [shape: f32[16,4,8], index: 3, kind: input, shape index: {}]
  %s4 = inlined_call_operand.vmem [shape: f32[1,8], index: 4, kind: input, shape index: {}]
  %s5 = inlined_call_operand.vmem [shape: f32[16,8,16], index: 5, kind: input, shape index: {}]
  %s6 = inlined_call_operand.vmem [shape: f32[1,16], index: 6, kind: input, shape index: {}]
  %s7 = inlined_call_operand.vmem [shape: f32[16,16,32], index: 7, kind: input, shape index: {}]
  %s8 = inlined_call_operand.vmem [shape: f32[1,32], index: 8, kind: input, shape index: {}]
  %s9 = inlined_call_operand.hbm [shape: f32[2,1,32], index: 9, kind: output, shape index: {}]
  %s10 = sld [smem:[#allocation0]]
  $region69: #{cnn_encoder.1} parent=0
    _
  %s12 = ssub.s32 1, %s10
  %s13 = scalar_select 0, %s12, %s10
  $region1: #{cnn_encoder.1} parent=0
    #allocation10 [shape = 'u8[1024]{0}', space=vmem, size = 0x400, scoped, tag = 'output window, operand 0']
    #allocation11 [shape = 's32[2]{0}', space=sflag, size = 0x8, scoped, tag = 'scoped memory for cnn_encoder.1']
    %14 = vsyncpa [#allocation11], 0
    %s15 = scalar_lea.sflag [#allocation11], 1
    %16 = vsyncpa %s15, 0
    loop: start=0, step=1, limit=4
    $region2: #{cnn_encoder.1} parent=1 // loop_pre_header
      _
    $region3: #{cnn_encoder.1} parent=1 // loop_header
      %s18 = sphi 0, %s22
      %p19 = scmp.ge.s32.totalorder %s18, 4
      %s28 = sphi 0, %s30
      %s31 = sphi 0, %s28
      %s32 = sphi 0, %s31
      %s48 = sphi 0, %s32
      %s52 = sphi 0, %s52
      %s54 = sphi 0, %s52
      %s55 = sphi 0, %s54
      %s69 = sphi 0, %s55
      %s73 = sphi 0, %s73
      %s75 = sphi 0, %s73
      %s76 = sphi 0, %s75
      %s90 = sphi 0, %s76
      %s94 = sphi 0, %s94
      %s96 = sphi 0, %s94
      %s97 = sphi 0, %s96
      %s111 = sphi 0, %s97
      %s115 = sphi 0, %s115
      %s117 = sphi 0, %s115
      %s118 = sphi 0, %s117
      %s132 = sphi 0, %s118
      %s136 = sphi 0, %s136
      %s138 = sphi 0, %s136
      %s139 = sphi 0, %s138
      %s153 = sphi 0, %s139
      %s157 = sphi 0, %s157
      %s159 = sphi 0, %s157
      %s160 = sphi 0, %s159
      %s174 = sphi 0, %s160
      %s178 = sphi 0, %s178
      %s180 = sphi 0, %s178
      %s181 = sphi 0, %s180
      %s195 = sphi 0, %s181
      %s199 = sphi 0, %s199
      %s201 = sphi 0, %s199
      %s202 = sphi 0, %s201
      %s216 = sphi 0, %s202
      %s222 = sphi 0, %s224
      %s225 = sphi 0, %s222
      %s226 = sphi 0, %s225
      %s242 = sphi 0, %s226
    $region4: #{cnn_encoder.1} parent=1 // loop_header_branch
      %21 = sbr.rel (%p19) target = $region8
    $region5: #{cnn_encoder.1} parent=1 // loop_body
      %s23 = ssub.s32 %s18, 1
      %s24 = ssub.s32 %s18, 2
      %s25 = sadd.s32 %s18, 1
      %s26 = ssub.s32 %s18, %s25
      %p27 = scmp.eq.s32.totalorder %s26, 0
      %s29 = sadd.s32 %s28, 1
      %s30 = scalar_select %p27, %s28, %s29
      %p33 = pneg %p27
      %p34 = scmp.eq.s32.totalorder %s18, 1
      %p35 = por %p33, %p34
      %p36 = scmp.ne.s32.totalorder %s28, %s31
      %p37 = scmp.eq.s32.totalorder %s18, 0
      %p38 = por %p36, %p37
      %p39 = scmp.ne.s32.totalorder %s28, %s31
      %p40 = scmp.eq.s32.totalorder %s23, 1
      %p41 = por %p39, %p40
      %p42 = scmp.ne.s32.totalorder %s31, %s32
      %p43 = scmp.eq.s32.totalorder %s23, 0
      %p44 = por %p42, %p43
      %p45 = scmp.ne.s32.totalorder %s31, %s32
      %p46 = scmp.eq.s32.totalorder %s24, 1
      %p47 = por %p45, %p46
      %p49 = scmp.ne.s32.totalorder %s32, %s48
      %p50 = scmp.eq.s32.totalorder %s24, 0
      %p51 = por %p49, %p50
      %s53 = sadd.s32 %s52, 1
      %p56 = scmp.eq.s32.totalorder %s18, 1
      %p57 = scmp.ne.s32.totalorder %s52, %s54
      %p58 = scmp.eq.s32.totalorder %s18, 0
      %p59 = por %p57, %p58
      %p60 = scmp.ne.s32.totalorder %s52, %s54
      %p61 = scmp.eq.s32.totalorder %s23, 1
      %p62 = por %p60, %p61
      %p63 = scmp.ne.s32.totalorder %s54, %s55
      %p64 = scmp.eq.s32.totalorder %s23, 0
      %p65 = por %p63, %p64
      %p66 = scmp.ne.s32.totalorder %s54, %s55
      %p67 = scmp.eq.s32.totalorder %s24, 1
      %p68 = por %p66, %p67
      %p70 = scmp.ne.s32.totalorder %s55, %s69
      %p71 = scmp.eq.s32.totalorder %s24, 0
      %p72 = por %p70, %p71
      %s74 = sadd.s32 %s73, 1
      %p77 = scmp.eq.s32.totalorder %s18, 1
      %p78 = scmp.ne.s32.totalorder %s73, %s75
      %p79 = scmp.eq.s32.totalorder %s18, 0
      %p80 = por %p78, %p79
      %p81 = scmp.ne.s32.totalorder %s73, %s75
      %p82 = scmp.eq.s32.totalorder %s23, 1
      %p83 = por %p81, %p82
      %p84 = scmp.ne.s32.totalorder %s75, %s76
      %p85 = scmp.eq.s32.totalorder %s23, 0
      %p86 = por %p84, %p85
      %p87 = scmp.ne.s32.totalorder %s75, %s76
      %p88 = scmp.eq.s32.totalorder %s24, 1
      %p89 = por %p87, %p88
      %p91 = scmp.ne.s32.totalorder %s76, %s90
      %p92 = scmp.eq.s32.totalorder %s24, 0
      %p93 = por %p91, %p92
      %s95 = sadd.s32 %s94, 1
      %p98 = scmp.eq.s32.totalorder %s18, 1
      %p99 = scmp.ne.s32.totalorder %s94, %s96
      %p100 = scmp.eq.s32.totalorder %s18, 0
      %p101 = por %p99, %p100
      %p102 = scmp.ne.s32.totalorder %s94, %s96
      %p103 = scmp.eq.s32.totalorder %s23, 1
      %p104 = por %p102, %p103
      %p105 = scmp.ne.s32.totalorder %s96, %s97
      %p106 = scmp.eq.s32.totalorder %s23, 0
      %p107 = por %p105, %p106
      %p108 = scmp.ne.s32.totalorder %s96, %s97
      %p109 = scmp.eq.s32.totalorder %s24, 1
      %p110 = por %p108, %p109
      %p112 = scmp.ne.s32.totalorder %s97, %s111
      %p113 = scmp.eq.s32.totalorder %s24, 0
      %p114 = por %p112, %p113
      %s116 = sadd.s32 %s115, 1
      %p119 = scmp.eq.s32.totalorder %s18, 1
      %p120 = scmp.ne.s32.totalorder %s115, %s117
      %p121 = scmp.eq.s32.totalorder %s18, 0
      %p122 = por %p120, %p121
      %p123 = scmp.ne.s32.totalorder %s115, %s117
      %p124 = scmp.eq.s32.totalorder %s23, 1
      %p125 = por %p123, %p124
      %p126 = scmp.ne.s32.totalorder %s117, %s118
      %p127 = scmp.eq.s32.totalorder %s23, 0
      %p128 = por %p126, %p127
      %p129 = scmp.ne.s32.totalorder %s117, %s118
      %p130 = scmp.eq.s32.totalorder %s24, 1
      %p131 = por %p129, %p130
      %p133 = scmp.ne.s32.totalorder %s118, %s132
      %p134 = scmp.eq.s32.totalorder %s24, 0
      %p135 = por %p133, %p134
      %s137 = sadd.s32 %s136, 1
      %p140 = scmp.eq.s32.totalorder %s18, 1
      %p141 = scmp.ne.s32.totalorder %s136, %s138
      %p142 = scmp.eq.s32.totalorder %s18, 0
      %p143 = por %p141, %p142
      %p144 = scmp.ne.s32.totalorder %s136, %s138
      %p145 = scmp.eq.s32.totalorder %s23, 1
      %p146 = por %p144, %p145
      %p147 = scmp.ne.s32.totalorder %s138, %s139
      %p148 = scmp.eq.s32.totalorder %s23, 0
      %p149 = por %p147, %p148
      %p150 = scmp.ne.s32.totalorder %s138, %s139
      %p151 = scmp.eq.s32.totalorder %s24, 1
      %p152 = por %p150, %p151
      %p154 = scmp.ne.s32.totalorder %s139, %s153
      %p155 = scmp.eq.s32.totalorder %s24, 0
      %p156 = por %p154, %p155
      %s158 = sadd.s32 %s157, 1
      %p161 = scmp.eq.s32.totalorder %s18, 1
      %p162 = scmp.ne.s32.totalorder %s157, %s159
      %p163 = scmp.eq.s32.totalorder %s18, 0
      %p164 = por %p162, %p163
      %p165 = scmp.ne.s32.totalorder %s157, %s159
      %p166 = scmp.eq.s32.totalorder %s23, 1
      %p167 = por %p165, %p166
      %p168 = scmp.ne.s32.totalorder %s159, %s160
      %p169 = scmp.eq.s32.totalorder %s23, 0
      %p170 = por %p168, %p169
      %p171 = scmp.ne.s32.totalorder %s159, %s160
      %p172 = scmp.eq.s32.totalorder %s24, 1
      %p173 = por %p171, %p172
      %p175 = scmp.ne.s32.totalorder %s160, %s174
      %p176 = scmp.eq.s32.totalorder %s24, 0
      %p177 = por %p175, %p176
      %s179 = sadd.s32 %s178, 1
      %p182 = scmp.eq.s32.totalorder %s18, 1
      %p183 = scmp.ne.s32.totalorder %s178, %s180
      %p184 = scmp.eq.s32.totalorder %s18, 0
      %p185 = por %p183, %p184
      %p186 = scmp.ne.s32.totalorder %s178, %s180
      %p187 = scmp.eq.s32.totalorder %s23, 1
      %p188 = por %p186, %p187
      %p189 = scmp.ne.s32.totalorder %s180, %s181
      %p190 = scmp.eq.s32.totalorder %s23, 0
      %p191 = por %p189, %p190
      %p192 = scmp.ne.s32.totalorder %s180, %s181
      %p193 = scmp.eq.s32.totalorder %s24, 1
      %p194 = por %p192, %p193
      %p196 = scmp.ne.s32.totalorder %s181, %s195
      %p197 = scmp.eq.s32.totalorder %s24, 0
      %p198 = por %p196, %p197
      %s200 = sadd.s32 %s199, 1
      %p203 = scmp.eq.s32.totalorder %s18, 1
      %p204 = scmp.ne.s32.totalorder %s199, %s201
      %p205 = scmp.eq.s32.totalorder %s18, 0
      %p206 = por %p204, %p205
      %p207 = scmp.ne.s32.totalorder %s199, %s201
      %p208 = scmp.eq.s32.totalorder %s23, 1
      %p209 = por %p207, %p208
      %p210 = scmp.ne.s32.totalorder %s201, %s202
      %p211 = scmp.eq.s32.totalorder %s23, 0
      %p212 = por %p210, %p211
      %p213 = scmp.ne.s32.totalorder %s201, %s202
      %p214 = scmp.eq.s32.totalorder %s24, 1
      %p215 = por %p213, %p214
      %p217 = scmp.ne.s32.totalorder %s202, %s216
      %p218 = scmp.eq.s32.totalorder %s24, 0
      %p219 = por %p217, %p218
      %s220 = ssub.s32 %s18, %s25
      %p221 = scmp.eq.s32.totalorder %s220, 0
      %s223 = sadd.s32 %s222, 1
      %s224 = scalar_select %p221, %s222, %s223
      %p227 = pneg %p221
      %p228 = scmp.eq.s32.totalorder %s18, 1
      %p229 = por %p227, %p228
      %p230 = scmp.ne.s32.totalorder %s222, %s225
      %p231 = scmp.eq.s32.totalorder %s18, 0
      %p232 = por %p230, %p231
      %p233 = scmp.ne.s32.totalorder %s222, %s225
      %p234 = scmp.eq.s32.totalorder %s23, 1
      %p235 = por %p233, %p234
      %p236 = scmp.ne.s32.totalorder %s225, %s226
      %p237 = scmp.eq.s32.totalorder %s23, 0
      %p238 = por %p236, %p237
      %p239 = scmp.ne.s32.totalorder %s225, %s226
      %p240 = scmp.eq.s32.totalorder %s24, 1
      %p241 = por %p239, %p240
      %p243 = scmp.ne.s32.totalorder %s226, %s242
      %p244 = scmp.eq.s32.totalorder %s24, 0
      %p245 = por %p243, %p244
      %p246 = scmp.le.s32.totalorder 1, %s18
      %p247 = scmp.lt.s32.totalorder %s18, 3
      %p248 = pnand %p246, %p247
      %p249 = pneg %p248
      // Predicated region
      $region9: #{cnn_encoder.1} parent=5 // pred_check
        _
      $region10: #{cnn_encoder.1} parent=5 // pred_check_branch
        %251 = sbr.rel (%p248) target = $region12
      $region11: #{cnn_encoder.1} parent=5 // pred_region
        %s252 = ssub.s32 %s18, 1
        // Predicated region
        $region13: #{cnn_encoder.1} parent=11 // pred_check
          %p253 = pneg %p65
        $region14: #{cnn_encoder.1} parent=11 // pred_check_branch
          %255 = sbr.rel (%p253) target = $region16
        $region15: #{cnn_encoder.1} parent=11 // pred_region
          _
        $region16: #{cnn_encoder.1} parent=11 // pred_fallthru
          _
        // Predicated region
        $region17: #{cnn_encoder.1} parent=11 // pred_check
          %p256 = pneg %p86
        $region18: #{cnn_encoder.1} parent=11 // pred_check_branch
          %258 = sbr.rel (%p256) target = $region20
        $region19: #{cnn_encoder.1} parent=11 // pred_region
          _
        $region20: #{cnn_encoder.1} parent=11 // pred_fallthru
          _
        // Predicated region
        $region21: #{cnn_encoder.1} parent=11 // pred_check
          %p259 = pneg %p107
        $region22: #{cnn_encoder.1} parent=11 // pred_check_branch
          %261 = sbr.rel (%p259) target = $region24
        $region23: #{cnn_encoder.1} parent=11 // pred_region
          _
        $region24: #{cnn_encoder.1} parent=11 // pred_fallthru
          _
        // Predicated region
        $region25: #{cnn_encoder.1} parent=11 // pred_check
          %p262 = pneg %p128
        $region26: #{cnn_encoder.1} parent=11 // pred_check_branch
          %264 = sbr.rel (%p262) target = $region28
        $region27: #{cnn_encoder.1} parent=11 // pred_region
          _
        $region28: #{cnn_encoder.1} parent=11 // pred_fallthru
          _
        // Predicated region
        $region29: #{cnn_encoder.1} parent=11 // pred_check
          %p265 = pneg %p149
        $region30: #{cnn_encoder.1} parent=11 // pred_check_branch
          %267 = sbr.rel (%p265) target = $region32
        $region31: #{cnn_encoder.1} parent=11 // pred_region
          _
        $region32: #{cnn_encoder.1} parent=11 // pred_fallthru
          _
        // Predicated region
        $region33: #{cnn_encoder.1} parent=11 // pred_check
          %p268 = pneg %p170
        $region34: #{cnn_encoder.1} parent=11 // pred_check_branch
          %270 = sbr.rel (%p268) target = $region36
        $region35: #{cnn_encoder.1} parent=11 // pred_region
          _
        $region36: #{cnn_encoder.1} parent=11 // pred_fallthru
          _
        // Predicated region
        $region37: #{cnn_encoder.1} parent=11 // pred_check
          %p271 = pneg %p191
        $region38: #{cnn_encoder.1} parent=11 // pred_check_branch
          %273 = sbr.rel (%p271) target = $region40
        $region39: #{cnn_encoder.1} parent=11 // pred_region
          _
        $region40: #{cnn_encoder.1} parent=11 // pred_fallthru
          _
        // Predicated region
        $region41: #{cnn_encoder.1} parent=11 // pred_check
          %p274 = pneg %p212
        $region42: #{cnn_encoder.1} parent=11 // pred_check_branch
          %276 = sbr.rel (%p274) target = $region44
        $region43: #{cnn_encoder.1} parent=11 // pred_region
          _
        $region44: #{cnn_encoder.1} parent=11 // pred_fallthru
          _
      $region12: #{cnn_encoder.1} parent=5 // pred_fallthru
        _
      %p277 = scmp.lt.s32.totalorder %s18, 2
      // Predicated region
      $region45: #{cnn_encoder.1} parent=5 // pred_check
        %p278 = pneg %p277
      $region46: #{cnn_encoder.1} parent=5 // pred_check_branch
        %280 = sbr.rel (%p278) target = $region48
      $region47: #{cnn_encoder.1} parent=5 // pred_region
        // Predicated region
        $region49: #{cnn_encoder.1} parent=47 // pred_check
          %p281 = pneg %p38
        $region50: #{cnn_encoder.1} parent=47 // pred_check_branch
          %283 = sbr.rel (%p281) target = $region52
        $region51: #{cnn_encoder.1} parent=47 // pred_region
          %p284 = scmp.lt.s32.totalorder %s18, 1
          %s285 = scalar_select %p284, %s18, 1
          %s286 = smul.addr %s285, 32
          %s287 = smul.addr %s286, 8
          %s288 = scalar_lea.vmem %s0, %s287
        $region52: #{cnn_encoder.1} parent=47 // pred_fallthru
          _
      $region48: #{cnn_encoder.1} parent=5 // pred_fallthru
        _
      %p289 = scmp.le.s32.totalorder 1, %s18
      %p290 = scmp.lt.s32.totalorder %s18, 3
      %p291 = pnand %p289, %p290
      %p292 = pneg %p291
      // Predicated region
      $region53: #{cnn_encoder.1} parent=5 // pred_check
        _
      $region54: #{cnn_encoder.1} parent=5 // pred_check_branch
        %294 = sbr.rel (%p291) target = $region56
      $region55: #{cnn_encoder.1} parent=5 // pred_region
        %s295 = ssub.s32 %s18, 1
        %p296 = scmp.lt.s32.totalorder %s23, 1
        %s297 = scalar_select %p296, %s23, 1
        %s298 = smul.addr %s297, 32
        %s299 = smul.addr %s298, 8
        %s300 = scalar_lea.vmem %s0, %s299
        %p301 = pneg %p44
        %p302 = pneg %p41
        %p303 = pneg %p65
        %p304 = pneg %p62
        %p305 = pneg %p86
        %p306 = pneg %p83
        %p307 = pneg %p107
        %p308 = pneg %p104
        %p309 = pneg %p128
        %p310 = pneg %p125
        %p311 = pneg %p149
        %p312 = pneg %p146
        %p313 = pneg %p170
        %p314 = pneg %p167
        %p315 = pneg %p191
        %p316 = pneg %p188
        %p317 = pneg %p212
        %p318 = pneg %p209
        %p319 = pneg %p238
        %p320 = pneg %p235
        %s321 = sand.u32 %s225, 1
        %s322 = scalar_lea.sflag [#allocation11], %s321
        %s323 = sand.u32 %s225, 1
        %s324 = scalar_lea.vmem [#allocation10], %s323
        %p325 = scmp.lt.s32.totalorder %s23, 1
        %s326 = scalar_select %p325, %s23, 1
        %s327 = smul.addr %s326, 32
        %s328 = smul.addr %s327, 8
        %s329 = scalar_lea.vmem %s0, %s328
        %v330 = vld [vmem:[%s329] sm:$0xff]
        %v331 = vld [vmem:[%s329 + $0x8] sm:$0xff]
        %v332 = vld [vmem:[%s329 + $0x10] sm:$0xff]
        %v333 = vld [vmem:[%s329 + $0x18] sm:$0xff]
        %v334 = vld [vmem:[%s329 + $0x20] sm:$0xff]
        %v335 = vld [vmem:[%s329 + $0x28] sm:$0xff]
        %v336 = vld [vmem:[%s329 + $0x30] sm:$0xff]
        %v337 = vld [vmem:[%s329 + $0x38] sm:$0xff]
        %v338 = vld [vmem:[%s329 + $0x40] sm:$0xff]
        %v339 = vld [vmem:[%s329 + $0x48] sm:$0xff]
        %v340 = vld [vmem:[%s329 + $0x50] sm:$0xff]
        %v341 = vld [vmem:[%s329 + $0x58] sm:$0xff]
        %v342 = vld [vmem:[%s329 + $0x60] sm:$0xff]
        %v343 = vld [vmem:[%s329 + $0x68] sm:$0xff]
        %v344 = vld [vmem:[%s329 + $0x70] sm:$0xff]
        %v345 = vld [vmem:[%s329 + $0x78] sm:$0xff]
        %v346 = vld [vmem:[%s329 + $0x80] sm:$0xff]
        %v347 = vld [vmem:[%s329 + $0x88] sm:$0xff]
        %v348 = vld [vmem:[%s329 + $0x90] sm:$0xff]
        %v349 = vld [vmem:[%s329 + $0x98] sm:$0xff]
        %v350 = vld [vmem:[%s329 + $0xa0] sm:$0xff]
        %v351 = vld [vmem:[%s329 + $0xa8] sm:$0xff]
        %v352 = vld [vmem:[%s329 + $0xb0] sm:$0xff]
        %v353 = vld [vmem:[%s329 + $0xb8] sm:$0xff]
        %v354 = vld [vmem:[%s329 + $0xc0] sm:$0xff]
        %v355 = vld [vmem:[%s329 + $0xc8] sm:$0xff]
        %v356 = vld [vmem:[%s329 + $0xd0] sm:$0xff]
        %v357 = vld [vmem:[%s329 + $0xd8] sm:$0xff]
        %v358 = vld [vmem:[%s329 + $0xe0] sm:$0xff]
        %v359 = vld [vmem:[%s329 + $0xe8] sm:$0xff]
        %v360 = vld [vmem:[%s329 + $0xf0] sm:$0xff]
        %v361 = vld [vmem:[%s329 + $0xf8] sm:$0xff]
        %vm362 = vcmask 31744
        %363 = vst.msk [vmem:[#allocation2] sm:$0xff] %vm362, 0.0
        %364 = vst.msk [vmem:[#allocation2 + $0x8] sm:$0xff] %vm362, 0.0
        %vm365 = vcmask 25600
        %366 = vst.msk [vmem:[#allocation2 + $0x10] sm:$0x3] %vm365, 0.0
        %367 = vst.msk [vmem:[#allocation2 + $0x18] sm:$0xff] %vm362, 0.0
        %368 = vst.msk [vmem:[#allocation2 + $0x20] sm:$0xff] %vm362, 0.0
        %369 = vst.msk [vmem:[#allocation2 + $0x28] sm:$0x3] %vm365, 0.0
        %370 = vst.msk [vmem:[#allocation2 + $0x30] sm:$0xff] %vm362, 0.0
        %371 = vst.msk [vmem:[#allocation2 + $0x38] sm:$0xff] %vm362, 0.0
        %372 = vst.msk [vmem:[#allocation2 + $0x40] sm:$0x3] %vm365, 0.0
        %373 = vst.msk [vmem:[#allocation2 + $0x48] sm:$0xff] %vm362, 0.0
        %374 = vst.msk [vmem:[#allocation2 + $0x50] sm:$0xff] %vm362, 0.0
        %375 = vst.msk [vmem:[#allocation2 + $0x58] sm:$0x3] %vm365, 0.0
        %376 = vst.msk [vmem:[#allocation2 + $0x60] sm:$0xff] %vm362, 0.0
        %377 = vst.msk [vmem:[#allocation2 + $0x68] sm:$0xff] %vm362, 0.0
        %378 = vst.msk [vmem:[#allocation2 + $0x70] sm:$0x3] %vm365, 0.0
        %379 = vst.msk [vmem:[#allocation2 + $0x78] sm:$0xff] %vm362, 0.0
        %380 = vst.msk [vmem:[#allocation2 + $0x80] sm:$0xff] %vm362, 0.0
        %381 = vst.msk [vmem:[#allocation2 + $0x88] sm:$0x3] %vm365, 0.0
        %382 = vst.msk [vmem:[#allocation2 + $0x90] sm:$0xff] %vm362, 0.0
        %383 = vst.msk [vmem:[#allocation2 + $0x98] sm:$0xff] %vm362, 0.0
        %384 = vst.msk [vmem:[#allocation2 + $0xa0] sm:$0x3] %vm365, 0.0
        %385 = vst.msk [vmem:[#allocation2 + $0xa8] sm:$0xff] %vm362, 0.0
        %386 = vst.msk [vmem:[#allocation2 + $0xb0] sm:$0xff] %vm362, 0.0
        %387 = vst.msk [vmem:[#allocation2 + $0xb8] sm:$0x3] %vm365, 0.0
        %388 = vst.msk [vmem:[#allocation2 + $0xc0] sm:$0xff] %vm362, 0.0
        %389 = vst.msk [vmem:[#allocation2 + $0xc8] sm:$0xff] %vm362, 0.0
        %390 = vst.msk [vmem:[#allocation2 + $0xd0] sm:$0x3] %vm365, 0.0
        %391 = vst.msk [vmem:[#allocation2 + $0xd8] sm:$0xff] %vm362, 0.0
        %392 = vst.msk [vmem:[#allocation2 + $0xe0] sm:$0xff] %vm362, 0.0
        %393 = vst.msk [vmem:[#allocation2 + $0xe8] sm:$0x3] %vm365, 0.0
        %394 = vst.msk [vmem:[#allocation2 + $0xf0] sm:$0xff] %vm362, 0.0
        %395 = vst.msk [vmem:[#allocation2 + $0xf8] sm:$0xff] %vm362, 0.0
        %396 = vst.msk [vmem:[#allocation2 + $0x100] sm:$0x3] %vm365, 0.0
        %397 = vst.msk [vmem:[#allocation2 + $0x108] sm:$0xff] %vm362, 0.0
        %398 = vst.msk [vmem:[#allocation2 + $0x110] sm:$0xff] %vm362, 0.0
        %399 = vst.msk [vmem:[#allocation2 + $0x118] sm:$0x3] %vm365, 0.0
        %400 = vst.msk [vmem:[#allocation2 + $0x120] sm:$0xff] %vm362, 0.0
        %401 = vst.msk [vmem:[#allocation2 + $0x128] sm:$0xff] %vm362, 0.0
        %402 = vst.msk [vmem:[#allocation2 + $0x130] sm:$0x3] %vm365, 0.0
        %403 = vst.msk [vmem:[#allocation2 + $0x138] sm:$0xff] %vm362, 0.0
        %404 = vst.msk [vmem:[#allocation2 + $0x140] sm:$0xff] %vm362, 0.0
        %405 = vst.msk [vmem:[#allocation2 + $0x148] sm:$0x3] %vm365, 0.0
        %406 = vst.msk [vmem:[#allocation2 + $0x150] sm:$0xff] %vm362, 0.0
        %407 = vst.msk [vmem:[#allocation2 + $0x158] sm:$0xff] %vm362, 0.0
        %408 = vst.msk [vmem:[#allocation2 + $0x160] sm:$0x3] %vm365, 0.0
        %409 = vst.msk [vmem:[#allocation2 + $0x168] sm:$0xff] %vm362, 0.0
        %410 = vst.msk [vmem:[#allocation2 + $0x170] sm:$0xff] %vm362, 0.0
        %411 = vst.msk [vmem:[#allocation2 + $0x178] sm:$0x3] %vm365, 0.0
        %412 = vst.msk [vmem:[#allocation2 + $0x180] sm:$0xff] %vm362, 0.0
        %413 = vst.msk [vmem:[#allocation2 + $0x188] sm:$0xff] %vm362, 0.0
        %414 = vst.msk [vmem:[#allocation2 + $0x190] sm:$0x3] %vm365, 0.0
        %415 = vst.msk [vmem:[#allocation2 + $0x198] sm:$0xff] %vm362, 0.0
        %416 = vst.msk [vmem:[#allocation2 + $0x1a0] sm:$0xff] %vm362, 0.0
        %417 = vst.msk [vmem:[#allocation2 + $0x1a8] sm:$0x3] %vm365, 0.0
        %s418 = scalar_lea.vmem [#allocation2], 24
        %419 = vst.msk [vmem:[%s418 + $0x1] sm:$0xff] %vm362, %v330
        %420 = vst.msk [vmem:[%s418 + $0x9] sm:$0xff] %vm362, %v331
        %421 = vst.msk [vmem:[%s418 + $0x19] sm:$0xff] %vm362, %v332
        %422 = vst.msk [vmem:[%s418 + $0x21] sm:$0xff] %vm362, %v333
        %423 = vst.msk [vmem:[%s418 + $0x31] sm:$0xff] %vm362, %v334
        %424 = vst.msk [vmem:[%s418 + $0x39] sm:$0xff] %vm362, %v335
        %425 = vst.msk [vmem:[%s418 + $0x49] sm:$0xff] %vm362, %v336
        %426 = vst.msk [vmem:[%s418 + $0x51] sm:$0xff] %vm362, %v337
        %427 = vst.msk [vmem:[%s418 + $0x61] sm:$0xff] %vm362, %v338
        %428 = vst.msk [vmem:[%s418 + $0x69] sm:$0xff] %vm362, %v339
        %429 = vst.msk [vmem:[%s418 + $0x79] sm:$0xff] %vm362, %v340
        %430 = vst.msk [vmem:[%s418 + $0x81] sm:$0xff] %vm362, %v341
        %431 = vst.msk [vmem:[%s418 + $0x91] sm:$0xff] %vm362, %v342
        %432 = vst.msk [vmem:[%s418 + $0x99] sm:$0xff] %vm362, %v343
        %433 = vst.msk [vmem:[%s418 + $0xa9] sm:$0xff] %vm362, %v344
        %434 = vst.msk [vmem:[%s418 + $0xb1] sm:$0xff] %vm362, %v345
        %435 = vst.msk [vmem:[%s418 + $0xc1] sm:$0xff] %vm362, %v346
        %436 = vst.msk [vmem:[%s418 + $0xc9] sm:$0xff] %vm362, %v347
        %437 = vst.msk [vmem:[%s418 + $0xd9] sm:$0xff] %vm362, %v348
        %438 = vst.msk [vmem:[%s418 + $0xe1] sm:$0xff] %vm362, %v349
        %439 = vst.msk [vmem:[%s418 + $0xf1] sm:$0xff] %vm362, %v350
        %440 = vst.msk [vmem:[%s418 + $0xf9] sm:$0xff] %vm362, %v351
        %441 = vst.msk [vmem:[%s418 + $0x109] sm:$0xff] %vm362, %v352
        %442 = vst.msk [vmem:[%s418 + $0x111] sm:$0xff] %vm362, %v353
        %443 = vst.msk [vmem:[%s418 + $0x121] sm:$0xff] %vm362, %v354
        %444 = vst.msk [vmem:[%s418 + $0x129] sm:$0xff] %vm362, %v355
        %445 = vst.msk [vmem:[%s418 + $0x139] sm:$0xff] %vm362, %v356
        %446 = vst.msk [vmem:[%s418 + $0x141] sm:$0xff] %vm362, %v357
        %447 = vst.msk [vmem:[%s418 + $0x151] sm:$0xff] %vm362, %v358
        %448 = vst.msk [vmem:[%s418 + $0x159] sm:$0xff] %vm362, %v359
        %449 = vst.msk [vmem:[%s418 + $0x169] sm:$0xff] %vm362, %v360
        %450 = vst.msk [vmem:[%s418 + $0x171] sm:$0xff] %vm362, %v361
        %v451 = vld [vmem:[#allocation2] sm:$0xff]
        %v452 = vld [vmem:[#allocation2 + $0x8] sm:$0xff]
        %v453 = vld [vmem:[#allocation2 + $0x10] sm:$0x3]
        %454 = vst.msk [vmem:[#allocation3] sm:$0xff] %vm362, %v451
        %455 = vst.msk [vmem:[#allocation3 + $0x8] sm:$0xff] %vm362, %v452
        %456 = vst.msk [vmem:[#allocation3 + $0x10] sm:$0x3] %vm365, %v453
        %s457 = scalar_lea.vmem [#allocation2], 48
        %v458 = vld [vmem:[%s457] sm:$0xff]
        %v459 = vld [vmem:[%s457 + $0x8] sm:$0xff]
        %v460 = vld [vmem:[%s457 + $0x10] sm:$0x3]
        %s461 = scalar_lea.vmem [#allocation3], 24
        %462 = vst.msk [vmem:[%s461] sm:$0xff] %vm362, %v458
        %463 = vst.msk [vmem:[%s461 + $0x8] sm:$0xff] %vm362, %v459
        %464 = vst.msk [vmem:[%s461 + $0x10] sm:$0x3] %vm365, %v460
        %s465 = scalar_lea.vmem [#allocation2], 96
        %v466 = vld [vmem:[%s465] sm:$0xff]
        %v467 = vld [vmem:[%s465 + $0x8] sm:$0xff]
        %v468 = vld [vmem:[%s465 + $0x10] sm:$0x3]
        %s469 = scalar_lea.vmem [#allocation3], 48
        %470 = vst.msk [vmem:[%s469] sm:$0xff] %vm362, %v466
        %471 = vst.msk [vmem:[%s469 + $0x8] sm:$0xff] %vm362, %v467
        %472 = vst.msk [vmem:[%s469 + $0x10] sm:$0x3] %vm365, %v468
        %s473 = scalar_lea.vmem [#allocation2], 144
        %v474 = vld [vmem:[%s473] sm:$0xff]
        %v475 = vld [vmem:[%s473 + $0x8] sm:$0xff]
        %v476 = vld [vmem:[%s473 + $0x10] sm:$0x3]
        %s477 = scalar_lea.vmem [#allocation3], 72
        %478 = vst.msk [vmem:[%s477] sm:$0xff] %vm362, %v474
        %479 = vst.msk [vmem:[%s477 + $0x8] sm:$0xff] %vm362, %v475
        %480 = vst.msk [vmem:[%s477 + $0x10] sm:$0x3] %vm365, %v476
        %s481 = scalar_lea.vmem [#allocation2], 192
        %v482 = vld [vmem:[%s481] sm:$0xff]
        %v483 = vld [vmem:[%s481 + $0x8] sm:$0xff]
        %v484 = vld [vmem:[%s481 + $0x10] sm:$0x3]
        %s485 = scalar_lea.vmem [#allocation3], 96
        %486 = vst.msk [vmem:[%s485] sm:$0xff] %vm362, %v482
        %487 = vst.msk [vmem:[%s485 + $0x8] sm:$0xff] %vm362, %v483
        %488 = vst.msk [vmem:[%s485 + $0x10] sm:$0x3] %vm365, %v484
        %s489 = scalar_lea.vmem [#allocation2], 240
        %v490 = vld [vmem:[%s489] sm:$0xff]
        %v491 = vld [vmem:[%s489 + $0x8] sm:$0xff]
        %v492 = vld [vmem:[%s489 + $0x10] sm:$0x3]
        %s493 = scalar_lea.vmem [#allocation3], 120
        %494 = vst.msk [vmem:[%s493] sm:$0xff] %vm362, %v490
        %495 = vst.msk [vmem:[%s493 + $0x8] sm:$0xff] %vm362, %v491
        %496 = vst.msk [vmem:[%s493 + $0x10] sm:$0x3] %vm365, %v492
        %s497 = scalar_lea.vmem [#allocation2], 288
        %v498 = vld [vmem:[%s497] sm:$0xff]
        %v499 = vld [vmem:[%s497 + $0x8] sm:$0xff]
        %v500 = vld [vmem:[%s497 + $0x10] sm:$0x3]
        %s501 = scalar_lea.vmem [#allocation3], 144
        %502 = vst.msk [vmem:[%s501] sm:$0xff] %vm362, %v498
        %503 = vst.msk [vmem:[%s501 + $0x8] sm:$0xff] %vm362, %v499
        %504 = vst.msk [vmem:[%s501 + $0x10] sm:$0x3] %vm365, %v500
        %s505 = scalar_lea.vmem [#allocation2], 336
        %v506 = vld [vmem:[%s505] sm:$0xff]
        %v507 = vld [vmem:[%s505 + $0x8] sm:$0xff]
        %v508 = vld [vmem:[%s505 + $0x10] sm:$0x3]
        %s509 = scalar_lea.vmem [#allocation3], 168
        %510 = vst.msk [vmem:[%s509] sm:$0xff] %vm362, %v506
        %511 = vst.msk [vmem:[%s509 + $0x8] sm:$0xff] %vm362, %v507
        %512 = vst.msk [vmem:[%s509 + $0x10] sm:$0x3] %vm365, %v508
        %v513 = vld [vmem:[#allocation3] ss:$2 sm:$0xff]
        %s514 = scalar_lea.vmem [#allocation3], 24
        %v515 = vld [vmem:[%s514] ss:$2 sm:$0xff]
        %s516 = scalar_lea.vmem [#allocation3], 48
        %v517 = vld [vmem:[%s516] ss:$2 sm:$0xff]
        %s518 = scalar_lea.vmem [#allocation3], 72
        %v519 = vld [vmem:[%s518] ss:$2 sm:$0xff]
        %s520 = scalar_lea.vmem [#allocation3], 96
        %v521 = vld [vmem:[%s520] ss:$2 sm:$0xff]
        %s522 = scalar_lea.vmem [#allocation3], 120
        %v523 = vld [vmem:[%s522] ss:$2 sm:$0xff]
        %s524 = scalar_lea.vmem [#allocation3], 144
        %v525 = vld [vmem:[%s524] ss:$2 sm:$0xff]
        %s526 = scalar_lea.vmem [#allocation3], 168
        %v527 = vld [vmem:[%s526] ss:$2 sm:$0xff]
        %v528 = vld [vmem:[%s1] sm:$0xf]
        %s529 = scalar_lea.vmem [#allocation3], 1
        %v530 = vld [vmem:[%s529] ss:$2 sm:$0xff]
        %s531 = scalar_lea.vmem [#allocation3], 25
        %v532 = vld [vmem:[%s531] ss:$2 sm:$0xff]
        %s533 = scalar_lea.vmem [#allocation3], 49
        %v534 = vld [vmem:[%s533] ss:$2 sm:$0xff]
        %s535 = scalar_lea.vmem [#allocation3], 73
        %v536 = vld [vmem:[%s535] ss:$2 sm:$0xff]
        %s537 = scalar_lea.vmem [#allocation3], 97
        %v538 = vld [vmem:[%s537] ss:$2 sm:$0xff]
        %s539 = scalar_lea.vmem [#allocation3], 121
        %v540 = vld [vmem:[%s539] ss:$2 sm:$0xff]
        %s541 = scalar_lea.vmem [#allocation3], 145
        %v542 = vld [vmem:[%s541] ss:$2 sm:$0xff]
        %s543 = scalar_lea.vmem [#allocation3], 169
        %v544 = vld [vmem:[%s543] ss:$2 sm:$0xff]
        %s545 = scalar_lea.vmem %s1, 4
        %v546 = vld [vmem:[%s545] sm:$0xf]
        %v548 = vsel %vm362, %v530, 0
        %v551 = vsel %vm362, %v532, 0
        %v554 = vsel %vm362, %v534, 0
        %v557 = vsel %vm362, %v536, 0
        %v560 = vsel %vm362, %v538, 0
        %v563 = vsel %vm362, %v540, 0
        %v566 = vsel %vm362, %v542, 0
        %v569 = vsel %vm362, %v544, 0
        %vm571 = vcmask 1043456
        %v573 = vsel %vm571, %v546, 0
        %575 = vmatpush.msra.mxu0 0.0
        %576 = vmatpush.msra.mxu0 0.0
        %577 = vmatpush.msra.mxu0 0.0
        %578 = vmatpush.msra.mxu0 0.0
        %579 = vmatpush.msra.mxu0 0.0
        %580 = vmatpush.msra.mxu0 0.0
        %581 = vmatpush.msra.mxu0 0.0
        %582 = vmatpush.msra.mxu0 0.0
        %583 = vmatpush.msra.mxu0 0.0
        %584 = vmatpush.msra.mxu0 0.0
        %585 = vmatpush.msra.mxu0 0.0
        %586 = vmatpush.msra.mxu0 0.0
        %587 = vmatpush.msra.mxu0 0.0
        %588 = vmatpush.msra.mxu0 0.0
        %589 = vmatpush.msra.mxu0 0.0
        %590 = vmatpush.msra.mxu0 %v573
        %591 = vmatmul.f32.gmra.mxu0 %v548
        %v592 = vpop.f32.mrf.mxu0
        %v593 = vadd.f32 0.0, %v592
        %594 = vmatmul.f32.gmra.mxu0 %v551
        %v595 = vpop.f32.mrf.mxu0
        %v596 = vadd.f32 0.0, %v595
        %597 = vmatmul.f32.gmra.mxu0 %v554
        %v598 = vpop.f32.mrf.mxu0
        %v599 = vadd.f32 0.0, %v598
        %600 = vmatmul.f32.gmra.mxu0 %v557
        %v601 = vpop.f32.mrf.mxu0
        %v602 = vadd.f32 0.0, %v601
        %603 = vmatmul.f32.gmra.mxu0 %v560
        %v604 = vpop.f32.mrf.mxu0
        %v605 = vadd.f32 0.0, %v604
        %606 = vmatmul.f32.gmra.mxu0 %v563
        %v607 = vpop.f32.mrf.mxu0
        %v608 = vadd.f32 0.0, %v607
        %609 = vmatmul.f32.gmra.mxu0 %v566
        %v610 = vpop.f32.mrf.mxu0
        %v611 = vadd.f32 0.0, %v610
        %612 = vmatmul.f32.gmra.mxu0 %v569
        %v613 = vpop.f32.mrf.mxu0
        %v614 = vadd.f32 0.0, %v613
        %615 = vdwg.mxu0
        %v617 = vsel %vm362, %v513, 0
        %v620 = vsel %vm362, %v515, 0
        %v623 = vsel %vm362, %v517, 0
        %v626 = vsel %vm362, %v519, 0
        %v629 = vsel %vm362, %v521, 0
        %v632 = vsel %vm362, %v523, 0
        %v635 = vsel %vm362, %v525, 0
        %v638 = vsel %vm362, %v527, 0
        %v641 = vsel %vm571, %v528, 0
        %643 = vmatpush.msra.mxu0 0.0
        %644 = vmatpush.msra.mxu0 0.0
        %645 = vmatpush.msra.mxu0 0.0
        %646 = vmatpush.msra.mxu0 0.0
        %647 = vmatpush.msra.mxu0 0.0
        %648 = vmatpush.msra.mxu0 0.0
        %649 = vmatpush.msra.mxu0 0.0
        %650 = vmatpush.msra.mxu0 0.0
        %651 = vmatpush.msra.mxu0 0.0
        %652 = vmatpush.msra.mxu0 0.0
        %653 = vmatpush.msra.mxu0 0.0
        %654 = vmatpush.msra.mxu0 0.0
        %655 = vmatpush.msra.mxu0 0.0
        %656 = vmatpush.msra.mxu0 0.0
        %657 = vmatpush.msra.mxu0 0.0
        %658 = vmatpush.msra.mxu0 %v641
        %659 = vmatmul.f32.gmra.mxu0 %v617
        %v660 = vpop.f32.mrf.mxu0
        %v661 = vadd.f32 %v593, %v660
        %662 = vmatmul.f32.gmra.mxu0 %v620
        %v663 = vpop.f32.mrf.mxu0
        %v664 = vadd.f32 %v596, %v663
        %665 = vmatmul.f32.gmra.mxu0 %v623
        %v666 = vpop.f32.mrf.mxu0
        %v667 = vadd.f32 %v599, %v666
        %668 = vmatmul.f32.gmra.mxu0 %v626
        %v669 = vpop.f32.mrf.mxu0
        %v670 = vadd.f32 %v602, %v669
        %671 = vmatmul.f32.gmra.mxu0 %v629
        %v672 = vpop.f32.mrf.mxu0
        %v673 = vadd.f32 %v605, %v672
        %674 = vmatmul.f32.gmra.mxu0 %v632
        %v675 = vpop.f32.mrf.mxu0
        %v676 = vadd.f32 %v608, %v675
        %677 = vmatmul.f32.gmra.mxu0 %v635
        %v678 = vpop.f32.mrf.mxu0
        %v679 = vadd.f32 %v611, %v678
        %680 = vmatmul.f32.gmra.mxu0 %v638
        %v681 = vpop.f32.mrf.mxu0
        %v682 = vadd.f32 %v614, %v681
        %683 = vdwg.mxu0
        %s684 = scalar_lea.vmem [#allocation3], 2
        %v685 = vld [vmem:[%s684] ss:$2 sm:$0xff]
        %s686 = scalar_lea.vmem [#allocation3], 26
        %v687 = vld [vmem:[%s686] ss:$2 sm:$0xff]
        %s688 = scalar_lea.vmem [#allocation3], 50
        %v689 = vld [vmem:[%s688] ss:$2 sm:$0xff]
        %s690 = scalar_lea.vmem [#allocation3], 74
        %v691 = vld [vmem:[%s690] ss:$2 sm:$0xff]
        %s692 = scalar_lea.vmem [#allocation3], 98
        %v693 = vld [vmem:[%s692] ss:$2 sm:$0xff]
        %s694 = scalar_lea.vmem [#allocation3], 122
        %v695 = vld [vmem:[%s694] ss:$2 sm:$0xff]
        %s696 = scalar_lea.vmem [#allocation3], 146
        %v697 = vld [vmem:[%s696] ss:$2 sm:$0xff]
        %s698 = scalar_lea.vmem [#allocation3], 170
        %v699 = vld [vmem:[%s698] ss:$2 sm:$0xff]
        %s700 = scalar_lea.vmem %s1, 8
        %v701 = vld [vmem:[%s700] sm:$0xf]
        %v703 = vsel %vm362, %v685, 0
        %v706 = vsel %vm362, %v687, 0
        %v709 = vsel %vm362, %v689, 0
        %v712 = vsel %vm362, %v691, 0
        %v715 = vsel %vm362, %v693, 0
        %v718 = vsel %vm362, %v695, 0
        %v721 = vsel %vm362, %v697, 0
        %v724 = vsel %vm362, %v699, 0
        %v727 = vsel %vm571, %v701, 0
        %729 = vmatpush.msra.mxu0 0.0
        %730 = vmatpush.msra.mxu0 0.0
        %731 = vmatpush.msra.mxu0 0.0
        %732 = vmatpush.msra.mxu0 0.0
        %733 = vmatpush.msra.mxu0 0.0
        %734 = vmatpush.msra.mxu0 0.0
        %735 = vmatpush.msra.mxu0 0.0
        %736 = vmatpush.msra.mxu0 0.0
        %737 = vmatpush.msra.mxu0 0.0
        %738 = vmatpush.msra.mxu0 0.0
        %739 = vmatpush.msra.mxu0 0.0
        %740 = vmatpush.msra.mxu0 0.0
        %741 = vmatpush.msra.mxu0 0.0
        %742 = vmatpush.msra.mxu0 0.0
        %743 = vmatpush.msra.mxu0 0.0
        %744 = vmatpush.msra.mxu0 %v727
        %745 = vmatmul.f32.gmra.mxu0 %v703
        %v746 = vpop.f32.mrf.mxu0
        %v747 = vadd.f32 0.0, %v746
        %748 = vmatmul.f32.gmra.mxu0 %v706
        %v749 = vpop.f32.mrf.mxu0
        %v750 = vadd.f32 0.0, %v749
        %751 = vmatmul.f32.gmra.mxu0 %v709
        %v752 = vpop.f32.mrf.mxu0
        %v753 = vadd.f32 0.0, %v752
        %754 = vmatmul.f32.gmra.mxu0 %v712
        %v755 = vpop.f32.mrf.mxu0
        %v756 = vadd.f32 0.0, %v755
        %757 = vmatmul.f32.gmra.mxu0 %v715
        %v758 = vpop.f32.mrf.mxu0
        %v759 = vadd.f32 0.0, %v758
        %760 = vmatmul.f32.gmra.mxu0 %v718
        %v761 = vpop.f32.mrf.mxu0
        %v762 = vadd.f32 0.0, %v761
        %763 = vmatmul.f32.gmra.mxu0 %v721
        %v764 = vpop.f32.mrf.mxu0
        %v765 = vadd.f32 0.0, %v764
        %766 = vmatmul.f32.gmra.mxu0 %v724
        %v767 = vpop.f32.mrf.mxu0
        %v768 = vadd.f32 0.0, %v767
        %769 = vdwg.mxu0
        %v770 = vadd.f32 %v661, %v747
        %v771 = vadd.f32 %v664, %v750
        %v772 = vadd.f32 %v667, %v753
        %v773 = vadd.f32 %v670, %v756
        %v774 = vadd.f32 %v673, %v759
        %v775 = vadd.f32 %v676, %v762
        %v776 = vadd.f32 %v679, %v765
        %v777 = vadd.f32 %v682, %v768
        %s778 = scalar_lea.vmem [#allocation3], 3
        %v779 = vld [vmem:[%s778] ss:$2 sm:$0xff]
        %s780 = scalar_lea.vmem [#allocation3], 27
        %v781 = vld [vmem:[%s780] ss:$2 sm:$0xff]
        %s782 = scalar_lea.vmem [#allocation3], 51
        %v783 = vld [vmem:[%s782] ss:$2 sm:$0xff]
        %s784 = scalar_lea.vmem [#allocation3], 75
        %v785 = vld [vmem:[%s784] ss:$2 sm:$0xff]
        %s786 = scalar_lea.vmem [#allocation3], 99
        %v787 = vld [vmem:[%s786] ss:$2 sm:$0xff]
        %s788 = scalar_lea.vmem [#allocation3], 123
        %v789 = vld [vmem:[%s788] ss:$2 sm:$0xff]
        %s790 = scalar_lea.vmem [#allocation3], 147
        %v791 = vld [vmem:[%s790] ss:$2 sm:$0xff]
        %s792 = scalar_lea.vmem [#allocation3], 171
        %v793 = vld [vmem:[%s792] ss:$2 sm:$0xff]
        %s794 = scalar_lea.vmem %s1, 12
        %v795 = vld [vmem:[%s794] sm:$0xf]
        %v797 = vsel %vm362, %v779, 0
        %v800 = vsel %vm362, %v781, 0
        %v803 = vsel %vm362, %v783, 0
        %v806 = vsel %vm362, %v785, 0
        %v809 = vsel %vm362, %v787, 0
        %v812 = vsel %vm362, %v789, 0
        %v815 = vsel %vm362, %v791, 0
        %v818 = vsel %vm362, %v793, 0
        %v821 = vsel %vm571, %v795, 0
        %823 = vmatpush.msra.mxu0 0.0
        %824 = vmatpush.msra.mxu0 0.0
        %825 = vmatpush.msra.mxu0 0.0
        %826 = vmatpush.msra.mxu0 0.0
        %827 = vmatpush.msra.mxu0 0.0
        %828 = vmatpush.msra.mxu0 0.0
        %829 = vmatpush.msra.mxu0 0.0
        %830 = vmatpush.msra.mxu0 0.0
        %831 = vmatpush.msra.mxu0 0.0
        %832 = vmatpush.msra.mxu0 0.0
        %833 = vmatpush.msra.mxu0 0.0
        %834 = vmatpush.msra.mxu0 0.0
        %835 = vmatpush.msra.mxu0 0.0
        %836 = vmatpush.msra.mxu0 0.0
        %837 = vmatpush.msra.mxu0 0.0
        %838 = vmatpush.msra.mxu0 %v821
        %839 = vmatmul.f32.gmra.mxu0 %v797
        %v840 = vpop.f32.mrf.mxu0
        %v841 = vadd.f32 0.0, %v840
        %842 = vmatmul.f32.gmra.mxu0 %v800
        %v843 = vpop.f32.mrf.mxu0
        %v844 = vadd.f32 0.0, %v843
        %845 = vmatmul.f32.gmra.mxu0 %v803
        %v846 = vpop.f32.mrf.mxu0
        %v847 = vadd.f32 0.0, %v846
        %848 = vmatmul.f32.gmra.mxu0 %v806
        %v849 = vpop.f32.mrf.mxu0
        %v850 = vadd.f32 0.0, %v849
        %851 = vmatmul.f32.gmra.mxu0 %v809
        %v852 = vpop.f32.mrf.mxu0
        %v853 = vadd.f32 0.0, %v852
        %854 = vmatmul.f32.gmra.mxu0 %v812
        %v855 = vpop.f32.mrf.mxu0
        %v856 = vadd.f32 0.0, %v855
        %857 = vmatmul.f32.gmra.mxu0 %v815
        %v858 = vpop.f32.mrf.mxu0
        %v859 = vadd.f32 0.0, %v858
        %860 = vmatmul.f32.gmra.mxu0 %v818
        %v861 = vpop.f32.mrf.mxu0
        %v862 = vadd.f32 0.0, %v861
        %863 = vdwg.mxu0
        %v864 = vadd.f32 %v770, %v841
        %v865 = vadd.f32 %v771, %v844
        %v866 = vadd.f32 %v772, %v847
        %v867 = vadd.f32 %v773, %v850
        %v868 = vadd.f32 %v774, %v853
        %v869 = vadd.f32 %v775, %v856
        %v870 = vadd.f32 %v776, %v859
        %v871 = vadd.f32 %v777, %v862
        %v872 = vld [vmem:[%s418] sm:$0xff]
        %v873 = vld [vmem:[%s418 + $0x8] sm:$0xff]
        %v874 = vld [vmem:[%s418 + $0x10] sm:$0x3]
        %875 = vst.msk [vmem:[#allocation3] sm:$0xff] %vm362, %v872
        %876 = vst.msk [vmem:[#allocation3 + $0x8] sm:$0xff] %vm362, %v873
        %877 = vst.msk [vmem:[#allocation3 + $0x10] sm:$0x3] %vm365, %v874
        %s878 = scalar_lea.vmem [#allocation2], 72
        %v879 = vld [vmem:[%s878] sm:$0xff]
        %v880 = vld [vmem:[%s878 + $0x8] sm:$0xff]
        %v881 = vld [vmem:[%s878 + $0x10] sm:$0x3]
        %882 = vst.msk [vmem:[%s461] sm:$0xff] %vm362, %v879
        %883 = vst.msk [vmem:[%s461 + $0x8] sm:$0xff] %vm362, %v880
        %884 = vst.msk [vmem:[%s461 + $0x10] sm:$0x3] %vm365, %v881
        %s885 = scalar_lea.vmem [#allocation2], 120
        %v886 = vld [vmem:[%s885] sm:$0xff]
        %v887 = vld [vmem:[%s885 + $0x8] sm:$0xff]
        %v888 = vld [vmem:[%s885 + $0x10] sm:$0x3]
        %889 = vst.msk [vmem:[%s469] sm:$0xff] %vm362, %v886
        %890 = vst.msk [vmem:[%s469 + $0x8] sm:$0xff] %vm362, %v887
        %891 = vst.msk [vmem:[%s469 + $0x10] sm:$0x3] %vm365, %v888
        %s892 = scalar_lea.vmem [#allocation2], 168
        %v893 = vld [vmem:[%s892] sm:$0xff]
        %v894 = vld [vmem:[%s892 + $0x8] sm:$0xff]
        %v895 = vld [vmem:[%s892 + $0x10] sm:$0x3]
        %896 = vst.msk [vmem:[%s477] sm:$0xff] %vm362, %v893
        %897 = vst.msk [vmem:[%s477 + $0x8] sm:$0xff] %vm362, %v894
        %898 = vst.msk [vmem:[%s477 + $0x10] sm:$0x3] %vm365, %v895
        %s899 = scalar_lea.vmem [#allocation2], 216
        %v900 = vld [vmem:[%s899] sm:$0xff]
        %v901 = vld [vmem:[%s899 + $0x8] sm:$0xff]
        %v902 = vld [vmem:[%s899 + $0x10] sm:$0x3]
        %903 = vst.msk [vmem:[%s485] sm:$0xff] %vm362, %v900
        %904 = vst.msk [vmem:[%s485 + $0x8] sm:$0xff] %vm362, %v901
        %905 = vst.msk [vmem:[%s485 + $0x10] sm:$0x3] %vm365, %v902
        %s906 = scalar_lea.vmem [#allocation2], 264
        %v907 = vld [vmem:[%s906] sm:$0xff]
        %v908 = vld [vmem:[%s906 + $0x8] sm:$0xff]
        %v909 = vld [vmem:[%s906 + $0x10] sm:$0x3]
        %910 = vst.msk [vmem:[%s493] sm:$0xff] %vm362, %v907
        %911 = vst.msk [vmem:[%s493 + $0x8] sm:$0xff] %vm362, %v908
        %912 = vst.msk [vmem:[%s493 + $0x10] sm:$0x3] %vm365, %v909
        %s913 = scalar_lea.vmem [#allocation2], 312
        %v914 = vld [vmem:[%s913] sm:$0xff]
        %v915 = vld [vmem:[%s913 + $0x8] sm:$0xff]
        %v916 = vld [vmem:[%s913 + $0x10] sm:$0x3]
        %917 = vst.msk [vmem:[%s501] sm:$0xff] %vm362, %v914
        %918 = vst.msk [vmem:[%s501 + $0x8] sm:$0xff] %vm362, %v915
        %919 = vst.msk [vmem:[%s501 + $0x10] sm:$0x3] %vm365, %v916
        %s920 = scalar_lea.vmem [#allocation2], 360
        %v921 = vld [vmem:[%s920] sm:$0xff]
        %v922 = vld [vmem:[%s920 + $0x8] sm:$0xff]
        %v923 = vld [vmem:[%s920 + $0x10] sm:$0x3]
        %924 = vst.msk [vmem:[%s509] sm:$0xff] %vm362, %v921
        %925 = vst.msk [vmem:[%s509 + $0x8] sm:$0xff] %vm362, %v922
        %926 = vst.msk [vmem:[%s509 + $0x10] sm:$0x3] %vm365, %v923
        %v927 = vld [vmem:[#allocation3] ss:$2 sm:$0xff]
        %v928 = vld [vmem:[%s514] ss:$2 sm:$0xff]
        %v929 = vld [vmem:[%s516] ss:$2 sm:$0xff]
        %v930 = vld [vmem:[%s518] ss:$2 sm:$0xff]
        %v931 = vld [vmem:[%s520] ss:$2 sm:$0xff]
        %v932 = vld [vmem:[%s522] ss:$2 sm:$0xff]
        %v933 = vld [vmem:[%s524] ss:$2 sm:$0xff]
        %v934 = vld [vmem:[%s526] ss:$2 sm:$0xff]
        %s935 = scalar_lea.vmem %s1, 16
        %v936 = vld [vmem:[%s935] sm:$0xf]
        %v938 = vsel %vm362, %v927, 0
        %v941 = vsel %vm362, %v928, 0
        %v944 = vsel %vm362, %v929, 0
        %v947 = vsel %vm362, %v930, 0
        %v950 = vsel %vm362, %v931, 0
        %v953 = vsel %vm362, %v932, 0
        %v956 = vsel %vm362, %v933, 0
        %v959 = vsel %vm362, %v934, 0
        %v962 = vsel %vm571, %v936, 0
        %964 = vmatpush.msra.mxu0 0.0
        %965 = vmatpush.msra.mxu0 0.0
        %966 = vmatpush.msra.mxu0 0.0
        %967 = vmatpush.msra.mxu0 0.0
        %968 = vmatpush.msra.mxu0 0.0
        %969 = vmatpush.msra.mxu0 0.0
        %970 = vmatpush.msra.mxu0 0.0
        %971 = vmatpush.msra.mxu0 0.0
        %972 = vmatpush.msra.mxu0 0.0
        %973 = vmatpush.msra.mxu0 0.0
        %974 = vmatpush.msra.mxu0 0.0
        %975 = vmatpush.msra.mxu0 0.0
        %976 = vmatpush.msra.mxu0 0.0
        %977 = vmatpush.msra.mxu0 0.0
        %978 = vmatpush.msra.mxu0 0.0
        %979 = vmatpush.msra.mxu0 %v962
        %980 = vmatmul.f32.gmra.mxu0 %v938
        %v981 = vpop.f32.mrf.mxu0
        %v982 = vadd.f32 0.0, %v981
        %983 = vmatmul.f32.gmra.mxu0 %v941
        %v984 = vpop.f32.mrf.mxu0
        %v985 = vadd.f32 0.0, %v984
        %986 = vmatmul.f32.gmra.mxu0 %v944
        %v987 = vpop.f32.mrf.mxu0
        %v988 = vadd.f32 0.0, %v987
        %989 = vmatmul.f32.gmra.mxu0 %v947
        %v990 = vpop.f32.mrf.mxu0
        %v991 = vadd.f32 0.0, %v990
        %992 = vmatmul.f32.gmra.mxu0 %v950
        %v993 = vpop.f32.mrf.mxu0
        %v994 = vadd.f32 0.0, %v993
        %995 = vmatmul.f32.gmra.mxu0 %v953
        %v996 = vpop.f32.mrf.mxu0
        %v997 = vadd.f32 0.0, %v996
        %998 = vmatmul.f32.gmra.mxu0 %v956
        %v999 = vpop.f32.mrf.mxu0
        %v1000 = vadd.f32 0.0, %v999
        %1001 = vmatmul.f32.gmra.mxu0 %v959
        %v1002 = vpop.f32.mrf.mxu0
        %v1003 = vadd.f32 0.0, %v1002
        %1004 = vdwg.mxu0
        %v1005 = vadd.f32 %v864, %v982
        %v1006 = vadd.f32 %v865, %v985
        %v1007 = vadd.f32 %v866, %v988
        %v1008 = vadd.f32 %v867, %v991
        %v1009 = vadd.f32 %v868, %v994
        %v1010 = vadd.f32 %v869, %v997
        %v1011 = vadd.f32 %v870, %v1000
        %v1012 = vadd.f32 %v871, %v1003
        %v1013 = vld [vmem:[%s529] ss:$2 sm:$0xff]
        %v1014 = vld [vmem:[%s531] ss:$2 sm:$0xff]
        %v1015 = vld [vmem:[%s533] ss:$2 sm:$0xff]
        %v1016 = vld [vmem:[%s535] ss:$2 sm:$0xff]
        %v1017 = vld [vmem:[%s537] ss:$2 sm:$0xff]
        %v1018 = vld [vmem:[%s539] ss:$2 sm:$0xff]
        %v1019 = vld [vmem:[%s541] ss:$2 sm:$0xff]
        %v1020 = vld [vmem:[%s543] ss:$2 sm:$0xff]
        %s1021 = scalar_lea.vmem %s1, 20
        %v1022 = vld [vmem:[%s1021] sm:$0xf]
        %v1024 = vsel %vm362, %v1013, 0
        %v1027 = vsel %vm362, %v1014, 0
        %v1030 = vsel %vm362, %v1015, 0
        %v1033 = vsel %vm362, %v1016, 0
        %v1036 = vsel %vm362, %v1017, 0
        %v1039 = vsel %vm362, %v1018, 0
        %v1042 = vsel %vm362, %v1019, 0
        %v1045 = vsel %vm362, %v1020, 0
        %v1048 = vsel %vm571, %v1022, 0
        %1050 = vmatpush.msra.mxu0 0.0
        %1051 = vmatpush.msra.mxu0 0.0
        %1052 = vmatpush.msra.mxu0 0.0
        %1053 = vmatpush.msra.mxu0 0.0
        %1054 = vmatpush.msra.mxu0 0.0
        %1055 = vmatpush.msra.mxu0 0.0
        %1056 = vmatpush.msra.mxu0 0.0
        %1057 = vmatpush.msra.mxu0 0.0
        %1058 = vmatpush.msra.mxu0 0.0
        %1059 = vmatpush.msra.mxu0 0.0
        %1060 = vmatpush.msra.mxu0 0.0
        %1061 = vmatpush.msra.mxu0 0.0
        %1062 = vmatpush.msra.mxu0 0.0
        %1063 = vmatpush.msra.mxu0 0.0
        %1064 = vmatpush.msra.mxu0 0.0
        %1065 = vmatpush.msra.mxu0 %v1048
        %1066 = vmatmul.f32.gmra.mxu0 %v1024
        %v1067 = vpop.f32.mrf.mxu0
        %v1068 = vadd.f32 0.0, %v1067
        %1069 = vmatmul.f32.gmra.mxu0 %v1027
        %v1070 = vpop.f32.mrf.mxu0
        %v1071 = vadd.f32 0.0, %v1070
        %1072 = vmatmul.f32.gmra.mxu0 %v1030
        %v1073 = vpop.f32.mrf.mxu0
        %v1074 = vadd.f32 0.0, %v1073
        %1075 = vmatmul.f32.gmra.mxu0 %v1033
        %v1076 = vpop.f32.mrf.mxu0
        %v1077 = vadd.f32 0.0, %v1076
        %1078 = vmatmul.f32.gmra.mxu0 %v1036
        %v1079 = vpop.f32.mrf.mxu0
        %v1080 = vadd.f32 0.0, %v1079
        %1081 = vmatmul.f32.gmra.mxu0 %v1039
        %v1082 = vpop.f32.mrf.mxu0
        %v1083 = vadd.f32 0.0, %v1082
        %1084 = vmatmul.f32.gmra.mxu0 %v1042
        %v1085 = vpop.f32.mrf.mxu0
        %v1086 = vadd.f32 0.0, %v1085
        %1087 = vmatmul.f32.gmra.mxu0 %v1045
        %v1088 = vpop.f32.mrf.mxu0
        %v1089 = vadd.f32 0.0, %v1088
        %1090 = vdwg.mxu0
        %v1091 = vadd.f32 %v1005, %v1068
        %v1092 = vadd.f32 %v1006, %v1071
        %v1093 = vadd.f32 %v1007, %v1074
        %v1094 = vadd.f32 %v1008, %v1077
        %v1095 = vadd.f32 %v1009, %v1080
        %v1096 = vadd.f32 %v1010, %v1083
        %v1097 = vadd.f32 %v1011, %v1086
        %v1098 = vadd.f32 %v1012, %v1089
        %v1099 = vld [vmem:[%s684] ss:$2 sm:$0xff]
        %v1100 = vld [vmem:[%s686] ss:$2 sm:$0xff]
        %v1101 = vld [vmem:[%s688] ss:$2 sm:$0xff]
        %v1102 = vld [vmem:[%s690] ss:$2 sm:$0xff]
        %v1103 = vld [vmem:[%s692] ss:$2 sm:$0xff]
        %v1104 = vld [vmem:[%s694] ss:$2 sm:$0xff]
        %v1105 = vld [vmem:[%s696] ss:$2 sm:$0xff]
        %v1106 = vld [vmem:[%s698] ss:$2 sm:$0xff]
        %s1107 = scalar_lea.vmem %s1, 24
        %v1108 = vld [vmem:[%s1107] sm:$0xf]
        %v1110 = vsel %vm362, %v1099, 0
        %v1113 = vsel %vm362, %v1100, 0
        %v1116 = vsel %vm362, %v1101, 0
        %v1119 = vsel %vm362, %v1102, 0
        %v1122 = vsel %vm362, %v1103, 0
        %v1125 = vsel %vm362, %v1104, 0
        %v1128 = vsel %vm362, %v1105, 0
        %v1131 = vsel %vm362, %v1106, 0
        %v1134 = vsel %vm571, %v1108, 0
        %1136 = vmatpush.msra.mxu0 0.0
        %1137 = vmatpush.msra.mxu0 0.0
        %1138 = vmatpush.msra.mxu0 0.0
        %1139 = vmatpush.msra.mxu0 0.0
        %1140 = vmatpush.msra.mxu0 0.0
        %1141 = vmatpush.msra.mxu0 0.0
        %1142 = vmatpush.msra.mxu0 0.0
        %1143 = vmatpush.msra.mxu0 0.0
        %1144 = vmatpush.msra.mxu0 0.0
        %1145 = vmatpush.msra.mxu0 0.0
        %1146 = vmatpush.msra.mxu0 0.0
        %1147 = vmatpush.msra.mxu0 0.0
        %1148 = vmatpush.msra.mxu0 0.0
        %1149 = vmatpush.msra.mxu0 0.0
        %1150 = vmatpush.msra.mxu0 0.0
        %1151 = vmatpush.msra.mxu0 %v1134
        %1152 = vmatmul.f32.gmra.mxu0 %v1110
        %v1153 = vpop.f32.mrf.mxu0
        %v1154 = vadd.f32 0.0, %v1153
        %1155 = vmatmul.f32.gmra.mxu0 %v1113
        %v1156 = vpop.f32.mrf.mxu0
        %v1157 = vadd.f32 0.0, %v1156
        %1158 = vmatmul.f32.gmra.mxu0 %v1116
        %v1159 = vpop.f32.mrf.mxu0
        %v1160 = vadd.f32 0.0, %v1159
        %1161 = vmatmul.f32.gmra.mxu0 %v1119
        %v1162 = vpop.f32.mrf.mxu0
        %v1163 = vadd.f32 0.0, %v1162
        %1164 = vmatmul.f32.gmra.mxu0 %v1122
        %v1165 = vpop.f32.mrf.mxu0
        %v1166 = vadd.f32 0.0, %v1165
        %1167 = vmatmul.f32.gmra.mxu0 %v1125
        %v1168 = vpop.f32.mrf.mxu0
        %v1169 = vadd.f32 0.0, %v1168
        %1170 = vmatmul.f32.gmra.mxu0 %v1128
        %v1171 = vpop.f32.mrf.mxu0
        %v1172 = vadd.f32 0.0, %v1171
        %1173 = vmatmul.f32.gmra.mxu0 %v1131
        %v1174 = vpop.f32.mrf.mxu0
        %v1175 = vadd.f32 0.0, %v1174
        %1176 = vdwg.mxu0
        %v1177 = vadd.f32 %v1091, %v1154
        %v1178 = vadd.f32 %v1092, %v1157
        %v1179 = vadd.f32 %v1093, %v1160
        %v1180 = vadd.f32 %v1094, %v1163
        %v1181 = vadd.f32 %v1095, %v1166
        %v1182 = vadd.f32 %v1096, %v1169
        %v1183 = vadd.f32 %v1097, %v1172
        %v1184 = vadd.f32 %v1098, %v1175
        %v1185 = vld [vmem:[%s778] ss:$2 sm:$0xff]
        %v1186 = vld [vmem:[%s780] ss:$2 sm:$0xff]
        %v1187 = vld [vmem:[%s782] ss:$2 sm:$0xff]
        %v1188 = vld [vmem:[%s784] ss:$2 sm:$0xff]
        %v1189 = vld [vmem:[%s786] ss:$2 sm:$0xff]
        %v1190 = vld [vmem:[%s788] ss:$2 sm:$0xff]
        %v1191 = vld [vmem:[%s790] ss:$2 sm:$0xff]
        %v1192 = vld [vmem:[%s792] ss:$2 sm:$0xff]
        %s1193 = scalar_lea.vmem %s1, 28
        %v1194 = vld [vmem:[%s1193] sm:$0xf]
        %v1196 = vsel %vm362, %v1185, 0
        %v1199 = vsel %vm362, %v1186, 0
        %v1202 = vsel %vm362, %v1187, 0
        %v1205 = vsel %vm362, %v1188, 0
        %v1208 = vsel %vm362, %v1189, 0
        %v1211 = vsel %vm362, %v1190, 0
        %v1214 = vsel %vm362, %v1191, 0
        %v1217 = vsel %vm362, %v1192, 0
        %v1220 = vsel %vm571, %v1194, 0
        %1222 = vmatpush.msra.mxu0 0.0
        %1223 = vmatpush.msra.mxu0 0.0
        %1224 = vmatpush.msra.mxu0 0.0
        %1225 = vmatpush.msra.mxu0 0.0
        %1226 = vmatpush.msra.mxu0 0.0
        %1227 = vmatpush.msra.mxu0 0.0
        %1228 = vmatpush.msra.mxu0 0.0
        %1229 = vmatpush.msra.mxu0 0.0
        %1230 = vmatpush.msra.mxu0 0.0
        %1231 = vmatpush.msra.mxu0 0.0
        %1232 = vmatpush.msra.mxu0 0.0
        %1233 = vmatpush.msra.mxu0 0.0
        %1234 = vmatpush.msra.mxu0 0.0
        %1235 = vmatpush.msra.mxu0 0.0
        %1236 = vmatpush.msra.mxu0 0.0
        %1237 = vmatpush.msra.mxu0 %v1220
        %1238 = vmatmul.f32.gmra.mxu0 %v1196
        %v1239 = vpop.f32.mrf.mxu0
        %v1240 = vadd.f32 0.0, %v1239
        %1241 = vmatmul.f32.gmra.mxu0 %v1199
        %v1242 = vpop.f32.mrf.mxu0
        %v1243 = vadd.f32 0.0, %v1242
        %1244 = vmatmul.f32.gmra.mxu0 %v1202
        %v1245 = vpop.f32.mrf.mxu0
        %v1246 = vadd.f32 0.0, %v1245
        %1247 = vmatmul.f32.gmra.mxu0 %v1205
        %v1248 = vpop.f32.mrf.mxu0
        %v1249 = vadd.f32 0.0, %v1248
        %1250 = vmatmul.f32.gmra.mxu0 %v1208
        %v1251 = vpop.f32.mrf.mxu0
        %v1252 = vadd.f32 0.0, %v1251
        %1253 = vmatmul.f32.gmra.mxu0 %v1211
        %v1254 = vpop.f32.mrf.mxu0
        %v1255 = vadd.f32 0.0, %v1254
        %1256 = vmatmul.f32.gmra.mxu0 %v1214
        %v1257 = vpop.f32.mrf.mxu0
        %v1258 = vadd.f32 0.0, %v1257
        %1259 = vmatmul.f32.gmra.mxu0 %v1217
        %v1260 = vpop.f32.mrf.mxu0
        %v1261 = vadd.f32 0.0, %v1260
        %1262 = vdwg.mxu0
        %v1263 = vadd.f32 %v1177, %v1240
        %v1264 = vadd.f32 %v1178, %v1243
        %v1265 = vadd.f32 %v1179, %v1246
        %v1266 = vadd.f32 %v1180, %v1249
        %v1267 = vadd.f32 %v1181, %v1252
        %v1268 = vadd.f32 %v1182, %v1255
        %v1269 = vadd.f32 %v1183, %v1258
        %v1270 = vadd.f32 %v1184, %v1261
        %v1271 = vld [vmem:[%s457] sm:$0xff]
        %v1272 = vld [vmem:[%s457 + $0x8] sm:$0xff]
        %v1273 = vld [vmem:[%s457 + $0x10] sm:$0x3]
        %1274 = vst.msk [vmem:[#allocation3] sm:$0xff] %vm362, %v1271
        %1275 = vst.msk [vmem:[#allocation3 + $0x8] sm:$0xff] %vm362, %v1272
        %1276 = vst.msk [vmem:[#allocation3 + $0x10] sm:$0x3] %vm365, %v1273
        %v1277 = vld [vmem:[%s465] sm:$0xff]
        %v1278 = vld [vmem:[%s465 + $0x8] sm:$0xff]
        %v1279 = vld [vmem:[%s465 + $0x10] sm:$0x3]
        %1280 = vst.msk [vmem:[%s461] sm:$0xff] %vm362, %v1277
        %1281 = vst.msk [vmem:[%s461 + $0x8] sm:$0xff] %vm362, %v1278
        %1282 = vst.msk [vmem:[%s461 + $0x10] sm:$0x3] %vm365, %v1279
        %v1283 = vld [vmem:[%s473] sm:$0xff]
        %v1284 = vld [vmem:[%s473 + $0x8] sm:$0xff]
        %v1285 = vld [vmem:[%s473 + $0x10] sm:$0x3]
        %1286 = vst.msk [vmem:[%s469] sm:$0xff] %vm362, %v1283
        %1287 = vst.msk [vmem:[%s469 + $0x8] sm:$0xff] %vm362, %v1284
        %1288 = vst.msk [vmem:[%s469 + $0x10] sm:$0x3] %vm365, %v1285
        %v1289 = vld [vmem:[%s481] sm:$0xff]
        %v1290 = vld [vmem:[%s481 + $0x8] sm:$0xff]
        %v1291 = vld [vmem:[%s481 + $0x10] sm:$0x3]
        %1292 = vst.msk [vmem:[%s477] sm:$0xff] %vm362, %v1289
        %1293 = vst.msk [vmem:[%s477 + $0x8] sm:$0xff] %vm362, %v1290
        %1294 = vst.msk [vmem:[%s477 + $0x10] sm:$0x3] %vm365, %v1291
        %v1295 = vld [vmem:[%s489] sm:$0xff]
        %v1296 = vld [vmem:[%s489 + $0x8] sm:$0xff]
        %v1297 = vld [vmem:[%s489 + $0x10] sm:$0x3]
        %1298 = vst.msk [vmem:[%s485] sm:$0xff] %vm362, %v1295
        %1299 = vst.msk [vmem:[%s485 + $0x8] sm:$0xff] %vm362, %v1296
        %1300 = vst.msk [vmem:[%s485 + $0x10] sm:$0x3] %vm365, %v1297
        %v1301 = vld [vmem:[%s497] sm:$0xff]
        %v1302 = vld [vmem:[%s497 + $0x8] sm:$0xff]
        %v1303 = vld [vmem:[%s497 + $0x10] sm:$0x3]
        %1304 = vst.msk [vmem:[%s493] sm:$0xff] %vm362, %v1301
        %1305 = vst.msk [vmem:[%s493 + $0x8] sm:$0xff] %vm362, %v1302
        %1306 = vst.msk [vmem:[%s493 + $0x10] sm:$0x3] %vm365, %v1303
        %v1307 = vld [vmem:[%s505] sm:$0xff]
        %v1308 = vld [vmem:[%s505 + $0x8] sm:$0xff]
        %v1309 = vld [vmem:[%s505 + $0x10] sm:$0x3]
        %1310 = vst.msk [vmem:[%s501] sm:$0xff] %vm362, %v1307
        %1311 = vst.msk [vmem:[%s501 + $0x8] sm:$0xff] %vm362, %v1308
        %1312 = vst.msk [vmem:[%s501 + $0x10] sm:$0x3] %vm365, %v1309
        %s1313 = scalar_lea.vmem [#allocation2], 384
        %v1314 = vld [vmem:[%s1313] sm:$0xff]
        %v1315 = vld [vmem:[%s1313 + $0x8] sm:$0xff]
        %v1316 = vld [vmem:[%s1313 + $0x10] sm:$0x3]
        %1317 = vst.msk [vmem:[%s509] sm:$0xff] %vm362, %v1314
        %1318 = vst.msk [vmem:[%s509 + $0x8] sm:$0xff] %vm362, %v1315
        %1319 = vst.msk [vmem:[%s509 + $0x10] sm:$0x3] %vm365, %v1316
        %v1320 = vld [vmem:[#allocation3] ss:$2 sm:$0xff]
        %v1321 = vld [vmem:[%s514] ss:$2 sm:$0xff]
        %v1322 = vld [vmem:[%s516] ss:$2 sm:$0xff]
        %v1323 = vld [vmem:[%s518] ss:$2 sm:$0xff]
        %v1324 = vld [vmem:[%s520] ss:$2 sm:$0xff]
        %v1325 = vld [vmem:[%s522] ss:$2 sm:$0xff]
        %v1326 = vld [vmem:[%s524] ss:$2 sm:$0xff]
        %v1327 = vld [vmem:[%s526] ss:$2 sm:$0xff]
        %s1328 = scalar_lea.vmem %s1, 32
        %v1329 = vld [vmem:[%s1328] sm:$0xf]
        %v1331 = vsel %vm362, %v1320, 0
        %v1334 = vsel %vm362, %v1321, 0
        %v1337 = vsel %vm362, %v1322, 0
        %v1340 = vsel %vm362, %v1323, 0
        %v1343 = vsel %vm362, %v1324, 0
        %v1346 = vsel %vm362, %v1325, 0
        %v1349 = vsel %vm362, %v1326, 0
        %v1352 = vsel %vm362, %v1327, 0
        %v1355 = vsel %vm571, %v1329, 0
        %1357 = vmatpush.msra.mxu0 0.0
        %1358 = vmatpush.msra.mxu0 0.0
        %1359 = vmatpush.msra.mxu0 0.0
        %1360 = vmatpush.msra.mxu0 0.0
        %1361 = vmatpush.msra.mxu0 0.0
        %1362 = vmatpush.msra.mxu0 0.0
        %1363 = vmatpush.msra.mxu0 0.0
        %1364 = vmatpush.msra.mxu0 0.0
        %1365 = vmatpush.msra.mxu0 0.0
        %1366 = vmatpush.msra.mxu0 0.0
        %1367 = vmatpush.msra.mxu0 0.0
        %1368 = vmatpush.msra.mxu0 0.0
        %1369 = vmatpush.msra.mxu0 0.0
        %1370 = vmatpush.msra.mxu0 0.0
        %1371 = vmatpush.msra.mxu0 0.0
        %1372 = vmatpush.msra.mxu0 %v1355
        %1373 = vmatmul.f32.gmra.mxu0 %v1331
        %v1374 = vpop.f32.mrf.mxu0
        %v1375 = vadd.f32 0.0, %v1374
        %1376 = vmatmul.f32.gmra.mxu0 %v1334
        %v1377 = vpop.f32.mrf.mxu0
        %v1378 = vadd.f32 0.0, %v1377
        %1379 = vmatmul.f32.gmra.mxu0 %v1337
        %v1380 = vpop.f32.mrf.mxu0
        %v1381 = vadd.f32 0.0, %v1380
        %1382 = vmatmul.f32.gmra.mxu0 %v1340
        %v1383 = vpop.f32.mrf.mxu0
        %v1384 = vadd.f32 0.0, %v1383
        %1385 = vmatmul.f32.gmra.mxu0 %v1343
        %v1386 = vpop.f32.mrf.mxu0
        %v1387 = vadd.f32 0.0, %v1386
        %1388 = vmatmul.f32.gmra.mxu0 %v1346
        %v1389 = vpop.f32.mrf.mxu0
        %v1390 = vadd.f32 0.0, %v1389
        %1391 = vmatmul.f32.gmra.mxu0 %v1349
        %v1392 = vpop.f32.mrf.mxu0
        %v1393 = vadd.f32 0.0, %v1392
        %1394 = vmatmul.f32.gmra.mxu0 %v1352
        %v1395 = vpop.f32.mrf.mxu0
        %v1396 = vadd.f32 0.0, %v1395
        %1397 = vdwg.mxu0
        %v1398 = vadd.f32 %v1263, %v1375
        %v1399 = vadd.f32 %v1264, %v1378
        %v1400 = vadd.f32 %v1265, %v1381
        %v1401 = vadd.f32 %v1266, %v1384
        %v1402 = vadd.f32 %v1267, %v1387
        %v1403 = vadd.f32 %v1268, %v1390
        %v1404 = vadd.f32 %v1269, %v1393
        %v1405 = vadd.f32 %v1270, %v1396
        %v1406 = vld [vmem:[%s529] ss:$2 sm:$0xff]
        %v1407 = vld [vmem:[%s531] ss:$2 sm:$0xff]
        %v1408 = vld [vmem:[%s533] ss:$2 sm:$0xff]
        %v1409 = vld [vmem:[%s535] ss:$2 sm:$0xff]
        %v1410 = vld [vmem:[%s537] ss:$2 sm:$0xff]
        %v1411 = vld [vmem:[%s539] ss:$2 sm:$0xff]
        %v1412 = vld [vmem:[%s541] ss:$2 sm:$0xff]
        %v1413 = vld [vmem:[%s543] ss:$2 sm:$0xff]
        %s1414 = scalar_lea.vmem %s1, 36
        %v1415 = vld [vmem:[%s1414] sm:$0xf]
        %v1417 = vsel %vm362, %v1406, 0
        %v1420 = vsel %vm362, %v1407, 0
        %v1423 = vsel %vm362, %v1408, 0
        %v1426 = vsel %vm362, %v1409, 0
        %v1429 = vsel %vm362, %v1410, 0
        %v1432 = vsel %vm362, %v1411, 0
        %v1435 = vsel %vm362, %v1412, 0
        %v1438 = vsel %vm362, %v1413, 0
        %v1441 = vsel %vm571, %v1415, 0
        %1443 = vmatpush.msra.mxu0 0.0
        %1444 = vmatpush.msra.mxu0 0.0
        %1445 = vmatpush.msra.mxu0 0.0
        %1446 = vmatpush.msra.mxu0 0.0
        %1447 = vmatpush.msra.mxu0 0.0
        %1448 = vmatpush.msra.mxu0 0.0
        %1449 = vmatpush.msra.mxu0 0.0
        %1450 = vmatpush.msra.mxu0 0.0
        %1451 = vmatpush.msra.mxu0 0.0
        %1452 = vmatpush.msra.mxu0 0.0
        %1453 = vmatpush.msra.mxu0 0.0
        %1454 = vmatpush.msra.mxu0 0.0
        %1455 = vmatpush.msra.mxu0 0.0
        %1456 = vmatpush.msra.mxu0 0.0
        %1457 = vmatpush.msra.mxu0 0.0
        %1458 = vmatpush.msra.mxu0 %v1441
        %1459 = vmatmul.f32.gmra.mxu0 %v1417
        %v1460 = vpop.f32.mrf.mxu0
        %v1461 = vadd.f32 0.0, %v1460
        %1462 = vmatmul.f32.gmra.mxu0 %v1420
        %v1463 = vpop.f32.mrf.mxu0
        %v1464 = vadd.f32 0.0, %v1463
        %1465 = vmatmul.f32.gmra.mxu0 %v1423
        %v1466 = vpop.f32.mrf.mxu0
        %v1467 = vadd.f32 0.0, %v1466
        %1468 = vmatmul.f32.gmra.mxu0 %v1426
        %v1469 = vpop.f32.mrf.mxu0
        %v1470 = vadd.f32 0.0, %v1469
        %1471 = vmatmul.f32.gmra.mxu0 %v1429
        %v1472 = vpop.f32.mrf.mxu0
        %v1473 = vadd.f32 0.0, %v1472
        %1474 = vmatmul.f32.gmra.mxu0 %v1432
        %v1475 = vpop.f32.mrf.mxu0
        %v1476 = vadd.f32 0.0, %v1475
        %1477 = vmatmul.f32.gmra.mxu0 %v1435
        %v1478 = vpop.f32.mrf.mxu0
        %v1479 = vadd.f32 0.0, %v1478
        %1480 = vmatmul.f32.gmra.mxu0 %v1438
        %v1481 = vpop.f32.mrf.mxu0
        %v1482 = vadd.f32 0.0, %v1481
        %1483 = vdwg.mxu0
        %v1484 = vadd.f32 %v1398, %v1461
        %v1485 = vadd.f32 %v1399, %v1464
        %v1486 = vadd.f32 %v1400, %v1467
        %v1487 = vadd.f32 %v1401, %v1470
        %v1488 = vadd.f32 %v1402, %v1473
        %v1489 = vadd.f32 %v1403, %v1476
        %v1490 = vadd.f32 %v1404, %v1479
        %v1491 = vadd.f32 %v1405, %v1482
        %v1492 = vld [vmem:[%s684] ss:$2 sm:$0xff]
        %v1493 = vld [vmem:[%s686] ss:$2 sm:$0xff]
        %v1494 = vld [vmem:[%s688] ss:$2 sm:$0xff]
        %v1495 = vld [vmem:[%s690] ss:$2 sm:$0xff]
        %v1496 = vld [vmem:[%s692] ss:$2 sm:$0xff]
        %v1497 = vld [vmem:[%s694] ss:$2 sm:$0xff]
        %v1498 = vld [vmem:[%s696] ss:$2 sm:$0xff]
        %v1499 = vld [vmem:[%s698] ss:$2 sm:$0xff]
        %s1500 = scalar_lea.vmem %s1, 40
        %v1501 = vld [vmem:[%s1500] sm:$0xf]
        %v1503 = vsel %vm362, %v1492, 0
        %v1506 = vsel %vm362, %v1493, 0
        %v1509 = vsel %vm362, %v1494, 0
        %v1512 = vsel %vm362, %v1495, 0
        %v1515 = vsel %vm362, %v1496, 0
        %v1518 = vsel %vm362, %v1497, 0
        %v1521 = vsel %vm362, %v1498, 0
        %v1524 = vsel %vm362, %v1499, 0
        %v1527 = vsel %vm571, %v1501, 0
        %1529 = vmatpush.msra.mxu0 0.0
        %1530 = vmatpush.msra.mxu0 0.0
        %1531 = vmatpush.msra.mxu0 0.0
        %1532 = vmatpush.msra.mxu0 0.0
        %1533 = vmatpush.msra.mxu0 0.0
        %1534 = vmatpush.msra.mxu0 0.0
        %1535 = vmatpush.msra.mxu0 0.0
        %1536 = vmatpush.msra.mxu0 0.0
        %1537 = vmatpush.msra.mxu0 0.0
        %1538 = vmatpush.msra.mxu0 0.0
        %1539 = vmatpush.msra.mxu0 0.0
        %1540 = vmatpush.msra.mxu0 0.0
        %1541 = vmatpush.msra.mxu0 0.0
        %1542 = vmatpush.msra.mxu0 0.0
        %1543 = vmatpush.msra.mxu0 0.0
        %1544 = vmatpush.msra.mxu0 %v1527
        %1545 = vmatmul.f32.gmra.mxu0 %v1503
        %v1546 = vpop.f32.mrf.mxu0
        %v1547 = vadd.f32 0.0, %v1546
        %1548 = vmatmul.f32.gmra.mxu0 %v1506
        %v1549 = vpop.f32.mrf.mxu0
        %v1550 = vadd.f32 0.0, %v1549
        %1551 = vmatmul.f32.gmra.mxu0 %v1509
        %v1552 = vpop.f32.mrf.mxu0
        %v1553 = vadd.f32 0.0, %v1552
        %1554 = vmatmul.f32.gmra.mxu0 %v1512
        %v1555 = vpop.f32.mrf.mxu0
        %v1556 = vadd.f32 0.0, %v1555
        %1557 = vmatmul.f32.gmra.mxu0 %v1515
        %v1558 = vpop.f32.mrf.mxu0
        %v1559 = vadd.f32 0.0, %v1558
        %1560 = vmatmul.f32.gmra.mxu0 %v1518
        %v1561 = vpop.f32.mrf.mxu0
        %v1562 = vadd.f32 0.0, %v1561
        %1563 = vmatmul.f32.gmra.mxu0 %v1521
        %v1564 = vpop.f32.mrf.mxu0
        %v1565 = vadd.f32 0.0, %v1564
        %1566 = vmatmul.f32.gmra.mxu0 %v1524
        %v1567 = vpop.f32.mrf.mxu0
        %v1568 = vadd.f32 0.0, %v1567
        %1569 = vdwg.mxu0
        %v1570 = vadd.f32 %v1484, %v1547
        %v1571 = vadd.f32 %v1485, %v1550
        %v1572 = vadd.f32 %v1486, %v1553
        %v1573 = vadd.f32 %v1487, %v1556
        %v1574 = vadd.f32 %v1488, %v1559
        %v1575 = vadd.f32 %v1489, %v1562
        %v1576 = vadd.f32 %v1490, %v1565
        %v1577 = vadd.f32 %v1491, %v1568
        %v1578 = vld [vmem:[%s778] ss:$2 sm:$0xff]
        %v1579 = vld [vmem:[%s780] ss:$2 sm:$0xff]
        %v1580 = vld [vmem:[%s782] ss:$2 sm:$0xff]
        %v1581 = vld [vmem:[%s784] ss:$2 sm:$0xff]
        %v1582 = vld [vmem:[%s786] ss:$2 sm:$0xff]
        %v1583 = vld [vmem:[%s788] ss:$2 sm:$0xff]
        %v1584 = vld [vmem:[%s790] ss:$2 sm:$0xff]
        %v1585 = vld [vmem:[%s792] ss:$2 sm:$0xff]
        %s1586 = scalar_lea.vmem %s1, 44
        %v1587 = vld [vmem:[%s1586] sm:$0xf]
        %v1589 = vsel %vm362, %v1578, 0
        %v1592 = vsel %vm362, %v1579, 0
        %v1595 = vsel %vm362, %v1580, 0
        %v1598 = vsel %vm362, %v1581, 0
        %v1601 = vsel %vm362, %v1582, 0
        %v1604 = vsel %vm362, %v1583, 0
        %v1607 = vsel %vm362, %v1584, 0
        %v1610 = vsel %vm362, %v1585, 0
        %v1613 = vsel %vm571, %v1587, 0
        %1615 = vmatpush.msra.mxu0 0.0
        %1616 = vmatpush.msra.mxu0 0.0
        %1617 = vmatpush.msra.mxu0 0.0
        %1618 = vmatpush.msra.mxu0 0.0
        %1619 = vmatpush.msra.mxu0 0.0
        %1620 = vmatpush.msra.mxu0 0.0
        %1621 = vmatpush.msra.mxu0 0.0
        %1622 = vmatpush.msra.mxu0 0.0
        %1623 = vmatpush.msra.mxu0 0.0
        %1624 = vmatpush.msra.mxu0 0.0
        %1625 = vmatpush.msra.mxu0 0.0
        %1626 = vmatpush.msra.mxu0 0.0
        %1627 = vmatpush.msra.mxu0 0.0
        %1628 = vmatpush.msra.mxu0 0.0
        %1629 = vmatpush.msra.mxu0 0.0
        %1630 = vmatpush.msra.mxu0 %v1613
        %1631 = vmatmul.f32.gmra.mxu0 %v1589
        %v1632 = vpop.f32.mrf.mxu0
        %v1633 = vadd.f32 0.0, %v1632
        %1634 = vmatmul.f32.gmra.mxu0 %v1592
        %v1635 = vpop.f32.mrf.mxu0
        %v1636 = vadd.f32 0.0, %v1635
        %1637 = vmatmul.f32.gmra.mxu0 %v1595
        %v1638 = vpop.f32.mrf.mxu0
        %v1639 = vadd.f32 0.0, %v1638
        %1640 = vmatmul.f32.gmra.mxu0 %v1598
        %v1641 = vpop.f32.mrf.mxu0
        %v1642 = vadd.f32 0.0, %v1641
        %1643 = vmatmul.f32.gmra.mxu0 %v1601
        %v1644 = vpop.f32.mrf.mxu0
        %v1645 = vadd.f32 0.0, %v1644
        %1646 = vmatmul.f32.gmra.mxu0 %v1604
        %v1647 = vpop.f32.mrf.mxu0
        %v1648 = vadd.f32 0.0, %v1647
        %1649 = vmatmul.f32.gmra.mxu0 %v1607
        %v1650 = vpop.f32.mrf.mxu0
        %v1651 = vadd.f32 0.0, %v1650
        %1652 = vmatmul.f32.gmra.mxu0 %v1610
        %v1653 = vpop.f32.mrf.mxu0
        %v1654 = vadd.f32 0.0, %v1653
        %1655 = vdwg.mxu0
        %v1656 = vadd.f32 %v1570, %v1633
        %v1657 = vadd.f32 %v1571, %v1636
        %v1658 = vadd.f32 %v1572, %v1639
        %v1659 = vadd.f32 %v1573, %v1642
        %v1660 = vadd.f32 %v1574, %v1645
        %v1661 = vadd.f32 %v1575, %v1648
        %v1662 = vadd.f32 %v1576, %v1651
        %v1663 = vadd.f32 %v1577, %v1654
        %v1664 = vld [vmem:[%s878] sm:$0xff]
        %v1665 = vld [vmem:[%s878 + $0x8] sm:$0xff]
        %v1666 = vld [vmem:[%s878 + $0x10] sm:$0x3]
        %1667 = vst.msk [vmem:[#allocation3] sm:$0xff] %vm362, %v1664
        %1668 = vst.msk [vmem:[#allocation3 + $0x8] sm:$0xff] %vm362, %v1665
        %1669 = vst.msk [vmem:[#allocation3 + $0x10] sm:$0x3] %vm365, %v1666
        %v1670 = vld [vmem:[%s885] sm:$0xff]
        %v1671 = vld [vmem:[%s885 + $0x8] sm:$0xff]
        %v1672 = vld [vmem:[%s885 + $0x10] sm:$0x3]
        %1673 = vst.msk [vmem:[%s461] sm:$0xff] %vm362, %v1670
        %1674 = vst.msk [vmem:[%s461 + $0x8] sm:$0xff] %vm362, %v1671
        %1675 = vst.msk [vmem:[%s461 + $0x10] sm:$0x3] %vm365, %v1672
        %v1676 = vld [vmem:[%s892] sm:$0xff]
        %v1677 = vld [vmem:[%s892 + $0x8] sm:$0xff]
        %v1678 = vld [vmem:[%s892 + $0x10] sm:$0x3]
        %1679 = vst.msk [vmem:[%s469] sm:$0xff] %vm362, %v1676
        %1680 = vst.msk [vmem:[%s469 + $0x8] sm:$0xff] %vm362, %v1677
        %1681 = vst.msk [vmem:[%s469 + $0x10] sm:$0x3] %vm365, %v1678
        %v1682 = vld [vmem:[%s899] sm:$0xff]
        %v1683 = vld [vmem:[%s899 + $0x8] sm:$0xff]
        %v1684 = vld [vmem:[%s899 + $0x10] sm:$0x3]
        %1685 = vst.msk [vmem:[%s477] sm:$0xff] %vm362, %v1682
        %1686 = vst.msk [vmem:[%s477 + $0x8] sm:$0xff] %vm362, %v1683
        %1687 = vst.msk [vmem:[%s477 + $0x10] sm:$0x3] %vm365, %v1684
        %v1688 = vld [vmem:[%s906] sm:$0xff]
        %v1689 = vld [vmem:[%s906 + $0x8] sm:$0xff]
        %v1690 = vld [vmem:[%s906 + $0x10] sm:$0x3]
        %1691 = vst.msk [vmem:[%s485] sm:$0xff] %vm362, %v1688
        %1692 = vst.msk [vmem:[%s485 + $0x8] sm:$0xff] %vm362, %v1689
        %1693 = vst.msk [vmem:[%s485 + $0x10] sm:$0x3] %vm365, %v1690
        %v1694 = vld [vmem:[%s913] sm:$0xff]
        %v1695 = vld [vmem:[%s913 + $0x8] sm:$0xff]
        %v1696 = vld [vmem:[%s913 + $0x10] sm:$0x3]
        %1697 = vst.msk [vmem:[%s493] sm:$0xff] %vm362, %v1694
        %1698 = vst.msk [vmem:[%s493 + $0x8] sm:$0xff] %vm362, %v1695
        %1699 = vst.msk [vmem:[%s493 + $0x10] sm:$0x3] %vm365, %v1696
        %v1700 = vld [vmem:[%s920] sm:$0xff]
        %v1701 = vld [vmem:[%s920 + $0x8] sm:$0xff]
        %v1702 = vld [vmem:[%s920 + $0x10] sm:$0x3]
        %1703 = vst.msk [vmem:[%s501] sm:$0xff] %vm362, %v1700
        %1704 = vst.msk [vmem:[%s501 + $0x8] sm:$0xff] %vm362, %v1701
        %1705 = vst.msk [vmem:[%s501 + $0x10] sm:$0x3] %vm365, %v1702
        %s1706 = scalar_lea.vmem [#allocation2], 408
        %v1707 = vld [vmem:[%s1706] sm:$0xff]
        %v1708 = vld [vmem:[%s1706 + $0x8] sm:$0xff]
        %v1709 = vld [vmem:[%s1706 + $0x10] sm:$0x3]
        %1710 = vst.msk [vmem:[%s509] sm:$0xff] %vm362, %v1707
        %1711 = vst.msk [vmem:[%s509 + $0x8] sm:$0xff] %vm362, %v1708
        %1712 = vst.msk [vmem:[%s509 + $0x10] sm:$0x3] %vm365, %v1709
        %v1713 = vld [vmem:[#allocation3] ss:$2 sm:$0xff]
        %v1714 = vld [vmem:[%s514] ss:$2 sm:$0xff]
        %v1715 = vld [vmem:[%s516] ss:$2 sm:$0xff]
        %v1716 = vld [vmem:[%s518] ss:$2 sm:$0xff]
        %v1717 = vld [vmem:[%s520] ss:$2 sm:$0xff]
        %v1718 = vld [vmem:[%s522] ss:$2 sm:$0xff]
        %v1719 = vld [vmem:[%s524] ss:$2 sm:$0xff]
        %v1720 = vld [vmem:[%s526] ss:$2 sm:$0xff]
        %s1721 = scalar_lea.vmem %s1, 48
        %v1722 = vld [vmem:[%s1721] sm:$0xf]
        %v1724 = vsel %vm362, %v1713, 0
        %v1727 = vsel %vm362, %v1714, 0
        %v1730 = vsel %vm362, %v1715, 0
        %v1733 = vsel %vm362, %v1716, 0
        %v1736 = vsel %vm362, %v1717, 0
        %v1739 = vsel %vm362, %v1718, 0
        %v1742 = vsel %vm362, %v1719, 0
        %v1745 = vsel %vm362, %v1720, 0
        %v1748 = vsel %vm571, %v1722, 0
        %1750 = vmatpush.msra.mxu0 0.0
        %1751 = vmatpush.msra.mxu0 0.0
        %1752 = vmatpush.msra.mxu0 0.0
        %1753 = vmatpush.msra.mxu0 0.0
        %1754 = vmatpush.msra.mxu0 0.0
        %1755 = vmatpush.msra.mxu0 0.0
        %1756 = vmatpush.msra.mxu0 0.0
        %1757 = vmatpush.msra.mxu0 0.0
        %1758 = vmatpush.msra.mxu0 0.0
        %1759 = vmatpush.msra.mxu0 0.0
        %1760 = vmatpush.msra.mxu0 0.0
        %1761 = vmatpush.msra.mxu0 0.0
        %1762 = vmatpush.msra.mxu0 0.0
        %1763 = vmatpush.msra.mxu0 0.0
        %1764 = vmatpush.msra.mxu0 0.0
        %1765 = vmatpush.msra.mxu0 %v1748
        %1766 = vmatmul.f32.gmra.mxu0 %v1724
        %v1767 = vpop.f32.mrf.mxu0
        %v1768 = vadd.f32 0.0, %v1767
        %1769 = vmatmul.f32.gmra.mxu0 %v1727
        %v1770 = vpop.f32.mrf.mxu0
        %v1771 = vadd.f32 0.0, %v1770
        %1772 = vmatmul.f32.gmra.mxu0 %v1730
        %v1773 = vpop.f32.mrf.mxu0
        %v1774 = vadd.f32 0.0, %v1773
        %1775 = vmatmul.f32.gmra.mxu0 %v1733
        %v1776 = vpop.f32.mrf.mxu0
        %v1777 = vadd.f32 0.0, %v1776
        %1778 = vmatmul.f32.gmra.mxu0 %v1736
        %v1779 = vpop.f32.mrf.mxu0
        %v1780 = vadd.f32 0.0, %v1779
        %1781 = vmatmul.f32.gmra.mxu0 %v1739
        %v1782 = vpop.f32.mrf.mxu0
        %v1783 = vadd.f32 0.0, %v1782
        %1784 = vmatmul.f32.gmra.mxu0 %v1742
        %v1785 = vpop.f32.mrf.mxu0
        %v1786 = vadd.f32 0.0, %v1785
        %1787 = vmatmul.f32.gmra.mxu0 %v1745
        %v1788 = vpop.f32.mrf.mxu0
        %v1789 = vadd.f32 0.0, %v1788
        %1790 = vdwg.mxu0
        %v1791 = vadd.f32 %v1656, %v1768
        %v1792 = vadd.f32 %v1657, %v1771
        %v1793 = vadd.f32 %v1658, %v1774
        %v1794 = vadd.f32 %v1659, %v1777
        %v1795 = vadd.f32 %v1660, %v1780
        %v1796 = vadd.f32 %v1661, %v1783
        %v1797 = vadd.f32 %v1662, %v1786
        %v1798 = vadd.f32 %v1663, %v1789
        %v1799 = vld [vmem:[%s529] ss:$2 sm:$0xff]
        %v1800 = vld [vmem:[%s531] ss:$2 sm:$0xff]
        %v1801 = vld [vmem:[%s533] ss:$2 sm:$0xff]
        %v1802 = vld [vmem:[%s535] ss:$2 sm:$0xff]
        %v1803 = vld [vmem:[%s537] ss:$2 sm:$0xff]
        %v1804 = vld [vmem:[%s539] ss:$2 sm:$0xff]
        %v1805 = vld [vmem:[%s541] ss:$2 sm:$0xff]
        %v1806 = vld [vmem:[%s543] ss:$2 sm:$0xff]
        %s1807 = scalar_lea.vmem %s1, 52
        %v1808 = vld [vmem:[%s1807] sm:$0xf]
        %v1810 = vsel %vm362, %v1799, 0
        %v1813 = vsel %vm362, %v1800, 0
        %v1816 = vsel %vm362, %v1801, 0
        %v1819 = vsel %vm362, %v1802, 0
        %v1822 = vsel %vm362, %v1803, 0
        %v1825 = vsel %vm362, %v1804, 0
        %v1828 = vsel %vm362, %v1805, 0
        %v1831 = vsel %vm362, %v1806, 0
        %v1834 = vsel %vm571, %v1808, 0
        %1836 = vmatpush.msra.mxu0 0.0
        %1837 = vmatpush.msra.mxu0 0.0
        %1838 = vmatpush.msra.mxu0 0.0
        %1839 = vmatpush.msra.mxu0 0.0
        %1840 = vmatpush.msra.mxu0 0.0
        %1841 = vmatpush.msra.mxu0 0.0
        %1842 = vmatpush.msra.mxu0 0.0
        %1843 = vmatpush.msra.mxu0 0.0
        %1844 = vmatpush.msra.mxu0 0.0
        %1845 = vmatpush.msra.mxu0 0.0
        %1846 = vmatpush.msra.mxu0 0.0
        %1847 = vmatpush.msra.mxu0 0.0
        %1848 = vmatpush.msra.mxu0 0.0
        %1849 = vmatpush.msra.mxu0 0.0
        %1850 = vmatpush.msra.mxu0 0.0
        %1851 = vmatpush.msra.mxu0 %v1834
        %1852 = vmatmul.f32.gmra.mxu0 %v1810
        %v1853 = vpop.f32.mrf.mxu0
        %v1854 = vadd.f32 0.0, %v1853
        %1855 = vmatmul.f32.gmra.mxu0 %v1813
        %v1856 = vpop.f32.mrf.mxu0
        %v1857 = vadd.f32 0.0, %v1856
        %1858 = vmatmul.f32.gmra.mxu0 %v1816
        %v1859 = vpop.f32.mrf.mxu0
        %v1860 = vadd.f32 0.0, %v1859
        %1861 = vmatmul.f32.gmra.mxu0 %v1819
        %v1862 = vpop.f32.mrf.mxu0
        %v1863 = vadd.f32 0.0, %v1862
        %1864 = vmatmul.f32.gmra.mxu0 %v1822
        %v1865 = vpop.f32.mrf.mxu0
        %v1866 = vadd.f32 0.0, %v1865
        %1867 = vmatmul.f32.gmra.mxu0 %v1825
        %v1868 = vpop.f32.mrf.mxu0
        %v1869 = vadd.f32 0.0, %v1868
        %1870 = vmatmul.f32.gmra.mxu0 %v1828
        %v1871 = vpop.f32.mrf.mxu0
        %v1872 = vadd.f32 0.0, %v1871
        %1873 = vmatmul.f32.gmra.mxu0 %v1831
        %v1874 = vpop.f32.mrf.mxu0
        %v1875 = vadd.f32 0.0, %v1874
        %1876 = vdwg.mxu0
        %v1877 = vadd.f32 %v1791, %v1854
        %v1878 = vadd.f32 %v1792, %v1857
        %v1879 = vadd.f32 %v1793, %v1860
        %v1880 = vadd.f32 %v1794, %v1863
        %v1881 = vadd.f32 %v1795, %v1866
        %v1882 = vadd.f32 %v1796, %v1869
        %v1883 = vadd.f32 %v1797, %v1872
        %v1884 = vadd.f32 %v1798, %v1875
        %v1885 = vld [vmem:[%s684] ss:$2 sm:$0xff]
        %v1886 = vld [vmem:[%s686] ss:$2 sm:$0xff]
        %v1887 = vld [vmem:[%s688] ss:$2 sm:$0xff]
        %v1888 = vld [vmem:[%s690] ss:$2 sm:$0xff]
        %v1889 = vld [vmem:[%s692] ss:$2 sm:$0xff]
        %v1890 = vld [vmem:[%s694] ss:$2 sm:$0xff]
        %v1891 = vld [vmem:[%s696] ss:$2 sm:$0xff]
        %v1892 = vld [vmem:[%s698] ss:$2 sm:$0xff]
        %s1893 = scalar_lea.vmem %s1, 56
        %v1894 = vld [vmem:[%s1893] sm:$0xf]
        %v1896 = vsel %vm362, %v1885, 0
        %v1899 = vsel %vm362, %v1886, 0
        %v1902 = vsel %vm362, %v1887, 0
        %v1905 = vsel %vm362, %v1888, 0
        %v1908 = vsel %vm362, %v1889, 0
        %v1911 = vsel %vm362, %v1890, 0
        %v1914 = vsel %vm362, %v1891, 0
        %v1917 = vsel %vm362, %v1892, 0
        %v1920 = vsel %vm571, %v1894, 0
        %1922 = vmatpush.msra.mxu0 0.0
        %1923 = vmatpush.msra.mxu0 0.0
        %1924 = vmatpush.msra.mxu0 0.0
        %1925 = vmatpush.msra.mxu0 0.0
        %1926 = vmatpush.msra.mxu0 0.0
        %1927 = vmatpush.msra.mxu0 0.0
        %1928 = vmatpush.msra.mxu0 0.0
        %1929 = vmatpush.msra.mxu0 0.0
        %1930 = vmatpush.msra.mxu0 0.0
        %1931 = vmatpush.msra.mxu0 0.0
        %1932 = vmatpush.msra.mxu0 0.0
        %1933 = vmatpush.msra.mxu0 0.0
        %1934 = vmatpush.msra.mxu0 0.0
        %1935 = vmatpush.msra.mxu0 0.0
        %1936 = vmatpush.msra.mxu0 0.0
        %1937 = vmatpush.msra.mxu0 %v1920
        %1938 = vmatmul.f32.gmra.mxu0 %v1896
        %v1939 = vpop.f32.mrf.mxu0
        %v1940 = vadd.f32 0.0, %v1939
        %1941 = vmatmul.f32.gmra.mxu0 %v1899
        %v1942 = vpop.f32.mrf.mxu0
        %v1943 = vadd.f32 0.0, %v1942
        %1944 = vmatmul.f32.gmra.mxu0 %v1902
        %v1945 = vpop.f32.mrf.mxu0
        %v1946 = vadd.f32 0.0, %v1945
        %1947 = vmatmul.f32.gmra.mxu0 %v1905
        %v1948 = vpop.f32.mrf.mxu0
        %v1949 = vadd.f32 0.0, %v1948
        %1950 = vmatmul.f32.gmra.mxu0 %v1908
        %v1951 = vpop.f32.mrf.mxu0
        %v1952 = vadd.f32 0.0, %v1951
        %1953 = vmatmul.f32.gmra.mxu0 %v1911
        %v1954 = vpop.f32.mrf.mxu0
        %v1955 = vadd.f32 0.0, %v1954
        %1956 = vmatmul.f32.gmra.mxu0 %v1914
        %v1957 = vpop.f32.mrf.mxu0
        %v1958 = vadd.f32 0.0, %v1957
        %1959 = vmatmul.f32.gmra.mxu0 %v1917
        %v1960 = vpop.f32.mrf.mxu0
        %v1961 = vadd.f32 0.0, %v1960
        %1962 = vdwg.mxu0
        %v1963 = vadd.f32 %v1877, %v1940
        %v1964 = vadd.f32 %v1878, %v1943
        %v1965 = vadd.f32 %v1879, %v1946
        %v1966 = vadd.f32 %v1880, %v1949
        %v1967 = vadd.f32 %v1881, %v1952
        %v1968 = vadd.f32 %v1882, %v1955
        %v1969 = vadd.f32 %v1883, %v1958
        %v1970 = vadd.f32 %v1884, %v1961
        %v1971 = vld [vmem:[%s778] ss:$2 sm:$0xff]
        %v1972 = vld [vmem:[%s780] ss:$2 sm:$0xff]
        %v1973 = vld [vmem:[%s782] ss:$2 sm:$0xff]
        %v1974 = vld [vmem:[%s784] ss:$2 sm:$0xff]
        %v1975 = vld [vmem:[%s786] ss:$2 sm:$0xff]
        %v1976 = vld [vmem:[%s788] ss:$2 sm:$0xff]
        %v1977 = vld [vmem:[%s790] ss:$2 sm:$0xff]
        %v1978 = vld [vmem:[%s792] ss:$2 sm:$0xff]
        %s1979 = scalar_lea.vmem %s1, 60
        %v1980 = vld [vmem:[%s1979] sm:$0xf]
        %v1982 = vsel %vm362, %v1971, 0
        %v1985 = vsel %vm362, %v1972, 0
        %v1988 = vsel %vm362, %v1973, 0
        %v1991 = vsel %vm362, %v1974, 0
        %v1994 = vsel %vm362, %v1975, 0
        %v1997 = vsel %vm362, %v1976, 0
        %v2000 = vsel %vm362, %v1977, 0
        %v2003 = vsel %vm362, %v1978, 0
        %v2006 = vsel %vm571, %v1980, 0
        %2008 = vmatpush.msra.mxu0 0.0
        %2009 = vmatpush.msra.mxu0 0.0
        %2010 = vmatpush.msra.mxu0 0.0
        %2011 = vmatpush.msra.mxu0 0.0
        %2012 = vmatpush.msra.mxu0 0.0
        %2013 = vmatpush.msra.mxu0 0.0
        %2014 = vmatpush.msra.mxu0 0.0
        %2015 = vmatpush.msra.mxu0 0.0
        %2016 = vmatpush.msra.mxu0 0.0
        %2017 = vmatpush.msra.mxu0 0.0
        %2018 = vmatpush.msra.mxu0 0.0
        %2019 = vmatpush.msra.mxu0 0.0
        %2020 = vmatpush.msra.mxu0 0.0
        %2021 = vmatpush.msra.mxu0 0.0
        %2022 = vmatpush.msra.mxu0 0.0
        %2023 = vmatpush.msra.mxu0 %v2006
        %2024 = vmatmul.f32.gmra.mxu0 %v1982
        %v2025 = vpop.f32.mrf.mxu0
        %v2026 = vadd.f32 0.0, %v2025
        %2027 = vmatmul.f32.gmra.mxu0 %v1985
        %v2028 = vpop.f32.mrf.mxu0
        %v2029 = vadd.f32 0.0, %v2028
        %2030 = vmatmul.f32.gmra.mxu0 %v1988
        %v2031 = vpop.f32.mrf.mxu0
        %v2032 = vadd.f32 0.0, %v2031
        %2033 = vmatmul.f32.gmra.mxu0 %v1991
        %v2034 = vpop.f32.mrf.mxu0
        %v2035 = vadd.f32 0.0, %v2034
        %2036 = vmatmul.f32.gmra.mxu0 %v1994
        %v2037 = vpop.f32.mrf.mxu0
        %v2038 = vadd.f32 0.0, %v2037
        %2039 = vmatmul.f32.gmra.mxu0 %v1997
        %v2040 = vpop.f32.mrf.mxu0
        %v2041 = vadd.f32 0.0, %v2040
        %2042 = vmatmul.f32.gmra.mxu0 %v2000
        %v2043 = vpop.f32.mrf.mxu0
        %v2044 = vadd.f32 0.0, %v2043
        %2045 = vmatmul.f32.gmra.mxu0 %v2003
        %v2046 = vpop.f32.mrf.mxu0
        %v2047 = vadd.f32 0.0, %v2046
        %2048 = vdwg.mxu0
        %v2049 = vadd.f32 %v1963, %v2026
        %v2050 = vadd.f32 %v1964, %v2029
        %v2051 = vadd.f32 %v1965, %v2032
        %v2052 = vadd.f32 %v1966, %v2035
        %v2053 = vadd.f32 %v1967, %v2038
        %v2054 = vadd.f32 %v1968, %v2041
        %v2055 = vadd.f32 %v1969, %v2044
        %v2056 = vadd.f32 %v1970, %v2047
        %v2057 = vld [vmem:[%s2] sm:$0x1]
        %v2059 = vperm.slane %v2057, 0
        %v2061 = vadd.f32 %v2049, %v2059
        %v2062 = vadd.f32 %v2050, %v2059
        %v2063 = vadd.f32 %v2051, %v2059
        %v2064 = vadd.f32 %v2052, %v2059
        %v2065 = vadd.f32 %v2053, %v2059
        %v2066 = vadd.f32 %v2054, %v2059
        %v2067 = vadd.f32 %v2055, %v2059
        %v2068 = vadd.f32 %v2056, %v2059
        %v2069 = vmax.f32 %v2061, 0.0
        %v2070 = vmax.f32 %v2062, 0.0
        %v2071 = vmax.f32 %v2063, 0.0
        %v2072 = vmax.f32 %v2064, 0.0
        %v2073 = vmax.f32 %v2065, 0.0
        %v2074 = vmax.f32 %v2066, 0.0
        %v2075 = vmax.f32 %v2067, 0.0
        %v2076 = vmax.f32 %v2068, 0.0
        %2077 = vst.msk [vmem:[#allocation4] sm:$0xff] %vm362, 0.0
        %2078 = vst.msk [vmem:[#allocation4 + $0x8] sm:$0x3] %vm365, 0.0
        %2079 = vst.msk [vmem:[#allocation4 + $0x10] sm:$0xff] %vm362, 0.0
        %2080 = vst.msk [vmem:[#allocation4 + $0x18] sm:$0x3] %vm365, 0.0
        %2081 = vst.msk [vmem:[#allocation4 + $0x20] sm:$0xff] %vm362, 0.0
        %2082 = vst.msk [vmem:[#allocation4 + $0x28] sm:$0x3] %vm365, 0.0
        %2083 = vst.msk [vmem:[#allocation4 + $0x30] sm:$0xff] %vm362, 0.0
        %2084 = vst.msk [vmem:[#allocation4 + $0x38] sm:$0x3] %vm365, 0.0
        %2085 = vst.msk [vmem:[#allocation4 + $0x40] sm:$0xff] %vm362, 0.0
        %2086 = vst.msk [vmem:[#allocation4 + $0x48] sm:$0x3] %vm365, 0.0
        %2087 = vst.msk [vmem:[#allocation4 + $0x50] sm:$0xff] %vm362, 0.0
        %2088 = vst.msk [vmem:[#allocation4 + $0x58] sm:$0x3] %vm365, 0.0
        %2089 = vst.msk [vmem:[#allocation4 + $0x60] sm:$0xff] %vm362, 0.0
        %2090 = vst.msk [vmem:[#allocation4 + $0x68] sm:$0x3] %vm365, 0.0
        %2091 = vst.msk [vmem:[#allocation4 + $0x70] sm:$0xff] %vm362, 0.0
        %2092 = vst.msk [vmem:[#allocation4 + $0x78] sm:$0x3] %vm365, 0.0
        %2093 = vst.msk [vmem:[#allocation4 + $0x80] sm:$0xff] %vm362, 0.0
        %2094 = vst.msk [vmem:[#allocation4 + $0x88] sm:$0x3] %vm365, 0.0
        %2095 = vst.msk [vmem:[#allocation4 + $0x90] sm:$0xff] %vm362, 0.0
        %2096 = vst.msk [vmem:[#allocation4 + $0x98] sm:$0x3] %vm365, 0.0
        %s2097 = scalar_lea.vmem [#allocation4], 16
        %2098 = vst.msk [vmem:[%s2097 + $0x1] sm:$0xff] %vm362, %v2069
        %2099 = vst.msk [vmem:[%s2097 + $0x11] sm:$0xff] %vm362, %v2070
        %2100 = vst.msk [vmem:[%s2097 + $0x21] sm:$0xff] %vm362, %v2071
        %2101 = vst.msk [vmem:[%s2097 + $0x31] sm:$0xff] %vm362, %v2072
        %2102 = vst.msk [vmem:[%s2097 + $0x41] sm:$0xff] %vm362, %v2073
        %2103 = vst.msk [vmem:[%s2097 + $0x51] sm:$0xff] %vm362, %v2074
        %2104 = vst.msk [vmem:[%s2097 + $0x61] sm:$0xff] %vm362, %v2075
        %2105 = vst.msk [vmem:[%s2097 + $0x71] sm:$0xff] %vm362, %v2076
        %v2106 = vld [vmem:[#allocation4] sm:$0xff]
        %v2107 = vld [vmem:[#allocation4 + $0x8] sm:$0x3]
        %2108 = vst.msk [vmem:[#allocation5] sm:$0xff] %vm362, %v2106
        %2109 = vst.msk [vmem:[#allocation5 + $0x8] sm:$0x3] %vm365, %v2107
        %s2110 = scalar_lea.vmem [#allocation4], 32
        %v2111 = vld [vmem:[%s2110] sm:$0xff]
        %v2112 = vld [vmem:[%s2110 + $0x8] sm:$0x3]
        %s2113 = scalar_lea.vmem [#allocation5], 16
        %2114 = vst.msk [vmem:[%s2113] sm:$0xff] %vm362, %v2111
        %2115 = vst.msk [vmem:[%s2113 + $0x8] sm:$0x3] %vm365, %v2112
        %s2116 = scalar_lea.vmem [#allocation4], 64
        %v2117 = vld [vmem:[%s2116] sm:$0xff]
        %v2118 = vld [vmem:[%s2116 + $0x8] sm:$0x3]
        %s2119 = scalar_lea.vmem [#allocation5], 32
        %2120 = vst.msk [vmem:[%s2119] sm:$0xff] %vm362, %v2117
        %2121 = vst.msk [vmem:[%s2119 + $0x8] sm:$0x3] %vm365, %v2118
        %s2122 = scalar_lea.vmem [#allocation4], 96
        %v2123 = vld [vmem:[%s2122] sm:$0xff]
        %v2124 = vld [vmem:[%s2122 + $0x8] sm:$0x3]
        %s2125 = scalar_lea.vmem [#allocation5], 48
        %2126 = vst.msk [vmem:[%s2125] sm:$0xff] %vm362, %v2123
        %2127 = vst.msk [vmem:[%s2125 + $0x8] sm:$0x3] %vm365, %v2124
        %v2128 = vld [vmem:[#allocation5] ss:$2 sm:$0xf]
        %s2129 = scalar_lea.vmem [#allocation5], 16
        %v2130 = vld [vmem:[%s2129] ss:$2 sm:$0xf]
        %s2131 = scalar_lea.vmem [#allocation5], 32
        %v2132 = vld [vmem:[%s2131] ss:$2 sm:$0xf]
        %s2133 = scalar_lea.vmem [#allocation5], 48
        %v2134 = vld [vmem:[%s2133] ss:$2 sm:$0xf]
        %v2135 = vld [vmem:[%s3] sm:$0xf]
        %s2136 = scalar_lea.vmem [#allocation5], 1
        %v2137 = vld [vmem:[%s2136] ss:$2 sm:$0xf]
        %s2138 = scalar_lea.vmem [#allocation5], 17
        %v2139 = vld [vmem:[%s2138] ss:$2 sm:$0xf]
        %s2140 = scalar_lea.vmem [#allocation5], 33
        %v2141 = vld [vmem:[%s2140] ss:$2 sm:$0xf]
        %s2142 = scalar_lea.vmem [#allocation5], 49
        %v2143 = vld [vmem:[%s2142] ss:$2 sm:$0xf]
        %s2144 = scalar_lea.vmem %s3, 4
        %v2145 = vld [vmem:[%s2144] sm:$0xf]
        %2150 = vst [vmem:[#allocation1] ss:$2 sm:$0xff] %v2137
        %s2151 = scalar_lea.vmem [#allocation1], 1
        %2152 = vst [vmem:[%s2151] ss:$2 sm:$0xff] %v2139
        %s2153 = scalar_lea.vmem [#allocation1], 16
        %2154 = vst [vmem:[%s2153] ss:$2 sm:$0xff] %v2141
        %s2155 = scalar_lea.vmem [#allocation1], 17
        %2156 = vst [vmem:[%s2155] ss:$2 sm:$0xff] %v2143
        %v2157 = vld.sshfl [vmem:[#allocation1] sm:$0xff pattern:$0x75316420]
        %v2158 = vld.sshfl [vmem:[#allocation1 + $0x10] sm:$0xff pattern:$0x75316420]
        %v2159 = vsel %vm362, %v2157, 0
        %v2161 = vsel %vm362, %v2158, 0
        %v2164 = vsel %vm571, %v2145, 0
        %2166 = vmatpush.msra.mxu0 0.0
        %2167 = vmatpush.msra.mxu0 0.0
        %2168 = vmatpush.msra.mxu0 0.0
        %2169 = vmatpush.msra.mxu0 0.0
        %2170 = vmatpush.msra.mxu0 0.0
        %2171 = vmatpush.msra.mxu0 0.0
        %2172 = vmatpush.msra.mxu0 0.0
        %2173 = vmatpush.msra.mxu0 0.0
        %2174 = vmatpush.msra.mxu0 0.0
        %2175 = vmatpush.msra.mxu0 0.0
        %2176 = vmatpush.msra.mxu0 0.0
        %2177 = vmatpush.msra.mxu0 0.0
        %2178 = vmatpush.msra.mxu0 0.0
        %2179 = vmatpush.msra.mxu0 0.0
        %2180 = vmatpush.msra.mxu0 0.0
        %2181 = vmatpush.msra.mxu0 %v2164
        %2182 = vmatmul.f32.gmra.mxu0 %v2159
        %v2183 = vpop.f32.mrf.mxu0
        %v2184 = vadd.f32 0.0, %v2183
        %2185 = vmatmul.f32.gmra.mxu0 %v2161
        %v2186 = vpop.f32.mrf.mxu0
        %v2187 = vadd.f32 0.0, %v2186
        %2188 = vdwg.mxu0
        %2193 = vst [vmem:[#allocation1] ss:$2 sm:$0xff] %v2128
        %s2194 = scalar_lea.vmem [#allocation1], 1
        %2195 = vst [vmem:[%s2194] ss:$2 sm:$0xff] %v2130
        %s2196 = scalar_lea.vmem [#allocation1], 16
        %2197 = vst [vmem:[%s2196] ss:$2 sm:$0xff] %v2132
        %s2198 = scalar_lea.vmem [#allocation1], 17
        %2199 = vst [vmem:[%s2198] ss:$2 sm:$0xff] %v2134
        %v2200 = vld.sshfl [vmem:[#allocation1] sm:$0xff pattern:$0x75316420]
        %v2201 = vld.sshfl [vmem:[#allocation1 + $0x10] sm:$0xff pattern:$0x75316420]
        %v2202 = vsel %vm362, %v2200, 0
        %v2204 = vsel %vm362, %v2201, 0
        %v2207 = vsel %vm571, %v2135, 0
        %2209 = vmatpush.msra.mxu0 0.0
        %2210 = vmatpush.msra.mxu0 0.0
        %2211 = vmatpush.msra.mxu0 0.0
        %2212 = vmatpush.msra.mxu0 0.0
        %2213 = vmatpush.msra.mxu0 0.0
        %2214 = vmatpush.msra.mxu0 0.0
        %2215 = vmatpush.msra.mxu0 0.0
        %2216 = vmatpush.msra.mxu0 0.0
        %2217 = vmatpush.msra.mxu0 0.0
        %2218 = vmatpush.msra.mxu0 0.0
        %2219 = vmatpush.msra.mxu0 0.0
        %2220 = vmatpush.msra.mxu0 0.0
        %2221 = vmatpush.msra.mxu0 0.0
        %2222 = vmatpush.msra.mxu0 0.0
        %2223 = vmatpush.msra.mxu0 0.0
        %2224 = vmatpush.msra.mxu0 %v2207
        %2225 = vmatmul.f32.gmra.mxu0 %v2202
        %v2226 = vpop.f32.mrf.mxu0
        %v2227 = vadd.f32 %v2184, %v2226
        %2228 = vmatmul.f32.gmra.mxu0 %v2204
        %v2229 = vpop.f32.mrf.mxu0
        %v2230 = vadd.f32 %v2187, %v2229
        %2231 = vdwg.mxu0
        %s2232 = scalar_lea.vmem [#allocation5], 2
        %v2233 = vld [vmem:[%s2232] ss:$2 sm:$0xf]
        %s2234 = scalar_lea.vmem [#allocation5], 18
        %v2235 = vld [vmem:[%s2234] ss:$2 sm:$0xf]
        %s2236 = scalar_lea.vmem [#allocation5], 34
        %v2237 = vld [vmem:[%s2236] ss:$2 sm:$0xf]
        %s2238 = scalar_lea.vmem [#allocation5], 50
        %v2239 = vld [vmem:[%s2238] ss:$2 sm:$0xf]
        %s2240 = scalar_lea.vmem %s3, 8
        %v2241 = vld [vmem:[%s2240] sm:$0xf]
        %2246 = vst [vmem:[#allocation1] ss:$2 sm:$0xff] %v2233
        %s2247 = scalar_lea.vmem [#allocation1], 1
        %2248 = vst [vmem:[%s2247] ss:$2 sm:$0xff] %v2235
        %s2249 = scalar_lea.vmem [#allocation1], 16
        %2250 = vst [vmem:[%s2249] ss:$2 sm:$0xff] %v2237
        %s2251 = scalar_lea.vmem [#allocation1], 17
        %2252 = vst [vmem:[%s2251] ss:$2 sm:$0xff] %v2239
        %v2253 = vld.sshfl [vmem:[#allocation1] sm:$0xff pattern:$0x75316420]
        %v2254 = vld.sshfl [vmem:[#allocation1 + $0x10] sm:$0xff pattern:$0x75316420]
        %v2255 = vsel %vm362, %v2253, 0
        %v2257 = vsel %vm362, %v2254, 0
        %v2260 = vsel %vm571, %v2241, 0
        %2262 = vmatpush.msra.mxu0 0.0
        %2263 = vmatpush.msra.mxu0 0.0
        %2264 = vmatpush.msra.mxu0 0.0
        %2265 = vmatpush.msra.mxu0 0.0
        %2266 = vmatpush.msra.mxu0 0.0
        %2267 = vmatpush.msra.mxu0 0.0
        %2268 = vmatpush.msra.mxu0 0.0
        %2269 = vmatpush.msra.mxu0 0.0
        %2270 = vmatpush.msra.mxu0 0.0
        %2271 = vmatpush.msra.mxu0 0.0
        %2272 = vmatpush.msra.mxu0 0.0
        %2273 = vmatpush.msra.mxu0 0.0
        %2274 = vmatpush.msra.mxu0 0.0
        %2275 = vmatpush.msra.mxu0 0.0
        %2276 = vmatpush.msra.mxu0 0.0
        %2277 = vmatpush.msra.mxu0 %v2260
        %2278 = vmatmul.f32.gmra.mxu0 %v2255
        %v2279 = vpop.f32.mrf.mxu0
        %v2280 = vadd.f32 0.0, %v2279
        %2281 = vmatmul.f32.gmra.mxu0 %v2257
        %v2282 = vpop.f32.mrf.mxu0
        %v2283 = vadd.f32 0.0, %v2282
        %2284 = vdwg.mxu0
        %v2285 = vadd.f32 %v2227, %v2280
        %v2286 = vadd.f32 %v2230, %v2283
        %s2287 = scalar_lea.vmem [#allocation5], 3
        %v2288 = vld [vmem:[%s2287] ss:$2 sm:$0xf]
        %s2289 = scalar_lea.vmem [#allocation5], 19
        %v2290 = vld [vmem:[%s2289] ss:$2 sm:$0xf]
        %s2291 = scalar_lea.vmem [#allocation5], 35
        %v2292 = vld [vmem:[%s2291] ss:$2 sm:$0xf]
        %s2293 = scalar_lea.vmem [#allocation5], 51
        %v2294 = vld [vmem:[%s2293] ss:$2 sm:$0xf]
        %s2295 = scalar_lea.vmem %s3, 12
        %v2296 = vld [vmem:[%s2295] sm:$0xf]
        %2301 = vst [vmem:[#allocation1] ss:$2 sm:$0xff] %v2288
        %s2302 = scalar_lea.vmem [#allocation1], 1
        %2303 = vst [vmem:[%s2302] ss:$2 sm:$0xff] %v2290
        %s2304 = scalar_lea.vmem [#allocation1], 16
        %2305 = vst [vmem:[%s2304] ss:$2 sm:$0xff] %v2292
        %s2306 = scalar_lea.vmem [#allocation1], 17
        %2307 = vst [vmem:[%s2306] ss:$2 sm:$0xff] %v2294
        %v2308 = vld.sshfl [vmem:[#allocation1] sm:$0xff pattern:$0x75316420]
        %v2309 = vld.sshfl [vmem:[#allocation1 + $0x10] sm:$0xff pattern:$0x75316420]
        %v2310 = vsel %vm362, %v2308, 0
        %v2312 = vsel %vm362, %v2309, 0
        %v2315 = vsel %vm571, %v2296, 0
        %2317 = vmatpush.msra.mxu0 0.0
        %2318 = vmatpush.msra.mxu0 0.0
        %2319 = vmatpush.msra.mxu0 0.0
        %2320 = vmatpush.msra.mxu0 0.0
        %2321 = vmatpush.msra.mxu0 0.0
        %2322 = vmatpush.msra.mxu0 0.0
        %2323 = vmatpush.msra.mxu0 0.0
        %2324 = vmatpush.msra.mxu0 0.0
        %2325 = vmatpush.msra.mxu0 0.0
        %2326 = vmatpush.msra.mxu0 0.0
        %2327 = vmatpush.msra.mxu0 0.0
        %2328 = vmatpush.msra.mxu0 0.0
        %2329 = vmatpush.msra.mxu0 0.0
        %2330 = vmatpush.msra.mxu0 0.0
        %2331 = vmatpush.msra.mxu0 0.0
        %2332 = vmatpush.msra.mxu0 %v2315
        %2333 = vmatmul.f32.gmra.mxu0 %v2310
        %v2334 = vpop.f32.mrf.mxu0
        %v2335 = vadd.f32 0.0, %v2334
        %2336 = vmatmul.f32.gmra.mxu0 %v2312
        %v2337 = vpop.f32.mrf.mxu0
        %v2338 = vadd.f32 0.0, %v2337
        %2339 = vdwg.mxu0
        %v2340 = vadd.f32 %v2285, %v2335
        %v2341 = vadd.f32 %v2286, %v2338
        %v2342 = vld [vmem:[%s2097] sm:$0xff]
        %v2343 = vld [vmem:[%s2097 + $0x8] sm:$0x3]
        %2344 = vst.msk [vmem:[#allocation5] sm:$0xff] %vm362, %v2342
        %2345 = vst.msk [vmem:[#allocation5 + $0x8] sm:$0x3] %vm365, %v2343
        %s2346 = scalar_lea.vmem [#allocation4], 48
        %v2347 = vld [vmem:[%s2346] sm:$0xff]
        %v2348 = vld [vmem:[%s2346 + $0x8] sm:$0x3]
        %2349 = vst.msk [vmem:[%s2113] sm:$0xff] %vm362, %v2347
        %2350 = vst.msk [vmem:[%s2113 + $0x8] sm:$0x3] %vm365, %v2348
        %s2351 = scalar_lea.vmem [#allocation4], 80
        %v2352 = vld [vmem:[%s2351] sm:$0xff]
        %v2353 = vld [vmem:[%s2351 + $0x8] sm:$0x3]
        %2354 = vst.msk [vmem:[%s2119] sm:$0xff] %vm362, %v2352
        %2355 = vst.msk [vmem:[%s2119 + $0x8] sm:$0x3] %vm365, %v2353
        %s2356 = scalar_lea.vmem [#allocation4], 112
        %v2357 = vld [vmem:[%s2356] sm:$0xff]
        %v2358 = vld [vmem:[%s2356 + $0x8] sm:$0x3]
        %2359 = vst.msk [vmem:[%s2125] sm:$0xff] %vm362, %v2357
        %2360 = vst.msk [vmem:[%s2125 + $0x8] sm:$0x3] %vm365, %v2358
        %v2361 = vld [vmem:[#allocation5] ss:$2 sm:$0xf]
        %v2362 = vld [vmem:[%s2129] ss:$2 sm:$0xf]
        %v2363 = vld [vmem:[%s2131] ss:$2 sm:$0xf]
        %v2364 = vld [vmem:[%s2133] ss:$2 sm:$0xf]
        %s2365 = scalar_lea.vmem %s3, 16
        %v2366 = vld [vmem:[%s2365] sm:$0xf]
        %2371 = vst [vmem:[#allocation1] ss:$2 sm:$0xff] %v2361
        %s2372 = scalar_lea.vmem [#allocation1], 1
        %2373 = vst [vmem:[%s2372] ss:$2 sm:$0xff] %v2362
        %s2374 = scalar_lea.vmem [#allocation1], 16
        %2375 = vst [vmem:[%s2374] ss:$2 sm:$0xff] %v2363
        %s2376 = scalar_lea.vmem [#allocation1], 17
        %2377 = vst [vmem:[%s2376] ss:$2 sm:$0xff] %v2364
        %v2378 = vld.sshfl [vmem:[#allocation1] sm:$0xff pattern:$0x75316420]
        %v2379 = vld.sshfl [vmem:[#allocation1 + $0x10] sm:$0xff pattern:$0x75316420]
        %v2380 = vsel %vm362, %v2378, 0
        %v2382 = vsel %vm362, %v2379, 0
        %v2385 = vsel %vm571, %v2366, 0
        %2387 = vmatpush.msra.mxu0 0.0
        %2388 = vmatpush.msra.mxu0 0.0
        %2389 = vmatpush.msra.mxu0 0.0
        %2390 = vmatpush.msra.mxu0 0.0
        %2391 = vmatpush.msra.mxu0 0.0
        %2392 = vmatpush.msra.mxu0 0.0
        %2393 = vmatpush.msra.mxu0 0.0
        %2394 = vmatpush.msra.mxu0 0.0
        %2395 = vmatpush.msra.mxu0 0.0
        %2396 = vmatpush.msra.mxu0 0.0
        %2397 = vmatpush.msra.mxu0 0.0
        %2398 = vmatpush.msra.mxu0 0.0
        %2399 = vmatpush.msra.mxu0 0.0
        %2400 = vmatpush.msra.mxu0 0.0
        %2401 = vmatpush.msra.mxu0 0.0
        %2402 = vmatpush.msra.mxu0 %v2385
        %2403 = vmatmul.f32.gmra.mxu0 %v2380
        %v2404 = vpop.f32.mrf.mxu0
        %v2405 = vadd.f32 0.0, %v2404
        %2406 = vmatmul.f32.gmra.mxu0 %v2382
        %v2407 = vpop.f32.mrf.mxu0
        %v2408 = vadd.f32 0.0, %v2407
        %2409 = vdwg.mxu0
        %v2410 = vadd.f32 %v2340, %v2405
        %v2411 = vadd.f32 %v2341, %v2408
        %v2412 = vld [vmem:[%s2136] ss:$2 sm:$0xf]
        %v2413 = vld [vmem:[%s2138] ss:$2 sm:$0xf]
        %v2414 = vld [vmem:[%s2140] ss:$2 sm:$0xf]
        %v2415 = vld [vmem:[%s2142] ss:$2 sm:$0xf]
        %s2416 = scalar_lea.vmem %s3, 20
        %v2417 = vld [vmem:[%s2416] sm:$0xf]
        %2422 = vst [vmem:[#allocation1] ss:$2 sm:$0xff] %v2412
        %s2423 = scalar_lea.vmem [#allocation1], 1
        %2424 = vst [vmem:[%s2423] ss:$2 sm:$0xff] %v2413
        %s2425 = scalar_lea.vmem [#allocation1], 16
        %2426 = vst [vmem:[%s2425] ss:$2 sm:$0xff] %v2414
        %s2427 = scalar_lea.vmem [#allocation1], 17
        %2428 = vst [vmem:[%s2427] ss:$2 sm:$0xff] %v2415
        %v2429 = vld.sshfl [vmem:[#allocation1] sm:$0xff pattern:$0x75316420]
        %v2430 = vld.sshfl [vmem:[#allocation1 + $0x10] sm:$0xff pattern:$0x75316420]
        %v2431 = vsel %vm362, %v2429, 0
        %v2433 = vsel %vm362, %v2430, 0
        %v2436 = vsel %vm571, %v2417, 0
        %2438 = vmatpush.msra.mxu0 0.0
        %2439 = vmatpush.msra.mxu0 0.0
        %2440 = vmatpush.msra.mxu0 0.0
        %2441 = vmatpush.msra.mxu0 0.0
        %2442 = vmatpush.msra.mxu0 0.0
        %2443 = vmatpush.msra.mxu0 0.0
        %2444 = vmatpush.msra.mxu0 0.0
        %2445 = vmatpush.msra.mxu0 0.0
        %2446 = vmatpush.msra.mxu0 0.0
        %2447 = vmatpush.msra.mxu0 0.0
        %2448 = vmatpush.msra.mxu0 0.0
        %2449 = vmatpush.msra.mxu0 0.0
        %2450 = vmatpush.msra.mxu0 0.0
        %2451 = vmatpush.msra.mxu0 0.0
        %2452 = vmatpush.msra.mxu0 0.0
        %2453 = vmatpush.msra.mxu0 %v2436
        %2454 = vmatmul.f32.gmra.mxu0 %v2431
        %v2455 = vpop.f32.mrf.mxu0
        %v2456 = vadd.f32 0.0, %v2455
        %2457 = vmatmul.f32.gmra.mxu0 %v2433
        %v2458 = vpop.f32.mrf.mxu0
        %v2459 = vadd.f32 0.0, %v2458
        %2460 = vdwg.mxu0
        %v2461 = vadd.f32 %v2410, %v2456
        %v2462 = vadd.f32 %v2411, %v2459
        %v2463 = vld [vmem:[%s2232] ss:$2 sm:$0xf]
        %v2464 = vld [vmem:[%s2234] ss:$2 sm:$0xf]
        %v2465 = vld [vmem:[%s2236] ss:$2 sm:$0xf]
        %v2466 = vld [vmem:[%s2238] ss:$2 sm:$0xf]
        %s2467 = scalar_lea.vmem %s3, 24
        %v2468 = vld [vmem:[%s2467] sm:$0xf]
        %2473 = vst [vmem:[#allocation1] ss:$2 sm:$0xff] %v2463
        %s2474 = scalar_lea.vmem [#allocation1], 1
        %2475 = vst [vmem:[%s2474] ss:$2 sm:$0xff] %v2464
        %s2476 = scalar_lea.vmem [#allocation1], 16
        %2477 = vst [vmem:[%s2476] ss:$2 sm:$0xff] %v2465
        %s2478 = scalar_lea.vmem [#allocation1], 17
        %2479 = vst [vmem:[%s2478] ss:$2 sm:$0xff] %v2466
        %v2480 = vld.sshfl [vmem:[#allocation1] sm:$0xff pattern:$0x75316420]
        %v2481 = vld.sshfl [vmem:[#allocation1 + $0x10] sm:$0xff pattern:$0x75316420]
        %v2482 = vsel %vm362, %v2480, 0
        %v2484 = vsel %vm362, %v2481, 0
        %v2487 = vsel %vm571, %v2468, 0
        %2489 = vmatpush.msra.mxu0 0.0
        %2490 = vmatpush.msra.mxu0 0.0
        %2491 = vmatpush.msra.mxu0 0.0
        %2492 = vmatpush.msra.mxu0 0.0
        %2493 = vmatpush.msra.mxu0 0.0
        %2494 = vmatpush.msra.mxu0 0.0
        %2495 = vmatpush.msra.mxu0 0.0
        %2496 = vmatpush.msra.mxu0 0.0
        %2497 = vmatpush.msra.mxu0 0.0
        %2498 = vmatpush.msra.mxu0 0.0
        %2499 = vmatpush.msra.mxu0 0.0
        %2500 = vmatpush.msra.mxu0 0.0
        %2501 = vmatpush.msra.mxu0 0.0
        %2502 = vmatpush.msra.mxu0 0.0
        %2503 = vmatpush.msra.mxu0 0.0
        %2504 = vmatpush.msra.mxu0 %v2487
        %2505 = vmatmul.f32.gmra.mxu0 %v2482
        %v2506 = vpop.f32.mrf.mxu0
        %v2507 = vadd.f32 0.0, %v2506
        %2508 = vmatmul.f32.gmra.mxu0 %v2484
        %v2509 = vpop.f32.mrf.mxu0
        %v2510 = vadd.f32 0.0, %v2509
        %2511 = vdwg.mxu0
        %v2512 = vadd.f32 %v2461, %v2507
        %v2513 = vadd.f32 %v2462, %v2510
        %v2514 = vld [vmem:[%s2287] ss:$2 sm:$0xf]
        %v2515 = vld [vmem:[%s2289] ss:$2 sm:$0xf]
        %v2516 = vld [vmem:[%s2291] ss:$2 sm:$0xf]
        %v2517 = vld [vmem:[%s2293] ss:$2 sm:$0xf]
        %s2518 = scalar_lea.vmem %s3, 28
        %v2519 = vld [vmem:[%s2518] sm:$0xf]
        %2524 = vst [vmem:[#allocation1] ss:$2 sm:$0xff] %v2514
        %s2525 = scalar_lea.vmem [#allocation1], 1
        %2526 = vst [vmem:[%s2525] ss:$2 sm:$0xff] %v2515
        %s2527 = scalar_lea.vmem [#allocation1], 16
        %2528 = vst [vmem:[%s2527] ss:$2 sm:$0xff] %v2516
        %s2529 = scalar_lea.vmem [#allocation1], 17
        %2530 = vst [vmem:[%s2529] ss:$2 sm:$0xff] %v2517
        %v2531 = vld.sshfl [vmem:[#allocation1] sm:$0xff pattern:$0x75316420]
        %v2532 = vld.sshfl [vmem:[#allocation1 + $0x10] sm:$0xff pattern:$0x75316420]
        %v2533 = vsel %vm362, %v2531, 0
        %v2535 = vsel %vm362, %v2532, 0
        %v2538 = vsel %vm571, %v2519, 0
        %2540 = vmatpush.msra.mxu0 0.0
        %2541 = vmatpush.msra.mxu0 0.0
        %2542 = vmatpush.msra.mxu0 0.0
        %2543 = vmatpush.msra.mxu0 0.0
        %2544 = vmatpush.msra.mxu0 0.0
        %2545 = vmatpush.msra.mxu0 0.0
        %2546 = vmatpush.msra.mxu0 0.0
        %2547 = vmatpush.msra.mxu0 0.0
        %2548 = vmatpush.msra.mxu0 0.0
        %2549 = vmatpush.msra.mxu0 0.0
        %2550 = vmatpush.msra.mxu0 0.0
        %2551 = vmatpush.msra.mxu0 0.0
        %2552 = vmatpush.msra.mxu0 0.0
        %2553 = vmatpush.msra.mxu0 0.0
        %2554 = vmatpush.msra.mxu0 0.0
        %2555 = vmatpush.msra.mxu0 %v2538
        %2556 = vmatmul.f32.gmra.mxu0 %v2533
        %v2557 = vpop.f32.mrf.mxu0
        %v2558 = vadd.f32 0.0, %v2557
        %2559 = vmatmul.f32.gmra.mxu0 %v2535
        %v2560 = vpop.f32.mrf.mxu0
        %v2561 = vadd.f32 0.0, %v2560
        %2562 = vdwg.mxu0
        %v2563 = vadd.f32 %v2512, %v2558
        %v2564 = vadd.f32 %v2513, %v2561
        %v2565 = vld [vmem:[%s2110] sm:$0xff]
        %v2566 = vld [vmem:[%s2110 + $0x8] sm:$0x3]
        %2567 = vst.msk [vmem:[#allocation5] sm:$0xff] %vm362, %v2565
        %2568 = vst.msk [vmem:[#allocation5 + $0x8] sm:$0x3] %vm365, %v2566
        %v2569 = vld [vmem:[%s2116] sm:$0xff]
        %v2570 = vld [vmem:[%s2116 + $0x8] sm:$0x3]
        %2571 = vst.msk [vmem:[%s2113] sm:$0xff] %vm362, %v2569
        %2572 = vst.msk [vmem:[%s2113 + $0x8] sm:$0x3] %vm365, %v2570
        %v2573 = vld [vmem:[%s2122] sm:$0xff]
        %v2574 = vld [vmem:[%s2122 + $0x8] sm:$0x3]
        %2575 = vst.msk [vmem:[%s2119] sm:$0xff] %vm362, %v2573
        %2576 = vst.msk [vmem:[%s2119 + $0x8] sm:$0x3] %vm365, %v2574
        %s2577 = scalar_lea.vmem [#allocation4], 128
        %v2578 = vld [vmem:[%s2577] sm:$0xff]
        %v2579 = vld [vmem:[%s2577 + $0x8] sm:$0x3]
        %2580 = vst.msk [vmem:[%s2125] sm:$0xff] %vm362, %v2578
        %2581 = vst.msk [vmem:[%s2125 + $0x8] sm:$0x3] %vm365, %v2579
        %v2582 = vld [vmem:[#allocation5] ss:$2 sm:$0xf]
        %v2583 = vld [vmem:[%s2129] ss:$2 sm:$0xf]
        %v2584 = vld [vmem:[%s2131] ss:$2 sm:$0xf]
        %v2585 = vld [vmem:[%s2133] ss:$2 sm:$0xf]
        %s2586 = scalar_lea.vmem %s3, 32
        %v2587 = vld [vmem:[%s2586] sm:$0xf]
        %2592 = vst [vmem:[#allocation1] ss:$2 sm:$0xff] %v2582
        %s2593 = scalar_lea.vmem [#allocation1], 1
        %2594 = vst [vmem:[%s2593] ss:$2 sm:$0xff] %v2583
        %s2595 = scalar_lea.vmem [#allocation1], 16
        %2596 = vst [vmem:[%s2595] ss:$2 sm:$0xff] %v2584
        %s2597 = scalar_lea.vmem [#allocation1], 17
        %2598 = vst [vmem:[%s2597] ss:$2 sm:$0xff] %v2585
        %v2599 = vld.sshfl [vmem:[#allocation1] sm:$0xff pattern:$0x75316420]
        %v2600 = vld.sshfl [vmem:[#allocation1 + $0x10] sm:$0xff pattern:$0x75316420]
        %v2601 = vsel %vm362, %v2599, 0
        %v2603 = vsel %vm362, %v2600, 0
        %v2606 = vsel %vm571, %v2587, 0
        %2608 = vmatpush.msra.mxu0 0.0
        %2609 = vmatpush.msra.mxu0 0.0
        %2610 = vmatpush.msra.mxu0 0.0
        %2611 = vmatpush.msra.mxu0 0.0
        %2612 = vmatpush.msra.mxu0 0.0
        %2613 = vmatpush.msra.mxu0 0.0
        %2614 = vmatpush.msra.mxu0 0.0
        %2615 = vmatpush.msra.mxu0 0.0
        %2616 = vmatpush.msra.mxu0 0.0
        %2617 = vmatpush.msra.mxu0 0.0
        %2618 = vmatpush.msra.mxu0 0.0
        %2619 = vmatpush.msra.mxu0 0.0
        %2620 = vmatpush.msra.mxu0 0.0
        %2621 = vmatpush.msra.mxu0 0.0
        %2622 = vmatpush.msra.mxu0 0.0
        %2623 = vmatpush.msra.mxu0 %v2606
        %2624 = vmatmul.f32.gmra.mxu0 %v2601
        %v2625 = vpop.f32.mrf.mxu0
        %v2626 = vadd.f32 0.0, %v2625
        %2627 = vmatmul.f32.gmra.mxu0 %v2603
        %v2628 = vpop.f32.mrf.mxu0
        %v2629 = vadd.f32 0.0, %v2628
        %2630 = vdwg.mxu0
        %v2631 = vadd.f32 %v2563, %v2626
        %v2632 = vadd.f32 %v2564, %v2629
        %v2633 = vld [vmem:[%s2136] ss:$2 sm:$0xf]
        %v2634 = vld [vmem:[%s2138] ss:$2 sm:$0xf]
        %v2635 = vld [vmem:[%s2140] ss:$2 sm:$0xf]
        %v2636 = vld [vmem:[%s2142] ss:$2 sm:$0xf]
        %s2637 = scalar_lea.vmem %s3, 36
        %v2638 = vld [vmem:[%s2637] sm:$0xf]
        %2643 = vst [vmem:[#allocation1] ss:$2 sm:$0xff] %v2633
        %s2644 = scalar_lea.vmem [#allocation1], 1
        %2645 = vst [vmem:[%s2644] ss:$2 sm:$0xff] %v2634
        %s2646 = scalar_lea.vmem [#allocation1], 16
        %2647 = vst [vmem:[%s2646] ss:$2 sm:$0xff] %v2635
        %s2648 = scalar_lea.vmem [#allocation1], 17
        %2649 = vst [vmem:[%s2648] ss:$2 sm:$0xff] %v2636
        %v2650 = vld.sshfl [vmem:[#allocation1] sm:$0xff pattern:$0x75316420]
        %v2651 = vld.sshfl [vmem:[#allocation1 + $0x10] sm:$0xff pattern:$0x75316420]
        %v2652 = vsel %vm362, %v2650, 0
        %v2654 = vsel %vm362, %v2651, 0
        %v2657 = vsel %vm571, %v2638, 0
        %2659 = vmatpush.msra.mxu0 0.0
        %2660 = vmatpush.msra.mxu0 0.0
        %2661 = vmatpush.msra.mxu0 0.0
        %2662 = vmatpush.msra.mxu0 0.0
        %2663 = vmatpush.msra.mxu0 0.0
        %2664 = vmatpush.msra.mxu0 0.0
        %2665 = vmatpush.msra.mxu0 0.0
        %2666 = vmatpush.msra.mxu0 0.0
        %2667 = vmatpush.msra.mxu0 0.0
        %2668 = vmatpush.msra.mxu0 0.0
        %2669 = vmatpush.msra.mxu0 0.0
        %2670 = vmatpush.msra.mxu0 0.0
        %2671 = vmatpush.msra.mxu0 0.0
        %2672 = vmatpush.msra.mxu0 0.0
        %2673 = vmatpush.msra.mxu0 0.0
        %2674 = vmatpush.msra.mxu0 %v2657
        %2675 = vmatmul.f32.gmra.mxu0 %v2652
        %v2676 = vpop.f32.mrf.mxu0
        %v2677 = vadd.f32 0.0, %v2676
        %2678 = vmatmul.f32.gmra.mxu0 %v2654
        %v2679 = vpop.f32.mrf.mxu0
        %v2680 = vadd.f32 0.0, %v2679
        %2681 = vdwg.mxu0
        %v2682 = vadd.f32 %v2631, %v2677
        %v2683 = vadd.f32 %v2632, %v2680
        %v2684 = vld [vmem:[%s2232] ss:$2 sm:$0xf]
        %v2685 = vld [vmem:[%s2234] ss:$2 sm:$0xf]
        %v2686 = vld [vmem:[%s2236] ss:$2 sm:$0xf]
        %v2687 = vld [vmem:[%s2238] ss:$2 sm:$0xf]
        %s2688 = scalar_lea.vmem %s3, 40
        %v2689 = vld [vmem:[%s2688] sm:$0xf]
        %2694 = vst [vmem:[#allocation1] ss:$2 sm:$0xff] %v2684
        %s2695 = scalar_lea.vmem [#allocation1], 1
        %2696 = vst [vmem:[%s2695] ss:$2 sm:$0xff] %v2685
        %s2697 = scalar_lea.vmem [#allocation1], 16
        %2698 = vst [vmem:[%s2697] ss:$2 sm:$0xff] %v2686
        %s2699 = scalar_lea.vmem [#allocation1], 17
        %2700 = vst [vmem:[%s2699] ss:$2 sm:$0xff] %v2687
        %v2701 = vld.sshfl [vmem:[#allocation1] sm:$0xff pattern:$0x75316420]
        %v2702 = vld.sshfl [vmem:[#allocation1 + $0x10] sm:$0xff pattern:$0x75316420]
        %v2703 = vsel %vm362, %v2701, 0
        %v2705 = vsel %vm362, %v2702, 0
        %v2708 = vsel %vm571, %v2689, 0
        %2710 = vmatpush.msra.mxu0 0.0
        %2711 = vmatpush.msra.mxu0 0.0
        %2712 = vmatpush.msra.mxu0 0.0
        %2713 = vmatpush.msra.mxu0 0.0
        %2714 = vmatpush.msra.mxu0 0.0
        %2715 = vmatpush.msra.mxu0 0.0
        %2716 = vmatpush.msra.mxu0 0.0
        %2717 = vmatpush.msra.mxu0 0.0
        %2718 = vmatpush.msra.mxu0 0.0
        %2719 = vmatpush.msra.mxu0 0.0
        %2720 = vmatpush.msra.mxu0 0.0
        %2721 = vmatpush.msra.mxu0 0.0
        %2722 = vmatpush.msra.mxu0 0.0
        %2723 = vmatpush.msra.mxu0 0.0
        %2724 = vmatpush.msra.mxu0 0.0
        %2725 = vmatpush.msra.mxu0 %v2708
        %2726 = vmatmul.f32.gmra.mxu0 %v2703
        %v2727 = vpop.f32.mrf.mxu0
        %v2728 = vadd.f32 0.0, %v2727
        %2729 = vmatmul.f32.gmra.mxu0 %v2705
        %v2730 = vpop.f32.mrf.mxu0
        %v2731 = vadd.f32 0.0, %v2730
        %2732 = vdwg.mxu0
        %v2733 = vadd.f32 %v2682, %v2728
        %v2734 = vadd.f32 %v2683, %v2731
        %v2735 = vld [vmem:[%s2287] ss:$2 sm:$0xf]
        %v2736 = vld [vmem:[%s2289] ss:$2 sm:$0xf]
        %v2737 = vld [vmem:[%s2291] ss:$2 sm:$0xf]
        %v2738 = vld [vmem:[%s2293] ss:$2 sm:$0xf]
        %s2739 = scalar_lea.vmem %s3, 44
        %v2740 = vld [vmem:[%s2739] sm:$0xf]
        %2745 = vst [vmem:[#allocation1] ss:$2 sm:$0xff] %v2735
        %s2746 = scalar_lea.vmem [#allocation1], 1
        %2747 = vst [vmem:[%s2746] ss:$2 sm:$0xff] %v2736
        %s2748 = scalar_lea.vmem [#allocation1], 16
        %2749 = vst [vmem:[%s2748] ss:$2 sm:$0xff] %v2737
        %s2750 = scalar_lea.vmem [#allocation1], 17
        %2751 = vst [vmem:[%s2750] ss:$2 sm:$0xff] %v2738
        %v2752 = vld.sshfl [vmem:[#allocation1] sm:$0xff pattern:$0x75316420]
        %v2753 = vld.sshfl [vmem:[#allocation1 + $0x10] sm:$0xff pattern:$0x75316420]
        %v2754 = vsel %vm362, %v2752, 0
        %v2756 = vsel %vm362, %v2753, 0
        %v2759 = vsel %vm571, %v2740, 0
        %2761 = vmatpush.msra.mxu0 0.0
        %2762 = vmatpush.msra.mxu0 0.0
        %2763 = vmatpush.msra.mxu0 0.0
        %2764 = vmatpush.msra.mxu0 0.0
        %2765 = vmatpush.msra.mxu0 0.0
        %2766 = vmatpush.msra.mxu0 0.0
        %2767 = vmatpush.msra.mxu0 0.0
        %2768 = vmatpush.msra.mxu0 0.0
        %2769 = vmatpush.msra.mxu0 0.0
        %2770 = vmatpush.msra.mxu0 0.0
        %2771 = vmatpush.msra.mxu0 0.0
        %2772 = vmatpush.msra.mxu0 0.0
        %2773 = vmatpush.msra.mxu0 0.0
        %2774 = vmatpush.msra.mxu0 0.0
        %2775 = vmatpush.msra.mxu0 0.0
        %2776 = vmatpush.msra.mxu0 %v2759
        %2777 = vmatmul.f32.gmra.mxu0 %v2754
        %v2778 = vpop.f32.mrf.mxu0
        %v2779 = vadd.f32 0.0, %v2778
        %2780 = vmatmul.f32.gmra.mxu0 %v2756
        %v2781 = vpop.f32.mrf.mxu0
        %v2782 = vadd.f32 0.0, %v2781
        %2783 = vdwg.mxu0
        %v2784 = vadd.f32 %v2733, %v2779
        %v2785 = vadd.f32 %v2734, %v2782
        %v2786 = vld [vmem:[%s2346] sm:$0xff]
        %v2787 = vld [vmem:[%s2346 + $0x8] sm:$0x3]
        %2788 = vst.msk [vmem:[#allocation5] sm:$0xff] %vm362, %v2786
        %2789 = vst.msk [vmem:[#allocation5 + $0x8] sm:$0x3] %vm365, %v2787
        %v2790 = vld [vmem:[%s2351] sm:$0xff]
        %v2791 = vld [vmem:[%s2351 + $0x8] sm:$0x3]
        %2792 = vst.msk [vmem:[%s2113] sm:$0xff] %vm362, %v2790
        %2793 = vst.msk [vmem:[%s2113 + $0x8] sm:$0x3] %vm365, %v2791
        %v2794 = vld [vmem:[%s2356] sm:$0xff]
        %v2795 = vld [vmem:[%s2356 + $0x8] sm:$0x3]
        %2796 = vst.msk [vmem:[%s2119] sm:$0xff] %vm362, %v2794
        %2797 = vst.msk [vmem:[%s2119 + $0x8] sm:$0x3] %vm365, %v2795
        %s2798 = scalar_lea.vmem [#allocation4], 144
        %v2799 = vld [vmem:[%s2798] sm:$0xff]
        %v2800 = vld [vmem:[%s2798 + $0x8] sm:$0x3]
        %2801 = vst.msk [vmem:[%s2125] sm:$0xff] %vm362, %v2799
        %2802 = vst.msk [vmem:[%s2125 + $0x8] sm:$0x3] %vm365, %v2800
        %v2803 = vld [vmem:[#allocation5] ss:$2 sm:$0xf]
        %v2804 = vld [vmem:[%s2129] ss:$2 sm:$0xf]
        %v2805 = vld [vmem:[%s2131] ss:$2 sm:$0xf]
        %v2806 = vld [vmem:[%s2133] ss:$2 sm:$0xf]
        %s2807 = scalar_lea.vmem %s3, 48
        %v2808 = vld [vmem:[%s2807] sm:$0xf]
        %2813 = vst [vmem:[#allocation1] ss:$2 sm:$0xff] %v2803
        %s2814 = scalar_lea.vmem [#allocation1], 1
        %2815 = vst [vmem:[%s2814] ss:$2 sm:$0xff] %v2804
        %s2816 = scalar_lea.vmem [#allocation1], 16
        %2817 = vst [vmem:[%s2816] ss:$2 sm:$0xff] %v2805
        %s2818 = scalar_lea.vmem [#allocation1], 17
        %2819 = vst [vmem:[%s2818] ss:$2 sm:$0xff] %v2806
        %v2820 = vld.sshfl [vmem:[#allocation1] sm:$0xff pattern:$0x75316420]
        %v2821 = vld.sshfl [vmem:[#allocation1 + $0x10] sm:$0xff pattern:$0x75316420]
        %v2822 = vsel %vm362, %v2820, 0
        %v2824 = vsel %vm362, %v2821, 0
        %v2827 = vsel %vm571, %v2808, 0
        %2829 = vmatpush.msra.mxu0 0.0
        %2830 = vmatpush.msra.mxu0 0.0
        %2831 = vmatpush.msra.mxu0 0.0
        %2832 = vmatpush.msra.mxu0 0.0
        %2833 = vmatpush.msra.mxu0 0.0
        %2834 = vmatpush.msra.mxu0 0.0
        %2835 = vmatpush.msra.mxu0 0.0
        %2836 = vmatpush.msra.mxu0 0.0
        %2837 = vmatpush.msra.mxu0 0.0
        %2838 = vmatpush.msra.mxu0 0.0
        %2839 = vmatpush.msra.mxu0 0.0
        %2840 = vmatpush.msra.mxu0 0.0
        %2841 = vmatpush.msra.mxu0 0.0
        %2842 = vmatpush.msra.mxu0 0.0
        %2843 = vmatpush.msra.mxu0 0.0
        %2844 = vmatpush.msra.mxu0 %v2827
        %2845 = vmatmul.f32.gmra.mxu0 %v2822
        %v2846 = vpop.f32.mrf.mxu0
        %v2847 = vadd.f32 0.0, %v2846
        %2848 = vmatmul.f32.gmra.mxu0 %v2824
        %v2849 = vpop.f32.mrf.mxu0
        %v2850 = vadd.f32 0.0, %v2849
        %2851 = vdwg.mxu0
        %v2852 = vadd.f32 %v2784, %v2847
        %v2853 = vadd.f32 %v2785, %v2850
        %v2854 = vld [vmem:[%s2136] ss:$2 sm:$0xf]
        %v2855 = vld [vmem:[%s2138] ss:$2 sm:$0xf]
        %v2856 = vld [vmem:[%s2140] ss:$2 sm:$0xf]
        %v2857 = vld [vmem:[%s2142] ss:$2 sm:$0xf]
        %s2858 = scalar_lea.vmem %s3, 52
        %v2859 = vld [vmem:[%s2858] sm:$0xf]
        %2864 = vst [vmem:[#allocation1] ss:$2 sm:$0xff] %v2854
        %s2865 = scalar_lea.vmem [#allocation1], 1
        %2866 = vst [vmem:[%s2865] ss:$2 sm:$0xff] %v2855
        %s2867 = scalar_lea.vmem [#allocation1], 16
        %2868 = vst [vmem:[%s2867] ss:$2 sm:$0xff] %v2856
        %s2869 = scalar_lea.vmem [#allocation1], 17
        %2870 = vst [vmem:[%s2869] ss:$2 sm:$0xff] %v2857
        %v2871 = vld.sshfl [vmem:[#allocation1] sm:$0xff pattern:$0x75316420]
        %v2872 = vld.sshfl [vmem:[#allocation1 + $0x10] sm:$0xff pattern:$0x75316420]
        %v2873 = vsel %vm362, %v2871, 0
        %v2875 = vsel %vm362, %v2872, 0
        %v2878 = vsel %vm571, %v2859, 0
        %2880 = vmatpush.msra.mxu0 0.0
        %2881 = vmatpush.msra.mxu0 0.0
        %2882 = vmatpush.msra.mxu0 0.0
        %2883 = vmatpush.msra.mxu0 0.0
        %2884 = vmatpush.msra.mxu0 0.0
        %2885 = vmatpush.msra.mxu0 0.0
        %2886 = vmatpush.msra.mxu0 0.0
        %2887 = vmatpush.msra.mxu0 0.0
        %2888 = vmatpush.msra.mxu0 0.0
        %2889 = vmatpush.msra.mxu0 0.0
        %2890 = vmatpush.msra.mxu0 0.0
        %2891 = vmatpush.msra.mxu0 0.0
        %2892 = vmatpush.msra.mxu0 0.0
        %2893 = vmatpush.msra.mxu0 0.0
        %2894 = vmatpush.msra.mxu0 0.0
        %2895 = vmatpush.msra.mxu0 %v2878
        %2896 = vmatmul.f32.gmra.mxu0 %v2873
        %v2897 = vpop.f32.mrf.mxu0
        %v2898 = vadd.f32 0.0, %v2897
        %2899 = vmatmul.f32.gmra.mxu0 %v2875
        %v2900 = vpop.f32.mrf.mxu0
        %v2901 = vadd.f32 0.0, %v2900
        %2902 = vdwg.mxu0
        %v2903 = vadd.f32 %v2852, %v2898
        %v2904 = vadd.f32 %v2853, %v2901
        %v2905 = vld [vmem:[%s2232] ss:$2 sm:$0xf]
        %v2906 = vld [vmem:[%s2234] ss:$2 sm:$0xf]
        %v2907 = vld [vmem:[%s2236] ss:$2 sm:$0xf]
        %v2908 = vld [vmem:[%s2238] ss:$2 sm:$0xf]
        %s2909 = scalar_lea.vmem %s3, 56
        %v2910 = vld [vmem:[%s2909] sm:$0xf]
        %2915 = vst [vmem:[#allocation1] ss:$2 sm:$0xff] %v2905
        %s2916 = scalar_lea.vmem [#allocation1], 1
        %2917 = vst [vmem:[%s2916] ss:$2 sm:$0xff] %v2906
        %s2918 = scalar_lea.vmem [#allocation1], 16
        %2919 = vst [vmem:[%s2918] ss:$2 sm:$0xff] %v2907
        %s2920 = scalar_lea.vmem [#allocation1], 17
        %2921 = vst [vmem:[%s2920] ss:$2 sm:$0xff] %v2908
        %v2922 = vld.sshfl [vmem:[#allocation1] sm:$0xff pattern:$0x75316420]
        %v2923 = vld.sshfl [vmem:[#allocation1 + $0x10] sm:$0xff pattern:$0x75316420]
        %v2924 = vsel %vm362, %v2922, 0
        %v2926 = vsel %vm362, %v2923, 0
        %v2929 = vsel %vm571, %v2910, 0
        %2931 = vmatpush.msra.mxu0 0.0
        %2932 = vmatpush.msra.mxu0 0.0
        %2933 = vmatpush.msra.mxu0 0.0
        %2934 = vmatpush.msra.mxu0 0.0
        %2935 = vmatpush.msra.mxu0 0.0
        %2936 = vmatpush.msra.mxu0 0.0
        %2937 = vmatpush.msra.mxu0 0.0
        %2938 = vmatpush.msra.mxu0 0.0
        %2939 = vmatpush.msra.mxu0 0.0
        %2940 = vmatpush.msra.mxu0 0.0
        %2941 = vmatpush.msra.mxu0 0.0
        %2942 = vmatpush.msra.mxu0 0.0
        %2943 = vmatpush.msra.mxu0 0.0
        %2944 = vmatpush.msra.mxu0 0.0
        %2945 = vmatpush.msra.mxu0 0.0
        %2946 = vmatpush.msra.mxu0 %v2929
        %2947 = vmatmul.f32.gmra.mxu0 %v2924
        %v2948 = vpop.f32.mrf.mxu0
        %v2949 = vadd.f32 0.0, %v2948
        %2950 = vmatmul.f32.gmra.mxu0 %v2926
        %v2951 = vpop.f32.mrf.mxu0
        %v2952 = vadd.f32 0.0, %v2951
        %2953 = vdwg.mxu0
        %v2954 = vadd.f32 %v2903, %v2949
        %v2955 = vadd.f32 %v2904, %v2952
        %v2956 = vld [vmem:[%s2287] ss:$2 sm:$0xf]
        %v2957 = vld [vmem:[%s2289] ss:$2 sm:$0xf]
        %v2958 = vld [vmem:[%s2291] ss:$2 sm:$0xf]
        %v2959 = vld [vmem:[%s2293] ss:$2 sm:$0xf]
        %s2960 = scalar_lea.vmem %s3, 60
        %v2961 = vld [vmem:[%s2960] sm:$0xf]
        %2966 = vst [vmem:[#allocation1] ss:$2 sm:$0xff] %v2956
        %s2967 = scalar_lea.vmem [#allocation1], 1
        %2968 = vst [vmem:[%s2967] ss:$2 sm:$0xff] %v2957
        %s2969 = scalar_lea.vmem [#allocation1], 16
        %2970 = vst [vmem:[%s2969] ss:$2 sm:$0xff] %v2958
        %s2971 = scalar_lea.vmem [#allocation1], 17
        %2972 = vst [vmem:[%s2971] ss:$2 sm:$0xff] %v2959
        %v2973 = vld.sshfl [vmem:[#allocation1] sm:$0xff pattern:$0x75316420]
        %v2974 = vld.sshfl [vmem:[#allocation1 + $0x10] sm:$0xff pattern:$0x75316420]
        %v2975 = vsel %vm362, %v2973, 0
        %v2977 = vsel %vm362, %v2974, 0
        %v2980 = vsel %vm571, %v2961, 0
        %2982 = vmatpush.msra.mxu0 0.0
        %2983 = vmatpush.msra.mxu0 0.0
        %2984 = vmatpush.msra.mxu0 0.0
        %2985 = vmatpush.msra.mxu0 0.0
        %2986 = vmatpush.msra.mxu0 0.0
        %2987 = vmatpush.msra.mxu0 0.0
        %2988 = vmatpush.msra.mxu0 0.0
        %2989 = vmatpush.msra.mxu0 0.0
        %2990 = vmatpush.msra.mxu0 0.0
        %2991 = vmatpush.msra.mxu0 0.0
        %2992 = vmatpush.msra.mxu0 0.0
        %2993 = vmatpush.msra.mxu0 0.0
        %2994 = vmatpush.msra.mxu0 0.0
        %2995 = vmatpush.msra.mxu0 0.0
        %2996 = vmatpush.msra.mxu0 0.0
        %2997 = vmatpush.msra.mxu0 %v2980
        %2998 = vmatmul.f32.gmra.mxu0 %v2975
        %v2999 = vpop.f32.mrf.mxu0
        %v3000 = vadd.f32 0.0, %v2999
        %3001 = vmatmul.f32.gmra.mxu0 %v2977
        %v3002 = vpop.f32.mrf.mxu0
        %v3003 = vadd.f32 0.0, %v3002
        %3004 = vdwg.mxu0
        %v3005 = vadd.f32 %v2954, %v3000
        %v3006 = vadd.f32 %v2955, %v3003
        %v3007 = vld [vmem:[%s4] sm:$0x1]
        %v3009 = vperm.slane %v3007, 0
        %v3011 = vadd.f32 %v3005, %v3009
        %v3012 = vadd.f32 %v3006, %v3009
        %v3013 = vmax.f32 %v3011, 0.0
        %v3014 = vmax.f32 %v3012, 0.0
        %v3017 = vrot.slane %v3013, 4
        %v3018 = vrot.slane %v3014, 4
        %vm3021 = vcmask 62464
        %3022 = vst.msk [vmem:[#allocation6] sm:$0x3f] %vm3021, 0.0
        %3023 = vst.msk [vmem:[#allocation6 + $0x8] sm:$0x3f] %vm3021, 0.0
        %3024 = vst.msk [vmem:[#allocation6 + $0x10] sm:$0x3f] %vm3021, 0.0
        %3025 = vst.msk [vmem:[#allocation6 + $0x18] sm:$0x3f] %vm3021, 0.0
        %3026 = vst.msk [vmem:[#allocation6 + $0x20] sm:$0x3f] %vm3021, 0.0
        %3027 = vst.msk [vmem:[#allocation6 + $0x28] sm:$0x3f] %vm3021, 0.0
        %s3028 = scalar_lea.vmem [#allocation6], 8
        %vm3029 = vcmask 60416
        %3030 = vst.msk [vmem:[%s3028 + $0x1] sm:$0xf] %vm3029, %v3013
        %3031 = vst.msk [vmem:[%s3028 + $0x9] sm:$0xf] %vm3029, %v3017
        %3032 = vst.msk [vmem:[%s3028 + $0x11] sm:$0xf] %vm3029, %v3014
        %3033 = vst.msk [vmem:[%s3028 + $0x19] sm:$0xf] %vm3029, %v3018
        %v3034 = vld [vmem:[#allocation6] sm:$0x3f]
        %3035 = vst.msk [vmem:[#allocation7] sm:$0x3f] %vm3021, %v3034
        %s3036 = scalar_lea.vmem [#allocation6], 16
        %v3037 = vld [vmem:[%s3036] sm:$0x3f]
        %s3038 = scalar_lea.vmem [#allocation7], 8
        %3039 = vst.msk [vmem:[%s3038] sm:$0x3f] %vm3021, %v3037
        %v3040 = vld [vmem:[#allocation7] ss:$2 sm:$0x3]
        %s3041 = scalar_lea.vmem [#allocation7], 8
        %v3042 = vld [vmem:[%s3041] ss:$2 sm:$0x3]
        %v3043 = vld [vmem:[%s5] sm:$0xff]
        %s3044 = scalar_lea.vmem [#allocation7], 1
        %v3045 = vld [vmem:[%s3044] ss:$2 sm:$0x3]
        %s3046 = scalar_lea.vmem [#allocation7], 9
        %v3047 = vld [vmem:[%s3046] ss:$2 sm:$0x3]
        %s3048 = scalar_lea.vmem %s5, 8
        %v3049 = vld [vmem:[%s3048] sm:$0xff]
        %3052 = vst [vmem:[#allocation1] ss:$4 sm:$0xff] %v3045
        %s3053 = scalar_lea.vmem [#allocation1], 1
        %3054 = vst [vmem:[%s3053] ss:$4 sm:$0xff] %v3047
        %v3055 = vld.sshfl [vmem:[#allocation1] sm:$0xff pattern:$0x73625140]
        %vm3056 = vcmask 64512
        %v3057 = vsel %vm3056, %v3055, 0
        %3059 = vmatpush.msra.mxu0 0.0
        %3060 = vmatpush.msra.mxu0 0.0
        %3061 = vmatpush.msra.mxu0 0.0
        %3062 = vmatpush.msra.mxu0 0.0
        %3063 = vmatpush.msra.mxu0 0.0
        %3064 = vmatpush.msra.mxu0 0.0
        %3065 = vmatpush.msra.mxu0 0.0
        %3066 = vmatpush.msra.mxu0 0.0
        %3067 = vmatpush.msra.mxu0 0.0
        %3068 = vmatpush.msra.mxu0 0.0
        %3069 = vmatpush.msra.mxu0 0.0
        %3070 = vmatpush.msra.mxu0 0.0
        %3071 = vmatpush.msra.mxu0 0.0
        %3072 = vmatpush.msra.mxu0 0.0
        %3073 = vmatpush.msra.mxu0 0.0
        %3074 = vmatpush.msra.mxu0 %v3049
        %3075 = vmatmul.f32.gmra.mxu0 %v3057
        %v3076 = vpop.f32.mrf.mxu0
        %v3077 = vadd.f32 0.0, %v3076
        %3078 = vdwg.mxu0
        %3081 = vst [vmem:[#allocation1] ss:$4 sm:$0xff] %v3040
        %s3082 = scalar_lea.vmem [#allocation1], 1
        %3083 = vst [vmem:[%s3082] ss:$4 sm:$0xff] %v3042
        %v3084 = vld.sshfl [vmem:[#allocation1] sm:$0xff pattern:$0x73625140]
        %v3085 = vsel %vm3056, %v3084, 0
        %3087 = vmatpush.msra.mxu0 0.0
        %3088 = vmatpush.msra.mxu0 0.0
        %3089 = vmatpush.msra.mxu0 0.0
        %3090 = vmatpush.msra.mxu0 0.0
        %3091 = vmatpush.msra.mxu0 0.0
        %3092 = vmatpush.msra.mxu0 0.0
        %3093 = vmatpush.msra.mxu0 0.0
        %3094 = vmatpush.msra.mxu0 0.0
        %3095 = vmatpush.msra.mxu0 0.0
        %3096 = vmatpush.msra.mxu0 0.0
        %3097 = vmatpush.msra.mxu0 0.0
        %3098 = vmatpush.msra.mxu0 0.0
        %3099 = vmatpush.msra.mxu0 0.0
        %3100 = vmatpush.msra.mxu0 0.0
        %3101 = vmatpush.msra.mxu0 0.0
        %3102 = vmatpush.msra.mxu0 %v3043
        %3103 = vmatmul.f32.gmra.mxu0 %v3085
        %v3104 = vpop.f32.mrf.mxu0
        %v3105 = vadd.f32 %v3077, %v3104
        %3106 = vdwg.mxu0
        %s3107 = scalar_lea.vmem [#allocation7], 2
        %v3108 = vld [vmem:[%s3107] ss:$2 sm:$0x3]
        %s3109 = scalar_lea.vmem [#allocation7], 10
        %v3110 = vld [vmem:[%s3109] ss:$2 sm:$0x3]
        %s3111 = scalar_lea.vmem %s5, 16
        %v3112 = vld [vmem:[%s3111] sm:$0xff]
        %3115 = vst [vmem:[#allocation1] ss:$4 sm:$0xff] %v3108
        %s3116 = scalar_lea.vmem [#allocation1], 1
        %3117 = vst [vmem:[%s3116] ss:$4 sm:$0xff] %v3110
        %v3118 = vld.sshfl [vmem:[#allocation1] sm:$0xff pattern:$0x73625140]
        %v3119 = vsel %vm3056, %v3118, 0
        %3121 = vmatpush.msra.mxu0 0.0
        %3122 = vmatpush.msra.mxu0 0.0
        %3123 = vmatpush.msra.mxu0 0.0
        %3124 = vmatpush.msra.mxu0 0.0
        %3125 = vmatpush.msra.mxu0 0.0
        %3126 = vmatpush.msra.mxu0 0.0
        %3127 = vmatpush.msra.mxu0 0.0
        %3128 = vmatpush.msra.mxu0 0.0
        %3129 = vmatpush.msra.mxu0 0.0
        %3130 = vmatpush.msra.mxu0 0.0
        %3131 = vmatpush.msra.mxu0 0.0
        %3132 = vmatpush.msra.mxu0 0.0
        %3133 = vmatpush.msra.mxu0 0.0
        %3134 = vmatpush.msra.mxu0 0.0
        %3135 = vmatpush.msra.mxu0 0.0
        %3136 = vmatpush.msra.mxu0 %v3112
        %3137 = vmatmul.f32.gmra.mxu0 %v3119
        %v3138 = vpop.f32.mrf.mxu0
        %v3139 = vadd.f32 0.0, %v3138
        %3140 = vdwg.mxu0
        %v3141 = vadd.f32 %v3105, %v3139
        %s3142 = scalar_lea.vmem [#allocation7], 3
        %v3143 = vld [vmem:[%s3142] ss:$2 sm:$0x3]
        %s3144 = scalar_lea.vmem [#allocation7], 11
        %v3145 = vld [vmem:[%s3144] ss:$2 sm:$0x3]
        %s3146 = scalar_lea.vmem %s5, 24
        %v3147 = vld [vmem:[%s3146] sm:$0xff]
        %3150 = vst [vmem:[#allocation1] ss:$4 sm:$0xff] %v3143
        %s3151 = scalar_lea.vmem [#allocation1], 1
        %3152 = vst [vmem:[%s3151] ss:$4 sm:$0xff] %v3145
        %v3153 = vld.sshfl [vmem:[#allocation1] sm:$0xff pattern:$0x73625140]
        %v3154 = vsel %vm3056, %v3153, 0
        %3156 = vmatpush.msra.mxu0 0.0
        %3157 = vmatpush.msra.mxu0 0.0
        %3158 = vmatpush.msra.mxu0 0.0
        %3159 = vmatpush.msra.mxu0 0.0
        %3160 = vmatpush.msra.mxu0 0.0
        %3161 = vmatpush.msra.mxu0 0.0
        %3162 = vmatpush.msra.mxu0 0.0
        %3163 = vmatpush.msra.mxu0 0.0
        %3164 = vmatpush.msra.mxu0 0.0
        %3165 = vmatpush.msra.mxu0 0.0
        %3166 = vmatpush.msra.mxu0 0.0
        %3167 = vmatpush.msra.mxu0 0.0
        %3168 = vmatpush.msra.mxu0 0.0
        %3169 = vmatpush.msra.mxu0 0.0
        %3170 = vmatpush.msra.mxu0 0.0
        %3171 = vmatpush.msra.mxu0 %v3147
        %3172 = vmatmul.f32.gmra.mxu0 %v3154
        %v3173 = vpop.f32.mrf.mxu0
        %v3174 = vadd.f32 0.0, %v3173
        %3175 = vdwg.mxu0
        %v3176 = vadd.f32 %v3141, %v3174
        %v3177 = vld [vmem:[%s3028] sm:$0x3f]
        %3178 = vst.msk [vmem:[#allocation7] sm:$0x3f] %vm3021, %v3177
        %s3179 = scalar_lea.vmem [#allocation6], 24
        %v3180 = vld [vmem:[%s3179] sm:$0x3f]
        %3181 = vst.msk [vmem:[%s3038] sm:$0x3f] %vm3021, %v3180
        %v3182 = vld [vmem:[#allocation7] ss:$2 sm:$0x3]
        %v3183 = vld [vmem:[%s3041] ss:$2 sm:$0x3]
        %s3184 = scalar_lea.vmem %s5, 32
        %v3185 = vld [vmem:[%s3184] sm:$0xff]
        %3188 = vst [vmem:[#allocation1] ss:$4 sm:$0xff] %v3182
        %s3189 = scalar_lea.vmem [#allocation1], 1
        %3190 = vst [vmem:[%s3189] ss:$4 sm:$0xff] %v3183
        %v3191 = vld.sshfl [vmem:[#allocation1] sm:$0xff pattern:$0x73625140]
        %v3192 = vsel %vm3056, %v3191, 0
        %3194 = vmatpush.msra.mxu0 0.0
        %3195 = vmatpush.msra.mxu0 0.0
        %3196 = vmatpush.msra.mxu0 0.0
        %3197 = vmatpush.msra.mxu0 0.0
        %3198 = vmatpush.msra.mxu0 0.0
        %3199 = vmatpush.msra.mxu0 0.0
        %3200 = vmatpush.msra.mxu0 0.0
        %3201 = vmatpush.msra.mxu0 0.0
        %3202 = vmatpush.msra.mxu0 0.0
        %3203 = vmatpush.msra.mxu0 0.0
        %3204 = vmatpush.msra.mxu0 0.0
        %3205 = vmatpush.msra.mxu0 0.0
        %3206 = vmatpush.msra.mxu0 0.0
        %3207 = vmatpush.msra.mxu0 0.0
        %3208 = vmatpush.msra.mxu0 0.0
        %3209 = vmatpush.msra.mxu0 %v3185
        %3210 = vmatmul.f32.gmra.mxu0 %v3192
        %v3211 = vpop.f32.mrf.mxu0
        %v3212 = vadd.f32 0.0, %v3211
        %3213 = vdwg.mxu0
        %v3214 = vadd.f32 %v3176, %v3212
        %v3215 = vld [vmem:[%s3044] ss:$2 sm:$0x3]
        %v3216 = vld [vmem:[%s3046] ss:$2 sm:$0x3]
        %s3217 = scalar_lea.vmem %s5, 40
        %v3218 = vld [vmem:[%s3217] sm:$0xff]
        %3221 = vst [vmem:[#allocation1] ss:$4 sm:$0xff] %v3215
        %s3222 = scalar_lea.vmem [#allocation1], 1
        %3223 = vst [vmem:[%s3222] ss:$4 sm:$0xff] %v3216
        %v3224 = vld.sshfl [vmem:[#allocation1] sm:$0xff pattern:$0x73625140]
        %v3225 = vsel %vm3056, %v3224, 0
        %3227 = vmatpush.msra.mxu0 0.0
        %3228 = vmatpush.msra.mxu0 0.0
        %3229 = vmatpush.msra.mxu0 0.0
        %3230 = vmatpush.msra.mxu0 0.0
        %3231 = vmatpush.msra.mxu0 0.0
        %3232 = vmatpush.msra.mxu0 0.0
        %3233 = vmatpush.msra.mxu0 0.0
        %3234 = vmatpush.msra.mxu0 0.0
        %3235 = vmatpush.msra.mxu0 0.0
        %3236 = vmatpush.msra.mxu0 0.0
        %3237 = vmatpush.msra.mxu0 0.0
        %3238 = vmatpush.msra.mxu0 0.0
        %3239 = vmatpush.msra.mxu0 0.0
        %3240 = vmatpush.msra.mxu0 0.0
        %3241 = vmatpush.msra.mxu0 0.0
        %3242 = vmatpush.msra.mxu0 %v3218
        %3243 = vmatmul.f32.gmra.mxu0 %v3225
        %v3244 = vpop.f32.mrf.mxu0
        %v3245 = vadd.f32 0.0, %v3244
        %3246 = vdwg.mxu0
        %v3247 = vadd.f32 %v3214, %v3245
        %v3248 = vld [vmem:[%s3107] ss:$2 sm:$0x3]
        %v3249 = vld [vmem:[%s3109] ss:$2 sm:$0x3]
        %s3250 = scalar_lea.vmem %s5, 48
        %v3251 = vld [vmem:[%s3250] sm:$0xff]
        %3254 = vst [vmem:[#allocation1] ss:$4 sm:$0xff] %v3248
        %s3255 = scalar_lea.vmem [#allocation1], 1
        %3256 = vst [vmem:[%s3255] ss:$4 sm:$0xff] %v3249
        %v3257 = vld.sshfl [vmem:[#allocation1] sm:$0xff pattern:$0x73625140]
        %v3258 = vsel %vm3056, %v3257, 0
        %3260 = vmatpush.msra.mxu0 0.0
        %3261 = vmatpush.msra.mxu0 0.0
        %3262 = vmatpush.msra.mxu0 0.0
        %3263 = vmatpush.msra.mxu0 0.0
        %3264 = vmatpush.msra.mxu0 0.0
        %3265 = vmatpush.msra.mxu0 0.0
        %3266 = vmatpush.msra.mxu0 0.0
        %3267 = vmatpush.msra.mxu0 0.0
        %3268 = vmatpush.msra.mxu0 0.0
        %3269 = vmatpush.msra.mxu0 0.0
        %3270 = vmatpush.msra.mxu0 0.0
        %3271 = vmatpush.msra.mxu0 0.0
        %3272 = vmatpush.msra.mxu0 0.0
        %3273 = vmatpush.msra.mxu0 0.0
        %3274 = vmatpush.msra.mxu0 0.0
        %3275 = vmatpush.msra.mxu0 %v3251
        %3276 = vmatmul.f32.gmra.mxu0 %v3258
        %v3277 = vpop.f32.mrf.mxu0
        %v3278 = vadd.f32 0.0, %v3277
        %3279 = vdwg.mxu0
        %v3280 = vadd.f32 %v3247, %v3278
        %v3281 = vld [vmem:[%s3142] ss:$2 sm:$0x3]
        %v3282 = vld [vmem:[%s3144] ss:$2 sm:$0x3]
        %s3283 = scalar_lea.vmem %s5, 56
        %v3284 = vld [vmem:[%s3283] sm:$0xff]
        %3287 = vst [vmem:[#allocation1] ss:$4 sm:$0xff] %v3281
        %s3288 = scalar_lea.vmem [#allocation1], 1
        %3289 = vst [vmem:[%s3288] ss:$4 sm:$0xff] %v3282
        %v3290 = vld.sshfl [vmem:[#allocation1] sm:$0xff pattern:$0x73625140]
        %v3291 = vsel %vm3056, %v3290, 0
        %3293 = vmatpush.msra.mxu0 0.0
        %3294 = vmatpush.msra.mxu0 0.0
        %3295 = vmatpush.msra.mxu0 0.0
        %3296 = vmatpush.msra.mxu0 0.0
        %3297 = vmatpush.msra.mxu0 0.0
        %3298 = vmatpush.msra.mxu0 0.0
        %3299 = vmatpush.msra.mxu0 0.0
        %3300 = vmatpush.msra.mxu0 0.0
        %3301 = vmatpush.msra.mxu0 0.0
        %3302 = vmatpush.msra.mxu0 0.0
        %3303 = vmatpush.msra.mxu0 0.0
        %3304 = vmatpush.msra.mxu0 0.0
        %3305 = vmatpush.msra.mxu0 0.0
        %3306 = vmatpush.msra.mxu0 0.0
        %3307 = vmatpush.msra.mxu0 0.0
        %3308 = vmatpush.msra.mxu0 %v3284
        %3309 = vmatmul.f32.gmra.mxu0 %v3291
        %v3310 = vpop.f32.mrf.mxu0
        %v3311 = vadd.f32 0.0, %v3310
        %3312 = vdwg.mxu0
        %v3313 = vadd.f32 %v3280, %v3311
        %v3314 = vld [vmem:[%s3036] sm:$0x3f]
        %3315 = vst.msk [vmem:[#allocation7] sm:$0x3f] %vm3021, %v3314
        %s3316 = scalar_lea.vmem [#allocation6], 32
        %v3317 = vld [vmem:[%s3316] sm:$0x3f]
        %3318 = vst.msk [vmem:[%s3038] sm:$0x3f] %vm3021, %v3317
        %v3319 = vld [vmem:[#allocation7] ss:$2 sm:$0x3]
        %v3320 = vld [vmem:[%s3041] ss:$2 sm:$0x3]
        %s3321 = scalar_lea.vmem %s5, 64
        %v3322 = vld [vmem:[%s3321] sm:$0xff]
        %3325 = vst [vmem:[#allocation1] ss:$4 sm:$0xff] %v3319
        %s3326 = scalar_lea.vmem [#allocation1], 1
        %3327 = vst [vmem:[%s3326] ss:$4 sm:$0xff] %v3320
        %v3328 = vld.sshfl [vmem:[#allocation1] sm:$0xff pattern:$0x73625140]
        %v3329 = vsel %vm3056, %v3328, 0
        %3331 = vmatpush.msra.mxu0 0.0
        %3332 = vmatpush.msra.mxu0 0.0
        %3333 = vmatpush.msra.mxu0 0.0
        %3334 = vmatpush.msra.mxu0 0.0
        %3335 = vmatpush.msra.mxu0 0.0
        %3336 = vmatpush.msra.mxu0 0.0
        %3337 = vmatpush.msra.mxu0 0.0
        %3338 = vmatpush.msra.mxu0 0.0
        %3339 = vmatpush.msra.mxu0 0.0
        %3340 = vmatpush.msra.mxu0 0.0
        %3341 = vmatpush.msra.mxu0 0.0
        %3342 = vmatpush.msra.mxu0 0.0
        %3343 = vmatpush.msra.mxu0 0.0
        %3344 = vmatpush.msra.mxu0 0.0
        %3345 = vmatpush.msra.mxu0 0.0
        %3346 = vmatpush.msra.mxu0 %v3322
        %3347 = vmatmul.f32.gmra.mxu0 %v3329
        %v3348 = vpop.f32.mrf.mxu0
        %v3349 = vadd.f32 0.0, %v3348
        %3350 = vdwg.mxu0
        %v3351 = vadd.f32 %v3313, %v3349
        %v3352 = vld [vmem:[%s3044] ss:$2 sm:$0x3]
        %v3353 = vld [vmem:[%s3046] ss:$2 sm:$0x3]
        %s3354 = scalar_lea.vmem %s5, 72
        %v3355 = vld [vmem:[%s3354] sm:$0xff]
        %3358 = vst [vmem:[#allocation1] ss:$4 sm:$0xff] %v3352
        %s3359 = scalar_lea.vmem [#allocation1], 1
        %3360 = vst [vmem:[%s3359] ss:$4 sm:$0xff] %v3353
        %v3361 = vld.sshfl [vmem:[#allocation1] sm:$0xff pattern:$0x73625140]
        %v3362 = vsel %vm3056, %v3361, 0
        %3364 = vmatpush.msra.mxu0 0.0
        %3365 = vmatpush.msra.mxu0 0.0
        %3366 = vmatpush.msra.mxu0 0.0
        %3367 = vmatpush.msra.mxu0 0.0
        %3368 = vmatpush.msra.mxu0 0.0
        %3369 = vmatpush.msra.mxu0 0.0
        %3370 = vmatpush.msra.mxu0 0.0
        %3371 = vmatpush.msra.mxu0 0.0
        %3372 = vmatpush.msra.mxu0 0.0
        %3373 = vmatpush.msra.mxu0 0.0
        %3374 = vmatpush.msra.mxu0 0.0
        %3375 = vmatpush.msra.mxu0 0.0
        %3376 = vmatpush.msra.mxu0 0.0
        %3377 = vmatpush.msra.mxu0 0.0
        %3378 = vmatpush.msra.mxu0 0.0
        %3379 = vmatpush.msra.mxu0 %v3355
        %3380 = vmatmul.f32.gmra.mxu0 %v3362
        %v3381 = vpop.f32.mrf.mxu0
        %v3382 = vadd.f32 0.0, %v3381
        %3383 = vdwg.mxu0
        %v3384 = vadd.f32 %v3351, %v3382
        %v3385 = vld [vmem:[%s3107] ss:$2 sm:$0x3]
        %v3386 = vld [vmem:[%s3109] ss:$2 sm:$0x3]
        %s3387 = scalar_lea.vmem %s5, 80
        %v3388 = vld [vmem:[%s3387] sm:$0xff]
        %3391 = vst [vmem:[#allocation1] ss:$4 sm:$0xff] %v3385
        %s3392 = scalar_lea.vmem [#allocation1], 1
        %3393 = vst [vmem:[%s3392] ss:$4 sm:$0xff] %v3386
        %v3394 = vld.sshfl [vmem:[#allocation1] sm:$0xff pattern:$0x73625140]
        %v3395 = vsel %vm3056, %v3394, 0
        %3397 = vmatpush.msra.mxu0 0.0
        %3398 = vmatpush.msra.mxu0 0.0
        %3399 = vmatpush.msra.mxu0 0.0
        %3400 = vmatpush.msra.mxu0 0.0
        %3401 = vmatpush.msra.mxu0 0.0
        %3402 = vmatpush.msra.mxu0 0.0
        %3403 = vmatpush.msra.mxu0 0.0
        %3404 = vmatpush.msra.mxu0 0.0
        %3405 = vmatpush.msra.mxu0 0.0
        %3406 = vmatpush.msra.mxu0 0.0
        %3407 = vmatpush.msra.mxu0 0.0
        %3408 = vmatpush.msra.mxu0 0.0
        %3409 = vmatpush.msra.mxu0 0.0
        %3410 = vmatpush.msra.mxu0 0.0
        %3411 = vmatpush.msra.mxu0 0.0
        %3412 = vmatpush.msra.mxu0 %v3388
        %3413 = vmatmul.f32.gmra.mxu0 %v3395
        %v3414 = vpop.f32.mrf.mxu0
        %v3415 = vadd.f32 0.0, %v3414
        %3416 = vdwg.mxu0
        %v3417 = vadd.f32 %v3384, %v3415
        %v3418 = vld [vmem:[%s3142] ss:$2 sm:$0x3]
        %v3419 = vld [vmem:[%s3144] ss:$2 sm:$0x3]
        %s3420 = scalar_lea.vmem %s5, 88
        %v3421 = vld [vmem:[%s3420] sm:$0xff]
        %3424 = vst [vmem:[#allocation1] ss:$4 sm:$0xff] %v3418
        %s3425 = scalar_lea.vmem [#allocation1], 1
        %3426 = vst [vmem:[%s3425] ss:$4 sm:$0xff] %v3419
        %v3427 = vld.sshfl [vmem:[#allocation1] sm:$0xff pattern:$0x73625140]
        %v3428 = vsel %vm3056, %v3427, 0
        %3430 = vmatpush.msra.mxu0 0.0
        %3431 = vmatpush.msra.mxu0 0.0
        %3432 = vmatpush.msra.mxu0 0.0
        %3433 = vmatpush.msra.mxu0 0.0
        %3434 = vmatpush.msra.mxu0 0.0
        %3435 = vmatpush.msra.mxu0 0.0
        %3436 = vmatpush.msra.mxu0 0.0
        %3437 = vmatpush.msra.mxu0 0.0
        %3438 = vmatpush.msra.mxu0 0.0
        %3439 = vmatpush.msra.mxu0 0.0
        %3440 = vmatpush.msra.mxu0 0.0
        %3441 = vmatpush.msra.mxu0 0.0
        %3442 = vmatpush.msra.mxu0 0.0
        %3443 = vmatpush.msra.mxu0 0.0
        %3444 = vmatpush.msra.mxu0 0.0
        %3445 = vmatpush.msra.mxu0 %v3421
        %3446 = vmatmul.f32.gmra.mxu0 %v3428
        %v3447 = vpop.f32.mrf.mxu0
        %v3448 = vadd.f32 0.0, %v3447
        %3449 = vdwg.mxu0
        %v3450 = vadd.f32 %v3417, %v3448
        %v3451 = vld [vmem:[%s3179] sm:$0x3f]
        %3452 = vst.msk [vmem:[#allocation7] sm:$0x3f] %vm3021, %v3451
        %s3453 = scalar_lea.vmem [#allocation6], 40
        %v3454 = vld [vmem:[%s3453] sm:$0x3f]
        %3455 = vst.msk [vmem:[%s3038] sm:$0x3f] %vm3021, %v3454
        %v3456 = vld [vmem:[#allocation7] ss:$2 sm:$0x3]
        %v3457 = vld [vmem:[%s3041] ss:$2 sm:$0x3]
        %s3458 = scalar_lea.vmem %s5, 96
        %v3459 = vld [vmem:[%s3458] sm:$0xff]
        %3462 = vst [vmem:[#allocation1] ss:$4 sm:$0xff] %v3456
        %s3463 = scalar_lea.vmem [#allocation1], 1
        %3464 = vst [vmem:[%s3463] ss:$4 sm:$0xff] %v3457
        %v3465 = vld.sshfl [vmem:[#allocation1] sm:$0xff pattern:$0x73625140]
        %v3466 = vsel %vm3056, %v3465, 0
        %3468 = vmatpush.msra.mxu0 0.0
        %3469 = vmatpush.msra.mxu0 0.0
        %3470 = vmatpush.msra.mxu0 0.0
        %3471 = vmatpush.msra.mxu0 0.0
        %3472 = vmatpush.msra.mxu0 0.0
        %3473 = vmatpush.msra.mxu0 0.0
        %3474 = vmatpush.msra.mxu0 0.0
        %3475 = vmatpush.msra.mxu0 0.0
        %3476 = vmatpush.msra.mxu0 0.0
        %3477 = vmatpush.msra.mxu0 0.0
        %3478 = vmatpush.msra.mxu0 0.0
        %3479 = vmatpush.msra.mxu0 0.0
        %3480 = vmatpush.msra.mxu0 0.0
        %3481 = vmatpush.msra.mxu0 0.0
        %3482 = vmatpush.msra.mxu0 0.0
        %3483 = vmatpush.msra.mxu0 %v3459
        %3484 = vmatmul.f32.gmra.mxu0 %v3466
        %v3485 = vpop.f32.mrf.mxu0
        %v3486 = vadd.f32 0.0, %v3485
        %3487 = vdwg.mxu0
        %v3488 = vadd.f32 %v3450, %v3486
        %v3489 = vld [vmem:[%s3044] ss:$2 sm:$0x3]
        %v3490 = vld [vmem:[%s3046] ss:$2 sm:$0x3]
        %s3491 = scalar_lea.vmem %s5, 104
        %v3492 = vld [vmem:[%s3491] sm:$0xff]
        %3495 = vst [vmem:[#allocation1] ss:$4 sm:$0xff] %v3489
        %s3496 = scalar_lea.vmem [#allocation1], 1
        %3497 = vst [vmem:[%s3496] ss:$4 sm:$0xff] %v3490
        %v3498 = vld.sshfl [vmem:[#allocation1] sm:$0xff pattern:$0x73625140]
        %v3499 = vsel %vm3056, %v3498, 0
        %3501 = vmatpush.msra.mxu0 0.0
        %3502 = vmatpush.msra.mxu0 0.0
        %3503 = vmatpush.msra.mxu0 0.0
        %3504 = vmatpush.msra.mxu0 0.0
        %3505 = vmatpush.msra.mxu0 0.0
        %3506 = vmatpush.msra.mxu0 0.0
        %3507 = vmatpush.msra.mxu0 0.0
        %3508 = vmatpush.msra.mxu0 0.0
        %3509 = vmatpush.msra.mxu0 0.0
        %3510 = vmatpush.msra.mxu0 0.0
        %3511 = vmatpush.msra.mxu0 0.0
        %3512 = vmatpush.msra.mxu0 0.0
        %3513 = vmatpush.msra.mxu0 0.0
        %3514 = vmatpush.msra.mxu0 0.0
        %3515 = vmatpush.msra.mxu0 0.0
        %3516 = vmatpush.msra.mxu0 %v3492
        %3517 = vmatmul.f32.gmra.mxu0 %v3499
        %v3518 = vpop.f32.mrf.mxu0
        %v3519 = vadd.f32 0.0, %v3518
        %3520 = vdwg.mxu0
        %v3521 = vadd.f32 %v3488, %v3519
        %v3522 = vld [vmem:[%s3107] ss:$2 sm:$0x3]
        %v3523 = vld [vmem:[%s3109] ss:$2 sm:$0x3]
        %s3524 = scalar_lea.vmem %s5, 112
        %v3525 = vld [vmem:[%s3524] sm:$0xff]
        %3528 = vst [vmem:[#allocation1] ss:$4 sm:$0xff] %v3522
        %s3529 = scalar_lea.vmem [#allocation1], 1
        %3530 = vst [vmem:[%s3529] ss:$4 sm:$0xff] %v3523
        %v3531 = vld.sshfl [vmem:[#allocation1] sm:$0xff pattern:$0x73625140]
        %v3532 = vsel %vm3056, %v3531, 0
        %3534 = vmatpush.msra.mxu0 0.0
        %3535 = vmatpush.msra.mxu0 0.0
        %3536 = vmatpush.msra.mxu0 0.0
        %3537 = vmatpush.msra.mxu0 0.0
        %3538 = vmatpush.msra.mxu0 0.0
        %3539 = vmatpush.msra.mxu0 0.0
        %3540 = vmatpush.msra.mxu0 0.0
        %3541 = vmatpush.msra.mxu0 0.0
        %3542 = vmatpush.msra.mxu0 0.0
        %3543 = vmatpush.msra.mxu0 0.0
        %3544 = vmatpush.msra.mxu0 0.0
        %3545 = vmatpush.msra.mxu0 0.0
        %3546 = vmatpush.msra.mxu0 0.0
        %3547 = vmatpush.msra.mxu0 0.0
        %3548 = vmatpush.msra.mxu0 0.0
        %3549 = vmatpush.msra.mxu0 %v3525
        %3550 = vmatmul.f32.gmra.mxu0 %v3532
        %v3551 = vpop.f32.mrf.mxu0
        %v3552 = vadd.f32 0.0, %v3551
        %3553 = vdwg.mxu0
        %v3554 = vadd.f32 %v3521, %v3552
        %v3555 = vld [vmem:[%s3142] ss:$2 sm:$0x3]
        %v3556 = vld [vmem:[%s3144] ss:$2 sm:$0x3]
        %s3557 = scalar_lea.vmem %s5, 120
        %v3558 = vld [vmem:[%s3557] sm:$0xff]
        %3561 = vst [vmem:[#allocation1] ss:$4 sm:$0xff] %v3555
        %s3562 = scalar_lea.vmem [#allocation1], 1
        %3563 = vst [vmem:[%s3562] ss:$4 sm:$0xff] %v3556
        %v3564 = vld.sshfl [vmem:[#allocation1] sm:$0xff pattern:$0x73625140]
        %v3565 = vsel %vm3056, %v3564, 0
        %3567 = vmatpush.msra.mxu0 0.0
        %3568 = vmatpush.msra.mxu0 0.0
        %3569 = vmatpush.msra.mxu0 0.0
        %3570 = vmatpush.msra.mxu0 0.0
        %3571 = vmatpush.msra.mxu0 0.0
        %3572 = vmatpush.msra.mxu0 0.0
        %3573 = vmatpush.msra.mxu0 0.0
        %3574 = vmatpush.msra.mxu0 0.0
        %3575 = vmatpush.msra.mxu0 0.0
        %3576 = vmatpush.msra.mxu0 0.0
        %3577 = vmatpush.msra.mxu0 0.0
        %3578 = vmatpush.msra.mxu0 0.0
        %3579 = vmatpush.msra.mxu0 0.0
        %3580 = vmatpush.msra.mxu0 0.0
        %3581 = vmatpush.msra.mxu0 0.0
        %3582 = vmatpush.msra.mxu0 %v3558
        %3583 = vmatmul.f32.gmra.mxu0 %v3565
        %v3584 = vpop.f32.mrf.mxu0
        %v3585 = vadd.f32 0.0, %v3584
        %3586 = vdwg.mxu0
        %v3587 = vadd.f32 %v3554, %v3585
        %v3588 = vld [vmem:[%s6] sm:$0x1]
        %v3590 = vperm.slane %v3588, 0
        %v3592 = vadd.f32 %v3587, %v3590
        %v3593 = vmax.f32 %v3592, 0.0
        %v3595 = vrot.slane %v3593, 2
        %vm3597 = vcmask 125952
        %3598 = vst.msk [vmem:[#allocation8] sm:$0xf] %vm3597, 0.0
        %3599 = vst.msk [vmem:[#allocation8 + $0x4] sm:$0xf] %vm3597, 0.0
        %3600 = vst.msk [vmem:[#allocation8 + $0x8] sm:$0xf] %vm3597, 0.0
        %3601 = vst.msk [vmem:[#allocation8 + $0xc] sm:$0xf] %vm3597, 0.0
        %s3602 = scalar_lea.vmem [#allocation8], 4
        %vm3603 = vcmask 123904
        %3604 = vst.msk [vmem:[%s3602 + $0x1] sm:$0x3] %vm3603, %v3593
        %3605 = vst.msk [vmem:[%s3602 + $0x5] sm:$0x3] %vm3603, %v3595
        %v3606 = vld [vmem:[#allocation8] sm:$0xf]
        %3607 = vst.msk [vmem:[#allocation9] sm:$0xf] %vm3597, %v3606
        %v3608 = vld [vmem:[#allocation9] ss:$2 sm:$0x1]
        %v3609 = vld [vmem:[%s7] sm:$0xff]
        %v3610 = vld [vmem:[%s7 + $0x8] sm:$0xff]
        %s3611 = scalar_lea.vmem [#allocation9], 1
        %v3612 = vld [vmem:[%s3611] ss:$2 sm:$0x1]
        %s3613 = scalar_lea.vmem %s7, 16
        %v3614 = vld [vmem:[%s3613] sm:$0xff]
        %v3615 = vld [vmem:[%s3613 + $0x8] sm:$0xff]
        %vm3616 = vcmask 130048
        %v3618 = vsel %vm3616, %v3612, 0
        %3620 = vmatpush.msra.mxu0 0.0
        %3621 = vmatpush.msra.mxu0 0.0
        %3622 = vmatpush.msra.mxu0 0.0
        %3623 = vmatpush.msra.mxu0 0.0
        %3624 = vmatpush.msra.mxu0 0.0
        %3625 = vmatpush.msra.mxu0 0.0
        %3626 = vmatpush.msra.mxu0 0.0
        %3627 = vmatpush.msra.mxu0 0.0
        %3628 = vmatpush.msra.mxu0 0.0
        %3629 = vmatpush.msra.mxu0 0.0
        %3630 = vmatpush.msra.mxu0 0.0
        %3631 = vmatpush.msra.mxu0 0.0
        %3632 = vmatpush.msra.mxu0 0.0
        %3633 = vmatpush.msra.mxu0 0.0
        %3634 = vmatpush.msra.mxu0 %v3615
        %3635 = vmatpush.msra.mxu0 %v3614
        %3636 = vmatmul.f32.gmra.mxu0 %v3618
        %v3637 = vpop.f32.mrf.mxu0
        %v3638 = vadd.f32 0.0, %v3637
        %3639 = vdwg.mxu0
        %v3641 = vsel %vm3616, %v3608, 0
        %3643 = vmatpush.msra.mxu0 0.0
        %3644 = vmatpush.msra.mxu0 0.0
        %3645 = vmatpush.msra.mxu0 0.0
        %3646 = vmatpush.msra.mxu0 0.0
        %3647 = vmatpush.msra.mxu0 0.0
        %3648 = vmatpush.msra.mxu0 0.0
        %3649 = vmatpush.msra.mxu0 0.0
        %3650 = vmatpush.msra.mxu0 0.0
        %3651 = vmatpush.msra.mxu0 0.0
        %3652 = vmatpush.msra.mxu0 0.0
        %3653 = vmatpush.msra.mxu0 0.0
        %3654 = vmatpush.msra.mxu0 0.0
        %3655 = vmatpush.msra.mxu0 0.0
        %3656 = vmatpush.msra.mxu0 0.0
        %3657 = vmatpush.msra.mxu0 %v3610
        %3658 = vmatpush.msra.mxu0 %v3609
        %3659 = vmatmul.f32.gmra.mxu0 %v3641
        %v3660 = vpop.f32.mrf.mxu0
        %v3661 = vadd.f32 %v3638, %v3660
        %3662 = vdwg.mxu0
        %s3663 = scalar_lea.vmem [#allocation9], 2
        %v3664 = vld [vmem:[%s3663] ss:$2 sm:$0x1]
        %s3665 = scalar_lea.vmem %s7, 32
        %v3666 = vld [vmem:[%s3665] sm:$0xff]
        %v3667 = vld [vmem:[%s3665 + $0x8] sm:$0xff]
        %v3669 = vsel %vm3616, %v3664, 0
        %3671 = vmatpush.msra.mxu0 0.0
        %3672 = vmatpush.msra.mxu0 0.0
        %3673 = vmatpush.msra.mxu0 0.0
        %3674 = vmatpush.msra.mxu0 0.0
        %3675 = vmatpush.msra.mxu0 0.0
        %3676 = vmatpush.msra.mxu0 0.0
        %3677 = vmatpush.msra.mxu0 0.0
        %3678 = vmatpush.msra.mxu0 0.0
        %3679 = vmatpush.msra.mxu0 0.0
        %3680 = vmatpush.msra.mxu0 0.0
        %3681 = vmatpush.msra.mxu0 0.0
        %3682 = vmatpush.msra.mxu0 0.0
        %3683 = vmatpush.msra.mxu0 0.0
        %3684 = vmatpush.msra.mxu0 0.0
        %3685 = vmatpush.msra.mxu0 %v3667
        %3686 = vmatpush.msra.mxu0 %v3666
        %3687 = vmatmul.f32.gmra.mxu0 %v3669
        %v3688 = vpop.f32.mrf.mxu0
        %v3689 = vadd.f32 0.0, %v3688
        %3690 = vdwg.mxu0
        %v3691 = vadd.f32 %v3661, %v3689
        %s3692 = scalar_lea.vmem [#allocation9], 3
        %v3693 = vld [vmem:[%s3692] ss:$2 sm:$0x1]
        %s3694 = scalar_lea.vmem %s7, 48
        %v3695 = vld [vmem:[%s3694] sm:$0xff]
        %v3696 = vld [vmem:[%s3694 + $0x8] sm:$0xff]
        %v3698 = vsel %vm3616, %v3693, 0
        %3700 = vmatpush.msra.mxu0 0.0
        %3701 = vmatpush.msra.mxu0 0.0
        %3702 = vmatpush.msra.mxu0 0.0
        %3703 = vmatpush.msra.mxu0 0.0
        %3704 = vmatpush.msra.mxu0 0.0
        %3705 = vmatpush.msra.mxu0 0.0
        %3706 = vmatpush.msra.mxu0 0.0
        %3707 = vmatpush.msra.mxu0 0.0
        %3708 = vmatpush.msra.mxu0 0.0
        %3709 = vmatpush.msra.mxu0 0.0
        %3710 = vmatpush.msra.mxu0 0.0
        %3711 = vmatpush.msra.mxu0 0.0
        %3712 = vmatpush.msra.mxu0 0.0
        %3713 = vmatpush.msra.mxu0 0.0
        %3714 = vmatpush.msra.mxu0 %v3696
        %3715 = vmatpush.msra.mxu0 %v3695
        %3716 = vmatmul.f32.gmra.mxu0 %v3698
        %v3717 = vpop.f32.mrf.mxu0
        %v3718 = vadd.f32 0.0, %v3717
        %3719 = vdwg.mxu0
        %v3720 = vadd.f32 %v3691, %v3718
        %v3721 = vld [vmem:[%s3602] sm:$0xf]
        %3722 = vst.msk [vmem:[#allocation9] sm:$0xf] %vm3597, %v3721
        %v3723 = vld [vmem:[#allocation9] ss:$2 sm:$0x1]
        %s3724 = scalar_lea.vmem %s7, 64
        %v3725 = vld [vmem:[%s3724] sm:$0xff]
        %v3726 = vld [vmem:[%s3724 + $0x8] sm:$0xff]
        %v3728 = vsel %vm3616, %v3723, 0
        %3730 = vmatpush.msra.mxu0 0.0
        %3731 = vmatpush.msra.mxu0 0.0
        %3732 = vmatpush.msra.mxu0 0.0
        %3733 = vmatpush.msra.mxu0 0.0
        %3734 = vmatpush.msra.mxu0 0.0
        %3735 = vmatpush.msra.mxu0 0.0
        %3736 = vmatpush.msra.mxu0 0.0
        %3737 = vmatpush.msra.mxu0 0.0
        %3738 = vmatpush.msra.mxu0 0.0
        %3739 = vmatpush.msra.mxu0 0.0
        %3740 = vmatpush.msra.mxu0 0.0
        %3741 = vmatpush.msra.mxu0 0.0
        %3742 = vmatpush.msra.mxu0 0.0
        %3743 = vmatpush.msra.mxu0 0.0
        %3744 = vmatpush.msra.mxu0 %v3726
        %3745 = vmatpush.msra.mxu0 %v3725
        %3746 = vmatmul.f32.gmra.mxu0 %v3728
        %v3747 = vpop.f32.mrf.mxu0
        %v3748 = vadd.f32 0.0, %v3747
        %3749 = vdwg.mxu0
        %v3750 = vadd.f32 %v3720, %v3748
        %v3751 = vld [vmem:[%s3611] ss:$2 sm:$0x1]
        %s3752 = scalar_lea.vmem %s7, 80
        %v3753 = vld [vmem:[%s3752] sm:$0xff]
        %v3754 = vld [vmem:[%s3752 + $0x8] sm:$0xff]
        %v3756 = vsel %vm3616, %v3751, 0
        %3758 = vmatpush.msra.mxu0 0.0
        %3759 = vmatpush.msra.mxu0 0.0
        %3760 = vmatpush.msra.mxu0 0.0
        %3761 = vmatpush.msra.mxu0 0.0
        %3762 = vmatpush.msra.mxu0 0.0
        %3763 = vmatpush.msra.mxu0 0.0
        %3764 = vmatpush.msra.mxu0 0.0
        %3765 = vmatpush.msra.mxu0 0.0
        %3766 = vmatpush.msra.mxu0 0.0
        %3767 = vmatpush.msra.mxu0 0.0
        %3768 = vmatpush.msra.mxu0 0.0
        %3769 = vmatpush.msra.mxu0 0.0
        %3770 = vmatpush.msra.mxu0 0.0
        %3771 = vmatpush.msra.mxu0 0.0
        %3772 = vmatpush.msra.mxu0 %v3754
        %3773 = vmatpush.msra.mxu0 %v3753
        %3774 = vmatmul.f32.gmra.mxu0 %v3756
        %v3775 = vpop.f32.mrf.mxu0
        %v3776 = vadd.f32 0.0, %v3775
        %3777 = vdwg.mxu0
        %v3778 = vadd.f32 %v3750, %v3776
        %v3779 = vld [vmem:[%s3663] ss:$2 sm:$0x1]
        %s3780 = scalar_lea.vmem %s7, 96
        %v3781 = vld [vmem:[%s3780] sm:$0xff]
        %v3782 = vld [vmem:[%s3780 + $0x8] sm:$0xff]
        %v3784 = vsel %vm3616, %v3779, 0
        %3786 = vmatpush.msra.mxu0 0.0
        %3787 = vmatpush.msra.mxu0 0.0
        %3788 = vmatpush.msra.mxu0 0.0
        %3789 = vmatpush.msra.mxu0 0.0
        %3790 = vmatpush.msra.mxu0 0.0
        %3791 = vmatpush.msra.mxu0 0.0
        %3792 = vmatpush.msra.mxu0 0.0
        %3793 = vmatpush.msra.mxu0 0.0
        %3794 = vmatpush.msra.mxu0 0.0
        %3795 = vmatpush.msra.mxu0 0.0
        %3796 = vmatpush.msra.mxu0 0.0
        %3797 = vmatpush.msra.mxu0 0.0
        %3798 = vmatpush.msra.mxu0 0.0
        %3799 = vmatpush.msra.mxu0 0.0
        %3800 = vmatpush.msra.mxu0 %v3782
        %3801 = vmatpush.msra.mxu0 %v3781
        %3802 = vmatmul.f32.gmra.mxu0 %v3784
        %v3803 = vpop.f32.mrf.mxu0
        %v3804 = vadd.f32 0.0, %v3803
        %3805 = vdwg.mxu0
        %v3806 = vadd.f32 %v3778, %v3804
        %v3807 = vld [vmem:[%s3692] ss:$2 sm:$0x1]
        %s3808 = scalar_lea.vmem %s7, 112
        %v3809 = vld [vmem:[%s3808] sm:$0xff]
        %v3810 = vld [vmem:[%s3808 + $0x8] sm:$0xff]
        %v3812 = vsel %vm3616, %v3807, 0
        %3814 = vmatpush.msra.mxu0 0.0
        %3815 = vmatpush.msra.mxu0 0.0
        %3816 = vmatpush.msra.mxu0 0.0
        %3817 = vmatpush.msra.mxu0 0.0
        %3818 = vmatpush.msra.mxu0 0.0
        %3819 = vmatpush.msra.mxu0 0.0
        %3820 = vmatpush.msra.mxu0 0.0
        %3821 = vmatpush.msra.mxu0 0.0
        %3822 = vmatpush.msra.mxu0 0.0
        %3823 = vmatpush.msra.mxu0 0.0
        %3824 = vmatpush.msra.mxu0 0.0
        %3825 = vmatpush.msra.mxu0 0.0
        %3826 = vmatpush.msra.mxu0 0.0
        %3827 = vmatpush.msra.mxu0 0.0
        %3828 = vmatpush.msra.mxu0 %v3810
        %3829 = vmatpush.msra.mxu0 %v3809
        %3830 = vmatmul.f32.gmra.mxu0 %v3812
        %v3831 = vpop.f32.mrf.mxu0
        %v3832 = vadd.f32 0.0, %v3831
        %3833 = vdwg.mxu0
        %v3834 = vadd.f32 %v3806, %v3832
        %s3835 = scalar_lea.vmem [#allocation8], 8
        %v3836 = vld [vmem:[%s3835] sm:$0xf]
        %3837 = vst.msk [vmem:[#allocation9] sm:$0xf] %vm3597, %v3836
        %v3838 = vld [vmem:[#allocation9] ss:$2 sm:$0x1]
        %s3839 = scalar_lea.vmem %s7, 128
        %v3840 = vld [vmem:[%s3839] sm:$0xff]
        %v3841 = vld [vmem:[%s3839 + $0x8] sm:$0xff]
        %v3843 = vsel %vm3616, %v3838, 0
        %3845 = vmatpush.msra.mxu0 0.0
        %3846 = vmatpush.msra.mxu0 0.0
        %3847 = vmatpush.msra.mxu0 0.0
        %3848 = vmatpush.msra.mxu0 0.0
        %3849 = vmatpush.msra.mxu0 0.0
        %3850 = vmatpush.msra.mxu0 0.0
        %3851 = vmatpush.msra.mxu0 0.0
        %3852 = vmatpush.msra.mxu0 0.0
        %3853 = vmatpush.msra.mxu0 0.0
        %3854 = vmatpush.msra.mxu0 0.0
        %3855 = vmatpush.msra.mxu0 0.0
        %3856 = vmatpush.msra.mxu0 0.0
        %3857 = vmatpush.msra.mxu0 0.0
        %3858 = vmatpush.msra.mxu0 0.0
        %3859 = vmatpush.msra.mxu0 %v3841
        %3860 = vmatpush.msra.mxu0 %v3840
        %3861 = vmatmul.f32.gmra.mxu0 %v3843
        %v3862 = vpop.f32.mrf.mxu0
        %v3863 = vadd.f32 0.0, %v3862
        %3864 = vdwg.mxu0
        %v3865 = vadd.f32 %v3834, %v3863
        %v3866 = vld [vmem:[%s3611] ss:$2 sm:$0x1]
        %s3867 = scalar_lea.vmem %s7, 144
        %v3868 = vld [vmem:[%s3867] sm:$0xff]
        %v3869 = vld [vmem:[%s3867 + $0x8] sm:$0xff]
        %v3871 = vsel %vm3616, %v3866, 0
        %3873 = vmatpush.msra.mxu0 0.0
        %3874 = vmatpush.msra.mxu0 0.0
        %3875 = vmatpush.msra.mxu0 0.0
        %3876 = vmatpush.msra.mxu0 0.0
        %3877 = vmatpush.msra.mxu0 0.0
        %3878 = vmatpush.msra.mxu0 0.0
        %3879 = vmatpush.msra.mxu0 0.0
        %3880 = vmatpush.msra.mxu0 0.0
        %3881 = vmatpush.msra.mxu0 0.0
        %3882 = vmatpush.msra.mxu0 0.0
        %3883 = vmatpush.msra.mxu0 0.0
        %3884 = vmatpush.msra.mxu0 0.0
        %3885 = vmatpush.msra.mxu0 0.0
        %3886 = vmatpush.msra.mxu0 0.0
        %3887 = vmatpush.msra.mxu0 %v3869
        %3888 = vmatpush.msra.mxu0 %v3868
        %3889 = vmatmul.f32.gmra.mxu0 %v3871
        %v3890 = vpop.f32.mrf.mxu0
        %v3891 = vadd.f32 0.0, %v3890
        %3892 = vdwg.mxu0
        %v3893 = vadd.f32 %v3865, %v3891
        %v3894 = vld [vmem:[%s3663] ss:$2 sm:$0x1]
        %s3895 = scalar_lea.vmem %s7, 160
        %v3896 = vld [vmem:[%s3895] sm:$0xff]
        %v3897 = vld [vmem:[%s3895 + $0x8] sm:$0xff]
        %v3899 = vsel %vm3616, %v3894, 0
        %3901 = vmatpush.msra.mxu0 0.0
        %3902 = vmatpush.msra.mxu0 0.0
        %3903 = vmatpush.msra.mxu0 0.0
        %3904 = vmatpush.msra.mxu0 0.0
        %3905 = vmatpush.msra.mxu0 0.0
        %3906 = vmatpush.msra.mxu0 0.0
        %3907 = vmatpush.msra.mxu0 0.0
        %3908 = vmatpush.msra.mxu0 0.0
        %3909 = vmatpush.msra.mxu0 0.0
        %3910 = vmatpush.msra.mxu0 0.0
        %3911 = vmatpush.msra.mxu0 0.0
        %3912 = vmatpush.msra.mxu0 0.0
        %3913 = vmatpush.msra.mxu0 0.0
        %3914 = vmatpush.msra.mxu0 0.0
        %3915 = vmatpush.msra.mxu0 %v3897
        %3916 = vmatpush.msra.mxu0 %v3896
        %3917 = vmatmul.f32.gmra.mxu0 %v3899
        %v3918 = vpop.f32.mrf.mxu0
        %v3919 = vadd.f32 0.0, %v3918
        %3920 = vdwg.mxu0
        %v3921 = vadd.f32 %v3893, %v3919
        %v3922 = vld [vmem:[%s3692] ss:$2 sm:$0x1]
        %s3923 = scalar_lea.vmem %s7, 176
        %v3924 = vld [vmem:[%s3923] sm:$0xff]
        %v3925 = vld [vmem:[%s3923 + $0x8] sm:$0xff]
        %v3927 = vsel %vm3616, %v3922, 0
        %3929 = vmatpush.msra.mxu0 0.0
        %3930 = vmatpush.msra.mxu0 0.0
        %3931 = vmatpush.msra.mxu0 0.0
        %3932 = vmatpush.msra.mxu0 0.0
        %3933 = vmatpush.msra.mxu0 0.0
        %3934 = vmatpush.msra.mxu0 0.0
        %3935 = vmatpush.msra.mxu0 0.0
        %3936 = vmatpush.msra.mxu0 0.0
        %3937 = vmatpush.msra.mxu0 0.0
        %3938 = vmatpush.msra.mxu0 0.0
        %3939 = vmatpush.msra.mxu0 0.0
        %3940 = vmatpush.msra.mxu0 0.0
        %3941 = vmatpush.msra.mxu0 0.0
        %3942 = vmatpush.msra.mxu0 0.0
        %3943 = vmatpush.msra.mxu0 %v3925
        %3944 = vmatpush.msra.mxu0 %v3924
        %3945 = vmatmul.f32.gmra.mxu0 %v3927
        %v3946 = vpop.f32.mrf.mxu0
        %v3947 = vadd.f32 0.0, %v3946
        %3948 = vdwg.mxu0
        %v3949 = vadd.f32 %v3921, %v3947
        %s3950 = scalar_lea.vmem [#allocation8], 12
        %v3951 = vld [vmem:[%s3950] sm:$0xf]
        %3952 = vst.msk [vmem:[#allocation9] sm:$0xf] %vm3597, %v3951
        %v3953 = vld [vmem:[#allocation9] ss:$2 sm:$0x1]
        %s3954 = scalar_lea.vmem %s7, 192
        %v3955 = vld [vmem:[%s3954] sm:$0xff]
        %v3956 = vld [vmem:[%s3954 + $0x8] sm:$0xff]
        %v3958 = vsel %vm3616, %v3953, 0
        %3960 = vmatpush.msra.mxu0 0.0
        %3961 = vmatpush.msra.mxu0 0.0
        %3962 = vmatpush.msra.mxu0 0.0
        %3963 = vmatpush.msra.mxu0 0.0
        %3964 = vmatpush.msra.mxu0 0.0
        %3965 = vmatpush.msra.mxu0 0.0
        %3966 = vmatpush.msra.mxu0 0.0
        %3967 = vmatpush.msra.mxu0 0.0
        %3968 = vmatpush.msra.mxu0 0.0
        %3969 = vmatpush.msra.mxu0 0.0
        %3970 = vmatpush.msra.mxu0 0.0
        %3971 = vmatpush.msra.mxu0 0.0
        %3972 = vmatpush.msra.mxu0 0.0
        %3973 = vmatpush.msra.mxu0 0.0
        %3974 = vmatpush.msra.mxu0 %v3956
        %3975 = vmatpush.msra.mxu0 %v3955
        %3976 = vmatmul.f32.gmra.mxu0 %v3958
        %v3977 = vpop.f32.mrf.mxu0
        %v3978 = vadd.f32 0.0, %v3977
        %3979 = vdwg.mxu0
        %v3980 = vadd.f32 %v3949, %v3978
        %v3981 = vld [vmem:[%s3611] ss:$2 sm:$0x1]
        %s3982 = scalar_lea.vmem %s7, 208
        %v3983 = vld [vmem:[%s3982] sm:$0xff]
        %v3984 = vld [vmem:[%s3982 + $0x8] sm:$0xff]
        %v3986 = vsel %vm3616, %v3981, 0
        %3988 = vmatpush.msra.mxu0 0.0
        %3989 = vmatpush.msra.mxu0 0.0
        %3990 = vmatpush.msra.mxu0 0.0
        %3991 = vmatpush.msra.mxu0 0.0
        %3992 = vmatpush.msra.mxu0 0.0
        %3993 = vmatpush.msra.mxu0 0.0
        %3994 = vmatpush.msra.mxu0 0.0
        %3995 = vmatpush.msra.mxu0 0.0
        %3996 = vmatpush.msra.mxu0 0.0
        %3997 = vmatpush.msra.mxu0 0.0
        %3998 = vmatpush.msra.mxu0 0.0
        %3999 = vmatpush.msra.mxu0 0.0
        %4000 = vmatpush.msra.mxu0 0.0
        %4001 = vmatpush.msra.mxu0 0.0
        %4002 = vmatpush.msra.mxu0 %v3984
        %4003 = vmatpush.msra.mxu0 %v3983
        %4004 = vmatmul.f32.gmra.mxu0 %v3986
        %v4005 = vpop.f32.mrf.mxu0
        %v4006 = vadd.f32 0.0, %v4005
        %4007 = vdwg.mxu0
        %v4008 = vadd.f32 %v3980, %v4006
        %v4009 = vld [vmem:[%s3663] ss:$2 sm:$0x1]
        %s4010 = scalar_lea.vmem %s7, 224
        %v4011 = vld [vmem:[%s4010] sm:$0xff]
        %v4012 = vld [vmem:[%s4010 + $0x8] sm:$0xff]
        %v4014 = vsel %vm3616, %v4009, 0
        %4016 = vmatpush.msra.mxu0 0.0
        %4017 = vmatpush.msra.mxu0 0.0
        %4018 = vmatpush.msra.mxu0 0.0
        %4019 = vmatpush.msra.mxu0 0.0
        %4020 = vmatpush.msra.mxu0 0.0
        %4021 = vmatpush.msra.mxu0 0.0
        %4022 = vmatpush.msra.mxu0 0.0
        %4023 = vmatpush.msra.mxu0 0.0
        %4024 = vmatpush.msra.mxu0 0.0
        %4025 = vmatpush.msra.mxu0 0.0
        %4026 = vmatpush.msra.mxu0 0.0
        %4027 = vmatpush.msra.mxu0 0.0
        %4028 = vmatpush.msra.mxu0 0.0
        %4029 = vmatpush.msra.mxu0 0.0
        %4030 = vmatpush.msra.mxu0 %v4012
        %4031 = vmatpush.msra.mxu0 %v4011
        %4032 = vmatmul.f32.gmra.mxu0 %v4014
        %v4033 = vpop.f32.mrf.mxu0
        %v4034 = vadd.f32 0.0, %v4033
        %4035 = vdwg.mxu0
        %v4036 = vadd.f32 %v4008, %v4034
        %v4037 = vld [vmem:[%s3692] ss:$2 sm:$0x1]
        %s4038 = scalar_lea.vmem %s7, 240
        %v4039 = vld [vmem:[%s4038] sm:$0xff]
        %v4040 = vld [vmem:[%s4038 + $0x8] sm:$0xff]
        %v4042 = vsel %vm3616, %v4037, 0
        %4044 = vmatpush.msra.mxu0 0.0
        %4045 = vmatpush.msra.mxu0 0.0
        %4046 = vmatpush.msra.mxu0 0.0
        %4047 = vmatpush.msra.mxu0 0.0
        %4048 = vmatpush.msra.mxu0 0.0
        %4049 = vmatpush.msra.mxu0 0.0
        %4050 = vmatpush.msra.mxu0 0.0
        %4051 = vmatpush.msra.mxu0 0.0
        %4052 = vmatpush.msra.mxu0 0.0
        %4053 = vmatpush.msra.mxu0 0.0
        %4054 = vmatpush.msra.mxu0 0.0
        %4055 = vmatpush.msra.mxu0 0.0
        %4056 = vmatpush.msra.mxu0 0.0
        %4057 = vmatpush.msra.mxu0 0.0
        %4058 = vmatpush.msra.mxu0 %v4040
        %4059 = vmatpush.msra.mxu0 %v4039
        %4060 = vmatmul.f32.gmra.mxu0 %v4042
        %v4061 = vpop.f32.mrf.mxu0
        %v4062 = vadd.f32 0.0, %v4061
        %4063 = vdwg.mxu0
        %v4064 = vadd.f32 %v4036, %v4062
        %v4065 = vld [vmem:[%s8] sm:$0x1]
        %v4066 = vadd.f32 %v4064, %v4065
        %v4067 = vmax.f32 %v4066, 0.0
        %vm4068 = vcmask 253952
        %4069 = vst.msk [vmem:[%s324] sm:$0x1] %vm4068, %v4067
        %s4070 = sand.u32 %s225, 1
        %s4071 = scalar_lea.sflag [#allocation11], %s4070
        %s4072 = sand.u32 %s225, 1
        %s4073 = scalar_lea.vmem [#allocation10], %s4072
        // Predicated region
        $region57: #{cnn_encoder.1} parent=55 // pred_check
          %p4074 = pneg %p235
        $region58: #{cnn_encoder.1} parent=55 // pred_check_branch
          %4076 = sbr.rel (%p4074) target = $region60
        $region59: #{cnn_encoder.1} parent=55 // pred_region
          %4078 = vsyncadd %s4071, 0
          %s4079 = scalar_lea.hbm %s9, %s23
          %s4081 = sshll.u32 %s4073, 4
          %s4082 = int_to_ptr.vmem [resolvable:$true] %s4081
          %s4083 = sshll.u32 %s4079, 4
          %s4084 = int_to_ptr.hbm [resolvable:$true] %s4083
          %4086 = dma.vmem_to_hbm [thread:$0]  %s4082, 16, %s4084, %s4071
        $region60: #{cnn_encoder.1} parent=55 // pred_fallthru
          _
      $region56: #{cnn_encoder.1} parent=5 // pred_fallthru
        _
      %p4087 = scmp.le.s32.totalorder 2, %s18
      // Predicated region
      $region61: #{cnn_encoder.1} parent=5 // pred_check
        %p4088 = pneg %p4087
      $region62: #{cnn_encoder.1} parent=5 // pred_check_branch
        %4090 = sbr.rel (%p4088) target = $region64
      $region63: #{cnn_encoder.1} parent=5 // pred_region
        %s4091 = ssub.s32 %s18, 2
        // Predicated region
        $region65: #{cnn_encoder.1} parent=63 // pred_check
          %p4092 = pneg %p241
        $region66: #{cnn_encoder.1} parent=63 // pred_check_branch
          %4094 = sbr.rel (%p4092) target = $region68
        $region67: #{cnn_encoder.1} parent=63 // pred_region
          %s4095 = sand.u32 %s226, 1
          %s4096 = scalar_lea.sflag [#allocation11], %s4095
          %s4097 = sand.u32 %s226, 1
          %s4098 = scalar_lea.vmem [#allocation10], %s4097
          %4100 = dma.done %s4096, 16
        $region68: #{cnn_encoder.1} parent=63 // pred_fallthru
          _
      $region64: #{cnn_encoder.1} parent=5 // pred_fallthru
        _
    $region6: #{cnn_encoder.1} parent=1 // loop_footer
      %s22 = sadd.s32 1, %s18
    $region7: #{cnn_encoder.1} parent=1 // loop_footer_branch
      %17 = sbr.rel target = $region3
    $region8: #{cnn_encoder.1} parent=1 // loop_exit
      _
    %4101 = vsyncpa [#allocation11], 1
    %s4102 = scalar_lea.sflag [#allocation11], 1
    %4103 = vsyncpa %s4102, 1

</llo_original>
